<compile_context>
chip_gen: v7x
topology: tpu7x:2x2x1
jax: 0.10.0
libtpu: 0.0.40
codegen_flags: <defaults>
</compile_context>

<pallas_src>
import math
import jax
import jax.numpy as jnp
from jax.experimental import pallas as pl
from jax.experimental.pallas import tpu as pltpu

# ----------------------------- model config (small) -------------------------
VOCAB = 512        # stands in for 30522
HIDDEN = 128       # stands in for 768
N_HEADS = 4        # stands in for 12
HEAD_DIM = HIDDEN // N_HEADS
FFN = 256          # stands in for 3072
N_LAYERS = 2       # stands in for 6
MAX_POS = 64
LN_EPS = 1e-12

BATCH = 2
SEQ = 16
N_MASKED = 4

DECODER_V_TILE = 256   # lane-dense vocab tile for the tied decoder / CE kernel

BF16 = jnp.bfloat16


def _layernorm_rows(x, gamma, beta, eps=LN_EPS):
    """f32 row-wise LayerNorm (used inside kernels)."""
    mu = jnp.mean(x, axis=-1, keepdims=True)
    var = jnp.mean(jnp.square(x - mu), axis=-1, keepdims=True)
    return (x - mu) * jax.lax.rsqrt(var + eps) * gamma + beta


def _layer_rows_per_step(batch, seq):
    """Rows of the [B*S, H] slab processed per grid step in the layer kernel.

    v7x has 2 TensorCores per chip -> keep a 2-step "parallel" batch grid so
    both TCs get work; v5e/v6e are single-TC -> fold the whole batch into one
    grid step (2x MXU row occupancy, no per-step overhead)."""
    try:
        kind = jax.devices()[0].device_kind.lower()
    except Exception:
        kind = ""
    if "v7" in kind and batch % 2 == 0:
        return (batch // 2) * seq
    return batch * seq


# ----------------------------- fused transformer layer ----------------------
def transformer_layer_pallas(x2d, p, *, seq, rows_per_step, input_ln=None):
    """One DistilBERT TransformerBlock fused into a single kernel.

    x2d: [B*S, H] f32 (rows grouped by batch element) -> [B*S, H] f32.
    input_ln: optional (gamma, beta) — the embedding LayerNorm folded into
    the first layer's kernel (applied before QKV; residual uses the LN'd x).
    """
    N, H = x2d.shape
    assert N % rows_per_step == 0 and rows_per_step % seq == 0
    G = N // rows_per_step
    bc = rows_per_step // seq
    apply_input_ln = input_ln is not None

    weights = []
    if apply_input_ln:
        weights += [input_ln[0], input_ln[1]]
    weights += [p["qkv_w"], p["qkv_b"], p["o_w"], p["o_b"],
                p["sa_ln_g"], p["sa_ln_b"], p["lin1_w"], p["lin1_b"],
                p["lin2_w"], p["lin2_b"], p["out_ln_g"], p["out_ln_b"]]

    def kernel(x_ref, *refs):
        o_ref = refs[-1]
        wrefs = refs[:-1]
        off = 0
        if apply_input_ln:
            pre_g, pre_b = wrefs[0], wrefs[1]
            off = 2
        (qkv_w, qkv_b, o_w, o_b, sa_g, sa_b,
         l1_w, l1_b, l2_w, l2_b, og, ob) = wrefs[off:off + 12]

        xv = x_ref[...]                                   # [rows, H] f32
        if apply_input_ln:
            xv = _layernorm_rows(xv, pre_g[...], pre_b[...])

        # --- fused Q/K/V projection: [rows,H] @ [H,3H] (bf16 MXU, f32 acc) ---
        qkv = jnp.dot(xv.astype(BF16), qkv_w[...],
                      preferred_element_type=jnp.float32) + qkv_b[...]

        # --- multi-head attention; attn_out accumulated through W_o per head
        #     (no lane-axis concat).  1/sqrt(d) is folded into the Q weights. --
        attn_rows = []
        for b in range(bc):
            r0 = b * seq
            acc = None
            for h in range(N_HEADS):
                c0 = h * HEAD_DIM
                q = qkv[r0:r0 + seq, c0:c0 + HEAD_DIM]
                k = qkv[r0:r0 + seq, H + c0:H + c0 + HEAD_DIM]
                v = qkv[r0:r0 + seq, 2 * H + c0:2 * H + c0 + HEAD_DIM]
                s = jax.lax.dot_general(q.astype(BF16), k.astype(BF16),
                                        (((1,), (1,)), ((), ())),
                                        preferred_element_type=jnp.float32)  # [S,S]
                s = s - jnp.max(s, axis=-1, keepdims=True)
                pr = jnp.exp(s)                                              # f32 softmax
                pr = pr * pl.reciprocal(jnp.sum(pr, axis=-1, keepdims=True),
                                        approx=True)
                ctx = jnp.dot(pr.astype(BF16), v.astype(BF16),
                              preferred_element_type=jnp.float32)            # [S, HD]
                part = jnp.dot(ctx.astype(BF16), o_w[c0:c0 + HEAD_DIM, :],
                               preferred_element_type=jnp.float32)           # [S, H]
                acc = part if acc is None else acc + part
            attn_rows.append(acc)
        attn = attn_rows[0] if bc == 1 else jnp.concatenate(attn_rows, axis=0)

        # --- residual + LayerNorm -------------------------------------------
        h1 = _layernorm_rows(xv + attn + o_b[...], sa_g[...], sa_b[...])

        # --- FFN: lin1 + exact GELU + lin2 + residual + LayerNorm ------------
        f = jnp.dot(h1.astype(BF16), l1_w[...],
                    preferred_element_type=jnp.float32) + l1_b[...]
        f = 0.5 * f * (1.0 + jax.lax.erf(f * (1.0 / math.sqrt(2.0))))        # f32 GELU
        f = jnp.dot(f.astype(BF16), l2_w[...],
                    preferred_element_type=jnp.float32) + l2_b[...]
        o_ref[...] = _layernorm_rows(h1 + f, og[...], ob[...]).astype(o_ref.dtype)

    x_spec = pl.BlockSpec((rows_per_step, H), lambda i: (i, 0))
    w_specs = [pl.BlockSpec(w.shape, lambda i: (0, 0)) for w in weights]
    # TODO(synk): at real DistilBERT scale add pipeline_mode=pl.Buffered(1) to the
    # constant-index weight specs, set vmem_limit_bytes, and split attn/FFN on v7x.

    return pl.pallas_call(
        kernel,
        out_shape=jax.ShapeDtypeStruct((N, H), x2d.dtype),
        grid=(G,),
        in_specs=[x_spec] + w_specs,
        out_specs=x_spec,
        compiler_params=pltpu.CompilerParams(
            dimension_semantics=("parallel",)),
    )(x2d, *weights)


# ----------------- tied MLM decoder + cross-entropy (fused) -----------------
def mlm_decoder_ce(hm, word_emb_t, labels):
    """Tied decoder on the GATHERED masked rows only, fused with per-row CE.

    hm: [R, H] f32 (R = B*P gathered hidden rows); word_emb_t: [H, V] bf16;
    labels: [R] int32.  Grid over lane-dense V tiles with an online logsumexp;
    the target logit is gathered in-kernel via a lane-iota compare.
    Returns (masked_logits [R, V] f32, per_row_ce [R, 1] f32)."""
    R, H = hm.shape
    V = word_emb_t.shape[1]
    TV = min(DECODER_V_TILE, V)
    assert V % TV == 0
    nvt = V // TV
    lab2 = labels.reshape(R, 1).astype(jnp.int32)

    def kernel(hm_ref, w_ref, lab_ref, logits_ref, loss_ref, m_sc, l_sc, t_sc):
        j = pl.program_id(0)

        @pl.when(j == 0)
        def _():
            m_sc[...] = jnp.full((R, 1), -jnp.inf, jnp.float32)
            l_sc[...] = jnp.zeros((R, 1), jnp.float32)
            t_sc[...] = jnp.zeros((R, 1), jnp.float32)

        logits = jnp.dot(hm_ref[...].astype(BF16), w_ref[...],
                         preferred_element_type=jnp.float32)          # [R, TV]
        logits_ref[...] = logits.astype(logits_ref.dtype)

        # target-logit gather via lane-iota compare (no one-hot materialised)
        cols = j * TV + jax.lax.broadcasted_iota(jnp.int32, (R, TV), 1)
        hit = (cols == lab_ref[...]).astype(jnp.float32)
        t_sc[...] += jnp.sum(logits * hit, axis=-1, keepdims=True)

        # online log-sum-exp across V tiles
        m_new = jnp.maximum(m_sc[...], jnp.max(logits, axis=-1, keepdims=True))
        l_sc[...] = (l_sc[...] * jnp.exp(m_sc[...] - m_new)
                     + jnp.sum(jnp.exp(logits - m_new), axis=-1, keepdims=True))
        m_sc[...] = m_new

        @pl.when(j == pl.num_programs(0) - 1)
        def _():
            loss_ref[...] = (m_sc[...] + jnp.log(l_sc[...])
                             - t_sc[...]).astype(loss_ref.dtype)

    return pl.pallas_call(
        kernel,
        out_shape=(jax.ShapeDtypeStruct((R, V), jnp.float32),
                   jax.ShapeDtypeStruct((R, 1), jnp.float32)),
        grid=(nvt,),
        in_specs=[pl.BlockSpec((R, H), lambda j: (0, 0)),
                  pl.BlockSpec((H, TV), lambda j: (0, j)),
                  pl.BlockSpec((R, 1), lambda j: (0, 0))],
        out_specs=(pl.BlockSpec((R, TV), lambda j: (0, j)),
                   pl.BlockSpec((R, 1), lambda j: (0, 0))),
        scratch_shapes=[pltpu.VMEM((R, 1), jnp.float32),
                        pltpu.VMEM((R, 1), jnp.float32),
                        pltpu.VMEM((R, 1), jnp.float32)],
        compiler_params=pltpu.CompilerParams(
            dimension_semantics=("arbitrary",)),
    )(hm, word_emb_t, lab2)


# ----------------------------- DistilBERT encoder ---------------------------
def distilbert_forward(params, src):
    """src: [B, S] int32 -> last_hidden_state [B, S, H]."""
    B, S = src.shape
    H = HIDDEN
    # Embedding gather + positional add stay as XLA glue (data-dependent gather).
    x = jnp.take(params["word_emb"], src, axis=0) + params["pos_emb"][:S][None, :, :]
    x2d = x.reshape(B * S, H)
    rows = _layer_rows_per_step(B, S)
    for li, lp in enumerate(params["layers"]):
        x2d = transformer_layer_pallas(
            x2d, lp, seq=S, rows_per_step=rows,
            input_ln=((params["emb_ln_g"], params["emb_ln_b"]) if li == 0 else None))
    return x2d.reshape(B, S, H)


# ----------------------------- PretrainingModel.forward ---------------------
def pretraining_forward(params, src, masked_lm_ids, masked_lm_positions, nsp_labels):
    B, S = src.shape
    V = params["word_emb"].shape[0]
    H = HIDDEN
    P = masked_lm_positions.shape[1]

    hidden = distilbert_forward(params, src)                      # [B, S, H]

    # Gather masked positions BEFORE the tied decoder: only the [B*P, H] rows
    # that are actually consumed reach the [H, V] matmul.
    hm = jnp.take_along_axis(hidden, masked_lm_positions[:, :, None],
                             axis=1).reshape(B * P, H)
    labels = masked_lm_ids.reshape(-1)
    masked_logits, per_row = mlm_decoder_ce(hm, params["word_emb_t"], labels)
    masked_outputs = masked_logits.reshape(B, P, V)

    # MLM loss: CrossEntropyLoss(ignore_index=0) — masked mean over valid targets.
    valid = (labels != 0).astype(jnp.float32)
    denom = jnp.maximum(jnp.sum(valid), 1.0)   # guard: torch returns NaN when 0 valid
    mlm_loss = jnp.sum(per_row[:, 0] * valid) / denom

    # NSP head + loss on the [CLS] rows: trivial [B,2] work — plain XLA glue.
    cls = hidden[:, 0, :]
    nsp_out = cls @ params["nsp_w_t"] + params["nsp_b"]
    nsp_logp = jax.nn.log_softmax(nsp_out, axis=-1)
    nsp_loss = -jnp.mean(jnp.take_along_axis(nsp_logp, nsp_labels[:, None], axis=1))

    return masked_outputs, nsp_out, mlm_loss, nsp_loss


# ----------------------------- deterministic parameter init -----------------
def init_params(key):
    """Weights stored pre-transposed / pre-concatenated in the layout the kernels
    consume; matmul weights stored as bf16 in HBM; 1/sqrt(d) folded into Q."""
    ks = iter(jax.random.split(key, 8 + N_LAYERS * 8))

    def normal(shape):
        return 0.02 * jax.random.normal(next(ks), shape, jnp.float32)

    word_emb = normal((VOCAB, HIDDEN))
    params = {
        "word_emb": word_emb,                          # f32 embedding lookup table
        "word_emb_t": word_emb.T.astype(BF16),         # bf16 [H, V] tied decoder RHS
        "pos_emb": normal((MAX_POS, HIDDEN)),
        "emb_ln_g": jnp.ones((1, HIDDEN), jnp.float32),
        "emb_ln_b": jnp.zeros((1, HIDDEN), jnp.float32),
        "nsp_w_t": normal((HIDDEN, 2)),                # [K, N] layout, f32 (XLA head)
        "nsp_b": jnp.zeros((2,), jnp.float32),
        "layers": [],
    }
    scale = 1.0 / math.sqrt(HEAD_DIM)
    for _ in range(N_LAYERS):
        q_w = normal((HIDDEN, HIDDEN)) * scale          # softmax scale folded into Q
        k_w = normal((HIDDEN, HIDDEN))
        v_w = normal((HIDDEN, HIDDEN))
        params["layers"].append({
            "qkv_w": jnp.concatenate([q_w, k_w, v_w], axis=1).astype(BF16),  # [H, 3H]
            "qkv_b": jnp.zeros((1, 3 * HIDDEN), jnp.float32),
            "o_w": normal((HIDDEN, HIDDEN)).astype(BF16),
            "o_b": jnp.zeros((1, HIDDEN), jnp.float32),
            "sa_ln_g": jnp.ones((1, HIDDEN), jnp.float32),
            "sa_ln_b": jnp.zeros((1, HIDDEN), jnp.float32),
            "lin1_w": normal((HIDDEN, FFN)).astype(BF16),
            "lin1_b": jnp.zeros((1, FFN), jnp.float32),
            "lin2_w": normal((FFN, HIDDEN)).astype(BF16),
            "lin2_b": jnp.zeros((1, HIDDEN), jnp.float32),
            "out_ln_g": jnp.ones((1, HIDDEN), jnp.float32),
            "out_ln_b": jnp.zeros((1, HIDDEN), jnp.float32),
        })
    return params


# ----------------------------- main ------------------------------------------
if __name__ == "__main__":
    root = jax.random.PRNGKey(0)
    k_param, k_src, k_pos, k_ids, k_nsp = jax.random.split(root, 5)

    params = init_params(k_param)

    src = jax.random.randint(k_src, (BATCH, SEQ), 0, VOCAB, dtype=jnp.int32)
    masked_lm_positions = jax.random.randint(
        k_pos, (BATCH, N_MASKED), 0, SEQ, dtype=jnp.int32)
    masked_lm_ids = jax.random.randint(
        k_ids, (BATCH, N_MASKED), 1, VOCAB, dtype=jnp.int32)
    # exercise ignore_index=0 on one target
    masked_lm_ids = masked_lm_ids.at[0, 0].set(0)
    nsp_labels = jax.random.randint(k_nsp, (BATCH,), 0, 2, dtype=jnp.int32)

    fwd = jax.jit(pretraining_forward)
    masked_outputs, nsp_out, mlm_loss, nsp_loss = fwd(
        params, src, masked_lm_ids, masked_lm_positions, nsp_labels)

    jax.block_until_ready((masked_outputs, nsp_out, mlm_loss, nsp_loss))

    assert masked_outputs.shape == (BATCH, N_MASKED, VOCAB)
    assert nsp_out.shape == (BATCH, 2)
    assert mlm_loss.shape == () and nsp_loss.shape == ()
    assert bool(jnp.isfinite(mlm_loss)) and bool(jnp.isfinite(nsp_loss))

    print("KERNEL_OK")
</pallas_src>

<mosaic_0001>
module attributes {stable_mosaic.version = 11 : i64} {
  func.func @kernel(%arg0: i32, %arg1: memref<32x128xf32, #tpu.memory_space<vmem>>, %arg2: memref<128x384xbf16, #tpu.memory_space<vmem>>, %arg3: memref<1x384xf32, #tpu.memory_space<vmem>>, %arg4: memref<128x128xbf16, #tpu.memory_space<vmem>>, %arg5: memref<1x128xf32, #tpu.memory_space<vmem>>, %arg6: memref<1x128xf32, #tpu.memory_space<vmem>>, %arg7: memref<1x128xf32, #tpu.memory_space<vmem>>, %arg8: memref<128x256xbf16, #tpu.memory_space<vmem>>, %arg9: memref<1x256xf32, #tpu.memory_space<vmem>>, %arg10: memref<256x128xbf16, #tpu.memory_space<vmem>>, %arg11: memref<1x128xf32, #tpu.memory_space<vmem>>, %arg12: memref<1x128xf32, #tpu.memory_space<vmem>>, %arg13: memref<1x128xf32, #tpu.memory_space<vmem>>, %arg14: memref<32x128xf32, #tpu.memory_space<vmem>>) attributes {dimension_semantics = [#tpu.dimension_semantics<parallel>], iteration_bounds = array<i64: 1>, scalar_prefetch = 0 : i64, scratch_operands = 0 : i64, tpu.core_type = #tpu.core_type<tc>, window_params = [{transform_indices = @transform_0, window_bounds = array<i64: 32, 128>}, {pipeline_mode = #tpu.pipeline_mode<synchronous>, transform_indices = @transform_1, window_bounds = array<i64: 128, 384>}, {pipeline_mode = #tpu.pipeline_mode<synchronous>, transform_indices = @transform_2, window_bounds = array<i64: 1, 384>}, {pipeline_mode = #tpu.pipeline_mode<synchronous>, transform_indices = @transform_3, window_bounds = array<i64: 128, 128>}, {pipeline_mode = #tpu.pipeline_mode<synchronous>, transform_indices = @transform_4, window_bounds = array<i64: 1, 128>}, {pipeline_mode = #tpu.pipeline_mode<synchronous>, transform_indices = @transform_5, window_bounds = array<i64: 1, 128>}, {pipeline_mode = #tpu.pipeline_mode<synchronous>, transform_indices = @transform_6, window_bounds = array<i64: 1, 128>}, {pipeline_mode = #tpu.pipeline_mode<synchronous>, transform_indices = @transform_7, window_bounds = array<i64: 128, 256>}, {pipeline_mode = #tpu.pipeline_mode<synchronous>, transform_indices = @transform_8, window_bounds = array<i64: 1, 256>}, {pipeline_mode = #tpu.pipeline_mode<synchronous>, transform_indices = @transform_9, window_bounds = array<i64: 256, 128>}, {pipeline_mode = #tpu.pipeline_mode<synchronous>, transform_indices = @transform_10, window_bounds = array<i64: 1, 128>}, {pipeline_mode = #tpu.pipeline_mode<synchronous>, transform_indices = @transform_11, window_bounds = array<i64: 1, 128>}, {pipeline_mode = #tpu.pipeline_mode<synchronous>, transform_indices = @transform_12, window_bounds = array<i64: 1, 128>}, {transform_indices = @transform_13, window_bounds = array<i64: 32, 128>}]} {
    %c0 = arith.constant 0 : index
    %c0_0 = arith.constant 0 : index
    %0 = vector.load %arg1[%c0, %c0_0] : memref<32x128xf32, #tpu.memory_space<vmem>>, vector<32x128xf32>
    %1 = arith.truncf %0 : vector<32x128xf32> to vector<32x128xbf16>
    %c0_1 = arith.constant 0 : index
    %c0_2 = arith.constant 0 : index
    %2 = vector.load %arg2[%c0_1, %c0_2] : memref<128x384xbf16, #tpu.memory_space<vmem>>, vector<128x384xbf16>
    %cst = arith.constant dense<0.000000e+00> : vector<32x384xf32>
    %3 = tpu.matmul %1, %2, %cst {dimension_numbers = #tpu.dot_dimension_numbers<[1], [0], [0], [1], [0, 0, 1, 1], [], []>} : vector<32x128xbf16>, vector<128x384xbf16>, vector<32x384xf32> -> vector<32x384xf32>
    %c0_3 = arith.constant 0 : index
    %c0_4 = arith.constant 0 : index
    %4 = vector.load %arg3[%c0_3, %c0_4] : memref<1x384xf32, #tpu.memory_space<vmem>>, vector<1x384xf32>
    %5 = vector.broadcast %4 : vector<1x384xf32> to vector<32x384xf32>
    %6 = arith.addf %3, %5 : vector<32x384xf32>
    %7 = vector.extract_strided_slice %6 {offsets = [0, 0], sizes = [16, 32], strides = [1, 1]} : vector<32x384xf32> to vector<16x32xf32>
    %8 = vector.extract_strided_slice %6 {offsets = [0, 128], sizes = [16, 32], strides = [1, 1]} : vector<32x384xf32> to vector<16x32xf32>
    %9 = vector.extract_strided_slice %6 {offsets = [0, 256], sizes = [16, 32], strides = [1, 1]} : vector<32x384xf32> to vector<16x32xf32>
    %10 = arith.truncf %7 : vector<16x32xf32> to vector<16x32xbf16>
    %11 = arith.truncf %8 : vector<16x32xf32> to vector<16x32xbf16>
    %cst_5 = arith.constant dense<0.000000e+00> : vector<16x16xf32>
    %12 = tpu.matmul %10, %11, %cst_5 {dimension_numbers = #tpu.dot_dimension_numbers<[1], [1], [0], [0], [0, 0, 1, 0], [], []>} : vector<16x32xbf16>, vector<16x32xbf16>, vector<16x16xf32> -> vector<16x16xf32>
    %cst_6 = arith.constant dense<0xFF800000> : vector<16xf32>
    %13 = vector.multi_reduction <maximumf>, %12, %cst_6 [1] : vector<16x16xf32> to vector<16xf32>
    %14 = vector.shape_cast %13 : vector<16xf32> to vector<16x1xf32>
    %15 = vector.broadcast %14 : vector<16x1xf32> to vector<16x16xf32>
    %16 = arith.subf %12, %15 : vector<16x16xf32>
    %17 = math.exp %16 : vector<16x16xf32>
    %cst_7 = arith.constant dense<0.000000e+00> : vector<16xf32>
    %18 = vector.multi_reduction <add>, %17, %cst_7 [1] : vector<16x16xf32> to vector<16xf32>
    %19 = vector.shape_cast %18 : vector<16xf32> to vector<16x1xf32>
    %20 = tpu.reciprocal %19 {approx = true} : vector<16x1xf32> -> vector<16x1xf32>
    %21 = vector.broadcast %20 : vector<16x1xf32> to vector<16x16xf32>
    %22 = arith.mulf %17, %21 : vector<16x16xf32>
    %23 = arith.truncf %22 : vector<16x16xf32> to vector<16x16xbf16>
    %24 = arith.truncf %9 : vector<16x32xf32> to vector<16x32xbf16>
    %cst_8 = arith.constant dense<0.000000e+00> : vector<16x32xf32>
    %25 = tpu.matmul %23, %24, %cst_8 {dimension_numbers = #tpu.dot_dimension_numbers<[1], [0], [0], [1], [0, 0, 1, 1], [], []>} : vector<16x16xbf16>, vector<16x32xbf16>, vector<16x32xf32> -> vector<16x32xf32>
    %26 = arith.truncf %25 : vector<16x32xf32> to vector<16x32xbf16>
    %c0_9 = arith.constant 0 : index
    %c0_10 = arith.constant 0 : index
    %27 = vector.load %arg4[%c0_9, %c0_10] : memref<128x128xbf16, #tpu.memory_space<vmem>>, vector<32x128xbf16>
    %cst_11 = arith.constant dense<0.000000e+00> : vector<16x128xf32>
    %28 = tpu.matmul %26, %27, %cst_11 {dimension_numbers = #tpu.dot_dimension_numbers<[1], [0], [0], [1], [0, 0, 1, 1], [], []>} : vector<16x32xbf16>, vector<32x128xbf16>, vector<16x128xf32> -> vector<16x128xf32>
    %29 = vector.extract_strided_slice %6 {offsets = [0, 32], sizes = [16, 32], strides = [1, 1]} : vector<32x384xf32> to vector<16x32xf32>
    %30 = vector.extract_strided_slice %6 {offsets = [0, 160], sizes = [16, 32], strides = [1, 1]} : vector<32x384xf32> to vector<16x32xf32>
    %31 = vector.extract_strided_slice %6 {offsets = [0, 288], sizes = [16, 32], strides = [1, 1]} : vector<32x384xf32> to vector<16x32xf32>
    %32 = arith.truncf %29 : vector<16x32xf32> to vector<16x32xbf16>
    %33 = arith.truncf %30 : vector<16x32xf32> to vector<16x32xbf16>
    %cst_12 = arith.constant dense<0.000000e+00> : vector<16x16xf32>
    %34 = tpu.matmul %32, %33, %cst_12 {dimension_numbers = #tpu.dot_dimension_numbers<[1], [1], [0], [0], [0, 0, 1, 0], [], []>} : vector<16x32xbf16>, vector<16x32xbf16>, vector<16x16xf32> -> vector<16x16xf32>
    %cst_13 = arith.constant dense<0xFF800000> : vector<16xf32>
    %35 = vector.multi_reduction <maximumf>, %34, %cst_13 [1] : vector<16x16xf32> to vector<16xf32>
    %36 = vector.shape_cast %35 : vector<16xf32> to vector<16x1xf32>
    %37 = vector.broadcast %36 : vector<16x1xf32> to vector<16x16xf32>
    %38 = arith.subf %34, %37 : vector<16x16xf32>
    %39 = math.exp %38 : vector<16x16xf32>
    %cst_14 = arith.constant dense<0.000000e+00> : vector<16xf32>
    %40 = vector.multi_reduction <add>, %39, %cst_14 [1] : vector<16x16xf32> to vector<16xf32>
    %41 = vector.shape_cast %40 : vector<16xf32> to vector<16x1xf32>
    %42 = tpu.reciprocal %41 {approx = true} : vector<16x1xf32> -> vector<16x1xf32>
    %43 = vector.broadcast %42 : vector<16x1xf32> to vector<16x16xf32>
    %44 = arith.mulf %39, %43 : vector<16x16xf32>
    %45 = arith.truncf %44 : vector<16x16xf32> to vector<16x16xbf16>
    %46 = arith.truncf %31 : vector<16x32xf32> to vector<16x32xbf16>
    %cst_15 = arith.constant dense<0.000000e+00> : vector<16x32xf32>
    %47 = tpu.matmul %45, %46, %cst_15 {dimension_numbers = #tpu.dot_dimension_numbers<[1], [0], [0], [1], [0, 0, 1, 1], [], []>} : vector<16x16xbf16>, vector<16x32xbf16>, vector<16x32xf32> -> vector<16x32xf32>
    %48 = arith.truncf %47 : vector<16x32xf32> to vector<16x32xbf16>
    %c32 = arith.constant 32 : index
    %c0_16 = arith.constant 0 : index
    %49 = vector.load %arg4[%c32, %c0_16] : memref<128x128xbf16, #tpu.memory_space<vmem>>, vector<32x128xbf16>
    %cst_17 = arith.constant dense<0.000000e+00> : vector<16x128xf32>
    %50 = tpu.matmul %48, %49, %cst_17 {dimension_numbers = #tpu.dot_dimension_numbers<[1], [0], [0], [1], [0, 0, 1, 1], [], []>} : vector<16x32xbf16>, vector<32x128xbf16>, vector<16x128xf32> -> vector<16x128xf32>
    %51 = arith.addf %28, %50 : vector<16x128xf32>
    %52 = vector.extract_strided_slice %6 {offsets = [0, 64], sizes = [16, 32], strides = [1, 1]} : vector<32x384xf32> to vector<16x32xf32>
    %53 = vector.extract_strided_slice %6 {offsets = [0, 192], sizes = [16, 32], strides = [1, 1]} : vector<32x384xf32> to vector<16x32xf32>
    %54 = vector.extract_strided_slice %6 {offsets = [0, 320], sizes = [16, 32], strides = [1, 1]} : vector<32x384xf32> to vector<16x32xf32>
    %55 = arith.truncf %52 : vector<16x32xf32> to vector<16x32xbf16>
    %56 = arith.truncf %53 : vector<16x32xf32> to vector<16x32xbf16>
    %cst_18 = arith.constant dense<0.000000e+00> : vector<16x16xf32>
    %57 = tpu.matmul %55, %56, %cst_18 {dimension_numbers = #tpu.dot_dimension_numbers<[1], [1], [0], [0], [0, 0, 1, 0], [], []>} : vector<16x32xbf16>, vector<16x32xbf16>, vector<16x16xf32> -> vector<16x16xf32>
    %cst_19 = arith.constant dense<0xFF800000> : vector<16xf32>
    %58 = vector.multi_reduction <maximumf>, %57, %cst_19 [1] : vector<16x16xf32> to vector<16xf32>
    %59 = vector.shape_cast %58 : vector<16xf32> to vector<16x1xf32>
    %60 = vector.broadcast %59 : vector<16x1xf32> to vector<16x16xf32>
    %61 = arith.subf %57, %60 : vector<16x16xf32>
    %62 = math.exp %61 : vector<16x16xf32>
    %cst_20 = arith.constant dense<0.000000e+00> : vector<16xf32>
    %63 = vector.multi_reduction <add>, %62, %cst_20 [1] : vector<16x16xf32> to vector<16xf32>
    %64 = vector.shape_cast %63 : vector<16xf32> to vector<16x1xf32>
    %65 = tpu.reciprocal %64 {approx = true} : vector<16x1xf32> -> vector<16x1xf32>
    %66 = vector.broadcast %65 : vector<16x1xf32> to vector<16x16xf32>
    %67 = arith.mulf %62, %66 : vector<16x16xf32>
    %68 = arith.truncf %67 : vector<16x16xf32> to vector<16x16xbf16>
    %69 = arith.truncf %54 : vector<16x32xf32> to vector<16x32xbf16>
    %cst_21 = arith.constant dense<0.000000e+00> : vector<16x32xf32>
    %70 = tpu.matmul %68, %69, %cst_21 {dimension_numbers = #tpu.dot_dimension_numbers<[1], [0], [0], [1], [0, 0, 1, 1], [], []>} : vector<16x16xbf16>, vector<16x32xbf16>, vector<16x32xf32> -> vector<16x32xf32>
    %71 = arith.truncf %70 : vector<16x32xf32> to vector<16x32xbf16>
    %c64 = arith.constant 64 : index
    %c0_22 = arith.constant 0 : index
    %72 = vector.load %arg4[%c64, %c0_22] : memref<128x128xbf16, #tpu.memory_space<vmem>>, vector<32x128xbf16>
    %cst_23 = arith.constant dense<0.000000e+00> : vector<16x128xf32>
    %73 = tpu.matmul %71, %72, %cst_23 {dimension_numbers = #tpu.dot_dimension_numbers<[1], [0], [0], [1], [0, 0, 1, 1], [], []>} : vector<16x32xbf16>, vector<32x128xbf16>, vector<16x128xf32> -> vector<16x128xf32>
    %74 = arith.addf %51, %73 : vector<16x128xf32>
    %75 = vector.extract_strided_slice %6 {offsets = [0, 96], sizes = [16, 32], strides = [1, 1]} : vector<32x384xf32> to vector<16x32xf32>
    %76 = vector.extract_strided_slice %6 {offsets = [0, 224], sizes = [16, 32], strides = [1, 1]} : vector<32x384xf32> to vector<16x32xf32>
    %77 = vector.extract_strided_slice %6 {offsets = [0, 352], sizes = [16, 32], strides = [1, 1]} : vector<32x384xf32> to vector<16x32xf32>
    %78 = arith.truncf %75 : vector<16x32xf32> to vector<16x32xbf16>
    %79 = arith.truncf %76 : vector<16x32xf32> to vector<16x32xbf16>
    %cst_24 = arith.constant dense<0.000000e+00> : vector<16x16xf32>
    %80 = tpu.matmul %78, %79, %cst_24 {dimension_numbers = #tpu.dot_dimension_numbers<[1], [1], [0], [0], [0, 0, 1, 0], [], []>} : vector<16x32xbf16>, vector<16x32xbf16>, vector<16x16xf32> -> vector<16x16xf32>
    %cst_25 = arith.constant dense<0xFF800000> : vector<16xf32>
    %81 = vector.multi_reduction <maximumf>, %80, %cst_25 [1] : vector<16x16xf32> to vector<16xf32>
    %82 = vector.shape_cast %81 : vector<16xf32> to vector<16x1xf32>
    %83 = vector.broadcast %82 : vector<16x1xf32> to vector<16x16xf32>
    %84 = arith.subf %80, %83 : vector<16x16xf32>
    %85 = math.exp %84 : vector<16x16xf32>
    %cst_26 = arith.constant dense<0.000000e+00> : vector<16xf32>
    %86 = vector.multi_reduction <add>, %85, %cst_26 [1] : vector<16x16xf32> to vector<16xf32>
    %87 = vector.shape_cast %86 : vector<16xf32> to vector<16x1xf32>
    %88 = tpu.reciprocal %87 {approx = true} : vector<16x1xf32> -> vector<16x1xf32>
    %89 = vector.broadcast %88 : vector<16x1xf32> to vector<16x16xf32>
    %90 = arith.mulf %85, %89 : vector<16x16xf32>
    %91 = arith.truncf %90 : vector<16x16xf32> to vector<16x16xbf16>
    %92 = arith.truncf %77 : vector<16x32xf32> to vector<16x32xbf16>
    %cst_27 = arith.constant dense<0.000000e+00> : vector<16x32xf32>
    %93 = tpu.matmul %91, %92, %cst_27 {dimension_numbers = #tpu.dot_dimension_numbers<[1], [0], [0], [1], [0, 0, 1, 1], [], []>} : vector<16x16xbf16>, vector<16x32xbf16>, vector<16x32xf32> -> vector<16x32xf32>
    %94 = arith.truncf %93 : vector<16x32xf32> to vector<16x32xbf16>
    %c96 = arith.constant 96 : index
    %c0_28 = arith.constant 0 : index
    %95 = vector.load %arg4[%c96, %c0_28] : memref<128x128xbf16, #tpu.memory_space<vmem>>, vector<32x128xbf16>
    %cst_29 = arith.constant dense<0.000000e+00> : vector<16x128xf32>
    %96 = tpu.matmul %94, %95, %cst_29 {dimension_numbers = #tpu.dot_dimension_numbers<[1], [0], [0], [1], [0, 0, 1, 1], [], []>} : vector<16x32xbf16>, vector<32x128xbf16>, vector<16x128xf32> -> vector<16x128xf32>
    %97 = arith.addf %74, %96 : vector<16x128xf32>
    %98 = vector.extract_strided_slice %6 {offsets = [16, 0], sizes = [16, 32], strides = [1, 1]} : vector<32x384xf32> to vector<16x32xf32>
    %99 = vector.extract_strided_slice %6 {offsets = [16, 128], sizes = [16, 32], strides = [1, 1]} : vector<32x384xf32> to vector<16x32xf32>
    %100 = vector.extract_strided_slice %6 {offsets = [16, 256], sizes = [16, 32], strides = [1, 1]} : vector<32x384xf32> to vector<16x32xf32>
    %101 = arith.truncf %98 : vector<16x32xf32> to vector<16x32xbf16>
    %102 = arith.truncf %99 : vector<16x32xf32> to vector<16x32xbf16>
    %cst_30 = arith.constant dense<0.000000e+00> : vector<16x16xf32>
    %103 = tpu.matmul %101, %102, %cst_30 {dimension_numbers = #tpu.dot_dimension_numbers<[1], [1], [0], [0], [0, 0, 1, 0], [], []>} : vector<16x32xbf16>, vector<16x32xbf16>, vector<16x16xf32> -> vector<16x16xf32>
    %cst_31 = arith.constant dense<0xFF800000> : vector<16xf32>
    %104 = vector.multi_reduction <maximumf>, %103, %cst_31 [1] : vector<16x16xf32> to vector<16xf32>
    %105 = vector.shape_cast %104 : vector<16xf32> to vector<16x1xf32>
    %106 = vector.broadcast %105 : vector<16x1xf32> to vector<16x16xf32>
    %107 = arith.subf %103, %106 : vector<16x16xf32>
    %108 = math.exp %107 : vector<16x16xf32>
    %cst_32 = arith.constant dense<0.000000e+00> : vector<16xf32>
    %109 = vector.multi_reduction <add>, %108, %cst_32 [1] : vector<16x16xf32> to vector<16xf32>
    %110 = vector.shape_cast %109 : vector<16xf32> to vector<16x1xf32>
    %111 = tpu.reciprocal %110 {approx = true} : vector<16x1xf32> -> vector<16x1xf32>
    %112 = vector.broadcast %111 : vector<16x1xf32> to vector<16x16xf32>
    %113 = arith.mulf %108, %112 : vector<16x16xf32>
    %114 = arith.truncf %113 : vector<16x16xf32> to vector<16x16xbf16>
    %115 = arith.truncf %100 : vector<16x32xf32> to vector<16x32xbf16>
    %cst_33 = arith.constant dense<0.000000e+00> : vector<16x32xf32>
    %116 = tpu.matmul %114, %115, %cst_33 {dimension_numbers = #tpu.dot_dimension_numbers<[1], [0], [0], [1], [0, 0, 1, 1], [], []>} : vector<16x16xbf16>, vector<16x32xbf16>, vector<16x32xf32> -> vector<16x32xf32>
    %117 = arith.truncf %116 : vector<16x32xf32> to vector<16x32xbf16>
    %c0_34 = arith.constant 0 : index
    %c0_35 = arith.constant 0 : index
    %118 = vector.load %arg4[%c0_34, %c0_35] : memref<128x128xbf16, #tpu.memory_space<vmem>>, vector<32x128xbf16>
    %cst_36 = arith.constant dense<0.000000e+00> : vector<16x128xf32>
    %119 = tpu.matmul %117, %118, %cst_36 {dimension_numbers = #tpu.dot_dimension_numbers<[1], [0], [0], [1], [0, 0, 1, 1], [], []>} : vector<16x32xbf16>, vector<32x128xbf16>, vector<16x128xf32> -> vector<16x128xf32>
    %120 = vector.extract_strided_slice %6 {offsets = [16, 32], sizes = [16, 32], strides = [1, 1]} : vector<32x384xf32> to vector<16x32xf32>
    %121 = vector.extract_strided_slice %6 {offsets = [16, 160], sizes = [16, 32], strides = [1, 1]} : vector<32x384xf32> to vector<16x32xf32>
    %122 = vector.extract_strided_slice %6 {offsets = [16, 288], sizes = [16, 32], strides = [1, 1]} : vector<32x384xf32> to vector<16x32xf32>
    %123 = arith.truncf %120 : vector<16x32xf32> to vector<16x32xbf16>
    %124 = arith.truncf %121 : vector<16x32xf32> to vector<16x32xbf16>
    %cst_37 = arith.constant dense<0.000000e+00> : vector<16x16xf32>
    %125 = tpu.matmul %123, %124, %cst_37 {dimension_numbers = #tpu.dot_dimension_numbers<[1], [1], [0], [0], [0, 0, 1, 0], [], []>} : vector<16x32xbf16>, vector<16x32xbf16>, vector<16x16xf32> -> vector<16x16xf32>
    %cst_38 = arith.constant dense<0xFF800000> : vector<16xf32>
    %126 = vector.multi_reduction <maximumf>, %125, %cst_38 [1] : vector<16x16xf32> to vector<16xf32>
    %127 = vector.shape_cast %126 : vector<16xf32> to vector<16x1xf32>
    %128 = vector.broadcast %127 : vector<16x1xf32> to vector<16x16xf32>
    %129 = arith.subf %125, %128 : vector<16x16xf32>
    %130 = math.exp %129 : vector<16x16xf32>
    %cst_39 = arith.constant dense<0.000000e+00> : vector<16xf32>
    %131 = vector.multi_reduction <add>, %130, %cst_39 [1] : vector<16x16xf32> to vector<16xf32>
    %132 = vector.shape_cast %131 : vector<16xf32> to vector<16x1xf32>
    %133 = tpu.reciprocal %132 {approx = true} : vector<16x1xf32> -> vector<16x1xf32>
    %134 = vector.broadcast %133 : vector<16x1xf32> to vector<16x16xf32>
    %135 = arith.mulf %130, %134 : vector<16x16xf32>
    %136 = arith.truncf %135 : vector<16x16xf32> to vector<16x16xbf16>
    %137 = arith.truncf %122 : vector<16x32xf32> to vector<16x32xbf16>
    %cst_40 = arith.constant dense<0.000000e+00> : vector<16x32xf32>
    %138 = tpu.matmul %136, %137, %cst_40 {dimension_numbers = #tpu.dot_dimension_numbers<[1], [0], [0], [1], [0, 0, 1, 1], [], []>} : vector<16x16xbf16>, vector<16x32xbf16>, vector<16x32xf32> -> vector<16x32xf32>
    %139 = arith.truncf %138 : vector<16x32xf32> to vector<16x32xbf16>
    %c32_41 = arith.constant 32 : index
    %c0_42 = arith.constant 0 : index
    %140 = vector.load %arg4[%c32_41, %c0_42] : memref<128x128xbf16, #tpu.memory_space<vmem>>, vector<32x128xbf16>
    %cst_43 = arith.constant dense<0.000000e+00> : vector<16x128xf32>
    %141 = tpu.matmul %139, %140, %cst_43 {dimension_numbers = #tpu.dot_dimension_numbers<[1], [0], [0], [1], [0, 0, 1, 1], [], []>} : vector<16x32xbf16>, vector<32x128xbf16>, vector<16x128xf32> -> vector<16x128xf32>
    %142 = arith.addf %119, %141 : vector<16x128xf32>
    %143 = vector.extract_strided_slice %6 {offsets = [16, 64], sizes = [16, 32], strides = [1, 1]} : vector<32x384xf32> to vector<16x32xf32>
    %144 = vector.extract_strided_slice %6 {offsets = [16, 192], sizes = [16, 32], strides = [1, 1]} : vector<32x384xf32> to vector<16x32xf32>
    %145 = vector.extract_strided_slice %6 {offsets = [16, 320], sizes = [16, 32], strides = [1, 1]} : vector<32x384xf32> to vector<16x32xf32>
    %146 = arith.truncf %143 : vector<16x32xf32> to vector<16x32xbf16>
    %147 = arith.truncf %144 : vector<16x32xf32> to vector<16x32xbf16>
    %cst_44 = arith.constant dense<0.000000e+00> : vector<16x16xf32>
    %148 = tpu.matmul %146, %147, %cst_44 {dimension_numbers = #tpu.dot_dimension_numbers<[1], [1], [0], [0], [0, 0, 1, 0], [], []>} : vector<16x32xbf16>, vector<16x32xbf16>, vector<16x16xf32> -> vector<16x16xf32>
    %cst_45 = arith.constant dense<0xFF800000> : vector<16xf32>
    %149 = vector.multi_reduction <maximumf>, %148, %cst_45 [1] : vector<16x16xf32> to vector<16xf32>
    %150 = vector.shape_cast %149 : vector<16xf32> to vector<16x1xf32>
    %151 = vector.broadcast %150 : vector<16x1xf32> to vector<16x16xf32>
    %152 = arith.subf %148, %151 : vector<16x16xf32>
    %153 = math.exp %152 : vector<16x16xf32>
    %cst_46 = arith.constant dense<0.000000e+00> : vector<16xf32>
    %154 = vector.multi_reduction <add>, %153, %cst_46 [1] : vector<16x16xf32> to vector<16xf32>
    %155 = vector.shape_cast %154 : vector<16xf32> to vector<16x1xf32>
    %156 = tpu.reciprocal %155 {approx = true} : vector<16x1xf32> -> vector<16x1xf32>
    %157 = vector.broadcast %156 : vector<16x1xf32> to vector<16x16xf32>
    %158 = arith.mulf %153, %157 : vector<16x16xf32>
    %159 = arith.truncf %158 : vector<16x16xf32> to vector<16x16xbf16>
    %160 = arith.truncf %145 : vector<16x32xf32> to vector<16x32xbf16>
    %cst_47 = arith.constant dense<0.000000e+00> : vector<16x32xf32>
    %161 = tpu.matmul %159, %160, %cst_47 {dimension_numbers = #tpu.dot_dimension_numbers<[1], [0], [0], [1], [0, 0, 1, 1], [], []>} : vector<16x16xbf16>, vector<16x32xbf16>, vector<16x32xf32> -> vector<16x32xf32>
    %162 = arith.truncf %161 : vector<16x32xf32> to vector<16x32xbf16>
    %c64_48 = arith.constant 64 : index
    %c0_49 = arith.constant 0 : index
    %163 = vector.load %arg4[%c64_48, %c0_49] : memref<128x128xbf16, #tpu.memory_space<vmem>>, vector<32x128xbf16>
    %cst_50 = arith.constant dense<0.000000e+00> : vector<16x128xf32>
    %164 = tpu.matmul %162, %163, %cst_50 {dimension_numbers = #tpu.dot_dimension_numbers<[1], [0], [0], [1], [0, 0, 1, 1], [], []>} : vector<16x32xbf16>, vector<32x128xbf16>, vector<16x128xf32> -> vector<16x128xf32>
    %165 = arith.addf %142, %164 : vector<16x128xf32>
    %166 = vector.extract_strided_slice %6 {offsets = [16, 96], sizes = [16, 32], strides = [1, 1]} : vector<32x384xf32> to vector<16x32xf32>
    %167 = vector.extract_strided_slice %6 {offsets = [16, 224], sizes = [16, 32], strides = [1, 1]} : vector<32x384xf32> to vector<16x32xf32>
    %168 = vector.extract_strided_slice %6 {offsets = [16, 352], sizes = [16, 32], strides = [1, 1]} : vector<32x384xf32> to vector<16x32xf32>
    %169 = arith.truncf %166 : vector<16x32xf32> to vector<16x32xbf16>
    %170 = arith.truncf %167 : vector<16x32xf32> to vector<16x32xbf16>
    %cst_51 = arith.constant dense<0.000000e+00> : vector<16x16xf32>
    %171 = tpu.matmul %169, %170, %cst_51 {dimension_numbers = #tpu.dot_dimension_numbers<[1], [1], [0], [0], [0, 0, 1, 0], [], []>} : vector<16x32xbf16>, vector<16x32xbf16>, vector<16x16xf32> -> vector<16x16xf32>
    %cst_52 = arith.constant dense<0xFF800000> : vector<16xf32>
    %172 = vector.multi_reduction <maximumf>, %171, %cst_52 [1] : vector<16x16xf32> to vector<16xf32>
    %173 = vector.shape_cast %172 : vector<16xf32> to vector<16x1xf32>
    %174 = vector.broadcast %173 : vector<16x1xf32> to vector<16x16xf32>
    %175 = arith.subf %171, %174 : vector<16x16xf32>
    %176 = math.exp %175 : vector<16x16xf32>
    %cst_53 = arith.constant dense<0.000000e+00> : vector<16xf32>
    %177 = vector.multi_reduction <add>, %176, %cst_53 [1] : vector<16x16xf32> to vector<16xf32>
    %178 = vector.shape_cast %177 : vector<16xf32> to vector<16x1xf32>
    %179 = tpu.reciprocal %178 {approx = true} : vector<16x1xf32> -> vector<16x1xf32>
    %180 = vector.broadcast %179 : vector<16x1xf32> to vector<16x16xf32>
    %181 = arith.mulf %176, %180 : vector<16x16xf32>
    %182 = arith.truncf %181 : vector<16x16xf32> to vector<16x16xbf16>
    %183 = arith.truncf %168 : vector<16x32xf32> to vector<16x32xbf16>
    %cst_54 = arith.constant dense<0.000000e+00> : vector<16x32xf32>
    %184 = tpu.matmul %182, %183, %cst_54 {dimension_numbers = #tpu.dot_dimension_numbers<[1], [0], [0], [1], [0, 0, 1, 1], [], []>} : vector<16x16xbf16>, vector<16x32xbf16>, vector<16x32xf32> -> vector<16x32xf32>
    %185 = arith.truncf %184 : vector<16x32xf32> to vector<16x32xbf16>
    %c96_55 = arith.constant 96 : index
    %c0_56 = arith.constant 0 : index
    %186 = vector.load %arg4[%c96_55, %c0_56] : memref<128x128xbf16, #tpu.memory_space<vmem>>, vector<32x128xbf16>
    %cst_57 = arith.constant dense<0.000000e+00> : vector<16x128xf32>
    %187 = tpu.matmul %185, %186, %cst_57 {dimension_numbers = #tpu.dot_dimension_numbers<[1], [0], [0], [1], [0, 0, 1, 1], [], []>} : vector<16x32xbf16>, vector<32x128xbf16>, vector<16x128xf32> -> vector<16x128xf32>
    %188 = arith.addf %165, %187 : vector<16x128xf32>
    %189 = tpu.concatenate %97, %188 in 0 : vector<16x128xf32>, vector<16x128xf32> -> vector<32x128xf32>
    %190 = arith.addf %0, %189 : vector<32x128xf32>
    %c0_58 = arith.constant 0 : index
    %c0_59 = arith.constant 0 : index
    %191 = vector.load %arg5[%c0_58, %c0_59] : memref<1x128xf32, #tpu.memory_space<vmem>>, vector<1x128xf32>
    %192 = vector.broadcast %191 : vector<1x128xf32> to vector<32x128xf32>
    %193 = arith.addf %190, %192 : vector<32x128xf32>
    %c0_60 = arith.constant 0 : index
    %c0_61 = arith.constant 0 : index
    %194 = vector.load %arg6[%c0_60, %c0_61] : memref<1x128xf32, #tpu.memory_space<vmem>>, vector<1x128xf32>
    %c0_62 = arith.constant 0 : index
    %c0_63 = arith.constant 0 : index
    %195 = vector.load %arg7[%c0_62, %c0_63] : memref<1x128xf32, #tpu.memory_space<vmem>>, vector<1x128xf32>
    %cst_64 = arith.constant dense<0.000000e+00> : vector<32xf32>
    %196 = vector.multi_reduction <add>, %193, %cst_64 [1] : vector<32x128xf32> to vector<32xf32>
    %197 = vector.shape_cast %196 : vector<32xf32> to vector<32x1xf32>
    %cst_65 = arith.constant 1.280000e+02 : f32
    %198 = vector.broadcast %cst_65 : f32 to vector<32x1xf32>
    %199 = arith.divf %197, %198 : vector<32x1xf32>
    %200 = vector.broadcast %199 : vector<32x1xf32> to vector<32x128xf32>
    %201 = arith.subf %193, %200 : vector<32x128xf32>
    %202 = arith.mulf %201, %201 : vector<32x128xf32>
    %cst_66 = arith.constant dense<0.000000e+00> : vector<32xf32>
    %203 = vector.multi_reduction <add>, %202, %cst_66 [1] : vector<32x128xf32> to vector<32xf32>
    %204 = vector.shape_cast %203 : vector<32xf32> to vector<32x1xf32>
    %cst_67 = arith.constant 1.280000e+02 : f32
    %205 = vector.broadcast %cst_67 : f32 to vector<32x1xf32>
    %206 = arith.divf %204, %205 : vector<32x1xf32>
    %207 = vector.broadcast %199 : vector<32x1xf32> to vector<32x128xf32>
    %208 = arith.subf %193, %207 : vector<32x128xf32>
    %cst_68 = arith.constant 9.99999996E-13 : f32
    %209 = vector.broadcast %cst_68 : f32 to vector<32x1xf32>
    %210 = arith.addf %206, %209 : vector<32x1xf32>
    %211 = math.rsqrt %210 : vector<32x1xf32>
    %212 = vector.broadcast %211 : vector<32x1xf32> to vector<32x128xf32>
    %213 = arith.mulf %208, %212 : vector<32x128xf32>
    %214 = vector.broadcast %194 : vector<1x128xf32> to vector<32x128xf32>
    %215 = arith.mulf %213, %214 : vector<32x128xf32>
    %216 = vector.broadcast %195 : vector<1x128xf32> to vector<32x128xf32>
    %217 = arith.addf %215, %216 : vector<32x128xf32>
    %218 = arith.truncf %217 : vector<32x128xf32> to vector<32x128xbf16>
    %c0_69 = arith.constant 0 : index
    %c0_70 = arith.constant 0 : index
    %219 = vector.load %arg8[%c0_69, %c0_70] : memref<128x256xbf16, #tpu.memory_space<vmem>>, vector<128x256xbf16>
    %cst_71 = arith.constant dense<0.000000e+00> : vector<32x256xf32>
    %220 = tpu.matmul %218, %219, %cst_71 {dimension_numbers = #tpu.dot_dimension_numbers<[1], [0], [0], [1], [0, 0, 1, 1], [], []>} : vector<32x128xbf16>, vector<128x256xbf16>, vector<32x256xf32> -> vector<32x256xf32>
    %c0_72 = arith.constant 0 : index
    %c0_73 = arith.constant 0 : index
    %221 = vector.load %arg9[%c0_72, %c0_73] : memref<1x256xf32, #tpu.memory_space<vmem>>, vector<1x256xf32>
    %222 = vector.broadcast %221 : vector<1x256xf32> to vector<32x256xf32>
    %223 = arith.addf %220, %222 : vector<32x256xf32>
    %cst_74 = arith.constant 5.000000e-01 : f32
    %224 = vector.broadcast %cst_74 : f32 to vector<32x256xf32>
    %225 = arith.mulf %224, %223 : vector<32x256xf32>
    %cst_75 = arith.constant 0.707106769 : f32
    %226 = vector.broadcast %cst_75 : f32 to vector<32x256xf32>
    %227 = arith.mulf %223, %226 : vector<32x256xf32>
    %228 = math.erf %227 : vector<32x256xf32>
    %cst_76 = arith.constant 1.000000e+00 : f32
    %229 = vector.broadcast %cst_76 : f32 to vector<32x256xf32>
    %230 = arith.addf %229, %228 : vector<32x256xf32>
    %231 = arith.mulf %225, %230 : vector<32x256xf32>
    %232 = arith.truncf %231 : vector<32x256xf32> to vector<32x256xbf16>
    %c0_77 = arith.constant 0 : index
    %c0_78 = arith.constant 0 : index
    %233 = vector.load %arg10[%c0_77, %c0_78] : memref<256x128xbf16, #tpu.memory_space<vmem>>, vector<256x128xbf16>
    %cst_79 = arith.constant dense<0.000000e+00> : vector<32x128xf32>
    %234 = tpu.matmul %232, %233, %cst_79 {dimension_numbers = #tpu.dot_dimension_numbers<[1], [0], [0], [1], [0, 0, 1, 1], [], []>} : vector<32x256xbf16>, vector<256x128xbf16>, vector<32x128xf32> -> vector<32x128xf32>
    %c0_80 = arith.constant 0 : index
    %c0_81 = arith.constant 0 : index
    %235 = vector.load %arg11[%c0_80, %c0_81] : memref<1x128xf32, #tpu.memory_space<vmem>>, vector<1x128xf32>
    %236 = vector.broadcast %235 : vector<1x128xf32> to vector<32x128xf32>
    %237 = arith.addf %234, %236 : vector<32x128xf32>
    %238 = arith.addf %217, %237 : vector<32x128xf32>
    %c0_82 = arith.constant 0 : index
    %c0_83 = arith.constant 0 : index
    %239 = vector.load %arg12[%c0_82, %c0_83] : memref<1x128xf32, #tpu.memory_space<vmem>>, vector<1x128xf32>
    %c0_84 = arith.constant 0 : index
    %c0_85 = arith.constant 0 : index
    %240 = vector.load %arg13[%c0_84, %c0_85] : memref<1x128xf32, #tpu.memory_space<vmem>>, vector<1x128xf32>
    %cst_86 = arith.constant dense<0.000000e+00> : vector<32xf32>
    %241 = vector.multi_reduction <add>, %238, %cst_86 [1] : vector<32x128xf32> to vector<32xf32>
    %242 = vector.shape_cast %241 : vector<32xf32> to vector<32x1xf32>
    %cst_87 = arith.constant 1.280000e+02 : f32
    %243 = vector.broadcast %cst_87 : f32 to vector<32x1xf32>
    %244 = arith.divf %242, %243 : vector<32x1xf32>
    %245 = vector.broadcast %244 : vector<32x1xf32> to vector<32x128xf32>
    %246 = arith.subf %238, %245 : vector<32x128xf32>
    %247 = arith.mulf %246, %246 : vector<32x128xf32>
    %cst_88 = arith.constant dense<0.000000e+00> : vector<32xf32>
    %248 = vector.multi_reduction <add>, %247, %cst_88 [1] : vector<32x128xf32> to vector<32xf32>
    %249 = vector.shape_cast %248 : vector<32xf32> to vector<32x1xf32>
    %cst_89 = arith.constant 1.280000e+02 : f32
    %250 = vector.broadcast %cst_89 : f32 to vector<32x1xf32>
    %251 = arith.divf %249, %250 : vector<32x1xf32>
    %252 = vector.broadcast %244 : vector<32x1xf32> to vector<32x128xf32>
    %253 = arith.subf %238, %252 : vector<32x128xf32>
    %cst_90 = arith.constant 9.99999996E-13 : f32
    %254 = vector.broadcast %cst_90 : f32 to vector<32x1xf32>
    %255 = arith.addf %251, %254 : vector<32x1xf32>
    %256 = math.rsqrt %255 : vector<32x1xf32>
    %257 = vector.broadcast %256 : vector<32x1xf32> to vector<32x128xf32>
    %258 = arith.mulf %253, %257 : vector<32x128xf32>
    %259 = vector.broadcast %239 : vector<1x128xf32> to vector<32x128xf32>
    %260 = arith.mulf %258, %259 : vector<32x128xf32>
    %261 = vector.broadcast %240 : vector<1x128xf32> to vector<32x128xf32>
    %262 = arith.addf %260, %261 : vector<32x128xf32>
    %c0_91 = arith.constant 0 : index
    %c0_92 = arith.constant 0 : index
    %263 = vector.load %arg14[%c0_91, %c0_92] : memref<32x128xf32, #tpu.memory_space<vmem>>, vector<32x128xf32>
    tpu.vector_store %arg14[%c0_91, %c0_92], %262 {strides = array<i32>} : memref<32x128xf32, #tpu.memory_space<vmem>>, vector<32x128xf32>,
    return
  }
  func.func @transform_0(%arg0: i32) -> (i32, i32) {
    %c0_i32 = arith.constant 0 : i32
    %c0_i32_0 = arith.constant 0 : i32
    return %arg0, %c0_i32 : i32, i32
  }
  func.func @transform_1(%arg0: i32) -> (i32, i32) {
    %c0_i32 = arith.constant 0 : i32
    %c0_i32_0 = arith.constant 0 : i32
    %c0_i32_1 = arith.constant 0 : i32
    return %c0_i32, %c0_i32_0 : i32, i32
  }
  func.func @transform_2(%arg0: i32) -> (i32, i32) {
    %c0_i32 = arith.constant 0 : i32
    %c0_i32_0 = arith.constant 0 : i32
    %c0_i32_1 = arith.constant 0 : i32
    return %c0_i32, %c0_i32_0 : i32, i32
  }
  func.func @transform_3(%arg0: i32) -> (i32, i32) {
    %c0_i32 = arith.constant 0 : i32
    %c0_i32_0 = arith.constant 0 : i32
    %c0_i32_1 = arith.constant 0 : i32
    return %c0_i32, %c0_i32_0 : i32, i32
  }
  func.func @transform_4(%arg0: i32) -> (i32, i32) {
    %c0_i32 = arith.constant 0 : i32
    %c0_i32_0 = arith.constant 0 : i32
    %c0_i32_1 = arith.constant 0 : i32
    return %c0_i32, %c0_i32_0 : i32, i32
  }
  func.func @transform_5(%arg0: i32) -> (i32, i32) {
    %c0_i32 = arith.constant 0 : i32
    %c0_i32_0 = arith.constant 0 : i32
    %c0_i32_1 = arith.constant 0 : i32
    return %c0_i32, %c0_i32_0 : i32, i32
  }
  func.func @transform_6(%arg0: i32) -> (i32, i32) {
    %c0_i32 = arith.constant 0 : i32
    %c0_i32_0 = arith.constant 0 : i32
    %c0_i32_1 = arith.constant 0 : i32
    return %c0_i32, %c0_i32_0 : i32, i32
  }
  func.func @transform_7(%arg0: i32) -> (i32, i32) {
    %c0_i32 = arith.constant 0 : i32
    %c0_i32_0 = arith.constant 0 : i32
    %c0_i32_1 = arith.constant 0 : i32
    return %c0_i32, %c0_i32_0 : i32, i32
  }
  func.func @transform_8(%arg0: i32) -> (i32, i32) {
    %c0_i32 = arith.constant 0 : i32
    %c0_i32_0 = arith.constant 0 : i32
    %c0_i32_1 = arith.constant 0 : i32
    return %c0_i32, %c0_i32_0 : i32, i32
  }
  func.func @transform_9(%arg0: i32) -> (i32, i32) {
    %c0_i32 = arith.constant 0 : i32
    %c0_i32_0 = arith.constant 0 : i32
    %c0_i32_1 = arith.constant 0 : i32
    return %c0_i32, %c0_i32_0 : i32, i32
  }
  func.func @transform_10(%arg0: i32) -> (i32, i32) {
    %c0_i32 = arith.constant 0 : i32
    %c0_i32_0 = arith.constant 0 : i32
    %c0_i32_1 = arith.constant 0 : i32
    return %c0_i32, %c0_i32_0 : i32, i32
  }
  func.func @transform_11(%arg0: i32) -> (i32, i32) {
    %c0_i32 = arith.constant 0 : i32
    %c0_i32_0 = arith.constant 0 : i32
    %c0_i32_1 = arith.constant 0 : i32
    return %c0_i32, %c0_i32_0 : i32, i32
  }
  func.func @transform_12(%arg0: i32) -> (i32, i32) {
    %c0_i32 = arith.constant 0 : i32
    %c0_i32_0 = arith.constant 0 : i32
    %c0_i32_1 = arith.constant 0 : i32
    return %c0_i32, %c0_i32_0 : i32, i32
  }
  func.func @transform_13(%arg0: i32) -> (i32, i32) {
    %c0_i32 = arith.constant 0 : i32
    %c0_i32_0 = arith.constant 0 : i32
    return %arg0, %c0_i32 : i32, i32
  }
}

module attributes {stable_mosaic.version = 11 : i64} {
  func.func @kernel(%arg0: i32, %arg1: memref<32x128xf32, #tpu.memory_space<vmem>>, %arg2: memref<1x128xf32, #tpu.memory_space<vmem>>, %arg3: memref<1x128xf32, #tpu.memory_space<vmem>>, %arg4: memref<128x384xbf16, #tpu.memory_space<vmem>>, %arg5: memref<1x384xf32, #tpu.memory_space<vmem>>, %arg6: memref<128x128xbf16, #tpu.memory_space<vmem>>, %arg7: memref<1x128xf32, #tpu.memory_space<vmem>>, %arg8: memref<1x128xf32, #tpu.memory_space<vmem>>, %arg9: memref<1x128xf32, #tpu.memory_space<vmem>>, %arg10: memref<128x256xbf16, #tpu.memory_space<vmem>>, %arg11: memref<1x256xf32, #tpu.memory_space<vmem>>, %arg12: memref<256x128xbf16, #tpu.memory_space<vmem>>, %arg13: memref<1x128xf32, #tpu.memory_space<vmem>>, %arg14: memref<1x128xf32, #tpu.memory_space<vmem>>, %arg15: memref<1x128xf32, #tpu.memory_space<vmem>>, %arg16: memref<32x128xf32, #tpu.memory_space<vmem>>) attributes {dimension_semantics = [#tpu.dimension_semantics<parallel>], iteration_bounds = array<i64: 1>, scalar_prefetch = 0 : i64, scratch_operands = 0 : i64, tpu.core_type = #tpu.core_type<tc>, window_params = [{transform_indices = @transform_0, window_bounds = array<i64: 32, 128>}, {pipeline_mode = #tpu.pipeline_mode<synchronous>, transform_indices = @transform_1, window_bounds = array<i64: 1, 128>}, {pipeline_mode = #tpu.pipeline_mode<synchronous>, transform_indices = @transform_2, window_bounds = array<i64: 1, 128>}, {pipeline_mode = #tpu.pipeline_mode<synchronous>, transform_indices = @transform_3, window_bounds = array<i64: 128, 384>}, {pipeline_mode = #tpu.pipeline_mode<synchronous>, transform_indices = @transform_4, window_bounds = array<i64: 1, 384>}, {pipeline_mode = #tpu.pipeline_mode<synchronous>, transform_indices = @transform_5, window_bounds = array<i64: 128, 128>}, {pipeline_mode = #tpu.pipeline_mode<synchronous>, transform_indices = @transform_6, window_bounds = array<i64: 1, 128>}, {pipeline_mode = #tpu.pipeline_mode<synchronous>, transform_indices = @transform_7, window_bounds = array<i64: 1, 128>}, {pipeline_mode = #tpu.pipeline_mode<synchronous>, transform_indices = @transform_8, window_bounds = array<i64: 1, 128>}, {pipeline_mode = #tpu.pipeline_mode<synchronous>, transform_indices = @transform_9, window_bounds = array<i64: 128, 256>}, {pipeline_mode = #tpu.pipeline_mode<synchronous>, transform_indices = @transform_10, window_bounds = array<i64: 1, 256>}, {pipeline_mode = #tpu.pipeline_mode<synchronous>, transform_indices = @transform_11, window_bounds = array<i64: 256, 128>}, {pipeline_mode = #tpu.pipeline_mode<synchronous>, transform_indices = @transform_12, window_bounds = array<i64: 1, 128>}, {pipeline_mode = #tpu.pipeline_mode<synchronous>, transform_indices = @transform_13, window_bounds = array<i64: 1, 128>}, {pipeline_mode = #tpu.pipeline_mode<synchronous>, transform_indices = @transform_14, window_bounds = array<i64: 1, 128>}, {transform_indices = @transform_15, window_bounds = array<i64: 32, 128>}]} {
    %c0 = arith.constant 0 : index
    %c0_0 = arith.constant 0 : index
    %0 = vector.load %arg1[%c0, %c0_0] : memref<32x128xf32, #tpu.memory_space<vmem>>, vector<32x128xf32>
    %c0_1 = arith.constant 0 : index
    %c0_2 = arith.constant 0 : index
    %1 = vector.load %arg2[%c0_1, %c0_2] : memref<1x128xf32, #tpu.memory_space<vmem>>, vector<1x128xf32>
    %c0_3 = arith.constant 0 : index
    %c0_4 = arith.constant 0 : index
    %2 = vector.load %arg3[%c0_3, %c0_4] : memref<1x128xf32, #tpu.memory_space<vmem>>, vector<1x128xf32>
    %cst = arith.constant dense<0.000000e+00> : vector<32xf32>
    %3 = vector.multi_reduction <add>, %0, %cst [1] : vector<32x128xf32> to vector<32xf32>
    %4 = vector.shape_cast %3 : vector<32xf32> to vector<32x1xf32>
    %cst_5 = arith.constant 1.280000e+02 : f32
    %5 = vector.broadcast %cst_5 : f32 to vector<32x1xf32>
    %6 = arith.divf %4, %5 : vector<32x1xf32>
    %7 = vector.broadcast %6 : vector<32x1xf32> to vector<32x128xf32>
    %8 = arith.subf %0, %7 : vector<32x128xf32>
    %9 = arith.mulf %8, %8 : vector<32x128xf32>
    %cst_6 = arith.constant dense<0.000000e+00> : vector<32xf32>
    %10 = vector.multi_reduction <add>, %9, %cst_6 [1] : vector<32x128xf32> to vector<32xf32>
    %11 = vector.shape_cast %10 : vector<32xf32> to vector<32x1xf32>
    %cst_7 = arith.constant 1.280000e+02 : f32
    %12 = vector.broadcast %cst_7 : f32 to vector<32x1xf32>
    %13 = arith.divf %11, %12 : vector<32x1xf32>
    %14 = vector.broadcast %6 : vector<32x1xf32> to vector<32x128xf32>
    %15 = arith.subf %0, %14 : vector<32x128xf32>
    %cst_8 = arith.constant 9.99999996E-13 : f32
    %16 = vector.broadcast %cst_8 : f32 to vector<32x1xf32>
    %17 = arith.addf %13, %16 : vector<32x1xf32>
    %18 = math.rsqrt %17 : vector<32x1xf32>
    %19 = vector.broadcast %18 : vector<32x1xf32> to vector<32x128xf32>
    %20 = arith.mulf %15, %19 : vector<32x128xf32>
    %21 = vector.broadcast %1 : vector<1x128xf32> to vector<32x128xf32>
    %22 = arith.mulf %20, %21 : vector<32x128xf32>
    %23 = vector.broadcast %2 : vector<1x128xf32> to vector<32x128xf32>
    %24 = arith.addf %22, %23 : vector<32x128xf32>
    %25 = arith.truncf %24 : vector<32x128xf32> to vector<32x128xbf16>
    %c0_9 = arith.constant 0 : index
    %c0_10 = arith.constant 0 : index
    %26 = vector.load %arg4[%c0_9, %c0_10] : memref<128x384xbf16, #tpu.memory_space<vmem>>, vector<128x384xbf16>
    %cst_11 = arith.constant dense<0.000000e+00> : vector<32x384xf32>
    %27 = tpu.matmul %25, %26, %cst_11 {dimension_numbers = #tpu.dot_dimension_numbers<[1], [0], [0], [1], [0, 0, 1, 1], [], []>} : vector<32x128xbf16>, vector<128x384xbf16>, vector<32x384xf32> -> vector<32x384xf32>
    %c0_12 = arith.constant 0 : index
    %c0_13 = arith.constant 0 : index
    %28 = vector.load %arg5[%c0_12, %c0_13] : memref<1x384xf32, #tpu.memory_space<vmem>>, vector<1x384xf32>
    %29 = vector.broadcast %28 : vector<1x384xf32> to vector<32x384xf32>
    %30 = arith.addf %27, %29 : vector<32x384xf32>
    %31 = vector.extract_strided_slice %30 {offsets = [0, 0], sizes = [16, 32], strides = [1, 1]} : vector<32x384xf32> to vector<16x32xf32>
    %32 = vector.extract_strided_slice %30 {offsets = [0, 128], sizes = [16, 32], strides = [1, 1]} : vector<32x384xf32> to vector<16x32xf32>
    %33 = vector.extract_strided_slice %30 {offsets = [0, 256], sizes = [16, 32], strides = [1, 1]} : vector<32x384xf32> to vector<16x32xf32>
    %34 = arith.truncf %31 : vector<16x32xf32> to vector<16x32xbf16>
    %35 = arith.truncf %32 : vector<16x32xf32> to vector<16x32xbf16>
    %cst_14 = arith.constant dense<0.000000e+00> : vector<16x16xf32>
    %36 = tpu.matmul %34, %35, %cst_14 {dimension_numbers = #tpu.dot_dimension_numbers<[1], [1], [0], [0], [0, 0, 1, 0], [], []>} : vector<16x32xbf16>, vector<16x32xbf16>, vector<16x16xf32> -> vector<16x16xf32>
    %cst_15 = arith.constant dense<0xFF800000> : vector<16xf32>
    %37 = vector.multi_reduction <maximumf>, %36, %cst_15 [1] : vector<16x16xf32> to vector<16xf32>
    %38 = vector.shape_cast %37 : vector<16xf32> to vector<16x1xf32>
    %39 = vector.broadcast %38 : vector<16x1xf32> to vector<16x16xf32>
    %40 = arith.subf %36, %39 : vector<16x16xf32>
    %41 = math.exp %40 : vector<16x16xf32>
    %cst_16 = arith.constant dense<0.000000e+00> : vector<16xf32>
    %42 = vector.multi_reduction <add>, %41, %cst_16 [1] : vector<16x16xf32> to vector<16xf32>
    %43 = vector.shape_cast %42 : vector<16xf32> to vector<16x1xf32>
    %44 = tpu.reciprocal %43 {approx = true} : vector<16x1xf32> -> vector<16x1xf32>
    %45 = vector.broadcast %44 : vector<16x1xf32> to vector<16x16xf32>
    %46 = arith.mulf %41, %45 : vector<16x16xf32>
    %47 = arith.truncf %46 : vector<16x16xf32> to vector<16x16xbf16>
    %48 = arith.truncf %33 : vector<16x32xf32> to vector<16x32xbf16>
    %cst_17 = arith.constant dense<0.000000e+00> : vector<16x32xf32>
    %49 = tpu.matmul %47, %48, %cst_17 {dimension_numbers = #tpu.dot_dimension_numbers<[1], [0], [0], [1], [0, 0, 1, 1], [], []>} : vector<16x16xbf16>, vector<16x32xbf16>, vector<16x32xf32> -> vector<16x32xf32>
    %50 = arith.truncf %49 : vector<16x32xf32> to vector<16x32xbf16>
    %c0_18 = arith.constant 0 : index
    %c0_19 = arith.constant 0 : index
    %51 = vector.load %arg6[%c0_18, %c0_19] : memref<128x128xbf16, #tpu.memory_space<vmem>>, vector<32x128xbf16>
    %cst_20 = arith.constant dense<0.000000e+00> : vector<16x128xf32>
    %52 = tpu.matmul %50, %51, %cst_20 {dimension_numbers = #tpu.dot_dimension_numbers<[1], [0], [0], [1], [0, 0, 1, 1], [], []>} : vector<16x32xbf16>, vector<32x128xbf16>, vector<16x128xf32> -> vector<16x128xf32>
    %53 = vector.extract_strided_slice %30 {offsets = [0, 32], sizes = [16, 32], strides = [1, 1]} : vector<32x384xf32> to vector<16x32xf32>
    %54 = vector.extract_strided_slice %30 {offsets = [0, 160], sizes = [16, 32], strides = [1, 1]} : vector<32x384xf32> to vector<16x32xf32>
    %55 = vector.extract_strided_slice %30 {offsets = [0, 288], sizes = [16, 32], strides = [1, 1]} : vector<32x384xf32> to vector<16x32xf32>
    %56 = arith.truncf %53 : vector<16x32xf32> to vector<16x32xbf16>
    %57 = arith.truncf %54 : vector<16x32xf32> to vector<16x32xbf16>
    %cst_21 = arith.constant dense<0.000000e+00> : vector<16x16xf32>
    %58 = tpu.matmul %56, %57, %cst_21 {dimension_numbers = #tpu.dot_dimension_numbers<[1], [1], [0], [0], [0, 0, 1, 0], [], []>} : vector<16x32xbf16>, vector<16x32xbf16>, vector<16x16xf32> -> vector<16x16xf32>
    %cst_22 = arith.constant dense<0xFF800000> : vector<16xf32>
    %59 = vector.multi_reduction <maximumf>, %58, %cst_22 [1] : vector<16x16xf32> to vector<16xf32>
    %60 = vector.shape_cast %59 : vector<16xf32> to vector<16x1xf32>
    %61 = vector.broadcast %60 : vector<16x1xf32> to vector<16x16xf32>
    %62 = arith.subf %58, %61 : vector<16x16xf32>
    %63 = math.exp %62 : vector<16x16xf32>
    %cst_23 = arith.constant dense<0.000000e+00> : vector<16xf32>
    %64 = vector.multi_reduction <add>, %63, %cst_23 [1] : vector<16x16xf32> to vector<16xf32>
    %65 = vector.shape_cast %64 : vector<16xf32> to vector<16x1xf32>
    %66 = tpu.reciprocal %65 {approx = true} : vector<16x1xf32> -> vector<16x1xf32>
    %67 = vector.broadcast %66 : vector<16x1xf32> to vector<16x16xf32>
    %68 = arith.mulf %63, %67 : vector<16x16xf32>
    %69 = arith.truncf %68 : vector<16x16xf32> to vector<16x16xbf16>
    %70 = arith.truncf %55 : vector<16x32xf32> to vector<16x32xbf16>
    %cst_24 = arith.constant dense<0.000000e+00> : vector<16x32xf32>
    %71 = tpu.matmul %69, %70, %cst_24 {dimension_numbers = #tpu.dot_dimension_numbers<[1], [0], [0], [1], [0, 0, 1, 1], [], []>} : vector<16x16xbf16>, vector<16x32xbf16>, vector<16x32xf32> -> vector<16x32xf32>
    %72 = arith.truncf %71 : vector<16x32xf32> to vector<16x32xbf16>
    %c32 = arith.constant 32 : index
    %c0_25 = arith.constant 0 : index
    %73 = vector.load %arg6[%c32, %c0_25] : memref<128x128xbf16, #tpu.memory_space<vmem>>, vector<32x128xbf16>
    %cst_26 = arith.constant dense<0.000000e+00> : vector<16x128xf32>
    %74 = tpu.matmul %72, %73, %cst_26 {dimension_numbers = #tpu.dot_dimension_numbers<[1], [0], [0], [1], [0, 0, 1, 1], [], []>} : vector<16x32xbf16>, vector<32x128xbf16>, vector<16x128xf32> -> vector<16x128xf32>
    %75 = arith.addf %52, %74 : vector<16x128xf32>
    %76 = vector.extract_strided_slice %30 {offsets = [0, 64], sizes = [16, 32], strides = [1, 1]} : vector<32x384xf32> to vector<16x32xf32>
    %77 = vector.extract_strided_slice %30 {offsets = [0, 192], sizes = [16, 32], strides = [1, 1]} : vector<32x384xf32> to vector<16x32xf32>
    %78 = vector.extract_strided_slice %30 {offsets = [0, 320], sizes = [16, 32], strides = [1, 1]} : vector<32x384xf32> to vector<16x32xf32>
    %79 = arith.truncf %76 : vector<16x32xf32> to vector<16x32xbf16>
    %80 = arith.truncf %77 : vector<16x32xf32> to vector<16x32xbf16>
    %cst_27 = arith.constant dense<0.000000e+00> : vector<16x16xf32>
    %81 = tpu.matmul %79, %80, %cst_27 {dimension_numbers = #tpu.dot_dimension_numbers<[1], [1], [0], [0], [0, 0, 1, 0], [], []>} : vector<16x32xbf16>, vector<16x32xbf16>, vector<16x16xf32> -> vector<16x16xf32>
    %cst_28 = arith.constant dense<0xFF800000> : vector<16xf32>
    %82 = vector.multi_reduction <maximumf>, %81, %cst_28 [1] : vector<16x16xf32> to vector<16xf32>
    %83 = vector.shape_cast %82 : vector<16xf32> to vector<16x1xf32>
    %84 = vector.broadcast %83 : vector<16x1xf32> to vector<16x16xf32>
    %85 = arith.subf %81, %84 : vector<16x16xf32>
    %86 = math.exp %85 : vector<16x16xf32>
    %cst_29 = arith.constant dense<0.000000e+00> : vector<16xf32>
    %87 = vector.multi_reduction <add>, %86, %cst_29 [1] : vector<16x16xf32> to vector<16xf32>
    %88 = vector.shape_cast %87 : vector<16xf32> to vector<16x1xf32>
    %89 = tpu.reciprocal %88 {approx = true} : vector<16x1xf32> -> vector<16x1xf32>
    %90 = vector.broadcast %89 : vector<16x1xf32> to vector<16x16xf32>
    %91 = arith.mulf %86, %90 : vector<16x16xf32>
    %92 = arith.truncf %91 : vector<16x16xf32> to vector<16x16xbf16>
    %93 = arith.truncf %78 : vector<16x32xf32> to vector<16x32xbf16>
    %cst_30 = arith.constant dense<0.000000e+00> : vector<16x32xf32>
    %94 = tpu.matmul %92, %93, %cst_30 {dimension_numbers = #tpu.dot_dimension_numbers<[1], [0], [0], [1], [0, 0, 1, 1], [], []>} : vector<16x16xbf16>, vector<16x32xbf16>, vector<16x32xf32> -> vector<16x32xf32>
    %95 = arith.truncf %94 : vector<16x32xf32> to vector<16x32xbf16>
    %c64 = arith.constant 64 : index
    %c0_31 = arith.constant 0 : index
    %96 = vector.load %arg6[%c64, %c0_31] : memref<128x128xbf16, #tpu.memory_space<vmem>>, vector<32x128xbf16>
    %cst_32 = arith.constant dense<0.000000e+00> : vector<16x128xf32>
    %97 = tpu.matmul %95, %96, %cst_32 {dimension_numbers = #tpu.dot_dimension_numbers<[1], [0], [0], [1], [0, 0, 1, 1], [], []>} : vector<16x32xbf16>, vector<32x128xbf16>, vector<16x128xf32> -> vector<16x128xf32>
    %98 = arith.addf %75, %97 : vector<16x128xf32>
    %99 = vector.extract_strided_slice %30 {offsets = [0, 96], sizes = [16, 32], strides = [1, 1]} : vector<32x384xf32> to vector<16x32xf32>
    %100 = vector.extract_strided_slice %30 {offsets = [0, 224], sizes = [16, 32], strides = [1, 1]} : vector<32x384xf32> to vector<16x32xf32>
    %101 = vector.extract_strided_slice %30 {offsets = [0, 352], sizes = [16, 32], strides = [1, 1]} : vector<32x384xf32> to vector<16x32xf32>
    %102 = arith.truncf %99 : vector<16x32xf32> to vector<16x32xbf16>
    %103 = arith.truncf %100 : vector<16x32xf32> to vector<16x32xbf16>
    %cst_33 = arith.constant dense<0.000000e+00> : vector<16x16xf32>
    %104 = tpu.matmul %102, %103, %cst_33 {dimension_numbers = #tpu.dot_dimension_numbers<[1], [1], [0], [0], [0, 0, 1, 0], [], []>} : vector<16x32xbf16>, vector<16x32xbf16>, vector<16x16xf32> -> vector<16x16xf32>
    %cst_34 = arith.constant dense<0xFF800000> : vector<16xf32>
    %105 = vector.multi_reduction <maximumf>, %104, %cst_34 [1] : vector<16x16xf32> to vector<16xf32>
    %106 = vector.shape_cast %105 : vector<16xf32> to vector<16x1xf32>
    %107 = vector.broadcast %106 : vector<16x1xf32> to vector<16x16xf32>
    %108 = arith.subf %104, %107 : vector<16x16xf32>
    %109 = math.exp %108 : vector<16x16xf32>
    %cst_35 = arith.constant dense<0.000000e+00> : vector<16xf32>
    %110 = vector.multi_reduction <add>, %109, %cst_35 [1] : vector<16x16xf32> to vector<16xf32>
    %111 = vector.shape_cast %110 : vector<16xf32> to vector<16x1xf32>
    %112 = tpu.reciprocal %111 {approx = true} : vector<16x1xf32> -> vector<16x1xf32>
    %113 = vector.broadcast %112 : vector<16x1xf32> to vector<16x16xf32>
    %114 = arith.mulf %109, %113 : vector<16x16xf32>
    %115 = arith.truncf %114 : vector<16x16xf32> to vector<16x16xbf16>
    %116 = arith.truncf %101 : vector<16x32xf32> to vector<16x32xbf16>
    %cst_36 = arith.constant dense<0.000000e+00> : vector<16x32xf32>
    %117 = tpu.matmul %115, %116, %cst_36 {dimension_numbers = #tpu.dot_dimension_numbers<[1], [0], [0], [1], [0, 0, 1, 1], [], []>} : vector<16x16xbf16>, vector<16x32xbf16>, vector<16x32xf32> -> vector<16x32xf32>
    %118 = arith.truncf %117 : vector<16x32xf32> to vector<16x32xbf16>
    %c96 = arith.constant 96 : index
    %c0_37 = arith.constant 0 : index
    %119 = vector.load %arg6[%c96, %c0_37] : memref<128x128xbf16, #tpu.memory_space<vmem>>, vector<32x128xbf16>
    %cst_38 = arith.constant dense<0.000000e+00> : vector<16x128xf32>
    %120 = tpu.matmul %118, %119, %cst_38 {dimension_numbers = #tpu.dot_dimension_numbers<[1], [0], [0], [1], [0, 0, 1, 1], [], []>} : vector<16x32xbf16>, vector<32x128xbf16>, vector<16x128xf32> -> vector<16x128xf32>
    %121 = arith.addf %98, %120 : vector<16x128xf32>
    %122 = vector.extract_strided_slice %30 {offsets = [16, 0], sizes = [16, 32], strides = [1, 1]} : vector<32x384xf32> to vector<16x32xf32>
    %123 = vector.extract_strided_slice %30 {offsets = [16, 128], sizes = [16, 32], strides = [1, 1]} : vector<32x384xf32> to vector<16x32xf32>
    %124 = vector.extract_strided_slice %30 {offsets = [16, 256], sizes = [16, 32], strides = [1, 1]} : vector<32x384xf32> to vector<16x32xf32>
    %125 = arith.truncf %122 : vector<16x32xf32> to vector<16x32xbf16>
    %126 = arith.truncf %123 : vector<16x32xf32> to vector<16x32xbf16>
    %cst_39 = arith.constant dense<0.000000e+00> : vector<16x16xf32>
    %127 = tpu.matmul %125, %126, %cst_39 {dimension_numbers = #tpu.dot_dimension_numbers<[1], [1], [0], [0], [0, 0, 1, 0], [], []>} : vector<16x32xbf16>, vector<16x32xbf16>, vector<16x16xf32> -> vector<16x16xf32>
    %cst_40 = arith.constant dense<0xFF800000> : vector<16xf32>
    %128 = vector.multi_reduction <maximumf>, %127, %cst_40 [1] : vector<16x16xf32> to vector<16xf32>
    %129 = vector.shape_cast %128 : vector<16xf32> to vector<16x1xf32>
    %130 = vector.broadcast %129 : vector<16x1xf32> to vector<16x16xf32>
    %131 = arith.subf %127, %130 : vector<16x16xf32>
    %132 = math.exp %131 : vector<16x16xf32>
    %cst_41 = arith.constant dense<0.000000e+00> : vector<16xf32>
    %133 = vector.multi_reduction <add>, %132, %cst_41 [1] : vector<16x16xf32> to vector<16xf32>
    %134 = vector.shape_cast %133 : vector<16xf32> to vector<16x1xf32>
    %135 = tpu.reciprocal %134 {approx = true} : vector<16x1xf32> -> vector<16x1xf32>
    %136 = vector.broadcast %135 : vector<16x1xf32> to vector<16x16xf32>
    %137 = arith.mulf %132, %136 : vector<16x16xf32>
    %138 = arith.truncf %137 : vector<16x16xf32> to vector<16x16xbf16>
    %139 = arith.truncf %124 : vector<16x32xf32> to vector<16x32xbf16>
    %cst_42 = arith.constant dense<0.000000e+00> : vector<16x32xf32>
    %140 = tpu.matmul %138, %139, %cst_42 {dimension_numbers = #tpu.dot_dimension_numbers<[1], [0], [0], [1], [0, 0, 1, 1], [], []>} : vector<16x16xbf16>, vector<16x32xbf16>, vector<16x32xf32> -> vector<16x32xf32>
    %141 = arith.truncf %140 : vector<16x32xf32> to vector<16x32xbf16>
    %c0_43 = arith.constant 0 : index
    %c0_44 = arith.constant 0 : index
    %142 = vector.load %arg6[%c0_43, %c0_44] : memref<128x128xbf16, #tpu.memory_space<vmem>>, vector<32x128xbf16>
    %cst_45 = arith.constant dense<0.000000e+00> : vector<16x128xf32>
    %143 = tpu.matmul %141, %142, %cst_45 {dimension_numbers = #tpu.dot_dimension_numbers<[1], [0], [0], [1], [0, 0, 1, 1], [], []>} : vector<16x32xbf16>, vector<32x128xbf16>, vector<16x128xf32> -> vector<16x128xf32>
    %144 = vector.extract_strided_slice %30 {offsets = [16, 32], sizes = [16, 32], strides = [1, 1]} : vector<32x384xf32> to vector<16x32xf32>
    %145 = vector.extract_strided_slice %30 {offsets = [16, 160], sizes = [16, 32], strides = [1, 1]} : vector<32x384xf32> to vector<16x32xf32>
    %146 = vector.extract_strided_slice %30 {offsets = [16, 288], sizes = [16, 32], strides = [1, 1]} : vector<32x384xf32> to vector<16x32xf32>
    %147 = arith.truncf %144 : vector<16x32xf32> to vector<16x32xbf16>
    %148 = arith.truncf %145 : vector<16x32xf32> to vector<16x32xbf16>
    %cst_46 = arith.constant dense<0.000000e+00> : vector<16x16xf32>
    %149 = tpu.matmul %147, %148, %cst_46 {dimension_numbers = #tpu.dot_dimension_numbers<[1], [1], [0], [0], [0, 0, 1, 0], [], []>} : vector<16x32xbf16>, vector<16x32xbf16>, vector<16x16xf32> -> vector<16x16xf32>
    %cst_47 = arith.constant dense<0xFF800000> : vector<16xf32>
    %150 = vector.multi_reduction <maximumf>, %149, %cst_47 [1] : vector<16x16xf32> to vector<16xf32>
    %151 = vector.shape_cast %150 : vector<16xf32> to vector<16x1xf32>
    %152 = vector.broadcast %151 : vector<16x1xf32> to vector<16x16xf32>
    %153 = arith.subf %149, %152 : vector<16x16xf32>
    %154 = math.exp %153 : vector<16x16xf32>
    %cst_48 = arith.constant dense<0.000000e+00> : vector<16xf32>
    %155 = vector.multi_reduction <add>, %154, %cst_48 [1] : vector<16x16xf32> to vector<16xf32>
    %156 = vector.shape_cast %155 : vector<16xf32> to vector<16x1xf32>
    %157 = tpu.reciprocal %156 {approx = true} : vector<16x1xf32> -> vector<16x1xf32>
    %158 = vector.broadcast %157 : vector<16x1xf32> to vector<16x16xf32>
    %159 = arith.mulf %154, %158 : vector<16x16xf32>
    %160 = arith.truncf %159 : vector<16x16xf32> to vector<16x16xbf16>
    %161 = arith.truncf %146 : vector<16x32xf32> to vector<16x32xbf16>
    %cst_49 = arith.constant dense<0.000000e+00> : vector<16x32xf32>
    %162 = tpu.matmul %160, %161, %cst_49 {dimension_numbers = #tpu.dot_dimension_numbers<[1], [0], [0], [1], [0, 0, 1, 1], [], []>} : vector<16x16xbf16>, vector<16x32xbf16>, vector<16x32xf32> -> vector<16x32xf32>
    %163 = arith.truncf %162 : vector<16x32xf32> to vector<16x32xbf16>
    %c32_50 = arith.constant 32 : index
    %c0_51 = arith.constant 0 : index
    %164 = vector.load %arg6[%c32_50, %c0_51] : memref<128x128xbf16, #tpu.memory_space<vmem>>, vector<32x128xbf16>
    %cst_52 = arith.constant dense<0.000000e+00> : vector<16x128xf32>
    %165 = tpu.matmul %163, %164, %cst_52 {dimension_numbers = #tpu.dot_dimension_numbers<[1], [0], [0], [1], [0, 0, 1, 1], [], []>} : vector<16x32xbf16>, vector<32x128xbf16>, vector<16x128xf32> -> vector<16x128xf32>
    %166 = arith.addf %143, %165 : vector<16x128xf32>
    %167 = vector.extract_strided_slice %30 {offsets = [16, 64], sizes = [16, 32], strides = [1, 1]} : vector<32x384xf32> to vector<16x32xf32>
    %168 = vector.extract_strided_slice %30 {offsets = [16, 192], sizes = [16, 32], strides = [1, 1]} : vector<32x384xf32> to vector<16x32xf32>
    %169 = vector.extract_strided_slice %30 {offsets = [16, 320], sizes = [16, 32], strides = [1, 1]} : vector<32x384xf32> to vector<16x32xf32>
    %170 = arith.truncf %167 : vector<16x32xf32> to vector<16x32xbf16>
    %171 = arith.truncf %168 : vector<16x32xf32> to vector<16x32xbf16>
    %cst_53 = arith.constant dense<0.000000e+00> : vector<16x16xf32>
    %172 = tpu.matmul %170, %171, %cst_53 {dimension_numbers = #tpu.dot_dimension_numbers<[1], [1], [0], [0], [0, 0, 1, 0], [], []>} : vector<16x32xbf16>, vector<16x32xbf16>, vector<16x16xf32> -> vector<16x16xf32>
    %cst_54 = arith.constant dense<0xFF800000> : vector<16xf32>
    %173 = vector.multi_reduction <maximumf>, %172, %cst_54 [1] : vector<16x16xf32> to vector<16xf32>
    %174 = vector.shape_cast %173 : vector<16xf32> to vector<16x1xf32>
    %175 = vector.broadcast %174 : vector<16x1xf32> to vector<16x16xf32>
    %176 = arith.subf %172, %175 : vector<16x16xf32>
    %177 = math.exp %176 : vector<16x16xf32>
    %cst_55 = arith.constant dense<0.000000e+00> : vector<16xf32>
    %178 = vector.multi_reduction <add>, %177, %cst_55 [1] : vector<16x16xf32> to vector<16xf32>
    %179 = vector.shape_cast %178 : vector<16xf32> to vector<16x1xf32>
    %180 = tpu.reciprocal %179 {approx = true} : vector<16x1xf32> -> vector<16x1xf32>
    %181 = vector.broadcast %180 : vector<16x1xf32> to vector<16x16xf32>
    %182 = arith.mulf %177, %181 : vector<16x16xf32>
    %183 = arith.truncf %182 : vector<16x16xf32> to vector<16x16xbf16>
    %184 = arith.truncf %169 : vector<16x32xf32> to vector<16x32xbf16>
    %cst_56 = arith.constant dense<0.000000e+00> : vector<16x32xf32>
    %185 = tpu.matmul %183, %184, %cst_56 {dimension_numbers = #tpu.dot_dimension_numbers<[1], [0], [0], [1], [0, 0, 1, 1], [], []>} : vector<16x16xbf16>, vector<16x32xbf16>, vector<16x32xf32> -> vector<16x32xf32>
    %186 = arith.truncf %185 : vector<16x32xf32> to vector<16x32xbf16>
    %c64_57 = arith.constant 64 : index
    %c0_58 = arith.constant 0 : index
    %187 = vector.load %arg6[%c64_57, %c0_58] : memref<128x128xbf16, #tpu.memory_space<vmem>>, vector<32x128xbf16>
    %cst_59 = arith.constant dense<0.000000e+00> : vector<16x128xf32>
    %188 = tpu.matmul %186, %187, %cst_59 {dimension_numbers = #tpu.dot_dimension_numbers<[1], [0], [0], [1], [0, 0, 1, 1], [], []>} : vector<16x32xbf16>, vector<32x128xbf16>, vector<16x128xf32> -> vector<16x128xf32>
    %189 = arith.addf %166, %188 : vector<16x128xf32>
    %190 = vector.extract_strided_slice %30 {offsets = [16, 96], sizes = [16, 32], strides = [1, 1]} : vector<32x384xf32> to vector<16x32xf32>
    %191 = vector.extract_strided_slice %30 {offsets = [16, 224], sizes = [16, 32], strides = [1, 1]} : vector<32x384xf32> to vector<16x32xf32>
    %192 = vector.extract_strided_slice %30 {offsets = [16, 352], sizes = [16, 32], strides = [1, 1]} : vector<32x384xf32> to vector<16x32xf32>
    %193 = arith.truncf %190 : vector<16x32xf32> to vector<16x32xbf16>
    %194 = arith.truncf %191 : vector<16x32xf32> to vector<16x32xbf16>
    %cst_60 = arith.constant dense<0.000000e+00> : vector<16x16xf32>
    %195 = tpu.matmul %193, %194, %cst_60 {dimension_numbers = #tpu.dot_dimension_numbers<[1], [1], [0], [0], [0, 0, 1, 0], [], []>} : vector<16x32xbf16>, vector<16x32xbf16>, vector<16x16xf32> -> vector<16x16xf32>
    %cst_61 = arith.constant dense<0xFF800000> : vector<16xf32>
    %196 = vector.multi_reduction <maximumf>, %195, %cst_61 [1] : vector<16x16xf32> to vector<16xf32>
    %197 = vector.shape_cast %196 : vector<16xf32> to vector<16x1xf32>
    %198 = vector.broadcast %197 : vector<16x1xf32> to vector<16x16xf32>
    %199 = arith.subf %195, %198 : vector<16x16xf32>
    %200 = math.exp %199 : vector<16x16xf32>
    %cst_62 = arith.constant dense<0.000000e+00> : vector<16xf32>
    %201 = vector.multi_reduction <add>, %200, %cst_62 [1] : vector<16x16xf32> to vector<16xf32>
    %202 = vector.shape_cast %201 : vector<16xf32> to vector<16x1xf32>
    %203 = tpu.reciprocal %202 {approx = true} : vector<16x1xf32> -> vector<16x1xf32>
    %204 = vector.broadcast %203 : vector<16x1xf32> to vector<16x16xf32>
    %205 = arith.mulf %200, %204 : vector<16x16xf32>
    %206 = arith.truncf %205 : vector<16x16xf32> to vector<16x16xbf16>
    %207 = arith.truncf %192 : vector<16x32xf32> to vector<16x32xbf16>
    %cst_63 = arith.constant dense<0.000000e+00> : vector<16x32xf32>
    %208 = tpu.matmul %206, %207, %cst_63 {dimension_numbers = #tpu.dot_dimension_numbers<[1], [0], [0], [1], [0, 0, 1, 1], [], []>} : vector<16x16xbf16>, vector<16x32xbf16>, vector<16x32xf32> -> vector<16x32xf32>
    %209 = arith.truncf %208 : vector<16x32xf32> to vector<16x32xbf16>
    %c96_64 = arith.constant 96 : index
    %c0_65 = arith.constant 0 : index
    %210 = vector.load %arg6[%c96_64, %c0_65] : memref<128x128xbf16, #tpu.memory_space<vmem>>, vector<32x128xbf16>
    %cst_66 = arith.constant dense<0.000000e+00> : vector<16x128xf32>
    %211 = tpu.matmul %209, %210, %cst_66 {dimension_numbers = #tpu.dot_dimension_numbers<[1], [0], [0], [1], [0, 0, 1, 1], [], []>} : vector<16x32xbf16>, vector<32x128xbf16>, vector<16x128xf32> -> vector<16x128xf32>
    %212 = arith.addf %189, %211 : vector<16x128xf32>
    %213 = tpu.concatenate %121, %212 in 0 : vector<16x128xf32>, vector<16x128xf32> -> vector<32x128xf32>
    %214 = arith.addf %24, %213 : vector<32x128xf32>
    %c0_67 = arith.constant 0 : index
    %c0_68 = arith.constant 0 : index
    %215 = vector.load %arg7[%c0_67, %c0_68] : memref<1x128xf32, #tpu.memory_space<vmem>>, vector<1x128xf32>
    %216 = vector.broadcast %215 : vector<1x128xf32> to vector<32x128xf32>
    %217 = arith.addf %214, %216 : vector<32x128xf32>
    %c0_69 = arith.constant 0 : index
    %c0_70 = arith.constant 0 : index
    %218 = vector.load %arg8[%c0_69, %c0_70] : memref<1x128xf32, #tpu.memory_space<vmem>>, vector<1x128xf32>
    %c0_71 = arith.constant 0 : index
    %c0_72 = arith.constant 0 : index
    %219 = vector.load %arg9[%c0_71, %c0_72] : memref<1x128xf32, #tpu.memory_space<vmem>>, vector<1x128xf32>
    %cst_73 = arith.constant dense<0.000000e+00> : vector<32xf32>
    %220 = vector.multi_reduction <add>, %217, %cst_73 [1] : vector<32x128xf32> to vector<32xf32>
    %221 = vector.shape_cast %220 : vector<32xf32> to vector<32x1xf32>
    %cst_74 = arith.constant 1.280000e+02 : f32
    %222 = vector.broadcast %cst_74 : f32 to vector<32x1xf32>
    %223 = arith.divf %221, %222 : vector<32x1xf32>
    %224 = vector.broadcast %223 : vector<32x1xf32> to vector<32x128xf32>
    %225 = arith.subf %217, %224 : vector<32x128xf32>
    %226 = arith.mulf %225, %225 : vector<32x128xf32>
    %cst_75 = arith.constant dense<0.000000e+00> : vector<32xf32>
    %227 = vector.multi_reduction <add>, %226, %cst_75 [1] : vector<32x128xf32> to vector<32xf32>
    %228 = vector.shape_cast %227 : vector<32xf32> to vector<32x1xf32>
    %cst_76 = arith.constant 1.280000e+02 : f32
    %229 = vector.broadcast %cst_76 : f32 to vector<32x1xf32>
    %230 = arith.divf %228, %229 : vector<32x1xf32>
    %231 = vector.broadcast %223 : vector<32x1xf32> to vector<32x128xf32>
    %232 = arith.subf %217, %231 : vector<32x128xf32>
    %cst_77 = arith.constant 9.99999996E-13 : f32
    %233 = vector.broadcast %cst_77 : f32 to vector<32x1xf32>
    %234 = arith.addf %230, %233 : vector<32x1xf32>
    %235 = math.rsqrt %234 : vector<32x1xf32>
    %236 = vector.broadcast %235 : vector<32x1xf32> to vector<32x128xf32>
    %237 = arith.mulf %232, %236 : vector<32x128xf32>
    %238 = vector.broadcast %218 : vector<1x128xf32> to vector<32x128xf32>
    %239 = arith.mulf %237, %238 : vector<32x128xf32>
    %240 = vector.broadcast %219 : vector<1x128xf32> to vector<32x128xf32>
    %241 = arith.addf %239, %240 : vector<32x128xf32>
    %242 = arith.truncf %241 : vector<32x128xf32> to vector<32x128xbf16>
    %c0_78 = arith.constant 0 : index
    %c0_79 = arith.constant 0 : index
    %243 = vector.load %arg10[%c0_78, %c0_79] : memref<128x256xbf16, #tpu.memory_space<vmem>>, vector<128x256xbf16>
    %cst_80 = arith.constant dense<0.000000e+00> : vector<32x256xf32>
    %244 = tpu.matmul %242, %243, %cst_80 {dimension_numbers = #tpu.dot_dimension_numbers<[1], [0], [0], [1], [0, 0, 1, 1], [], []>} : vector<32x128xbf16>, vector<128x256xbf16>, vector<32x256xf32> -> vector<32x256xf32>
    %c0_81 = arith.constant 0 : index
    %c0_82 = arith.constant 0 : index
    %245 = vector.load %arg11[%c0_81, %c0_82] : memref<1x256xf32, #tpu.memory_space<vmem>>, vector<1x256xf32>
    %246 = vector.broadcast %245 : vector<1x256xf32> to vector<32x256xf32>
    %247 = arith.addf %244, %246 : vector<32x256xf32>
    %cst_83 = arith.constant 5.000000e-01 : f32
    %248 = vector.broadcast %cst_83 : f32 to vector<32x256xf32>
    %249 = arith.mulf %248, %247 : vector<32x256xf32>
    %cst_84 = arith.constant 0.707106769 : f32
    %250 = vector.broadcast %cst_84 : f32 to vector<32x256xf32>
    %251 = arith.mulf %247, %250 : vector<32x256xf32>
    %252 = math.erf %251 : vector<32x256xf32>
    %cst_85 = arith.constant 1.000000e+00 : f32
    %253 = vector.broadcast %cst_85 : f32 to vector<32x256xf32>
    %254 = arith.addf %253, %252 : vector<32x256xf32>
    %255 = arith.mulf %249, %254 : vector<32x256xf32>
    %256 = arith.truncf %255 : vector<32x256xf32> to vector<32x256xbf16>
    %c0_86 = arith.constant 0 : index
    %c0_87 = arith.constant 0 : index
    %257 = vector.load %arg12[%c0_86, %c0_87] : memref<256x128xbf16, #tpu.memory_space<vmem>>, vector<256x128xbf16>
    %cst_88 = arith.constant dense<0.000000e+00> : vector<32x128xf32>
    %258 = tpu.matmul %256, %257, %cst_88 {dimension_numbers = #tpu.dot_dimension_numbers<[1], [0], [0], [1], [0, 0, 1, 1], [], []>} : vector<32x256xbf16>, vector<256x128xbf16>, vector<32x128xf32> -> vector<32x128xf32>
    %c0_89 = arith.constant 0 : index
    %c0_90 = arith.constant 0 : index
    %259 = vector.load %arg13[%c0_89, %c0_90] : memref<1x128xf32, #tpu.memory_space<vmem>>, vector<1x128xf32>
    %260 = vector.broadcast %259 : vector<1x128xf32> to vector<32x128xf32>
    %261 = arith.addf %258, %260 : vector<32x128xf32>
    %262 = arith.addf %241, %261 : vector<32x128xf32>
    %c0_91 = arith.constant 0 : index
    %c0_92 = arith.constant 0 : index
    %263 = vector.load %arg14[%c0_91, %c0_92] : memref<1x128xf32, #tpu.memory_space<vmem>>, vector<1x128xf32>
    %c0_93 = arith.constant 0 : index
    %c0_94 = arith.constant 0 : index
    %264 = vector.load %arg15[%c0_93, %c0_94] : memref<1x128xf32, #tpu.memory_space<vmem>>, vector<1x128xf32>
    %cst_95 = arith.constant dense<0.000000e+00> : vector<32xf32>
    %265 = vector.multi_reduction <add>, %262, %cst_95 [1] : vector<32x128xf32> to vector<32xf32>
    %266 = vector.shape_cast %265 : vector<32xf32> to vector<32x1xf32>
    %cst_96 = arith.constant 1.280000e+02 : f32
    %267 = vector.broadcast %cst_96 : f32 to vector<32x1xf32>
    %268 = arith.divf %266, %267 : vector<32x1xf32>
    %269 = vector.broadcast %268 : vector<32x1xf32> to vector<32x128xf32>
    %270 = arith.subf %262, %269 : vector<32x128xf32>
    %271 = arith.mulf %270, %270 : vector<32x128xf32>
    %cst_97 = arith.constant dense<0.000000e+00> : vector<32xf32>
    %272 = vector.multi_reduction <add>, %271, %cst_97 [1] : vector<32x128xf32> to vector<32xf32>
    %273 = vector.shape_cast %272 : vector<32xf32> to vector<32x1xf32>
    %cst_98 = arith.constant 1.280000e+02 : f32
    %274 = vector.broadcast %cst_98 : f32 to vector<32x1xf32>
    %275 = arith.divf %273, %274 : vector<32x1xf32>
    %276 = vector.broadcast %268 : vector<32x1xf32> to vector<32x128xf32>
    %277 = arith.subf %262, %276 : vector<32x128xf32>
    %cst_99 = arith.constant 9.99999996E-13 : f32
    %278 = vector.broadcast %cst_99 : f32 to vector<32x1xf32>
    %279 = arith.addf %275, %278 : vector<32x1xf32>
    %280 = math.rsqrt %279 : vector<32x1xf32>
    %281 = vector.broadcast %280 : vector<32x1xf32> to vector<32x128xf32>
    %282 = arith.mulf %277, %281 : vector<32x128xf32>
    %283 = vector.broadcast %263 : vector<1x128xf32> to vector<32x128xf32>
    %284 = arith.mulf %282, %283 : vector<32x128xf32>
    %285 = vector.broadcast %264 : vector<1x128xf32> to vector<32x128xf32>
    %286 = arith.addf %284, %285 : vector<32x128xf32>
    %c0_100 = arith.constant 0 : index
    %c0_101 = arith.constant 0 : index
    %287 = vector.load %arg16[%c0_100, %c0_101] : memref<32x128xf32, #tpu.memory_space<vmem>>, vector<32x128xf32>
    tpu.vector_store %arg16[%c0_100, %c0_101], %286 {strides = array<i32>} : memref<32x128xf32, #tpu.memory_space<vmem>>, vector<32x128xf32>,
    return
  }
  func.func @transform_0(%arg0: i32) -> (i32, i32) {
    %c0_i32 = arith.constant 0 : i32
    %c0_i32_0 = arith.constant 0 : i32
    return %arg0, %c0_i32 : i32, i32
  }
  func.func @transform_1(%arg0: i32) -> (i32, i32) {
    %c0_i32 = arith.constant 0 : i32
    %c0_i32_0 = arith.constant 0 : i32
    %c0_i32_1 = arith.constant 0 : i32
    return %c0_i32, %c0_i32_0 : i32, i32
  }
  func.func @transform_2(%arg0: i32) -> (i32, i32) {
    %c0_i32 = arith.constant 0 : i32
    %c0_i32_0 = arith.constant 0 : i32
    %c0_i32_1 = arith.constant 0 : i32
    return %c0_i32, %c0_i32_0 : i32, i32
  }
  func.func @transform_3(%arg0: i32) -> (i32, i32) {
    %c0_i32 = arith.constant 0 : i32
    %c0_i32_0 = arith.constant 0 : i32
    %c0_i32_1 = arith.constant 0 : i32
    return %c0_i32, %c0_i32_0 : i32, i32
  }
  func.func @transform_4(%arg0: i32) -> (i32, i32) {
    %c0_i32 = arith.constant 0 : i32
    %c0_i32_0 = arith.constant 0 : i32
    %c0_i32_1 = arith.constant 0 : i32
    return %c0_i32, %c0_i32_0 : i32, i32
  }
  func.func @transform_5(%arg0: i32) -> (i32, i32) {
    %c0_i32 = arith.constant 0 : i32
    %c0_i32_0 = arith.constant 0 : i32
    %c0_i32_1 = arith.constant 0 : i32
    return %c0_i32, %c0_i32_0 : i32, i32
  }
  func.func @transform_6(%arg0: i32) -> (i32, i32) {
    %c0_i32 = arith.constant 0 : i32
    %c0_i32_0 = arith.constant 0 : i32
    %c0_i32_1 = arith.constant 0 : i32
    return %c0_i32, %c0_i32_0 : i32, i32
  }
  func.func @transform_7(%arg0: i32) -> (i32, i32) {
    %c0_i32 = arith.constant 0 : i32
    %c0_i32_0 = arith.constant 0 : i32
    %c0_i32_1 = arith.constant 0 : i32
    return %c0_i32, %c0_i32_0 : i32, i32
  }
  func.func @transform_8(%arg0: i32) -> (i32, i32) {
    %c0_i32 = arith.constant 0 : i32
    %c0_i32_0 = arith.constant 0 : i32
    %c0_i32_1 = arith.constant 0 : i32
    return %c0_i32, %c0_i32_0 : i32, i32
  }
  func.func @transform_9(%arg0: i32) -> (i32, i32) {
    %c0_i32 = arith.constant 0 : i32
    %c0_i32_0 = arith.constant 0 : i32
    %c0_i32_1 = arith.constant 0 : i32
    return %c0_i32, %c0_i32_0 : i32, i32
  }
  func.func @transform_10(%arg0: i32) -> (i32, i32) {
    %c0_i32 = arith.constant 0 : i32
    %c0_i32_0 = arith.constant 0 : i32
    %c0_i32_1 = arith.constant 0 : i32
    return %c0_i32, %c0_i32_0 : i32, i32
  }
  func.func @transform_11(%arg0: i32) -> (i32, i32) {
    %c0_i32 = arith.constant 0 : i32
    %c0_i32_0 = arith.constant 0 : i32
    %c0_i32_1 = arith.constant 0 : i32
    return %c0_i32, %c0_i32_0 : i32, i32
  }
  func.func @transform_12(%arg0: i32) -> (i32, i32) {
    %c0_i32 = arith.constant 0 : i32
    %c0_i32_0 = arith.constant 0 : i32
    %c0_i32_1 = arith.constant 0 : i32
    return %c0_i32, %c0_i32_0 : i32, i32
  }
  func.func @transform_13(%arg0: i32) -> (i32, i32) {
    %c0_i32 = arith.constant 0 : i32
    %c0_i32_0 = arith.constant 0 : i32
    %c0_i32_1 = arith.constant 0 : i32
    return %c0_i32, %c0_i32_0 : i32, i32
  }
  func.func @transform_14(%arg0: i32) -> (i32, i32) {
    %c0_i32 = arith.constant 0 : i32
    %c0_i32_0 = arith.constant 0 : i32
    %c0_i32_1 = arith.constant 0 : i32
    return %c0_i32, %c0_i32_0 : i32, i32
  }
  func.func @transform_15(%arg0: i32) -> (i32, i32) {
    %c0_i32 = arith.constant 0 : i32
    %c0_i32_0 = arith.constant 0 : i32
    return %arg0, %c0_i32 : i32, i32
  }
}

module attributes {stable_mosaic.version = 11 : i64} {
  func.func @kernel(%arg0: i32, %arg1: memref<8x128xf32, #tpu.memory_space<vmem>>, %arg2: memref<128x256xbf16, #tpu.memory_space<vmem>>, %arg3: memref<8x1xi32, #tpu.memory_space<vmem>>, %arg4: memref<8x256xf32, #tpu.memory_space<vmem>>, %arg5: memref<8x1xf32, #tpu.memory_space<vmem>>, %arg6: memref<8x1xf32, #tpu.memory_space<vmem>>, %arg7: memref<8x1xf32, #tpu.memory_space<vmem>>, %arg8: memref<8x1xf32, #tpu.memory_space<vmem>>) attributes {dimension_semantics = [#tpu.dimension_semantics<arbitrary>], iteration_bounds = array<i64: 2>, scalar_prefetch = 0 : i64, scratch_operands = 3 : i64, tpu.core_type = #tpu.core_type<tc>, window_params = [{pipeline_mode = #tpu.pipeline_mode<synchronous>, transform_indices = @transform_0, window_bounds = array<i64: 8, 128>}, {transform_indices = @transform_1, window_bounds = array<i64: 128, 256>}, {pipeline_mode = #tpu.pipeline_mode<synchronous>, transform_indices = @transform_2, window_bounds = array<i64: 8, 1>}, {transform_indices = @transform_3, window_bounds = array<i64: 8, 256>}, {pipeline_mode = #tpu.pipeline_mode<synchronous>, transform_indices = @transform_4, window_bounds = array<i64: 8, 1>}]} {
    %c0_i32 = arith.constant 0 : i32
    %0 = arith.cmpi eq, %arg0, %c0_i32 : i32
    %1 = arith.extui %0 : i1 to i32
    %c0_i32_0 = arith.constant 0 : i32
    %2 = arith.cmpi ne, %1, %c0_i32_0 : i32
    scf.if %2 {
      %cst_26 = arith.constant 0xFF800000 : f32
      %43 = vector.broadcast %cst_26 : f32 to vector<8x1xf32>
      %c0_27 = arith.constant 0 : index
      %c0_28 = arith.constant 0 : index
      %44 = vector.load %arg6[%c0_27, %c0_28] : memref<8x1xf32, #tpu.memory_space<vmem>>, vector<8x1xf32>
      tpu.vector_store %arg6[%c0_27, %c0_28], %43 {strides = array<i32>} : memref<8x1xf32, #tpu.memory_space<vmem>>, vector<8x1xf32>,
      %cst_29 = arith.constant 0.000000e+00 : f32
      %45 = vector.broadcast %cst_29 : f32 to vector<8x1xf32>
      %c0_30 = arith.constant 0 : index
      %c0_31 = arith.constant 0 : index
      %46 = vector.load %arg7[%c0_30, %c0_31] : memref<8x1xf32, #tpu.memory_space<vmem>>, vector<8x1xf32>
      tpu.vector_store %arg7[%c0_30, %c0_31], %45 {strides = array<i32>} : memref<8x1xf32, #tpu.memory_space<vmem>>, vector<8x1xf32>,
      %cst_32 = arith.constant 0.000000e+00 : f32
      %47 = vector.broadcast %cst_32 : f32 to vector<8x1xf32>
      %c0_33 = arith.constant 0 : index
      %c0_34 = arith.constant 0 : index
      %48 = vector.load %arg8[%c0_33, %c0_34] : memref<8x1xf32, #tpu.memory_space<vmem>>, vector<8x1xf32>
      tpu.vector_store %arg8[%c0_33, %c0_34], %47 {strides = array<i32>} : memref<8x1xf32, #tpu.memory_space<vmem>>, vector<8x1xf32>,
    } else {
    }
    %c0 = arith.constant 0 : index
    %c0_1 = arith.constant 0 : index
    %3 = vector.load %arg1[%c0, %c0_1] : memref<8x128xf32, #tpu.memory_space<vmem>>, vector<8x128xf32>
    %4 = arith.truncf %3 : vector<8x128xf32> to vector<8x128xbf16>
    %c0_2 = arith.constant 0 : index
    %c0_3 = arith.constant 0 : index
    %5 = vector.load %arg2[%c0_2, %c0_3] : memref<128x256xbf16, #tpu.memory_space<vmem>>, vector<128x256xbf16>
    %cst = arith.constant dense<0.000000e+00> : vector<8x256xf32>
    %6 = tpu.matmul %4, %5, %cst {dimension_numbers = #tpu.dot_dimension_numbers<[1], [0], [0], [1], [0, 0, 1, 1], [], []>} : vector<8x128xbf16>, vector<128x256xbf16>, vector<8x256xf32> -> vector<8x256xf32>
    %c0_4 = arith.constant 0 : index
    %c0_5 = arith.constant 0 : index
    %7 = vector.load %arg4[%c0_4, %c0_5] : memref<8x256xf32, #tpu.memory_space<vmem>>, vector<8x256xf32>
    tpu.vector_store %arg4[%c0_4, %c0_5], %6 {strides = array<i32>} : memref<8x256xf32, #tpu.memory_space<vmem>>, vector<8x256xf32>,
    %c256_i32 = arith.constant 256 : i32
    %8 = arith.muli %arg0, %c256_i32 : i32
    %9 = tpu.iota {dimensions = array<i32: 1>} : vector<8x256xi32>
    %10 = vector.broadcast %8 : i32 to vector<8x256xi32>
    %11 = arith.addi %10, %9 : vector<8x256xi32>
    %c0_6 = arith.constant 0 : index
    %c0_7 = arith.constant 0 : index
    %12 = vector.load %arg3[%c0_6, %c0_7] : memref<8x1xi32, #tpu.memory_space<vmem>>, vector<8x1xi32>
    %13 = vector.broadcast %12 : vector<8x1xi32> to vector<8x256xi32>
    %14 = arith.cmpi eq, %11, %13 : vector<8x256xi32>
    %15 = arith.extui %14 : vector<8x256xi1> to vector<8x256xi32>
    %16 = arith.sitofp %15 : vector<8x256xi32> to vector<8x256xf32>
    %c0_8 = arith.constant 0 : index
    %c0_9 = arith.constant 0 : index
    %17 = vector.load %arg8[%c0_8, %c0_9] : memref<8x1xf32, #tpu.memory_space<vmem>>, vector<8x1xf32>
    %18 = arith.mulf %6, %16 : vector<8x256xf32>
    %cst_10 = arith.constant dense<0.000000e+00> : vector<8xf32>
    %19 = vector.multi_reduction <add>, %18, %cst_10 [1] : vector<8x256xf32> to vector<8xf32>
    %20 = vector.shape_cast %19 : vector<8xf32> to vector<8x1xf32>
    %21 = arith.addf %17, %20 : vector<8x1xf32>
    %c0_11 = arith.constant 0 : index
    %c0_12 = arith.constant 0 : index
    %22 = vector.load %arg8[%c0_11, %c0_12] : memref<8x1xf32, #tpu.memory_space<vmem>>, vector<8x1xf32>
    tpu.vector_store %arg8[%c0_11, %c0_12], %21 {strides = array<i32>} : memref<8x1xf32, #tpu.memory_space<vmem>>, vector<8x1xf32>,
    %c0_13 = arith.constant 0 : index
    %c0_14 = arith.constant 0 : index
    %23 = vector.load %arg6[%c0_13, %c0_14] : memref<8x1xf32, #tpu.memory_space<vmem>>, vector<8x1xf32>
    %cst_15 = arith.constant dense<0xFF800000> : vector<8xf32>
    %24 = vector.multi_reduction <maximumf>, %6, %cst_15 [1] : vector<8x256xf32> to vector<8xf32>
    %25 = vector.shape_cast %24 : vector<8xf32> to vector<8x1xf32>
    %26 = arith.maximumf %23, %25 : vector<8x1xf32>
    %c0_16 = arith.constant 0 : index
    %c0_17 = arith.constant 0 : index
    %27 = vector.load %arg7[%c0_16, %c0_17] : memref<8x1xf32, #tpu.memory_space<vmem>>, vector<8x1xf32>
    %c0_18 = arith.constant 0 : index
    %c0_19 = arith.constant 0 : index
    %28 = vector.load %arg6[%c0_18, %c0_19] : memref<8x1xf32, #tpu.memory_space<vmem>>, vector<8x1xf32>
    %29 = arith.subf %28, %26 : vector<8x1xf32>
    %30 = math.exp %29 : vector<8x1xf32>
    %31 = arith.mulf %27, %30 : vector<8x1xf32>
    %32 = vector.broadcast %26 : vector<8x1xf32> to vector<8x256xf32>
    %33 = arith.subf %6, %32 : vector<8x256xf32>
    %34 = math.exp %33 : vector<8x256xf32>
    %cst_20 = arith.constant dense<0.000000e+00> : vector<8xf32>
    %35 = vector.multi_reduction <add>, %34, %cst_20 [1] : vector<8x256xf32> to vector<8xf32>
    %36 = vector.shape_cast %35 : vector<8xf32> to vector<8x1xf32>
    %37 = arith.addf %31, %36 : vector<8x1xf32>
    %c0_21 = arith.constant 0 : index
    %c0_22 = arith.constant 0 : index
    %38 = vector.load %arg7[%c0_21, %c0_22] : memref<8x1xf32, #tpu.memory_space<vmem>>, vector<8x1xf32>
    tpu.vector_store %arg7[%c0_21, %c0_22], %37 {strides = array<i32>} : memref<8x1xf32, #tpu.memory_space<vmem>>, vector<8x1xf32>,
    %c0_23 = arith.constant 0 : index
    %c0_24 = arith.constant 0 : index
    %39 = vector.load %arg6[%c0_23, %c0_24] : memref<8x1xf32, #tpu.memory_space<vmem>>, vector<8x1xf32>
    tpu.vector_store %arg6[%c0_23, %c0_24], %26 {strides = array<i32>} : memref<8x1xf32, #tpu.memory_space<vmem>>, vector<8x1xf32>,
    %c1_i32 = arith.constant 1 : i32
    %40 = arith.cmpi eq, %arg0, %c1_i32 : i32
    %41 = arith.extui %40 : i1 to i32
    %c0_i32_25 = arith.constant 0 : i32
    %42 = arith.cmpi ne, %41, %c0_i32_25 : i32
    scf.if %42 {
      %c0_26 = arith.constant 0 : index
      %c0_27 = arith.constant 0 : index
      %43 = vector.load %arg6[%c0_26, %c0_27] : memref<8x1xf32, #tpu.memory_space<vmem>>, vector<8x1xf32>
      %c0_28 = arith.constant 0 : index
      %c0_29 = arith.constant 0 : index
      %44 = vector.load %arg7[%c0_28, %c0_29] : memref<8x1xf32, #tpu.memory_space<vmem>>, vector<8x1xf32>
      %45 = math.log %44 : vector<8x1xf32>
      %46 = arith.addf %43, %45 : vector<8x1xf32>
      %c0_30 = arith.constant 0 : index
      %c0_31 = arith.constant 0 : index
      %47 = vector.load %arg8[%c0_30, %c0_31] : memref<8x1xf32, #tpu.memory_space<vmem>>, vector<8x1xf32>
      %48 = arith.subf %46, %47 : vector<8x1xf32>
      %c0_32 = arith.constant 0 : index
      %c0_33 = arith.constant 0 : index
      %49 = vector.load %arg5[%c0_32, %c0_33] : memref<8x1xf32, #tpu.memory_space<vmem>>, vector<8x1xf32>
      tpu.vector_store %arg5[%c0_32, %c0_33], %48 {strides = array<i32>} : memref<8x1xf32, #tpu.memory_space<vmem>>, vector<8x1xf32>,
    } else {
    }
    return
  }
  func.func @transform_0(%arg0: i32) -> (i32, i32) {
    %c0_i32 = arith.constant 0 : i32
    %c0_i32_0 = arith.constant 0 : i32
    %c0_i32_1 = arith.constant 0 : i32
    return %c0_i32, %c0_i32_0 : i32, i32
  }
  func.func @transform_1(%arg0: i32) -> (i32, i32) {
    %c0_i32 = arith.constant 0 : i32
    %c0_i32_0 = arith.constant 0 : i32
    return %c0_i32, %arg0 : i32, i32
  }
  func.func @transform_2(%arg0: i32) -> (i32, i32) {
    %c0_i32 = arith.constant 0 : i32
    %c0_i32_0 = arith.constant 0 : i32
    %c0_i32_1 = arith.constant 0 : i32
    return %c0_i32, %c0_i32_0 : i32, i32
  }
  func.func @transform_3(%arg0: i32) -> (i32, i32) {
    %c0_i32 = arith.constant 0 : i32
    %c0_i32_0 = arith.constant 0 : i32
    return %c0_i32, %arg0 : i32, i32
  }
  func.func @transform_4(%arg0: i32) -> (i32, i32) {
    %c0_i32 = arith.constant 0 : i32
    %c0_i32_0 = arith.constant 0 : i32
    %c0_i32_1 = arith.constant 0 : i32
    return %c0_i32, %c0_i32_0 : i32, i32
  }
}

</mosaic_0001>

<llo_original>
// kernel: pretraining_forward.5
$region0: #{pretraining_forward.5}
  #allocation0 [shape = 'u32[]', space=smem, size = 0x4, offset = 0x4, fixed_abs, tag = 'smem constant byte address 0x4 - core index']
  #allocation1 [shape = 'u32[144,128]{1,0:T(1,128)}', space=vmem, size = 0x12000, scoped, tag = 'internal scratch']
  #allocation2 [shape = 'f32[8,1]{1,0:T(8,128)}', space=vmem, size = 0x1000, scoped, tag = 'scratch operand']
  #allocation3 [shape = 'f32[8,1]{1,0:T(8,128)}', space=vmem, size = 0x1000, scoped, tag = 'scratch operand']
  #allocation4 [shape = 'f32[8,1]{1,0:T(8,128)}', space=vmem, size = 0x1000, scoped, tag = 'scratch operand']
  %s0 = inlined_call_operand.vmem [shape: f32[8,128], index: 0, kind: input, shape index: {}]
  %s1 = inlined_call_operand.vmem [shape: bf16[128,512], index: 1, kind: input, shape index: {}]
  %s2 = inlined_call_operand.vmem [shape: s32[8,1], index: 2, kind: input, shape index: {}]
  %s3 = inlined_call_operand.vmem [shape: f32[8,512], index: 3, kind: output, shape index: {0}]
  %s4 = inlined_call_operand.vmem [shape: f32[8,1], index: 4, kind: output, shape index: {1}]
  %5 = xla_tuple %s3, %s4
  %s6 = sld [smem:[#allocation0]]
  $region99: #{pretraining_forward.5} parent=0
    _
  %s8 = ssub.s32 1, %s6
  %s9 = scalar_select 0, %s8, %s6
  $region1: #{pretraining_forward.5} parent=0
    #allocation5 [shape = 'u8[131072]{0}', space=vmem, size = 0x20000, scoped, tag = 'input window, operand 1']
    loop: start=0, step=1, limit=4
    $region2: #{pretraining_forward.5} parent=1 // loop_pre_header
      _
    $region3: #{pretraining_forward.5} parent=1 // loop_header
      %s11 = sphi 0, %s15
      %p12 = scmp.ge.s32.totalorder %s11, 4
      %s19 = sphi 0, %s19
      %s21 = sphi 0, %s19
      %s22 = sphi 0, %s21
      %s36 = sphi 0, %s22
      %s42 = sphi 0, %s44
      %s45 = sphi 0, %s42
      %s46 = sphi 0, %s45
      %s62 = sphi 0, %s46
      %s66 = sphi 0, %s66
      %s68 = sphi 0, %s66
      %s69 = sphi 0, %s68
      %s83 = sphi 0, %s69
      %s89 = sphi 0, %s91
      %s92 = sphi 0, %s89
      %s93 = sphi 0, %s92
      %s109 = sphi 0, %s93
      %s113 = sphi 0, %s113
      %s115 = sphi 0, %s113
      %s116 = sphi 0, %s115
      %s130 = sphi 0, %s116
    $region4: #{pretraining_forward.5} parent=1 // loop_header_branch
      %14 = sbr.rel (%p12) target = $region8
    $region5: #{pretraining_forward.5} parent=1 // loop_body
      %s16 = ssub.s32 %s11, 1
      %s17 = ssub.s32 %s11, 2
      %s18 = sadd.s32 %s11, 1
      %s20 = sadd.s32 %s19, 1
      %p23 = scmp.eq.s32.totalorder %s11, 1
      %p24 = scmp.ne.s32.totalorder %s19, %s21
      %p25 = scmp.eq.s32.totalorder %s11, 0
      %p26 = por %p24, %p25
      %p27 = scmp.ne.s32.totalorder %s19, %s21
      %p28 = scmp.eq.s32.totalorder %s16, 1
      %p29 = por %p27, %p28
      %p30 = scmp.ne.s32.totalorder %s21, %s22
      %p31 = scmp.eq.s32.totalorder %s16, 0
      %p32 = por %p30, %p31
      %p33 = scmp.ne.s32.totalorder %s21, %s22
      %p34 = scmp.eq.s32.totalorder %s17, 1
      %p35 = por %p33, %p34
      %p37 = scmp.ne.s32.totalorder %s22, %s36
      %p38 = scmp.eq.s32.totalorder %s17, 0
      %p39 = por %p37, %p38
      %s40 = ssub.s32 %s11, %s18
      %p41 = scmp.eq.s32.totalorder %s40, 0
      %s43 = sadd.s32 %s42, 1
      %s44 = scalar_select %p41, %s42, %s43
      %p47 = pneg %p41
      %p48 = scmp.eq.s32.totalorder %s11, 1
      %p49 = por %p47, %p48
      %p50 = scmp.ne.s32.totalorder %s42, %s45
      %p51 = scmp.eq.s32.totalorder %s11, 0
      %p52 = por %p50, %p51
      %p53 = scmp.ne.s32.totalorder %s42, %s45
      %p54 = scmp.eq.s32.totalorder %s16, 1
      %p55 = por %p53, %p54
      %p56 = scmp.ne.s32.totalorder %s45, %s46
      %p57 = scmp.eq.s32.totalorder %s16, 0
      %p58 = por %p56, %p57
      %p59 = scmp.ne.s32.totalorder %s45, %s46
      %p60 = scmp.eq.s32.totalorder %s17, 1
      %p61 = por %p59, %p60
      %p63 = scmp.ne.s32.totalorder %s46, %s62
      %p64 = scmp.eq.s32.totalorder %s17, 0
      %p65 = por %p63, %p64
      %s67 = sadd.s32 %s66, 1
      %p70 = scmp.eq.s32.totalorder %s11, 1
      %p71 = scmp.ne.s32.totalorder %s66, %s68
      %p72 = scmp.eq.s32.totalorder %s11, 0
      %p73 = por %p71, %p72
      %p74 = scmp.ne.s32.totalorder %s66, %s68
      %p75 = scmp.eq.s32.totalorder %s16, 1
      %p76 = por %p74, %p75
      %p77 = scmp.ne.s32.totalorder %s68, %s69
      %p78 = scmp.eq.s32.totalorder %s16, 0
      %p79 = por %p77, %p78
      %p80 = scmp.ne.s32.totalorder %s68, %s69
      %p81 = scmp.eq.s32.totalorder %s17, 1
      %p82 = por %p80, %p81
      %p84 = scmp.ne.s32.totalorder %s69, %s83
      %p85 = scmp.eq.s32.totalorder %s17, 0
      %p86 = por %p84, %p85
      %s87 = ssub.s32 %s11, %s18
      %p88 = scmp.eq.s32.totalorder %s87, 0
      %s90 = sadd.s32 %s89, 1
      %s91 = scalar_select %p88, %s89, %s90
      %p94 = pneg %p88
      %p95 = scmp.eq.s32.totalorder %s11, 1
      %p96 = por %p94, %p95
      %p97 = scmp.ne.s32.totalorder %s89, %s92
      %p98 = scmp.eq.s32.totalorder %s11, 0
      %p99 = por %p97, %p98
      %p100 = scmp.ne.s32.totalorder %s89, %s92
      %p101 = scmp.eq.s32.totalorder %s16, 1
      %p102 = por %p100, %p101
      %p103 = scmp.ne.s32.totalorder %s92, %s93
      %p104 = scmp.eq.s32.totalorder %s16, 0
      %p105 = por %p103, %p104
      %p106 = scmp.ne.s32.totalorder %s92, %s93
      %p107 = scmp.eq.s32.totalorder %s17, 1
      %p108 = por %p106, %p107
      %p110 = scmp.ne.s32.totalorder %s93, %s109
      %p111 = scmp.eq.s32.totalorder %s17, 0
      %p112 = por %p110, %p111
      %s114 = sadd.s32 %s113, 1
      %p117 = scmp.eq.s32.totalorder %s11, 1
      %p118 = scmp.ne.s32.totalorder %s113, %s115
      %p119 = scmp.eq.s32.totalorder %s11, 0
      %p120 = por %p118, %p119
      %p121 = scmp.ne.s32.totalorder %s113, %s115
      %p122 = scmp.eq.s32.totalorder %s16, 1
      %p123 = por %p121, %p122
      %p124 = scmp.ne.s32.totalorder %s115, %s116
      %p125 = scmp.eq.s32.totalorder %s16, 0
      %p126 = por %p124, %p125
      %p127 = scmp.ne.s32.totalorder %s115, %s116
      %p128 = scmp.eq.s32.totalorder %s17, 1
      %p129 = por %p127, %p128
      %p131 = scmp.ne.s32.totalorder %s116, %s130
      %p132 = scmp.eq.s32.totalorder %s17, 0
      %p133 = por %p131, %p132
      %p134 = scmp.le.s32.totalorder 1, %s11
      %p135 = scmp.lt.s32.totalorder %s11, 3
      %p136 = pnand %p134, %p135
      %p137 = pneg %p136
      // Predicated region
      $region9: #{pretraining_forward.5} parent=5 // pred_check
        _
      $region10: #{pretraining_forward.5} parent=5 // pred_check_branch
        %139 = sbr.rel (%p136) target = $region12
      $region11: #{pretraining_forward.5} parent=5 // pred_region
        %s140 = ssub.s32 %s11, 1
        // Predicated region
        $region13: #{pretraining_forward.5} parent=11 // pred_check
          %p141 = pneg %p32
        $region14: #{pretraining_forward.5} parent=11 // pred_check_branch
          %143 = sbr.rel (%p141) target = $region16
        $region15: #{pretraining_forward.5} parent=11 // pred_region
          _
        $region16: #{pretraining_forward.5} parent=11 // pred_fallthru
          _
        // Predicated region
        $region17: #{pretraining_forward.5} parent=11 // pred_check
          %p144 = pneg %p79
        $region18: #{pretraining_forward.5} parent=11 // pred_check_branch
          %146 = sbr.rel (%p144) target = $region20
        $region19: #{pretraining_forward.5} parent=11 // pred_region
          _
        $region20: #{pretraining_forward.5} parent=11 // pred_fallthru
          _
      $region12: #{pretraining_forward.5} parent=5 // pred_fallthru
        _
      %p147 = scmp.lt.s32.totalorder %s11, 2
      // Predicated region
      $region21: #{pretraining_forward.5} parent=5 // pred_check
        %p148 = pneg %p147
      $region22: #{pretraining_forward.5} parent=5 // pred_check_branch
        %150 = sbr.rel (%p148) target = $region24
      $region23: #{pretraining_forward.5} parent=5 // pred_region
        // Predicated region
        $region25: #{pretraining_forward.5} parent=23 // pred_check
          %p151 = pneg %p52
        $region26: #{pretraining_forward.5} parent=23 // pred_check_branch
          %153 = sbr.rel (%p151) target = $region28
        $region27: #{pretraining_forward.5} parent=23 // pred_region
          %s154 = sand.u32 %s42, 1
          %s155 = sand.u32 %s42, 1
          %s156 = smul.addr %s155, 128
          %s157 = scalar_lea.vmem [#allocation5], %s156
          %s158 = smul.u32 2, %s11
          %s159 = smul.addr %s158, 4
          %s160 = scalar_lea.vmem %s1, %s159
          // Predicated region
          $region29: #{pretraining_forward.5} parent=27 // pred_check
            _
          $region30: #{pretraining_forward.5} parent=27 // pred_check_branch
            %162 = sbr.rel (0) target = $region32
          $region31: #{pretraining_forward.5} parent=27 // pred_region
            // Predicated region
            $region33: #{pretraining_forward.5} parent=31 // pred_check
              _
            $region34: #{pretraining_forward.5} parent=31 // pred_check_branch
              %164 = sbr.rel (0) target = $region36
            $region35: #{pretraining_forward.5} parent=31 // pred_region
              // Predicated region
              $region48: #{pretraining_forward.5} parent=35 // pred_check
                _
              $region49: #{pretraining_forward.5} parent=35 // pred_check_branch
                %209 = sbr.rel (0) target = $region51
              $region50: #{pretraining_forward.5} parent=35 // pred_region
                loop: start=0, step=1, limit=1
                $region52: #{pretraining_forward.5} parent=50 // loop_pre_header
                  _
                $region53: #{pretraining_forward.5} parent=50 // loop_header
                  %s211 = sphi 0, %s215
                  %p212 = scmp.ge.s32.totalorder %s211, 1
                  %s216 = sphi %s160, %s160
                  %s217 = sphi %s157, %s157
                $region54: #{pretraining_forward.5} parent=50 // loop_header_branch
                  %214 = sbr.rel (%p212) target = $region58
                $region55: #{pretraining_forward.5} parent=50 // loop_body
                  %v218 = vld [vmem:[%s216] sm:$0xff]
                  %219 = vst [vmem:[%s217] sm:$0xff] %v218
                  %v220 = vld [vmem:[%s216 + $0x10] sm:$0xff]
                  %221 = vst [vmem:[%s217 + $0x8] sm:$0xff] %v220
                  %v222 = vld [vmem:[%s216 + $0x20] sm:$0xff]
                  %223 = vst [vmem:[%s217 + $0x10] sm:$0xff] %v222
                  %v224 = vld [vmem:[%s216 + $0x30] sm:$0xff]
                  %225 = vst [vmem:[%s217 + $0x18] sm:$0xff] %v224
                  %v226 = vld [vmem:[%s216 + $0x40] sm:$0xff]
                  %227 = vst [vmem:[%s217 + $0x20] sm:$0xff] %v226
                  %v228 = vld [vmem:[%s216 + $0x50] sm:$0xff]
                  %229 = vst [vmem:[%s217 + $0x28] sm:$0xff] %v228
                  %v230 = vld [vmem:[%s216 + $0x60] sm:$0xff]
                  %231 = vst [vmem:[%s217 + $0x30] sm:$0xff] %v230
                  %v232 = vld [vmem:[%s216 + $0x70] sm:$0xff]
                  %233 = vst [vmem:[%s217 + $0x38] sm:$0xff] %v232
                  %v234 = vld [vmem:[%s216 + $0x80] sm:$0xff]
                  %235 = vst [vmem:[%s217 + $0x40] sm:$0xff] %v234
                  %v236 = vld [vmem:[%s216 + $0x90] sm:$0xff]
                  %237 = vst [vmem:[%s217 + $0x48] sm:$0xff] %v236
                  %v238 = vld [vmem:[%s216 + $0xa0] sm:$0xff]
                  %239 = vst [vmem:[%s217 + $0x50] sm:$0xff] %v238
                  %v240 = vld [vmem:[%s216 + $0xb0] sm:$0xff]
                  %241 = vst [vmem:[%s217 + $0x58] sm:$0xff] %v240
                  %v242 = vld [vmem:[%s216 + $0xc0] sm:$0xff]
                  %243 = vst [vmem:[%s217 + $0x60] sm:$0xff] %v242
                  %v244 = vld [vmem:[%s216 + $0xd0] sm:$0xff]
                  %245 = vst [vmem:[%s217 + $0x68] sm:$0xff] %v244
                  %v246 = vld [vmem:[%s216 + $0xe0] sm:$0xff]
                  %247 = vst [vmem:[%s217 + $0x70] sm:$0xff] %v246
                  %v248 = vld [vmem:[%s216 + $0xf0] sm:$0xff]
                  %249 = vst [vmem:[%s217 + $0x78] sm:$0xff] %v248
                $region56: #{pretraining_forward.5} parent=50 // loop_footer
                  %s215 = sadd.s32 1, %s211
                $region57: #{pretraining_forward.5} parent=50 // loop_footer_branch
                  %210 = sbr.rel target = $region53
                $region58: #{pretraining_forward.5} parent=50 // loop_exit
                  _
              $region51: #{pretraining_forward.5} parent=35 // pred_fallthru
                _
              // Predicated region
              $region59: #{pretraining_forward.5} parent=35 // pred_check
                _
              $region60: #{pretraining_forward.5} parent=35 // pred_check_branch
                %251 = sbr.rel target = $region62
              $region61: #{pretraining_forward.5} parent=35 // pred_region
                _
              $region62: #{pretraining_forward.5} parent=35 // pred_fallthru
                _
            $region36: #{pretraining_forward.5} parent=31 // pred_fallthru
              _
            // Predicated region
            $region37: #{pretraining_forward.5} parent=31 // pred_check
              _
            $region38: #{pretraining_forward.5} parent=31 // pred_check_branch
              %166 = sbr.rel target = $region40
            $region39: #{pretraining_forward.5} parent=31 // pred_region
              loop: start=0, step=1, limit=1
              $region41: #{pretraining_forward.5} parent=39 // loop_pre_header
                _
              $region42: #{pretraining_forward.5} parent=39 // loop_header
                %s169 = sphi 0, %s173
                %p170 = scmp.ge.s32.totalorder %s169, 1
                %s174 = sphi %s160, %s160
                %s175 = sphi %s157, %s157
              $region43: #{pretraining_forward.5} parent=39 // loop_header_branch
                %172 = sbr.rel (%p170) target = $region47
              $region44: #{pretraining_forward.5} parent=39 // loop_body
                %v176 = vld [vmem:[%s174] sm:$0xff]
                %177 = vst [vmem:[%s175] sm:$0xff] %v176
                %v178 = vld [vmem:[%s174 + $0x10] sm:$0xff]
                %179 = vst [vmem:[%s175 + $0x8] sm:$0xff] %v178
                %v180 = vld [vmem:[%s174 + $0x20] sm:$0xff]
                %181 = vst [vmem:[%s175 + $0x10] sm:$0xff] %v180
                %v182 = vld [vmem:[%s174 + $0x30] sm:$0xff]
                %183 = vst [vmem:[%s175 + $0x18] sm:$0xff] %v182
                %v184 = vld [vmem:[%s174 + $0x40] sm:$0xff]
                %185 = vst [vmem:[%s175 + $0x20] sm:$0xff] %v184
                %v186 = vld [vmem:[%s174 + $0x50] sm:$0xff]
                %187 = vst [vmem:[%s175 + $0x28] sm:$0xff] %v186
                %v188 = vld [vmem:[%s174 + $0x60] sm:$0xff]
                %189 = vst [vmem:[%s175 + $0x30] sm:$0xff] %v188
                %v190 = vld [vmem:[%s174 + $0x70] sm:$0xff]
                %191 = vst [vmem:[%s175 + $0x38] sm:$0xff] %v190
                %v192 = vld [vmem:[%s174 + $0x80] sm:$0xff]
                %193 = vst [vmem:[%s175 + $0x40] sm:$0xff] %v192
                %v194 = vld [vmem:[%s174 + $0x90] sm:$0xff]
                %195 = vst [vmem:[%s175 + $0x48] sm:$0xff] %v194
                %v196 = vld [vmem:[%s174 + $0xa0] sm:$0xff]
                %197 = vst [vmem:[%s175 + $0x50] sm:$0xff] %v196
                %v198 = vld [vmem:[%s174 + $0xb0] sm:$0xff]
                %199 = vst [vmem:[%s175 + $0x58] sm:$0xff] %v198
                %v200 = vld [vmem:[%s174 + $0xc0] sm:$0xff]
                %201 = vst [vmem:[%s175 + $0x60] sm:$0xff] %v200
                %v202 = vld [vmem:[%s174 + $0xd0] sm:$0xff]
                %203 = vst [vmem:[%s175 + $0x68] sm:$0xff] %v202
                %v204 = vld [vmem:[%s174 + $0xe0] sm:$0xff]
                %205 = vst [vmem:[%s175 + $0x70] sm:$0xff] %v204
                %v206 = vld [vmem:[%s174 + $0xf0] sm:$0xff]
                %207 = vst [vmem:[%s175 + $0x78] sm:$0xff] %v206
              $region45: #{pretraining_forward.5} parent=39 // loop_footer
                %s173 = sadd.s32 1, %s169
              $region46: #{pretraining_forward.5} parent=39 // loop_footer_branch
                %168 = sbr.rel target = $region42
              $region47: #{pretraining_forward.5} parent=39 // loop_exit
                _
            $region40: #{pretraining_forward.5} parent=31 // pred_fallthru
              _
          $region32: #{pretraining_forward.5} parent=27 // pred_fallthru
            _
          %252 = vnop
        $region28: #{pretraining_forward.5} parent=23 // pred_fallthru
          _
      $region24: #{pretraining_forward.5} parent=5 // pred_fallthru
        _
      %p253 = scmp.le.s32.totalorder 1, %s11
      %p254 = scmp.lt.s32.totalorder %s11, 3
      %p255 = pnand %p253, %p254
      %p256 = pneg %p255
      // Predicated region
      $region63: #{pretraining_forward.5} parent=5 // pred_check
        _
      $region64: #{pretraining_forward.5} parent=5 // pred_check_branch
        %258 = sbr.rel (%p255) target = $region66
      $region65: #{pretraining_forward.5} parent=5 // pred_region
        %s259 = ssub.s32 %s11, 1
        %s260 = sand.u32 %s45, 1
        %s261 = sand.u32 %s45, 1
        %s262 = smul.addr %s261, 128
        %s263 = scalar_lea.vmem [#allocation5], %s262
        // Predicated region
        $region67: #{pretraining_forward.5} parent=65 // pred_check
          %p264 = pneg %p58
        $region68: #{pretraining_forward.5} parent=65 // pred_check_branch
          %266 = sbr.rel (%p264) target = $region70
        $region69: #{pretraining_forward.5} parent=65 // pred_region
          _
        $region70: #{pretraining_forward.5} parent=65 // pred_fallthru
          _
        %p267 = pneg %p32
        %p268 = pneg %p29
        %s269 = sand.u32 %s45, 1
        %s270 = sand.u32 %s45, 1
        %s271 = smul.addr %s270, 128
        %s272 = scalar_lea.vmem [#allocation5], %s271
        %p273 = pneg %p58
        %p274 = pneg %p55
        %p275 = pneg %p79
        %p276 = pneg %p76
        %p277 = pneg %p105
        %p278 = pneg %p102
        %s279 = smul.u32 2, %s16
        %p280 = scmp.lt.s32.totalorder %s279, 3
        %s281 = scalar_select %p280, %s279, 3
        %s282 = smul.addr %s281, 8
        %s283 = scalar_lea.vmem %s3, %s282
        %p284 = pneg %p126
        %p285 = pneg %p123
        %s286 = smul.u32 2, %s16
        %s287 = smul.u32 2, %s16
        %p288 = scmp.lt.s32.totalorder %s287, 3
        %s289 = scalar_select %p288, %s287, 3
        %s290 = smul.addr %s289, 8
        %s291 = scalar_lea.vmem %s3, %s290
        %s292 = smul.u32 2, %s16
        %p294 = scmp.eq.s32.totalorder %s16, 0
        // Predicated region
        $region71: #{pretraining_forward.5} parent=65 // pred_check
          %p295 = pneg %p294
        $region72: #{pretraining_forward.5} parent=65 // pred_check_branch
          %297 = sbr.rel (%p295) target = $region74
        $region73: #{pretraining_forward.5} parent=65 // pred_region
          %vm298 = vcmask 7168
          %299 = vst.msk [vmem:[#allocation2] sm:$0xff] %vm298, -inf
          %300 = vst.msk [vmem:[#allocation3] sm:$0xff] %vm298, 0.0
          %301 = vst.msk [vmem:[#allocation4] sm:$0xff] %vm298, 0.0
        $region74: #{pretraining_forward.5} parent=65 // pred_fallthru
          _
        %v302 = vld [vmem:[%s0] sm:$0xff]
        %v303 = vpack.c.bf16 %v302, %v302
        %v304 = vld [vmem:[%s263] sm:$0xff]
        %v305 = vld [vmem:[%s263 + $0x8] sm:$0xff]
        %v306 = vld [vmem:[%s263 + $0x10] sm:$0xff]
        %v307 = vld [vmem:[%s263 + $0x18] sm:$0xff]
        %v308 = vld [vmem:[%s263 + $0x20] sm:$0xff]
        %v309 = vld [vmem:[%s263 + $0x28] sm:$0xff]
        %v310 = vld [vmem:[%s263 + $0x30] sm:$0xff]
        %v311 = vld [vmem:[%s263 + $0x38] sm:$0xff]
        %v312 = vld [vmem:[%s263 + $0x40] sm:$0xff]
        %v313 = vld [vmem:[%s263 + $0x48] sm:$0xff]
        %v314 = vld [vmem:[%s263 + $0x50] sm:$0xff]
        %v315 = vld [vmem:[%s263 + $0x58] sm:$0xff]
        %v316 = vld [vmem:[%s263 + $0x60] sm:$0xff]
        %v317 = vld [vmem:[%s263 + $0x68] sm:$0xff]
        %v318 = vld [vmem:[%s263 + $0x70] sm:$0xff]
        %v319 = vld [vmem:[%s263 + $0x78] sm:$0xff]
        %v336 = vunpack.c.l.b16 %v304
        %v337 = vunpack.c.h.b16 %v304
        %v338 = vunpack.c.l.b16 %v305
        %v339 = vunpack.c.h.b16 %v305
        %v340 = vunpack.c.l.b16 %v306
        %v341 = vunpack.c.h.b16 %v306
        %v342 = vunpack.c.l.b16 %v307
        %v343 = vunpack.c.h.b16 %v307
        %v344 = vunpack.c.l.b16 %v308
        %v345 = vunpack.c.h.b16 %v308
        %v346 = vunpack.c.l.b16 %v309
        %v347 = vunpack.c.h.b16 %v309
        %v348 = vunpack.c.l.b16 %v310
        %v349 = vunpack.c.h.b16 %v310
        %v350 = vunpack.c.l.b16 %v311
        %v351 = vunpack.c.h.b16 %v311
        %v352 = vunpack.c.l.b16 %v312
        %v353 = vunpack.c.h.b16 %v312
        %v354 = vunpack.c.l.b16 %v313
        %v355 = vunpack.c.h.b16 %v313
        %v356 = vunpack.c.l.b16 %v314
        %v357 = vunpack.c.h.b16 %v314
        %v358 = vunpack.c.l.b16 %v315
        %v359 = vunpack.c.h.b16 %v315
        %v360 = vunpack.c.l.b16 %v316
        %v361 = vunpack.c.h.b16 %v316
        %v362 = vunpack.c.l.b16 %v317
        %v363 = vunpack.c.h.b16 %v317
        %v364 = vunpack.c.l.b16 %v318
        %v365 = vunpack.c.h.b16 %v318
        %v366 = vunpack.c.l.b16 %v319
        %v367 = vunpack.c.h.b16 %v319
        %v368 = vpack.c.b16 %v338, %v336
        %v369 = vpack.c.b16 %v339, %v337
        %v370 = vpack.c.b16 %v342, %v340
        %v371 = vpack.c.b16 %v343, %v341
        %v372 = vpack.c.b16 %v346, %v344
        %v373 = vpack.c.b16 %v347, %v345
        %v374 = vpack.c.b16 %v350, %v348
        %v375 = vpack.c.b16 %v351, %v349
        %v376 = vpack.c.b16 %v354, %v352
        %v377 = vpack.c.b16 %v355, %v353
        %v378 = vpack.c.b16 %v358, %v356
        %v379 = vpack.c.b16 %v359, %v357
        %v380 = vpack.c.b16 %v362, %v360
        %v381 = vpack.c.b16 %v363, %v361
        %v382 = vpack.c.b16 %v366, %v364
        %v383 = vpack.c.b16 %v367, %v365
        %400 = vmatprep.subr.bf16.mxu0 %v369
        %401 = vmatpush1.bf16.msra.mxu0 %v368
        %402 = vmatprep.subr.bf16.mxu0 %v371
        %403 = vmatpush1.bf16.msra.mxu0 %v370
        %404 = vmatprep.subr.bf16.mxu0 %v373
        %405 = vmatpush1.bf16.msra.mxu0 %v372
        %406 = vmatprep.subr.bf16.mxu0 %v375
        %407 = vmatpush1.bf16.msra.mxu0 %v374
        %408 = vmatprep.subr.bf16.mxu0 %v377
        %409 = vmatpush1.bf16.msra.mxu0 %v376
        %410 = vmatprep.subr.bf16.mxu0 %v379
        %411 = vmatpush1.bf16.msra.mxu0 %v378
        %412 = vmatprep.subr.bf16.mxu0 %v381
        %413 = vmatpush1.bf16.msra.mxu0 %v380
        %414 = vmatprep.subr.bf16.mxu0 %v383
        %415 = vmatpush1.bf16.msra.mxu0 %v382
        %416 = vmatprep.subr.bf16.mxu0 0
        %417 = vmatpush1.bf16.msra.mxu0 0
        %418 = vmatprep.subr.bf16.mxu0 0
        %419 = vmatpush1.bf16.msra.mxu0 0
        %420 = vmatprep.subr.bf16.mxu0 0
        %421 = vmatpush1.bf16.msra.mxu0 0
        %422 = vmatprep.subr.bf16.mxu0 0
        %423 = vmatpush1.bf16.msra.mxu0 0
        %424 = vmatprep.subr.bf16.mxu0 0
        %425 = vmatpush1.bf16.msra.mxu0 0
        %426 = vmatprep.subr.bf16.mxu0 0
        %427 = vmatpush1.bf16.msra.mxu0 0
        %428 = vmatprep.subr.bf16.mxu0 0
        %429 = vmatpush1.bf16.msra.mxu0 0
        %430 = vmatprep.subr.bf16.mxu0 0
        %431 = vmatpush1.bf16.msra.mxu0 0
        %432 = vmatprep.mubr.bf16.mxu0 0
        %433 = vmatmul.mubr.bf16.gmra.mrb[0].mxu0 %v303
        %v434 = vpop.f32.mrb[0].mxu0
        %v435 = vadd.f32 0.0, %v434
        %v436 = vpop.f32.mrb[0].mxu0
        %v437 = vadd.f32 0.0, %v436
        %v438 = vpop.f32.mrb[0].mxu0
        %v439 = vpop.f32.mrb[0].mxu0
        %440 = vdwg.mxu0
        %441 = vst [vmem:[%s291] sm:$0xff] %v435
        %442 = vst [vmem:[%s291 + $0x8] sm:$0xff] %v437
        %s443 = smul.u32 %s16, 256
        %v444 = vlaneseq
        %v445 = vand.u32 %v444, 127
        %v446 = vadd.s32 %v445, 128
        %v447 = vstv %s443
        %v448 = vadd.s32 %v447, %v445
        %v449 = vadd.s32 %v447, %v446
        %v450 = vld [vmem:[%s2] sm:$0xff]
        %451 = vset.pattern.permute.xlu0 0
        %452 = vperm.xlu0 %451, %v450
        %v453 = vpop.permute.xlu0 %452
        %vm454 = vcmp.eq.s32.totalorder %v448, %v453
        %vm455 = vcmp.eq.s32.totalorder %v449, %v453
        %v456 = vsel %vm454, 1, 0
        %v457 = vsel %vm455, 1, 0
        %v458 = vcvt.s32.f32 %v456
        %v459 = vcvt.s32.f32 %v457
        %v460 = vld [vmem:[#allocation4] sm:$0xff]
        %v461 = vmul.f32 %v435, %v458
        %v462 = vmul.f32 %v437, %v459
        %v463 = vadd.f32 %v461, %v462
        %464 = vadd.xlane.f32.xlu0 %v463
        %v465 = vpop.xlane.xlu0 %464
        %v466 = vadd.f32 %v460, %v465
        %vm467 = vcmask 7168
        %468 = vst.msk [vmem:[#allocation4] sm:$0xff] %vm467, %v466
        %v469 = vld [vmem:[#allocation2] sm:$0xff]
        %v470 = vmax.f32 %v435, %v437
        %471 = vmax.xlane.f32.xlu0 %v470
        %v472 = vpop.xlane.xlu0 %471
        %v473 = vmax.f32 %v469, %v472
        %v474 = vld [vmem:[#allocation3] sm:$0xff]
        %v475 = vsub.f32 %v469, %v473
        %v476 = vmul.f32 %v475, 1.442695
        %v477 = vpow.pop %v476
        %v478 = vmul.f32 %v474, %v477
        %480 = vset.pattern.permute.xlu0 0
        %481 = vperm.xlu0 %480, %v473
        %v482 = vpop.permute.xlu0 %481
        %v484 = vsub.f32 %v435, %v482
        %v485 = vsub.f32 %v437, %v482
        %v486 = vmul.f32 %v484, 1.442695
        %v487 = vpow.pop %v486
        %v488 = vmul.f32 %v485, 1.442695
        %v489 = vpow.pop %v488
        %v490 = vadd.f32 %v487, %v489
        %491 = vadd.xlane.f32.xlu0 %v490
        %v492 = vpop.xlane.xlu0 %491
        %v493 = vadd.f32 %v478, %v492
        %494 = vst.msk [vmem:[#allocation3] sm:$0xff] %vm467, %v493
        %495 = vst.msk [vmem:[#allocation2] sm:$0xff] %vm467, %v473
        %p496 = scmp.eq.s32.totalorder %s16, 1
        // Predicated region
        $region75: #{pretraining_forward.5} parent=65 // pred_check
          %p497 = pneg %p496
        $region76: #{pretraining_forward.5} parent=65 // pred_check_branch
          %499 = sbr.rel (%p497) target = $region78
        $region77: #{pretraining_forward.5} parent=65 // pred_region
          %v500 = vld [vmem:[#allocation2] sm:$0xff]
          %v501 = vld [vmem:[#allocation3] sm:$0xff]
          %v502 = vlog2.pop %v501
          %v503 = vmul.f32 %v502, 0.6931472
          %v504 = vadd.f32 %v500, %v503
          %v505 = vld [vmem:[#allocation4] sm:$0xff]
          %v506 = vsub.f32 %v504, %v505
          %507 = vst.msk [vmem:[%s4] sm:$0xff] %vm467, %v506
        $region78: #{pretraining_forward.5} parent=65 // pred_fallthru
          _
        %s508 = smul.u32 2, %s16
        %p509 = scmp.lt.s32.totalorder %s508, 3
        %s510 = scalar_select %p509, %s508, 3
        %s511 = smul.addr %s510, 8
        %s512 = scalar_lea.vmem %s3, %s511
        // Predicated region
        $region79: #{pretraining_forward.5} parent=65 // pred_check
          %p513 = pneg %p102
        $region80: #{pretraining_forward.5} parent=65 // pred_check_branch
          %515 = sbr.rel (%p513) target = $region82
        $region81: #{pretraining_forward.5} parent=65 // pred_region
          %s516 = smul.u32 2, %s16
        $region82: #{pretraining_forward.5} parent=65 // pred_fallthru
          _
        // Predicated region
        $region83: #{pretraining_forward.5} parent=65 // pred_check
          %p517 = pneg %p123
        $region84: #{pretraining_forward.5} parent=65 // pred_check_branch
          %519 = sbr.rel (%p517) target = $region86
        $region85: #{pretraining_forward.5} parent=65 // pred_region
          _
        $region86: #{pretraining_forward.5} parent=65 // pred_fallthru
          _
        // Predicated region
        $region87: #{pretraining_forward.5} parent=65 // pred_check
          %p520 = pneg %p123
        $region88: #{pretraining_forward.5} parent=65 // pred_check_branch
          %522 = sbr.rel (%p520) target = $region90
        $region89: #{pretraining_forward.5} parent=65 // pred_region
          _
        $region90: #{pretraining_forward.5} parent=65 // pred_fallthru
          _
      $region66: #{pretraining_forward.5} parent=5 // pred_fallthru
        _
      %p523 = scmp.le.s32.totalorder 2, %s11
      // Predicated region
      $region91: #{pretraining_forward.5} parent=5 // pred_check
        %p524 = pneg %p523
      $region92: #{pretraining_forward.5} parent=5 // pred_check_branch
        %526 = sbr.rel (%p524) target = $region94
      $region93: #{pretraining_forward.5} parent=5 // pred_region
        %s527 = ssub.s32 %s11, 2
        // Predicated region
        $region95: #{pretraining_forward.5} parent=93 // pred_check
          %p528 = pneg %p108
        $region96: #{pretraining_forward.5} parent=93 // pred_check_branch
          %530 = sbr.rel (%p528) target = $region98
        $region97: #{pretraining_forward.5} parent=93 // pred_region
          %s531 = smul.u32 2, %s17
          %p532 = scmp.lt.s32.totalorder %s531, 3
          %s533 = scalar_select %p532, %s531, 3
          %s534 = smul.addr %s533, 8
          %s535 = scalar_lea.vmem %s3, %s534
        $region98: #{pretraining_forward.5} parent=93 // pred_fallthru
          _
      $region94: #{pretraining_forward.5} parent=5 // pred_fallthru
        _
    $region6: #{pretraining_forward.5} parent=1 // loop_footer
      %s15 = sadd.s32 1, %s11
    $region7: #{pretraining_forward.5} parent=1 // loop_footer_branch
      %10 = sbr.rel target = $region3
    $region8: #{pretraining_forward.5} parent=1 // loop_exit
      _

// kernel: pretraining_forward.4
$region0: #{pretraining_forward.4}
  #allocation0 [shape = 'u32[]', space=smem, size = 0x4, offset = 0x4, fixed_abs, tag = 'smem constant byte address 0x4 - core index']
  #allocation1 [shape = 'u32[144,128]{1,0:T(1,128)}', space=vmem, size = 0x12000, scoped, tag = 'internal scratch']
  %s0 = inlined_call_operand.vmem [shape: f32[32,128], index: 0, kind: input, shape index: {}]
  %s1 = inlined_call_operand.vmem [shape: bf16[128,384], index: 1, kind: input, shape index: {}]
  %s2 = inlined_call_operand.vmem [shape: f32[1,384], index: 2, kind: input, shape index: {}]
  %s3 = inlined_call_operand.vmem [shape: bf16[128,128], index: 3, kind: input, shape index: {}]
  %s4 = inlined_call_operand.vmem [shape: f32[1,128], index: 4, kind: input, shape index: {}]
  %s5 = inlined_call_operand.vmem [shape: f32[1,128], index: 5, kind: input, shape index: {}]
  %s6 = inlined_call_operand.vmem [shape: f32[1,128], index: 6, kind: input, shape index: {}]
  %s7 = inlined_call_operand.vmem [shape: bf16[128,256], index: 7, kind: input, shape index: {}]
  %s8 = inlined_call_operand.vmem [shape: f32[1,256], index: 8, kind: input, shape index: {}]
  %s9 = inlined_call_operand.vmem [shape: bf16[256,128], index: 9, kind: input, shape index: {}]
  %s10 = inlined_call_operand.vmem [shape: f32[1,128], index: 10, kind: input, shape index: {}]
  %s11 = inlined_call_operand.vmem [shape: f32[1,128], index: 11, kind: input, shape index: {}]
  %s12 = inlined_call_operand.vmem [shape: f32[1,128], index: 12, kind: input, shape index: {}]
  %s13 = inlined_call_operand.vmem [shape: f32[32,128], index: 13, kind: output, shape index: {}]
  %s14 = sld [smem:[#allocation0]]
  $region62: #{pretraining_forward.4} parent=0
    _
  %s16 = ssub.s32 1, %s14
  %s17 = scalar_select 0, %s16, %s14
  // Predicated region
  $region2: #{pretraining_forward.4} parent=0 // pred_check
    _
  $region3: #{pretraining_forward.4} parent=0 // pred_check_branch
    %19 = sbr.rel (0) target = $region5
  $region4: #{pretraining_forward.4} parent=0 // pred_region
    _
  $region5: #{pretraining_forward.4} parent=0 // pred_fallthru
    _
  // Predicated region
  $region6: #{pretraining_forward.4} parent=0 // pred_check
    _
  $region7: #{pretraining_forward.4} parent=0 // pred_check_branch
    %21 = sbr.rel (0) target = $region9
  $region8: #{pretraining_forward.4} parent=0 // pred_region
    _
  $region9: #{pretraining_forward.4} parent=0 // pred_fallthru
    _
  // Predicated region
  $region10: #{pretraining_forward.4} parent=0 // pred_check
    _
  $region11: #{pretraining_forward.4} parent=0 // pred_check_branch
    %23 = sbr.rel (0) target = $region13
  $region12: #{pretraining_forward.4} parent=0 // pred_region
    _
  $region13: #{pretraining_forward.4} parent=0 // pred_fallthru
    _
  // Predicated region
  $region14: #{pretraining_forward.4} parent=0 // pred_check
    _
  $region15: #{pretraining_forward.4} parent=0 // pred_check_branch
    %25 = sbr.rel (0) target = $region17
  $region16: #{pretraining_forward.4} parent=0 // pred_region
    _
  $region17: #{pretraining_forward.4} parent=0 // pred_fallthru
    _
  // Predicated region
  $region18: #{pretraining_forward.4} parent=0 // pred_check
    _
  $region19: #{pretraining_forward.4} parent=0 // pred_check_branch
    %27 = sbr.rel (0) target = $region21
  $region20: #{pretraining_forward.4} parent=0 // pred_region
    _
  $region21: #{pretraining_forward.4} parent=0 // pred_fallthru
    _
  // Predicated region
  $region22: #{pretraining_forward.4} parent=0 // pred_check
    _
  $region23: #{pretraining_forward.4} parent=0 // pred_check_branch
    %29 = sbr.rel (0) target = $region25
  $region24: #{pretraining_forward.4} parent=0 // pred_region
    _
  $region25: #{pretraining_forward.4} parent=0 // pred_fallthru
    _
  // Predicated region
  $region26: #{pretraining_forward.4} parent=0 // pred_check
    _
  $region27: #{pretraining_forward.4} parent=0 // pred_check_branch
    %31 = sbr.rel (0) target = $region29
  $region28: #{pretraining_forward.4} parent=0 // pred_region
    _
  $region29: #{pretraining_forward.4} parent=0 // pred_fallthru
    _
  // Predicated region
  $region30: #{pretraining_forward.4} parent=0 // pred_check
    _
  $region31: #{pretraining_forward.4} parent=0 // pred_check_branch
    %33 = sbr.rel (0) target = $region33
  $region32: #{pretraining_forward.4} parent=0 // pred_region
    _
  $region33: #{pretraining_forward.4} parent=0 // pred_fallthru
    _
  // Predicated region
  $region34: #{pretraining_forward.4} parent=0 // pred_check
    _
  $region35: #{pretraining_forward.4} parent=0 // pred_check_branch
    %35 = sbr.rel (0) target = $region37
  $region36: #{pretraining_forward.4} parent=0 // pred_region
    _
  $region37: #{pretraining_forward.4} parent=0 // pred_fallthru
    _
  // Predicated region
  $region38: #{pretraining_forward.4} parent=0 // pred_check
    _
  $region39: #{pretraining_forward.4} parent=0 // pred_check_branch
    %37 = sbr.rel (0) target = $region41
  $region40: #{pretraining_forward.4} parent=0 // pred_region
    _
  $region41: #{pretraining_forward.4} parent=0 // pred_fallthru
    _
  // Predicated region
  $region42: #{pretraining_forward.4} parent=0 // pred_check
    _
  $region43: #{pretraining_forward.4} parent=0 // pred_check_branch
    %39 = sbr.rel (0) target = $region45
  $region44: #{pretraining_forward.4} parent=0 // pred_region
    _
  $region45: #{pretraining_forward.4} parent=0 // pred_fallthru
    _
  // Predicated region
  $region46: #{pretraining_forward.4} parent=0 // pred_check
    _
  $region47: #{pretraining_forward.4} parent=0 // pred_check_branch
    %41 = sbr.rel (0) target = $region49
  $region48: #{pretraining_forward.4} parent=0 // pred_region
    _
  $region49: #{pretraining_forward.4} parent=0 // pred_fallthru
    _
  // Predicated region
  $region50: #{pretraining_forward.4} parent=0 // pred_check
    _
  $region51: #{pretraining_forward.4} parent=0 // pred_check_branch
    %43 = sbr.rel (0) target = $region53
  $region52: #{pretraining_forward.4} parent=0 // pred_region
    _
  $region53: #{pretraining_forward.4} parent=0 // pred_fallthru
    _
  %v45 = vld [vmem:[%s0] sm:$0xff]
  %v46 = vld [vmem:[%s0 + $0x8] sm:$0xff]
  %v47 = vld [vmem:[%s0 + $0x10] sm:$0xff]
  %v48 = vld [vmem:[%s0 + $0x18] sm:$0xff]
  %v49 = vpack.c.bf16 %v46, %v45
  %v50 = vpack.c.bf16 %v48, %v47
  %v51 = vld [vmem:[%s1] sm:$0xff]
  %v52 = vld [vmem:[%s1 + $0x8] sm:$0xf]
  %v53 = vld [vmem:[%s1 + $0xc] sm:$0xff]
  %v54 = vld [vmem:[%s1 + $0x14] sm:$0xf]
  %v55 = vld [vmem:[%s1 + $0x18] sm:$0xff]
  %v56 = vld [vmem:[%s1 + $0x20] sm:$0xf]
  %v57 = vld [vmem:[%s1 + $0x24] sm:$0xff]
  %v58 = vld [vmem:[%s1 + $0x2c] sm:$0xf]
  %v59 = vld [vmem:[%s1 + $0x30] sm:$0xff]
  %v60 = vld [vmem:[%s1 + $0x38] sm:$0xf]
  %v61 = vld [vmem:[%s1 + $0x3c] sm:$0xff]
  %v62 = vld [vmem:[%s1 + $0x44] sm:$0xf]
  %v63 = vld [vmem:[%s1 + $0x48] sm:$0xff]
  %v64 = vld [vmem:[%s1 + $0x50] sm:$0xf]
  %v65 = vld [vmem:[%s1 + $0x54] sm:$0xff]
  %v66 = vld [vmem:[%s1 + $0x5c] sm:$0xf]
  %v67 = vld [vmem:[%s1 + $0x60] sm:$0xff]
  %v68 = vld [vmem:[%s1 + $0x68] sm:$0xf]
  %v69 = vld [vmem:[%s1 + $0x6c] sm:$0xff]
  %v70 = vld [vmem:[%s1 + $0x74] sm:$0xf]
  %v71 = vld [vmem:[%s1 + $0x78] sm:$0xff]
  %v72 = vld [vmem:[%s1 + $0x80] sm:$0xf]
  %v73 = vld [vmem:[%s1 + $0x84] sm:$0xff]
  %v74 = vld [vmem:[%s1 + $0x8c] sm:$0xf]
  %v75 = vld [vmem:[%s1 + $0x90] sm:$0xff]
  %v76 = vld [vmem:[%s1 + $0x98] sm:$0xf]
  %v77 = vld [vmem:[%s1 + $0x9c] sm:$0xff]
  %v78 = vld [vmem:[%s1 + $0xa4] sm:$0xf]
  %v79 = vld [vmem:[%s1 + $0xa8] sm:$0xff]
  %v80 = vld [vmem:[%s1 + $0xb0] sm:$0xf]
  %v81 = vld [vmem:[%s1 + $0xb4] sm:$0xff]
  %v82 = vld [vmem:[%s1 + $0xbc] sm:$0xf]
  %v83 = vld [vmem:[%s2] sm:$0x7]
  %v85 = vlaneseq
  %v86 = vshrl.u32 %v85, 7
  %v87 = vsub.s32 0, %v86
  %v88 = vrot.slane %v83, %v87
  %v89 = vlaneseq
  %v90 = vshrl.u32 %v89, 7
  %v91 = vsub.s32 1, %v90
  %v92 = vrot.slane %v83, %v91
  %v93 = vlaneseq
  %v94 = vshrl.u32 %v93, 7
  %v95 = vsub.s32 2, %v94
  %v96 = vrot.slane %v83, %v95
  %v132 = vunpack.c.l.b16 %v51
  %v133 = vunpack.c.h.b16 %v51
  %v134 = vunpack.c.l.b16 %v52
  %v135 = vunpack.c.l.b16 %v53
  %v136 = vunpack.c.h.b16 %v53
  %v137 = vunpack.c.l.b16 %v54
  %v138 = vunpack.c.l.b16 %v55
  %v139 = vunpack.c.h.b16 %v55
  %v140 = vunpack.c.l.b16 %v56
  %v141 = vunpack.c.l.b16 %v57
  %v142 = vunpack.c.h.b16 %v57
  %v143 = vunpack.c.l.b16 %v58
  %v144 = vunpack.c.l.b16 %v59
  %v145 = vunpack.c.h.b16 %v59
  %v146 = vunpack.c.l.b16 %v60
  %v147 = vunpack.c.l.b16 %v61
  %v148 = vunpack.c.h.b16 %v61
  %v149 = vunpack.c.l.b16 %v62
  %v150 = vunpack.c.l.b16 %v63
  %v151 = vunpack.c.h.b16 %v63
  %v152 = vunpack.c.l.b16 %v64
  %v153 = vunpack.c.l.b16 %v65
  %v154 = vunpack.c.h.b16 %v65
  %v155 = vunpack.c.l.b16 %v66
  %v156 = vunpack.c.l.b16 %v67
  %v157 = vunpack.c.h.b16 %v67
  %v158 = vunpack.c.l.b16 %v68
  %v159 = vunpack.c.l.b16 %v69
  %v160 = vunpack.c.h.b16 %v69
  %v161 = vunpack.c.l.b16 %v70
  %v162 = vunpack.c.l.b16 %v71
  %v163 = vunpack.c.h.b16 %v71
  %v164 = vunpack.c.l.b16 %v72
  %v165 = vunpack.c.l.b16 %v73
  %v166 = vunpack.c.h.b16 %v73
  %v167 = vunpack.c.l.b16 %v74
  %v168 = vunpack.c.l.b16 %v75
  %v169 = vunpack.c.h.b16 %v75
  %v170 = vunpack.c.l.b16 %v76
  %v171 = vunpack.c.l.b16 %v77
  %v172 = vunpack.c.h.b16 %v77
  %v173 = vunpack.c.l.b16 %v78
  %v174 = vunpack.c.l.b16 %v79
  %v175 = vunpack.c.h.b16 %v79
  %v176 = vunpack.c.l.b16 %v80
  %v177 = vunpack.c.l.b16 %v81
  %v178 = vunpack.c.h.b16 %v81
  %v179 = vunpack.c.l.b16 %v82
  %v180 = vpack.c.b16 %v135, %v132
  %v181 = vpack.c.b16 %v136, %v133
  %v182 = vpack.c.b16 %v137, %v134
  %v183 = vpack.c.b16 %v141, %v138
  %v184 = vpack.c.b16 %v142, %v139
  %v185 = vpack.c.b16 %v143, %v140
  %v186 = vpack.c.b16 %v147, %v144
  %v187 = vpack.c.b16 %v148, %v145
  %v188 = vpack.c.b16 %v149, %v146
  %v189 = vpack.c.b16 %v153, %v150
  %v190 = vpack.c.b16 %v154, %v151
  %v191 = vpack.c.b16 %v155, %v152
  %v192 = vpack.c.b16 %v159, %v156
  %v193 = vpack.c.b16 %v160, %v157
  %v194 = vpack.c.b16 %v161, %v158
  %v195 = vpack.c.b16 %v165, %v162
  %v196 = vpack.c.b16 %v166, %v163
  %v197 = vpack.c.b16 %v167, %v164
  %v198 = vpack.c.b16 %v171, %v168
  %v199 = vpack.c.b16 %v172, %v169
  %v200 = vpack.c.b16 %v173, %v170
  %v201 = vpack.c.b16 %v177, %v174
  %v202 = vpack.c.b16 %v178, %v175
  %v203 = vpack.c.b16 %v179, %v176
  %228 = vmatprep.subr.bf16.mxu0 %v181
  %229 = vmatpush1.bf16.msra.mxu0 %v180
  %230 = vmatprep.subr.bf16.mxu0 %v184
  %231 = vmatpush1.bf16.msra.mxu0 %v183
  %232 = vmatprep.subr.bf16.mxu0 %v187
  %233 = vmatpush1.bf16.msra.mxu0 %v186
  %234 = vmatprep.subr.bf16.mxu0 %v190
  %235 = vmatpush1.bf16.msra.mxu0 %v189
  %236 = vmatprep.subr.bf16.mxu0 %v193
  %237 = vmatpush1.bf16.msra.mxu0 %v192
  %238 = vmatprep.subr.bf16.mxu0 %v196
  %239 = vmatpush1.bf16.msra.mxu0 %v195
  %240 = vmatprep.subr.bf16.mxu0 %v199
  %241 = vmatpush1.bf16.msra.mxu0 %v198
  %242 = vmatprep.subr.bf16.mxu0 %v202
  %243 = vmatpush1.bf16.msra.mxu0 %v201
  %244 = vmatprep.subr.bf16.mxu0 0
  %245 = vmatpush1.bf16.msra.mxu0 0
  %246 = vmatprep.subr.bf16.mxu0 0
  %247 = vmatpush1.bf16.msra.mxu0 0
  %248 = vmatprep.subr.bf16.mxu0 0
  %249 = vmatpush1.bf16.msra.mxu0 0
  %250 = vmatprep.subr.bf16.mxu0 0
  %251 = vmatpush1.bf16.msra.mxu0 0
  %252 = vmatprep.subr.bf16.mxu0 0
  %253 = vmatpush1.bf16.msra.mxu0 0
  %254 = vmatprep.subr.bf16.mxu0 0
  %255 = vmatpush1.bf16.msra.mxu0 0
  %256 = vmatprep.subr.bf16.mxu0 0
  %257 = vmatpush1.bf16.msra.mxu0 0
  %258 = vmatprep.subr.bf16.mxu0 0
  %259 = vmatpush1.bf16.msra.mxu0 0
  %260 = vmatprep.mubr.bf16.mxu0 0
  %261 = vmatmul.mubr.bf16.gmra.mrb[0].mxu0 %v49
  %v262 = vpop.f32.mrb[0].mxu0
  %v263 = vadd.f32 %v88, %v262
  %v264 = vpop.f32.mrb[0].mxu0
  %v265 = vadd.f32 %v92, %v264
  %v266 = vpop.f32.mrb[0].mxu0
  %v267 = vadd.f32 %v88, %v266
  %v268 = vpop.f32.mrb[0].mxu0
  %v269 = vadd.f32 %v92, %v268
  %270 = vmatprep.mubr.bf16.mxu0 0
  %271 = vmatmul.mubr.bf16.gmra.mrb[0].mxu0 %v50
  %v272 = vpop.f32.mrb[0].mxu0
  %v273 = vadd.f32 %v88, %v272
  %v274 = vpop.f32.mrb[0].mxu0
  %v275 = vadd.f32 %v92, %v274
  %v276 = vpop.f32.mrb[0].mxu0
  %v277 = vadd.f32 %v88, %v276
  %v278 = vpop.f32.mrb[0].mxu0
  %v279 = vadd.f32 %v92, %v278
  %280 = vdwg.mxu0
  %281 = vmatprep.subr.bf16.mxu0 0
  %282 = vmatpush1.bf16.msra.mxu0 %v182
  %283 = vmatprep.subr.bf16.mxu0 0
  %284 = vmatpush1.bf16.msra.mxu0 %v185
  %285 = vmatprep.subr.bf16.mxu0 0
  %286 = vmatpush1.bf16.msra.mxu0 %v188
  %287 = vmatprep.subr.bf16.mxu0 0
  %288 = vmatpush1.bf16.msra.mxu0 %v191
  %289 = vmatprep.subr.bf16.mxu0 0
  %290 = vmatpush1.bf16.msra.mxu0 %v194
  %291 = vmatprep.subr.bf16.mxu0 0
  %292 = vmatpush1.bf16.msra.mxu0 %v197
  %293 = vmatprep.subr.bf16.mxu0 0
  %294 = vmatpush1.bf16.msra.mxu0 %v200
  %295 = vmatprep.subr.bf16.mxu0 0
  %296 = vmatpush1.bf16.msra.mxu0 %v203
  %297 = vmatprep.subr.bf16.mxu0 0
  %298 = vmatpush1.bf16.msra.mxu0 0
  %299 = vmatprep.subr.bf16.mxu0 0
  %300 = vmatpush1.bf16.msra.mxu0 0
  %301 = vmatprep.subr.bf16.mxu0 0
  %302 = vmatpush1.bf16.msra.mxu0 0
  %303 = vmatprep.subr.bf16.mxu0 0
  %304 = vmatpush1.bf16.msra.mxu0 0
  %305 = vmatprep.subr.bf16.mxu0 0
  %306 = vmatpush1.bf16.msra.mxu0 0
  %307 = vmatprep.subr.bf16.mxu0 0
  %308 = vmatpush1.bf16.msra.mxu0 0
  %309 = vmatprep.subr.bf16.mxu0 0
  %310 = vmatpush1.bf16.msra.mxu0 0
  %311 = vmatprep.subr.bf16.mxu0 0
  %312 = vmatpush1.bf16.msra.mxu0 0
  %313 = vmatprep.mubr.bf16.mxu0 0
  %314 = vmatmul.mubr.bf16.gmra.mrb[0].mxu0 %v49
  %v315 = vpop.f32.mrb[0].mxu0
  %v316 = vadd.f32 %v96, %v315
  %v317 = vpop.f32.mrb[0].mxu0
  %v318 = vpop.f32.mrb[0].mxu0
  %v319 = vadd.f32 %v96, %v318
  %v320 = vpop.f32.mrb[0].mxu0
  %321 = vmatprep.mubr.bf16.mxu0 0
  %322 = vmatmul.mubr.bf16.gmra.mrb[0].mxu0 %v50
  %v323 = vpop.f32.mrb[0].mxu0
  %v324 = vadd.f32 %v96, %v323
  %v325 = vpop.f32.mrb[0].mxu0
  %v326 = vpop.f32.mrb[0].mxu0
  %v327 = vadd.f32 %v96, %v326
  %v328 = vpop.f32.mrb[0].mxu0
  %329 = vdwg.mxu0
  %v330 = vpack.c.bf16 %v267, %v263
  %v331 = vpack.c.bf16 %v269, %v265
  %vm332 = vcmask 261120
  %v334 = vsel %vm332, %v330, 0
  %v337 = vsel %vm332, %v331, 0
  %339 = vmatprep.subr.bf16.mxu0 0
  %340 = vmatpush1.bf16.xpose.msra.mxu0 %v337
  %341 = vmatprep.subr.bf16.mxu0 0
  %342 = vmatpush1.bf16.xpose.msra.mxu0 0
  %343 = vmatprep.subr.bf16.mxu0 0
  %344 = vmatpush1.bf16.xpose.msra.mxu0 0
  %345 = vmatprep.subr.bf16.mxu0 0
  %346 = vmatpush1.bf16.xpose.msra.mxu0 0
  %347 = vmatprep.subr.bf16.mxu0 0
  %348 = vmatpush1.bf16.xpose.msra.mxu0 0
  %349 = vmatprep.subr.bf16.mxu0 0
  %350 = vmatpush1.bf16.xpose.msra.mxu0 0
  %351 = vmatprep.subr.bf16.mxu0 0
  %352 = vmatpush1.bf16.xpose.msra.mxu0 0
  %353 = vmatprep.subr.bf16.mxu0 0
  %354 = vmatpush1.bf16.xpose.msra.mxu0 0
  %355 = vmatprep.subr.bf16.mxu0 0
  %356 = vmatpush1.bf16.xpose.msra.mxu0 0
  %357 = vmatprep.subr.bf16.mxu0 0
  %358 = vmatpush1.bf16.xpose.msra.mxu0 0
  %359 = vmatprep.subr.bf16.mxu0 0
  %360 = vmatpush1.bf16.xpose.msra.mxu0 0
  %361 = vmatprep.subr.bf16.mxu0 0
  %362 = vmatpush1.bf16.xpose.msra.mxu0 0
  %363 = vmatprep.subr.bf16.mxu0 0
  %364 = vmatpush1.bf16.xpose.msra.mxu0 0
  %365 = vmatprep.subr.bf16.mxu0 0
  %366 = vmatpush1.bf16.xpose.msra.mxu0 0
  %367 = vmatprep.subr.bf16.mxu0 0
  %368 = vmatpush1.bf16.xpose.msra.mxu0 0
  %369 = vmatprep.subr.bf16.mxu0 0
  %370 = vmatpush1.bf16.xpose.msra.mxu0 0
  %371 = vmatprep.mubr.bf16.mxu0 0
  %372 = vmatmul.mubr.bf16.gmra.mrb[0].mxu0 %v334
  %v373 = vpop.f32.mrb[0].mxu0
  %v374 = vadd.f32 0.0, %v373
  %v375 = vpop.f32.mrb[0].mxu0
  %v376 = vpop.f32.mrb[0].mxu0
  %v377 = vadd.f32 0.0, %v376
  %v378 = vpop.f32.mrb[0].mxu0
  %379 = vdwg.mxu0
  %vm380 = vcmask 130048
  %v381 = vsel %vm380, %v374, -inf
  %382 = vmax.xlane.f32.xlu0 %v381
  %v383 = vpop.xlane.xlu0 %382
  %v384 = vsel %vm380, %v377, -inf
  %385 = vmax.xlane.f32.xlu0 %v384
  %v386 = vpop.xlane.xlu0 %385
  %v387 = vsub.f32 %v374, %v383
  %v388 = vsub.f32 %v377, %v386
  %v389 = vmul.f32 %v387, 1.442695
  %v390 = vpow.pop %v389
  %v391 = vmul.f32 %v388, 1.442695
  %v392 = vpow.pop %v391
  %v393 = vsel %vm380, %v390, 0.0
  %394 = vadd.xlane.f32.xlu0 %v393
  %v395 = vpop.xlane.xlu0 %394
  %v396 = vsel %vm380, %v392, 0.0
  %397 = vadd.xlane.f32.xlu0 %v396
  %v398 = vpop.xlane.xlu0 %397
  %v399 = vrcp.pop %v395
  %v400 = vrcp.pop %v398
  %v401 = vmul.f32 %v390, %v399
  %v402 = vmul.f32 %v392, %v400
  %v403 = vpack.c.bf16 %v402, %v401
  %v404 = vpack.c.bf16 %v319, %v316
  %v406 = vsel %vm380, %v403, 0
  %408 = vmatprep.subr.bf16.mxu0 0
  %409 = vmatpush1.bf16.msra.mxu0 %v404
  %410 = vmatprep.subr.bf16.mxu0 0
  %411 = vmatpush1.bf16.msra.mxu0 0
  %412 = vmatprep.subr.bf16.mxu0 0
  %413 = vmatpush1.bf16.msra.mxu0 0
  %414 = vmatprep.subr.bf16.mxu0 0
  %415 = vmatpush1.bf16.msra.mxu0 0
  %416 = vmatprep.subr.bf16.mxu0 0
  %417 = vmatpush1.bf16.msra.mxu0 0
  %418 = vmatprep.subr.bf16.mxu0 0
  %419 = vmatpush1.bf16.msra.mxu0 0
  %420 = vmatprep.subr.bf16.mxu0 0
  %421 = vmatpush1.bf16.msra.mxu0 0
  %422 = vmatprep.subr.bf16.mxu0 0
  %423 = vmatpush1.bf16.msra.mxu0 0
  %424 = vmatprep.subr.bf16.mxu0 0
  %425 = vmatpush1.bf16.msra.mxu0 0
  %426 = vmatprep.subr.bf16.mxu0 0
  %427 = vmatpush1.bf16.msra.mxu0 0
  %428 = vmatprep.subr.bf16.mxu0 0
  %429 = vmatpush1.bf16.msra.mxu0 0
  %430 = vmatprep.subr.bf16.mxu0 0
  %431 = vmatpush1.bf16.msra.mxu0 0
  %432 = vmatprep.subr.bf16.mxu0 0
  %433 = vmatpush1.bf16.msra.mxu0 0
  %434 = vmatprep.subr.bf16.mxu0 0
  %435 = vmatpush1.bf16.msra.mxu0 0
  %436 = vmatprep.subr.bf16.mxu0 0
  %437 = vmatpush1.bf16.msra.mxu0 0
  %438 = vmatprep.subr.bf16.mxu0 0
  %439 = vmatpush1.bf16.msra.mxu0 0
  %440 = vmatprep.mubr.bf16.mxu0 0
  %441 = vmatmul.mubr.bf16.gmra.mrb[0].mxu0 %v406
  %v442 = vpop.f32.mrb[0].mxu0
  %v443 = vadd.f32 0.0, %v442
  %v444 = vpop.f32.mrb[0].mxu0
  %v445 = vpop.f32.mrb[0].mxu0
  %v446 = vadd.f32 0.0, %v445
  %v447 = vpop.f32.mrb[0].mxu0
  %448 = vdwg.mxu0
  %v449 = vpack.c.bf16 %v446, %v443
  %v450 = vld [vmem:[%s3] sm:$0xf]
  %v451 = vld [vmem:[%s3 + $0x4] sm:$0xf]
  %v452 = vld [vmem:[%s3 + $0x8] sm:$0xf]
  %v453 = vld [vmem:[%s3 + $0xc] sm:$0xf]
  %455 = vrot.lane.b32.xlu0 %v330, 96
  %v456 = vpop.permute.xlu0 %455
  %458 = vrot.lane.b32.xlu0 %v331, 96
  %v459 = vpop.permute.xlu0 %458
  %v461 = vsel %vm332, %v456, 0
  %v464 = vsel %vm332, %v459, 0
  %466 = vmatprep.subr.bf16.mxu0 0
  %467 = vmatpush1.bf16.xpose.msra.mxu0 %v464
  %468 = vmatprep.subr.bf16.mxu0 0
  %469 = vmatpush1.bf16.xpose.msra.mxu0 0
  %470 = vmatprep.subr.bf16.mxu0 0
  %471 = vmatpush1.bf16.xpose.msra.mxu0 0
  %472 = vmatprep.subr.bf16.mxu0 0
  %473 = vmatpush1.bf16.xpose.msra.mxu0 0
  %474 = vmatprep.subr.bf16.mxu0 0
  %475 = vmatpush1.bf16.xpose.msra.mxu0 0
  %476 = vmatprep.subr.bf16.mxu0 0
  %477 = vmatpush1.bf16.xpose.msra.mxu0 0
  %478 = vmatprep.subr.bf16.mxu0 0
  %479 = vmatpush1.bf16.xpose.msra.mxu0 0
  %480 = vmatprep.subr.bf16.mxu0 0
  %481 = vmatpush1.bf16.xpose.msra.mxu0 0
  %482 = vmatprep.subr.bf16.mxu0 0
  %483 = vmatpush1.bf16.xpose.msra.mxu0 0
  %484 = vmatprep.subr.bf16.mxu0 0
  %485 = vmatpush1.bf16.xpose.msra.mxu0 0
  %486 = vmatprep.subr.bf16.mxu0 0
  %487 = vmatpush1.bf16.xpose.msra.mxu0 0
  %488 = vmatprep.subr.bf16.mxu0 0
  %489 = vmatpush1.bf16.xpose.msra.mxu0 0
  %490 = vmatprep.subr.bf16.mxu0 0
  %491 = vmatpush1.bf16.xpose.msra.mxu0 0
  %492 = vmatprep.subr.bf16.mxu0 0
  %493 = vmatpush1.bf16.xpose.msra.mxu0 0
  %494 = vmatprep.subr.bf16.mxu0 0
  %495 = vmatpush1.bf16.xpose.msra.mxu0 0
  %496 = vmatprep.subr.bf16.mxu0 0
  %497 = vmatpush1.bf16.xpose.msra.mxu0 0
  %498 = vmatprep.mubr.bf16.mxu0 0
  %499 = vmatmul.mubr.bf16.gmra.mrb[0].mxu0 %v461
  %v500 = vpop.f32.mrb[0].mxu0
  %v501 = vadd.f32 0.0, %v500
  %v502 = vpop.f32.mrb[0].mxu0
  %v503 = vpop.f32.mrb[0].mxu0
  %v504 = vadd.f32 0.0, %v503
  %v505 = vpop.f32.mrb[0].mxu0
  %506 = vdwg.mxu0
  %v507 = vsel %vm380, %v501, -inf
  %508 = vmax.xlane.f32.xlu0 %v507
  %v509 = vpop.xlane.xlu0 %508
  %v510 = vsel %vm380, %v504, -inf
  %511 = vmax.xlane.f32.xlu0 %v510
  %v512 = vpop.xlane.xlu0 %511
  %v513 = vsub.f32 %v501, %v509
  %v514 = vsub.f32 %v504, %v512
  %v515 = vmul.f32 %v513, 1.442695
  %v516 = vpow.pop %v515
  %v517 = vmul.f32 %v514, 1.442695
  %v518 = vpow.pop %v517
  %v519 = vsel %vm380, %v516, 0.0
  %520 = vadd.xlane.f32.xlu0 %v519
  %v521 = vpop.xlane.xlu0 %520
  %v522 = vsel %vm380, %v518, 0.0
  %523 = vadd.xlane.f32.xlu0 %v522
  %v524 = vpop.xlane.xlu0 %523
  %v525 = vrcp.pop %v521
  %v526 = vrcp.pop %v524
  %v527 = vmul.f32 %v516, %v525
  %v528 = vmul.f32 %v518, %v526
  %v529 = vpack.c.bf16 %v528, %v527
  %531 = vrot.lane.b32.xlu0 %v404, 96
  %v532 = vpop.permute.xlu0 %531
  %v535 = vsel %vm380, %v529, 0
  %537 = vmatprep.subr.bf16.mxu0 0
  %538 = vmatpush1.bf16.msra.mxu0 %v532
  %539 = vmatprep.subr.bf16.mxu0 0
  %540 = vmatpush1.bf16.msra.mxu0 0
  %541 = vmatprep.subr.bf16.mxu0 0
  %542 = vmatpush1.bf16.msra.mxu0 0
  %543 = vmatprep.subr.bf16.mxu0 0
  %544 = vmatpush1.bf16.msra.mxu0 0
  %545 = vmatprep.subr.bf16.mxu0 0
  %546 = vmatpush1.bf16.msra.mxu0 0
  %547 = vmatprep.subr.bf16.mxu0 0
  %548 = vmatpush1.bf16.msra.mxu0 0
  %549 = vmatprep.subr.bf16.mxu0 0
  %550 = vmatpush1.bf16.msra.mxu0 0
  %551 = vmatprep.subr.bf16.mxu0 0
  %552 = vmatpush1.bf16.msra.mxu0 0
  %553 = vmatprep.subr.bf16.mxu0 0
  %554 = vmatpush1.bf16.msra.mxu0 0
  %555 = vmatprep.subr.bf16.mxu0 0
  %556 = vmatpush1.bf16.msra.mxu0 0
  %557 = vmatprep.subr.bf16.mxu0 0
  %558 = vmatpush1.bf16.msra.mxu0 0
  %559 = vmatprep.subr.bf16.mxu0 0
  %560 = vmatpush1.bf16.msra.mxu0 0
  %561 = vmatprep.subr.bf16.mxu0 0
  %562 = vmatpush1.bf16.msra.mxu0 0
  %563 = vmatprep.subr.bf16.mxu0 0
  %564 = vmatpush1.bf16.msra.mxu0 0
  %565 = vmatprep.subr.bf16.mxu0 0
  %566 = vmatpush1.bf16.msra.mxu0 0
  %567 = vmatprep.subr.bf16.mxu0 0
  %568 = vmatpush1.bf16.msra.mxu0 0
  %569 = vmatprep.mubr.bf16.mxu0 0
  %570 = vmatmul.mubr.bf16.gmra.mrb[0].mxu0 %v535
  %v571 = vpop.f32.mrb[0].mxu0
  %v572 = vadd.f32 0.0, %v571
  %v573 = vpop.f32.mrb[0].mxu0
  %v574 = vpop.f32.mrb[0].mxu0
  %v575 = vadd.f32 0.0, %v574
  %v576 = vpop.f32.mrb[0].mxu0
  %577 = vdwg.mxu0
  %v578 = vpack.c.bf16 %v575, %v572
  %v579 = vld [vmem:[%s3 + $0x10] sm:$0xf]
  %v580 = vld [vmem:[%s3 + $0x14] sm:$0xf]
  %v581 = vld [vmem:[%s3 + $0x18] sm:$0xf]
  %v582 = vld [vmem:[%s3 + $0x1c] sm:$0xf]
  %v587 = vunpack.c.l.b16 %v579
  %v588 = vunpack.c.l.b16 %v580
  %v589 = vunpack.c.l.b16 %v581
  %v590 = vunpack.c.l.b16 %v582
  %v591 = vpack.c.b16 %v588, %v587
  %v592 = vpack.c.b16 %v590, %v589
  %v596 = vsel %vm332, %v578, 0
  %598 = vmatprep.subr.bf16.mxu0 0
  %599 = vmatpush1.bf16.msra.mxu0 %v591
  %600 = vmatprep.subr.bf16.mxu0 0
  %601 = vmatpush1.bf16.msra.mxu0 %v592
  %602 = vmatprep.subr.bf16.mxu0 0
  %603 = vmatpush1.bf16.msra.mxu0 0
  %604 = vmatprep.subr.bf16.mxu0 0
  %605 = vmatpush1.bf16.msra.mxu0 0
  %606 = vmatprep.subr.bf16.mxu0 0
  %607 = vmatpush1.bf16.msra.mxu0 0
  %608 = vmatprep.subr.bf16.mxu0 0
  %609 = vmatpush1.bf16.msra.mxu0 0
  %610 = vmatprep.subr.bf16.mxu0 0
  %611 = vmatpush1.bf16.msra.mxu0 0
  %612 = vmatprep.subr.bf16.mxu0 0
  %613 = vmatpush1.bf16.msra.mxu0 0
  %614 = vmatprep.subr.bf16.mxu0 0
  %615 = vmatpush1.bf16.msra.mxu0 0
  %616 = vmatprep.subr.bf16.mxu0 0
  %617 = vmatpush1.bf16.msra.mxu0 0
  %618 = vmatprep.subr.bf16.mxu0 0
  %619 = vmatpush1.bf16.msra.mxu0 0
  %620 = vmatprep.subr.bf16.mxu0 0
  %621 = vmatpush1.bf16.msra.mxu0 0
  %622 = vmatprep.subr.bf16.mxu0 0
  %623 = vmatpush1.bf16.msra.mxu0 0
  %624 = vmatprep.subr.bf16.mxu0 0
  %625 = vmatpush1.bf16.msra.mxu0 0
  %626 = vmatprep.subr.bf16.mxu0 0
  %627 = vmatpush1.bf16.msra.mxu0 0
  %628 = vmatprep.subr.bf16.mxu0 0
  %629 = vmatpush1.bf16.msra.mxu0 0
  %630 = vmatprep.mubr.bf16.mxu0 0
  %631 = vmatmul.mubr.bf16.gmra.mrb[0].mxu0 %v596
  %v632 = vpop.f32.mrb[0].mxu0
  %v633 = vadd.f32 0.0, %v632
  %v634 = vpop.f32.mrb[0].mxu0
  %v635 = vpop.f32.mrb[0].mxu0
  %v636 = vadd.f32 0.0, %v635
  %v637 = vpop.f32.mrb[0].mxu0
  %638 = vdwg.mxu0
  %v643 = vunpack.c.l.b16 %v450
  %v644 = vunpack.c.l.b16 %v451
  %v645 = vunpack.c.l.b16 %v452
  %v646 = vunpack.c.l.b16 %v453
  %v647 = vpack.c.b16 %v644, %v643
  %v648 = vpack.c.b16 %v646, %v645
  %v652 = vsel %vm332, %v449, 0
  %654 = vmatprep.subr.bf16.mxu0 0
  %655 = vmatpush1.bf16.msra.mxu0 %v647
  %656 = vmatprep.subr.bf16.mxu0 0
  %657 = vmatpush1.bf16.msra.mxu0 %v648
  %658 = vmatprep.subr.bf16.mxu0 0
  %659 = vmatpush1.bf16.msra.mxu0 0
  %660 = vmatprep.subr.bf16.mxu0 0
  %661 = vmatpush1.bf16.msra.mxu0 0
  %662 = vmatprep.subr.bf16.mxu0 0
  %663 = vmatpush1.bf16.msra.mxu0 0
  %664 = vmatprep.subr.bf16.mxu0 0
  %665 = vmatpush1.bf16.msra.mxu0 0
  %666 = vmatprep.subr.bf16.mxu0 0
  %667 = vmatpush1.bf16.msra.mxu0 0
  %668 = vmatprep.subr.bf16.mxu0 0
  %669 = vmatpush1.bf16.msra.mxu0 0
  %670 = vmatprep.subr.bf16.mxu0 0
  %671 = vmatpush1.bf16.msra.mxu0 0
  %672 = vmatprep.subr.bf16.mxu0 0
  %673 = vmatpush1.bf16.msra.mxu0 0
  %674 = vmatprep.subr.bf16.mxu0 0
  %675 = vmatpush1.bf16.msra.mxu0 0
  %676 = vmatprep.subr.bf16.mxu0 0
  %677 = vmatpush1.bf16.msra.mxu0 0
  %678 = vmatprep.subr.bf16.mxu0 0
  %679 = vmatpush1.bf16.msra.mxu0 0
  %680 = vmatprep.subr.bf16.mxu0 0
  %681 = vmatpush1.bf16.msra.mxu0 0
  %682 = vmatprep.subr.bf16.mxu0 0
  %683 = vmatpush1.bf16.msra.mxu0 0
  %684 = vmatprep.subr.bf16.mxu0 0
  %685 = vmatpush1.bf16.msra.mxu0 0
  %686 = vmatprep.mubr.bf16.mxu0 0
  %687 = vmatmul.mubr.bf16.gmra.mrb[0].mxu0 %v652
  %v688 = vpop.f32.mrb[0].mxu0
  %v689 = vadd.f32 %v633, %v688
  %v690 = vpop.f32.mrb[0].mxu0
  %v691 = vpop.f32.mrb[0].mxu0
  %v692 = vadd.f32 %v636, %v691
  %v693 = vpop.f32.mrb[0].mxu0
  %694 = vdwg.mxu0
  %695 = vrot.lane.b32.xlu0 %v330, 64
  %v696 = vpop.permute.xlu0 %695
  %697 = vrot.lane.b32.xlu0 %v331, 64
  %v698 = vpop.permute.xlu0 %697
  %v700 = vsel %vm332, %v696, 0
  %v703 = vsel %vm332, %v698, 0
  %705 = vmatprep.subr.bf16.mxu0 0
  %706 = vmatpush1.bf16.xpose.msra.mxu0 %v703
  %707 = vmatprep.subr.bf16.mxu0 0
  %708 = vmatpush1.bf16.xpose.msra.mxu0 0
  %709 = vmatprep.subr.bf16.mxu0 0
  %710 = vmatpush1.bf16.xpose.msra.mxu0 0
  %711 = vmatprep.subr.bf16.mxu0 0
  %712 = vmatpush1.bf16.xpose.msra.mxu0 0
  %713 = vmatprep.subr.bf16.mxu0 0
  %714 = vmatpush1.bf16.xpose.msra.mxu0 0
  %715 = vmatprep.subr.bf16.mxu0 0
  %716 = vmatpush1.bf16.xpose.msra.mxu0 0
  %717 = vmatprep.subr.bf16.mxu0 0
  %718 = vmatpush1.bf16.xpose.msra.mxu0 0
  %719 = vmatprep.subr.bf16.mxu0 0
  %720 = vmatpush1.bf16.xpose.msra.mxu0 0
  %721 = vmatprep.subr.bf16.mxu0 0
  %722 = vmatpush1.bf16.xpose.msra.mxu0 0
  %723 = vmatprep.subr.bf16.mxu0 0
  %724 = vmatpush1.bf16.xpose.msra.mxu0 0
  %725 = vmatprep.subr.bf16.mxu0 0
  %726 = vmatpush1.bf16.xpose.msra.mxu0 0
  %727 = vmatprep.subr.bf16.mxu0 0
  %728 = vmatpush1.bf16.xpose.msra.mxu0 0
  %729 = vmatprep.subr.bf16.mxu0 0
  %730 = vmatpush1.bf16.xpose.msra.mxu0 0
  %731 = vmatprep.subr.bf16.mxu0 0
  %732 = vmatpush1.bf16.xpose.msra.mxu0 0
  %733 = vmatprep.subr.bf16.mxu0 0
  %734 = vmatpush1.bf16.xpose.msra.mxu0 0
  %735 = vmatprep.subr.bf16.mxu0 0
  %736 = vmatpush1.bf16.xpose.msra.mxu0 0
  %737 = vmatprep.mubr.bf16.mxu0 0
  %738 = vmatmul.mubr.bf16.gmra.mrb[0].mxu0 %v700
  %v739 = vpop.f32.mrb[0].mxu0
  %v740 = vadd.f32 0.0, %v739
  %v741 = vpop.f32.mrb[0].mxu0
  %v742 = vpop.f32.mrb[0].mxu0
  %v743 = vadd.f32 0.0, %v742
  %v744 = vpop.f32.mrb[0].mxu0
  %745 = vdwg.mxu0
  %v746 = vsel %vm380, %v740, -inf
  %747 = vmax.xlane.f32.xlu0 %v746
  %v748 = vpop.xlane.xlu0 %747
  %v749 = vsel %vm380, %v743, -inf
  %750 = vmax.xlane.f32.xlu0 %v749
  %v751 = vpop.xlane.xlu0 %750
  %v752 = vsub.f32 %v740, %v748
  %v753 = vsub.f32 %v743, %v751
  %v754 = vmul.f32 %v752, 1.442695
  %v755 = vpow.pop %v754
  %v756 = vmul.f32 %v753, 1.442695
  %v757 = vpow.pop %v756
  %v758 = vsel %vm380, %v755, 0.0
  %759 = vadd.xlane.f32.xlu0 %v758
  %v760 = vpop.xlane.xlu0 %759
  %v761 = vsel %vm380, %v757, 0.0
  %762 = vadd.xlane.f32.xlu0 %v761
  %v763 = vpop.xlane.xlu0 %762
  %v764 = vrcp.pop %v760
  %v765 = vrcp.pop %v763
  %v766 = vmul.f32 %v755, %v764
  %v767 = vmul.f32 %v757, %v765
  %v768 = vpack.c.bf16 %v767, %v766
  %769 = vrot.lane.b32.xlu0 %v404, 64
  %v770 = vpop.permute.xlu0 %769
  %v773 = vsel %vm380, %v768, 0
  %775 = vmatprep.subr.bf16.mxu0 0
  %776 = vmatpush1.bf16.msra.mxu0 %v770
  %777 = vmatprep.subr.bf16.mxu0 0
  %778 = vmatpush1.bf16.msra.mxu0 0
  %779 = vmatprep.subr.bf16.mxu0 0
  %780 = vmatpush1.bf16.msra.mxu0 0
  %781 = vmatprep.subr.bf16.mxu0 0
  %782 = vmatpush1.bf16.msra.mxu0 0
  %783 = vmatprep.subr.bf16.mxu0 0
  %784 = vmatpush1.bf16.msra.mxu0 0
  %785 = vmatprep.subr.bf16.mxu0 0
  %786 = vmatpush1.bf16.msra.mxu0 0
  %787 = vmatprep.subr.bf16.mxu0 0
  %788 = vmatpush1.bf16.msra.mxu0 0
  %789 = vmatprep.subr.bf16.mxu0 0
  %790 = vmatpush1.bf16.msra.mxu0 0
  %791 = vmatprep.subr.bf16.mxu0 0
  %792 = vmatpush1.bf16.msra.mxu0 0
  %793 = vmatprep.subr.bf16.mxu0 0
  %794 = vmatpush1.bf16.msra.mxu0 0
  %795 = vmatprep.subr.bf16.mxu0 0
  %796 = vmatpush1.bf16.msra.mxu0 0
  %797 = vmatprep.subr.bf16.mxu0 0
  %798 = vmatpush1.bf16.msra.mxu0 0
  %799 = vmatprep.subr.bf16.mxu0 0
  %800 = vmatpush1.bf16.msra.mxu0 0
  %801 = vmatprep.subr.bf16.mxu0 0
  %802 = vmatpush1.bf16.msra.mxu0 0
  %803 = vmatprep.subr.bf16.mxu0 0
  %804 = vmatpush1.bf16.msra.mxu0 0
  %805 = vmatprep.subr.bf16.mxu0 0
  %806 = vmatpush1.bf16.msra.mxu0 0
  %807 = vmatprep.mubr.bf16.mxu0 0
  %808 = vmatmul.mubr.bf16.gmra.mrb[0].mxu0 %v773
  %v809 = vpop.f32.mrb[0].mxu0
  %v810 = vadd.f32 0.0, %v809
  %v811 = vpop.f32.mrb[0].mxu0
  %v812 = vpop.f32.mrb[0].mxu0
  %v813 = vadd.f32 0.0, %v812
  %v814 = vpop.f32.mrb[0].mxu0
  %815 = vdwg.mxu0
  %v816 = vpack.c.bf16 %v813, %v810
  %v817 = vld [vmem:[%s3 + $0x20] sm:$0xf]
  %v818 = vld [vmem:[%s3 + $0x24] sm:$0xf]
  %v819 = vld [vmem:[%s3 + $0x28] sm:$0xf]
  %v820 = vld [vmem:[%s3 + $0x2c] sm:$0xf]
  %v825 = vunpack.c.l.b16 %v817
  %v826 = vunpack.c.l.b16 %v818
  %v827 = vunpack.c.l.b16 %v819
  %v828 = vunpack.c.l.b16 %v820
  %v829 = vpack.c.b16 %v826, %v825
  %v830 = vpack.c.b16 %v828, %v827
  %v834 = vsel %vm332, %v816, 0
  %836 = vmatprep.subr.bf16.mxu0 0
  %837 = vmatpush1.bf16.msra.mxu0 %v829
  %838 = vmatprep.subr.bf16.mxu0 0
  %839 = vmatpush1.bf16.msra.mxu0 %v830
  %840 = vmatprep.subr.bf16.mxu0 0
  %841 = vmatpush1.bf16.msra.mxu0 0
  %842 = vmatprep.subr.bf16.mxu0 0
  %843 = vmatpush1.bf16.msra.mxu0 0
  %844 = vmatprep.subr.bf16.mxu0 0
  %845 = vmatpush1.bf16.msra.mxu0 0
  %846 = vmatprep.subr.bf16.mxu0 0
  %847 = vmatpush1.bf16.msra.mxu0 0
  %848 = vmatprep.subr.bf16.mxu0 0
  %849 = vmatpush1.bf16.msra.mxu0 0
  %850 = vmatprep.subr.bf16.mxu0 0
  %851 = vmatpush1.bf16.msra.mxu0 0
  %852 = vmatprep.subr.bf16.mxu0 0
  %853 = vmatpush1.bf16.msra.mxu0 0
  %854 = vmatprep.subr.bf16.mxu0 0
  %855 = vmatpush1.bf16.msra.mxu0 0
  %856 = vmatprep.subr.bf16.mxu0 0
  %857 = vmatpush1.bf16.msra.mxu0 0
  %858 = vmatprep.subr.bf16.mxu0 0
  %859 = vmatpush1.bf16.msra.mxu0 0
  %860 = vmatprep.subr.bf16.mxu0 0
  %861 = vmatpush1.bf16.msra.mxu0 0
  %862 = vmatprep.subr.bf16.mxu0 0
  %863 = vmatpush1.bf16.msra.mxu0 0
  %864 = vmatprep.subr.bf16.mxu0 0
  %865 = vmatpush1.bf16.msra.mxu0 0
  %866 = vmatprep.subr.bf16.mxu0 0
  %867 = vmatpush1.bf16.msra.mxu0 0
  %868 = vmatprep.mubr.bf16.mxu0 0
  %869 = vmatmul.mubr.bf16.gmra.mrb[0].mxu0 %v834
  %v870 = vpop.f32.mrb[0].mxu0
  %v871 = vadd.f32 0.0, %v870
  %v872 = vpop.f32.mrb[0].mxu0
  %v873 = vpop.f32.mrb[0].mxu0
  %v874 = vadd.f32 0.0, %v873
  %v875 = vpop.f32.mrb[0].mxu0
  %876 = vdwg.mxu0
  %v877 = vadd.f32 %v689, %v871
  %v878 = vadd.f32 %v692, %v874
  %879 = vrot.lane.b32.xlu0 %v330, 32
  %v880 = vpop.permute.xlu0 %879
  %881 = vrot.lane.b32.xlu0 %v331, 32
  %v882 = vpop.permute.xlu0 %881
  %v884 = vsel %vm332, %v880, 0
  %v887 = vsel %vm332, %v882, 0
  %889 = vmatprep.subr.bf16.mxu0 0
  %890 = vmatpush1.bf16.xpose.msra.mxu0 %v887
  %891 = vmatprep.subr.bf16.mxu0 0
  %892 = vmatpush1.bf16.xpose.msra.mxu0 0
  %893 = vmatprep.subr.bf16.mxu0 0
  %894 = vmatpush1.bf16.xpose.msra.mxu0 0
  %895 = vmatprep.subr.bf16.mxu0 0
  %896 = vmatpush1.bf16.xpose.msra.mxu0 0
  %897 = vmatprep.subr.bf16.mxu0 0
  %898 = vmatpush1.bf16.xpose.msra.mxu0 0
  %899 = vmatprep.subr.bf16.mxu0 0
  %900 = vmatpush1.bf16.xpose.msra.mxu0 0
  %901 = vmatprep.subr.bf16.mxu0 0
  %902 = vmatpush1.bf16.xpose.msra.mxu0 0
  %903 = vmatprep.subr.bf16.mxu0 0
  %904 = vmatpush1.bf16.xpose.msra.mxu0 0
  %905 = vmatprep.subr.bf16.mxu0 0
  %906 = vmatpush1.bf16.xpose.msra.mxu0 0
  %907 = vmatprep.subr.bf16.mxu0 0
  %908 = vmatpush1.bf16.xpose.msra.mxu0 0
  %909 = vmatprep.subr.bf16.mxu0 0
  %910 = vmatpush1.bf16.xpose.msra.mxu0 0
  %911 = vmatprep.subr.bf16.mxu0 0
  %912 = vmatpush1.bf16.xpose.msra.mxu0 0
  %913 = vmatprep.subr.bf16.mxu0 0
  %914 = vmatpush1.bf16.xpose.msra.mxu0 0
  %915 = vmatprep.subr.bf16.mxu0 0
  %916 = vmatpush1.bf16.xpose.msra.mxu0 0
  %917 = vmatprep.subr.bf16.mxu0 0
  %918 = vmatpush1.bf16.xpose.msra.mxu0 0
  %919 = vmatprep.subr.bf16.mxu0 0
  %920 = vmatpush1.bf16.xpose.msra.mxu0 0
  %921 = vmatprep.mubr.bf16.mxu0 0
  %922 = vmatmul.mubr.bf16.gmra.mrb[0].mxu0 %v884
  %v923 = vpop.f32.mrb[0].mxu0
  %v924 = vadd.f32 0.0, %v923
  %v925 = vpop.f32.mrb[0].mxu0
  %v926 = vpop.f32.mrb[0].mxu0
  %v927 = vadd.f32 0.0, %v926
  %v928 = vpop.f32.mrb[0].mxu0
  %929 = vdwg.mxu0
  %v930 = vsel %vm380, %v924, -inf
  %931 = vmax.xlane.f32.xlu0 %v930
  %v932 = vpop.xlane.xlu0 %931
  %v933 = vsel %vm380, %v927, -inf
  %934 = vmax.xlane.f32.xlu0 %v933
  %v935 = vpop.xlane.xlu0 %934
  %v936 = vsub.f32 %v924, %v932
  %v937 = vsub.f32 %v927, %v935
  %v938 = vmul.f32 %v936, 1.442695
  %v939 = vpow.pop %v938
  %v940 = vmul.f32 %v937, 1.442695
  %v941 = vpow.pop %v940
  %v942 = vsel %vm380, %v939, 0.0
  %943 = vadd.xlane.f32.xlu0 %v942
  %v944 = vpop.xlane.xlu0 %943
  %v945 = vsel %vm380, %v941, 0.0
  %946 = vadd.xlane.f32.xlu0 %v945
  %v947 = vpop.xlane.xlu0 %946
  %v948 = vrcp.pop %v944
  %v949 = vrcp.pop %v947
  %v950 = vmul.f32 %v939, %v948
  %v951 = vmul.f32 %v941, %v949
  %v952 = vpack.c.bf16 %v951, %v950
  %953 = vrot.lane.b32.xlu0 %v404, 32
  %v954 = vpop.permute.xlu0 %953
  %v957 = vsel %vm380, %v952, 0
  %959 = vmatprep.subr.bf16.mxu0 0
  %960 = vmatpush1.bf16.msra.mxu0 %v954
  %961 = vmatprep.subr.bf16.mxu0 0
  %962 = vmatpush1.bf16.msra.mxu0 0
  %963 = vmatprep.subr.bf16.mxu0 0
  %964 = vmatpush1.bf16.msra.mxu0 0
  %965 = vmatprep.subr.bf16.mxu0 0
  %966 = vmatpush1.bf16.msra.mxu0 0
  %967 = vmatprep.subr.bf16.mxu0 0
  %968 = vmatpush1.bf16.msra.mxu0 0
  %969 = vmatprep.subr.bf16.mxu0 0
  %970 = vmatpush1.bf16.msra.mxu0 0
  %971 = vmatprep.subr.bf16.mxu0 0
  %972 = vmatpush1.bf16.msra.mxu0 0
  %973 = vmatprep.subr.bf16.mxu0 0
  %974 = vmatpush1.bf16.msra.mxu0 0
  %975 = vmatprep.subr.bf16.mxu0 0
  %976 = vmatpush1.bf16.msra.mxu0 0
  %977 = vmatprep.subr.bf16.mxu0 0
  %978 = vmatpush1.bf16.msra.mxu0 0
  %979 = vmatprep.subr.bf16.mxu0 0
  %980 = vmatpush1.bf16.msra.mxu0 0
  %981 = vmatprep.subr.bf16.mxu0 0
  %982 = vmatpush1.bf16.msra.mxu0 0
  %983 = vmatprep.subr.bf16.mxu0 0
  %984 = vmatpush1.bf16.msra.mxu0 0
  %985 = vmatprep.subr.bf16.mxu0 0
  %986 = vmatpush1.bf16.msra.mxu0 0
  %987 = vmatprep.subr.bf16.mxu0 0
  %988 = vmatpush1.bf16.msra.mxu0 0
  %989 = vmatprep.subr.bf16.mxu0 0
  %990 = vmatpush1.bf16.msra.mxu0 0
  %991 = vmatprep.mubr.bf16.mxu0 0
  %992 = vmatmul.mubr.bf16.gmra.mrb[0].mxu0 %v957
  %v993 = vpop.f32.mrb[0].mxu0
  %v994 = vadd.f32 0.0, %v993
  %v995 = vpop.f32.mrb[0].mxu0
  %v996 = vpop.f32.mrb[0].mxu0
  %v997 = vadd.f32 0.0, %v996
  %v998 = vpop.f32.mrb[0].mxu0
  %999 = vdwg.mxu0
  %v1000 = vpack.c.bf16 %v997, %v994
  %v1001 = vld [vmem:[%s3 + $0x30] sm:$0xf]
  %v1002 = vld [vmem:[%s3 + $0x34] sm:$0xf]
  %v1003 = vld [vmem:[%s3 + $0x38] sm:$0xf]
  %v1004 = vld [vmem:[%s3 + $0x3c] sm:$0xf]
  %v1009 = vunpack.c.l.b16 %v1001
  %v1010 = vunpack.c.l.b16 %v1002
  %v1011 = vunpack.c.l.b16 %v1003
  %v1012 = vunpack.c.l.b16 %v1004
  %v1013 = vpack.c.b16 %v1010, %v1009
  %v1014 = vpack.c.b16 %v1012, %v1011
  %v1018 = vsel %vm332, %v1000, 0
  %1020 = vmatprep.subr.bf16.mxu0 0
  %1021 = vmatpush1.bf16.msra.mxu0 %v1013
  %1022 = vmatprep.subr.bf16.mxu0 0
  %1023 = vmatpush1.bf16.msra.mxu0 %v1014
  %1024 = vmatprep.subr.bf16.mxu0 0
  %1025 = vmatpush1.bf16.msra.mxu0 0
  %1026 = vmatprep.subr.bf16.mxu0 0
  %1027 = vmatpush1.bf16.msra.mxu0 0
  %1028 = vmatprep.subr.bf16.mxu0 0
  %1029 = vmatpush1.bf16.msra.mxu0 0
  %1030 = vmatprep.subr.bf16.mxu0 0
  %1031 = vmatpush1.bf16.msra.mxu0 0
  %1032 = vmatprep.subr.bf16.mxu0 0
  %1033 = vmatpush1.bf16.msra.mxu0 0
  %1034 = vmatprep.subr.bf16.mxu0 0
  %1035 = vmatpush1.bf16.msra.mxu0 0
  %1036 = vmatprep.subr.bf16.mxu0 0
  %1037 = vmatpush1.bf16.msra.mxu0 0
  %1038 = vmatprep.subr.bf16.mxu0 0
  %1039 = vmatpush1.bf16.msra.mxu0 0
  %1040 = vmatprep.subr.bf16.mxu0 0
  %1041 = vmatpush1.bf16.msra.mxu0 0
  %1042 = vmatprep.subr.bf16.mxu0 0
  %1043 = vmatpush1.bf16.msra.mxu0 0
  %1044 = vmatprep.subr.bf16.mxu0 0
  %1045 = vmatpush1.bf16.msra.mxu0 0
  %1046 = vmatprep.subr.bf16.mxu0 0
  %1047 = vmatpush1.bf16.msra.mxu0 0
  %1048 = vmatprep.subr.bf16.mxu0 0
  %1049 = vmatpush1.bf16.msra.mxu0 0
  %1050 = vmatprep.subr.bf16.mxu0 0
  %1051 = vmatpush1.bf16.msra.mxu0 0
  %1052 = vmatprep.mubr.bf16.mxu0 0
  %1053 = vmatmul.mubr.bf16.gmra.mrb[0].mxu0 %v1018
  %v1054 = vpop.f32.mrb[0].mxu0
  %v1055 = vadd.f32 0.0, %v1054
  %v1056 = vpop.f32.mrb[0].mxu0
  %v1057 = vpop.f32.mrb[0].mxu0
  %v1058 = vadd.f32 0.0, %v1057
  %v1059 = vpop.f32.mrb[0].mxu0
  %1060 = vdwg.mxu0
  %v1061 = vadd.f32 %v877, %v1055
  %v1062 = vadd.f32 %v878, %v1058
  %v1063 = vpack.c.bf16 %v277, %v273
  %v1064 = vpack.c.bf16 %v279, %v275
  %v1066 = vsel %vm332, %v1063, 0
  %v1069 = vsel %vm332, %v1064, 0
  %1071 = vmatprep.subr.bf16.mxu0 0
  %1072 = vmatpush1.bf16.xpose.msra.mxu0 %v1069
  %1073 = vmatprep.subr.bf16.mxu0 0
  %1074 = vmatpush1.bf16.xpose.msra.mxu0 0
  %1075 = vmatprep.subr.bf16.mxu0 0
  %1076 = vmatpush1.bf16.xpose.msra.mxu0 0
  %1077 = vmatprep.subr.bf16.mxu0 0
  %1078 = vmatpush1.bf16.xpose.msra.mxu0 0
  %1079 = vmatprep.subr.bf16.mxu0 0
  %1080 = vmatpush1.bf16.xpose.msra.mxu0 0
  %1081 = vmatprep.subr.bf16.mxu0 0
  %1082 = vmatpush1.bf16.xpose.msra.mxu0 0
  %1083 = vmatprep.subr.bf16.mxu0 0
  %1084 = vmatpush1.bf16.xpose.msra.mxu0 0
  %1085 = vmatprep.subr.bf16.mxu0 0
  %1086 = vmatpush1.bf16.xpose.msra.mxu0 0
  %1087 = vmatprep.subr.bf16.mxu0 0
  %1088 = vmatpush1.bf16.xpose.msra.mxu0 0
  %1089 = vmatprep.subr.bf16.mxu0 0
  %1090 = vmatpush1.bf16.xpose.msra.mxu0 0
  %1091 = vmatprep.subr.bf16.mxu0 0
  %1092 = vmatpush1.bf16.xpose.msra.mxu0 0
  %1093 = vmatprep.subr.bf16.mxu0 0
  %1094 = vmatpush1.bf16.xpose.msra.mxu0 0
  %1095 = vmatprep.subr.bf16.mxu0 0
  %1096 = vmatpush1.bf16.xpose.msra.mxu0 0
  %1097 = vmatprep.subr.bf16.mxu0 0
  %1098 = vmatpush1.bf16.xpose.msra.mxu0 0
  %1099 = vmatprep.subr.bf16.mxu0 0
  %1100 = vmatpush1.bf16.xpose.msra.mxu0 0
  %1101 = vmatprep.subr.bf16.mxu0 0
  %1102 = vmatpush1.bf16.xpose.msra.mxu0 0
  %1103 = vmatprep.mubr.bf16.mxu0 0
  %1104 = vmatmul.mubr.bf16.gmra.mrb[0].mxu0 %v1066
  %v1105 = vpop.f32.mrb[0].mxu0
  %v1106 = vadd.f32 0.0, %v1105
  %v1107 = vpop.f32.mrb[0].mxu0
  %v1108 = vpop.f32.mrb[0].mxu0
  %v1109 = vadd.f32 0.0, %v1108
  %v1110 = vpop.f32.mrb[0].mxu0
  %1111 = vdwg.mxu0
  %v1112 = vsel %vm380, %v1106, -inf
  %1113 = vmax.xlane.f32.xlu0 %v1112
  %v1114 = vpop.xlane.xlu0 %1113
  %v1115 = vsel %vm380, %v1109, -inf
  %1116 = vmax.xlane.f32.xlu0 %v1115
  %v1117 = vpop.xlane.xlu0 %1116
  %v1118 = vsub.f32 %v1106, %v1114
  %v1119 = vsub.f32 %v1109, %v1117
  %v1120 = vmul.f32 %v1118, 1.442695
  %v1121 = vpow.pop %v1120
  %v1122 = vmul.f32 %v1119, 1.442695
  %v1123 = vpow.pop %v1122
  %v1124 = vsel %vm380, %v1121, 0.0
  %1125 = vadd.xlane.f32.xlu0 %v1124
  %v1126 = vpop.xlane.xlu0 %1125
  %v1127 = vsel %vm380, %v1123, 0.0
  %1128 = vadd.xlane.f32.xlu0 %v1127
  %v1129 = vpop.xlane.xlu0 %1128
  %v1130 = vrcp.pop %v1126
  %v1131 = vrcp.pop %v1129
  %v1132 = vmul.f32 %v1121, %v1130
  %v1133 = vmul.f32 %v1123, %v1131
  %v1134 = vpack.c.bf16 %v1133, %v1132
  %v1135 = vpack.c.bf16 %v327, %v324
  %v1137 = vsel %vm380, %v1134, 0
  %1139 = vmatprep.subr.bf16.mxu0 0
  %1140 = vmatpush1.bf16.msra.mxu0 %v1135
  %1141 = vmatprep.subr.bf16.mxu0 0
  %1142 = vmatpush1.bf16.msra.mxu0 0
  %1143 = vmatprep.subr.bf16.mxu0 0
  %1144 = vmatpush1.bf16.msra.mxu0 0
  %1145 = vmatprep.subr.bf16.mxu0 0
  %1146 = vmatpush1.bf16.msra.mxu0 0
  %1147 = vmatprep.subr.bf16.mxu0 0
  %1148 = vmatpush1.bf16.msra.mxu0 0
  %1149 = vmatprep.subr.bf16.mxu0 0
  %1150 = vmatpush1.bf16.msra.mxu0 0
  %1151 = vmatprep.subr.bf16.mxu0 0
  %1152 = vmatpush1.bf16.msra.mxu0 0
  %1153 = vmatprep.subr.bf16.mxu0 0
  %1154 = vmatpush1.bf16.msra.mxu0 0
  %1155 = vmatprep.subr.bf16.mxu0 0
  %1156 = vmatpush1.bf16.msra.mxu0 0
  %1157 = vmatprep.subr.bf16.mxu0 0
  %1158 = vmatpush1.bf16.msra.mxu0 0
  %1159 = vmatprep.subr.bf16.mxu0 0
  %1160 = vmatpush1.bf16.msra.mxu0 0
  %1161 = vmatprep.subr.bf16.mxu0 0
  %1162 = vmatpush1.bf16.msra.mxu0 0
  %1163 = vmatprep.subr.bf16.mxu0 0
  %1164 = vmatpush1.bf16.msra.mxu0 0
  %1165 = vmatprep.subr.bf16.mxu0 0
  %1166 = vmatpush1.bf16.msra.mxu0 0
  %1167 = vmatprep.subr.bf16.mxu0 0
  %1168 = vmatpush1.bf16.msra.mxu0 0
  %1169 = vmatprep.subr.bf16.mxu0 0
  %1170 = vmatpush1.bf16.msra.mxu0 0
  %1171 = vmatprep.mubr.bf16.mxu0 0
  %1172 = vmatmul.mubr.bf16.gmra.mrb[0].mxu0 %v1137
  %v1173 = vpop.f32.mrb[0].mxu0
  %v1174 = vadd.f32 0.0, %v1173
  %v1175 = vpop.f32.mrb[0].mxu0
  %v1176 = vpop.f32.mrb[0].mxu0
  %v1177 = vadd.f32 0.0, %v1176
  %v1178 = vpop.f32.mrb[0].mxu0
  %1179 = vdwg.mxu0
  %v1180 = vpack.c.bf16 %v1177, %v1174
  %1182 = vrot.lane.b32.xlu0 %v1063, 96
  %v1183 = vpop.permute.xlu0 %1182
  %1185 = vrot.lane.b32.xlu0 %v1064, 96
  %v1186 = vpop.permute.xlu0 %1185
  %v1188 = vsel %vm332, %v1183, 0
  %v1191 = vsel %vm332, %v1186, 0
  %1193 = vmatprep.subr.bf16.mxu0 0
  %1194 = vmatpush1.bf16.xpose.msra.mxu0 %v1191
  %1195 = vmatprep.subr.bf16.mxu0 0
  %1196 = vmatpush1.bf16.xpose.msra.mxu0 0
  %1197 = vmatprep.subr.bf16.mxu0 0
  %1198 = vmatpush1.bf16.xpose.msra.mxu0 0
  %1199 = vmatprep.subr.bf16.mxu0 0
  %1200 = vmatpush1.bf16.xpose.msra.mxu0 0
  %1201 = vmatprep.subr.bf16.mxu0 0
  %1202 = vmatpush1.bf16.xpose.msra.mxu0 0
  %1203 = vmatprep.subr.bf16.mxu0 0
  %1204 = vmatpush1.bf16.xpose.msra.mxu0 0
  %1205 = vmatprep.subr.bf16.mxu0 0
  %1206 = vmatpush1.bf16.xpose.msra.mxu0 0
  %1207 = vmatprep.subr.bf16.mxu0 0
  %1208 = vmatpush1.bf16.xpose.msra.mxu0 0
  %1209 = vmatprep.subr.bf16.mxu0 0
  %1210 = vmatpush1.bf16.xpose.msra.mxu0 0
  %1211 = vmatprep.subr.bf16.mxu0 0
  %1212 = vmatpush1.bf16.xpose.msra.mxu0 0
  %1213 = vmatprep.subr.bf16.mxu0 0
  %1214 = vmatpush1.bf16.xpose.msra.mxu0 0
  %1215 = vmatprep.subr.bf16.mxu0 0
  %1216 = vmatpush1.bf16.xpose.msra.mxu0 0
  %1217 = vmatprep.subr.bf16.mxu0 0
  %1218 = vmatpush1.bf16.xpose.msra.mxu0 0
  %1219 = vmatprep.subr.bf16.mxu0 0
  %1220 = vmatpush1.bf16.xpose.msra.mxu0 0
  %1221 = vmatprep.subr.bf16.mxu0 0
  %1222 = vmatpush1.bf16.xpose.msra.mxu0 0
  %1223 = vmatprep.subr.bf16.mxu0 0
  %1224 = vmatpush1.bf16.xpose.msra.mxu0 0
  %1225 = vmatprep.mubr.bf16.mxu0 0
  %1226 = vmatmul.mubr.bf16.gmra.mrb[0].mxu0 %v1188
  %v1227 = vpop.f32.mrb[0].mxu0
  %v1228 = vadd.f32 0.0, %v1227
  %v1229 = vpop.f32.mrb[0].mxu0
  %v1230 = vpop.f32.mrb[0].mxu0
  %v1231 = vadd.f32 0.0, %v1230
  %v1232 = vpop.f32.mrb[0].mxu0
  %1233 = vdwg.mxu0
  %v1234 = vsel %vm380, %v1228, -inf
  %1235 = vmax.xlane.f32.xlu0 %v1234
  %v1236 = vpop.xlane.xlu0 %1235
  %v1237 = vsel %vm380, %v1231, -inf
  %1238 = vmax.xlane.f32.xlu0 %v1237
  %v1239 = vpop.xlane.xlu0 %1238
  %v1240 = vsub.f32 %v1228, %v1236
  %v1241 = vsub.f32 %v1231, %v1239
  %v1242 = vmul.f32 %v1240, 1.442695
  %v1243 = vpow.pop %v1242
  %v1244 = vmul.f32 %v1241, 1.442695
  %v1245 = vpow.pop %v1244
  %v1246 = vsel %vm380, %v1243, 0.0
  %1247 = vadd.xlane.f32.xlu0 %v1246
  %v1248 = vpop.xlane.xlu0 %1247
  %v1249 = vsel %vm380, %v1245, 0.0
  %1250 = vadd.xlane.f32.xlu0 %v1249
  %v1251 = vpop.xlane.xlu0 %1250
  %v1252 = vrcp.pop %v1248
  %v1253 = vrcp.pop %v1251
  %v1254 = vmul.f32 %v1243, %v1252
  %v1255 = vmul.f32 %v1245, %v1253
  %v1256 = vpack.c.bf16 %v1255, %v1254
  %1258 = vrot.lane.b32.xlu0 %v1135, 96
  %v1259 = vpop.permute.xlu0 %1258
  %v1262 = vsel %vm380, %v1256, 0
  %1264 = vmatprep.subr.bf16.mxu0 0
  %1265 = vmatpush1.bf16.msra.mxu0 %v1259
  %1266 = vmatprep.subr.bf16.mxu0 0
  %1267 = vmatpush1.bf16.msra.mxu0 0
  %1268 = vmatprep.subr.bf16.mxu0 0
  %1269 = vmatpush1.bf16.msra.mxu0 0
  %1270 = vmatprep.subr.bf16.mxu0 0
  %1271 = vmatpush1.bf16.msra.mxu0 0
  %1272 = vmatprep.subr.bf16.mxu0 0
  %1273 = vmatpush1.bf16.msra.mxu0 0
  %1274 = vmatprep.subr.bf16.mxu0 0
  %1275 = vmatpush1.bf16.msra.mxu0 0
  %1276 = vmatprep.subr.bf16.mxu0 0
  %1277 = vmatpush1.bf16.msra.mxu0 0
  %1278 = vmatprep.subr.bf16.mxu0 0
  %1279 = vmatpush1.bf16.msra.mxu0 0
  %1280 = vmatprep.subr.bf16.mxu0 0
  %1281 = vmatpush1.bf16.msra.mxu0 0
  %1282 = vmatprep.subr.bf16.mxu0 0
  %1283 = vmatpush1.bf16.msra.mxu0 0
  %1284 = vmatprep.subr.bf16.mxu0 0
  %1285 = vmatpush1.bf16.msra.mxu0 0
  %1286 = vmatprep.subr.bf16.mxu0 0
  %1287 = vmatpush1.bf16.msra.mxu0 0
  %1288 = vmatprep.subr.bf16.mxu0 0
  %1289 = vmatpush1.bf16.msra.mxu0 0
  %1290 = vmatprep.subr.bf16.mxu0 0
  %1291 = vmatpush1.bf16.msra.mxu0 0
  %1292 = vmatprep.subr.bf16.mxu0 0
  %1293 = vmatpush1.bf16.msra.mxu0 0
  %1294 = vmatprep.subr.bf16.mxu0 0
  %1295 = vmatpush1.bf16.msra.mxu0 0
  %1296 = vmatprep.mubr.bf16.mxu0 0
  %1297 = vmatmul.mubr.bf16.gmra.mrb[0].mxu0 %v1262
  %v1298 = vpop.f32.mrb[0].mxu0
  %v1299 = vadd.f32 0.0, %v1298
  %v1300 = vpop.f32.mrb[0].mxu0
  %v1301 = vpop.f32.mrb[0].mxu0
  %v1302 = vadd.f32 0.0, %v1301
  %v1303 = vpop.f32.mrb[0].mxu0
  %1304 = vdwg.mxu0
  %v1305 = vpack.c.bf16 %v1302, %v1299
  %v1307 = vsel %vm332, %v1305, 0
  %1309 = vmatprep.subr.bf16.mxu0 0
  %1310 = vmatpush1.bf16.msra.mxu0 %v591
  %1311 = vmatprep.subr.bf16.mxu0 0
  %1312 = vmatpush1.bf16.msra.mxu0 %v592
  %1313 = vmatprep.subr.bf16.mxu0 0
  %1314 = vmatpush1.bf16.msra.mxu0 0
  %1315 = vmatprep.subr.bf16.mxu0 0
  %1316 = vmatpush1.bf16.msra.mxu0 0
  %1317 = vmatprep.subr.bf16.mxu0 0
  %1318 = vmatpush1.bf16.msra.mxu0 0
  %1319 = vmatprep.subr.bf16.mxu0 0
  %1320 = vmatpush1.bf16.msra.mxu0 0
  %1321 = vmatprep.subr.bf16.mxu0 0
  %1322 = vmatpush1.bf16.msra.mxu0 0
  %1323 = vmatprep.subr.bf16.mxu0 0
  %1324 = vmatpush1.bf16.msra.mxu0 0
  %1325 = vmatprep.subr.bf16.mxu0 0
  %1326 = vmatpush1.bf16.msra.mxu0 0
  %1327 = vmatprep.subr.bf16.mxu0 0
  %1328 = vmatpush1.bf16.msra.mxu0 0
  %1329 = vmatprep.subr.bf16.mxu0 0
  %1330 = vmatpush1.bf16.msra.mxu0 0
  %1331 = vmatprep.subr.bf16.mxu0 0
  %1332 = vmatpush1.bf16.msra.mxu0 0
  %1333 = vmatprep.subr.bf16.mxu0 0
  %1334 = vmatpush1.bf16.msra.mxu0 0
  %1335 = vmatprep.subr.bf16.mxu0 0
  %1336 = vmatpush1.bf16.msra.mxu0 0
  %1337 = vmatprep.subr.bf16.mxu0 0
  %1338 = vmatpush1.bf16.msra.mxu0 0
  %1339 = vmatprep.subr.bf16.mxu0 0
  %1340 = vmatpush1.bf16.msra.mxu0 0
  %1341 = vmatprep.mubr.bf16.mxu0 0
  %1342 = vmatmul.mubr.bf16.gmra.mrb[0].mxu0 %v1307
  %v1343 = vpop.f32.mrb[0].mxu0
  %v1344 = vadd.f32 0.0, %v1343
  %v1345 = vpop.f32.mrb[0].mxu0
  %v1346 = vpop.f32.mrb[0].mxu0
  %v1347 = vadd.f32 0.0, %v1346
  %v1348 = vpop.f32.mrb[0].mxu0
  %1349 = vdwg.mxu0
  %v1351 = vsel %vm332, %v1180, 0
  %1353 = vmatprep.subr.bf16.mxu0 0
  %1354 = vmatpush1.bf16.msra.mxu0 %v647
  %1355 = vmatprep.subr.bf16.mxu0 0
  %1356 = vmatpush1.bf16.msra.mxu0 %v648
  %1357 = vmatprep.subr.bf16.mxu0 0
  %1358 = vmatpush1.bf16.msra.mxu0 0
  %1359 = vmatprep.subr.bf16.mxu0 0
  %1360 = vmatpush1.bf16.msra.mxu0 0
  %1361 = vmatprep.subr.bf16.mxu0 0
  %1362 = vmatpush1.bf16.msra.mxu0 0
  %1363 = vmatprep.subr.bf16.mxu0 0
  %1364 = vmatpush1.bf16.msra.mxu0 0
  %1365 = vmatprep.subr.bf16.mxu0 0
  %1366 = vmatpush1.bf16.msra.mxu0 0
  %1367 = vmatprep.subr.bf16.mxu0 0
  %1368 = vmatpush1.bf16.msra.mxu0 0
  %1369 = vmatprep.subr.bf16.mxu0 0
  %1370 = vmatpush1.bf16.msra.mxu0 0
  %1371 = vmatprep.subr.bf16.mxu0 0
  %1372 = vmatpush1.bf16.msra.mxu0 0
  %1373 = vmatprep.subr.bf16.mxu0 0
  %1374 = vmatpush1.bf16.msra.mxu0 0
  %1375 = vmatprep.subr.bf16.mxu0 0
  %1376 = vmatpush1.bf16.msra.mxu0 0
  %1377 = vmatprep.subr.bf16.mxu0 0
  %1378 = vmatpush1.bf16.msra.mxu0 0
  %1379 = vmatprep.subr.bf16.mxu0 0
  %1380 = vmatpush1.bf16.msra.mxu0 0
  %1381 = vmatprep.subr.bf16.mxu0 0
  %1382 = vmatpush1.bf16.msra.mxu0 0
  %1383 = vmatprep.subr.bf16.mxu0 0
  %1384 = vmatpush1.bf16.msra.mxu0 0
  %1385 = vmatprep.mubr.bf16.mxu0 0
  %1386 = vmatmul.mubr.bf16.gmra.mrb[0].mxu0 %v1351
  %v1387 = vpop.f32.mrb[0].mxu0
  %v1388 = vadd.f32 %v1344, %v1387
  %v1389 = vpop.f32.mrb[0].mxu0
  %v1390 = vpop.f32.mrb[0].mxu0
  %v1391 = vadd.f32 %v1347, %v1390
  %v1392 = vpop.f32.mrb[0].mxu0
  %1393 = vdwg.mxu0
  %1394 = vrot.lane.b32.xlu0 %v1063, 64
  %v1395 = vpop.permute.xlu0 %1394
  %1396 = vrot.lane.b32.xlu0 %v1064, 64
  %v1397 = vpop.permute.xlu0 %1396
  %v1399 = vsel %vm332, %v1395, 0
  %v1402 = vsel %vm332, %v1397, 0
  %1404 = vmatprep.subr.bf16.mxu0 0
  %1405 = vmatpush1.bf16.xpose.msra.mxu0 %v1402
  %1406 = vmatprep.subr.bf16.mxu0 0
  %1407 = vmatpush1.bf16.xpose.msra.mxu0 0
  %1408 = vmatprep.subr.bf16.mxu0 0
  %1409 = vmatpush1.bf16.xpose.msra.mxu0 0
  %1410 = vmatprep.subr.bf16.mxu0 0
  %1411 = vmatpush1.bf16.xpose.msra.mxu0 0
  %1412 = vmatprep.subr.bf16.mxu0 0
  %1413 = vmatpush1.bf16.xpose.msra.mxu0 0
  %1414 = vmatprep.subr.bf16.mxu0 0
  %1415 = vmatpush1.bf16.xpose.msra.mxu0 0
  %1416 = vmatprep.subr.bf16.mxu0 0
  %1417 = vmatpush1.bf16.xpose.msra.mxu0 0
  %1418 = vmatprep.subr.bf16.mxu0 0
  %1419 = vmatpush1.bf16.xpose.msra.mxu0 0
  %1420 = vmatprep.subr.bf16.mxu0 0
  %1421 = vmatpush1.bf16.xpose.msra.mxu0 0
  %1422 = vmatprep.subr.bf16.mxu0 0
  %1423 = vmatpush1.bf16.xpose.msra.mxu0 0
  %1424 = vmatprep.subr.bf16.mxu0 0
  %1425 = vmatpush1.bf16.xpose.msra.mxu0 0
  %1426 = vmatprep.subr.bf16.mxu0 0
  %1427 = vmatpush1.bf16.xpose.msra.mxu0 0
  %1428 = vmatprep.subr.bf16.mxu0 0
  %1429 = vmatpush1.bf16.xpose.msra.mxu0 0
  %1430 = vmatprep.subr.bf16.mxu0 0
  %1431 = vmatpush1.bf16.xpose.msra.mxu0 0
  %1432 = vmatprep.subr.bf16.mxu0 0
  %1433 = vmatpush1.bf16.xpose.msra.mxu0 0
  %1434 = vmatprep.subr.bf16.mxu0 0
  %1435 = vmatpush1.bf16.xpose.msra.mxu0 0
  %1436 = vmatprep.mubr.bf16.mxu0 0
  %1437 = vmatmul.mubr.bf16.gmra.mrb[0].mxu0 %v1399
  %v1438 = vpop.f32.mrb[0].mxu0
  %v1439 = vadd.f32 0.0, %v1438
  %v1440 = vpop.f32.mrb[0].mxu0
  %v1441 = vpop.f32.mrb[0].mxu0
  %v1442 = vadd.f32 0.0, %v1441
  %v1443 = vpop.f32.mrb[0].mxu0
  %1444 = vdwg.mxu0
  %v1445 = vsel %vm380, %v1439, -inf
  %1446 = vmax.xlane.f32.xlu0 %v1445
  %v1447 = vpop.xlane.xlu0 %1446
  %v1448 = vsel %vm380, %v1442, -inf
  %1449 = vmax.xlane.f32.xlu0 %v1448
  %v1450 = vpop.xlane.xlu0 %1449
  %v1451 = vsub.f32 %v1439, %v1447
  %v1452 = vsub.f32 %v1442, %v1450
  %v1453 = vmul.f32 %v1451, 1.442695
  %v1454 = vpow.pop %v1453
  %v1455 = vmul.f32 %v1452, 1.442695
  %v1456 = vpow.pop %v1455
  %v1457 = vsel %vm380, %v1454, 0.0
  %1458 = vadd.xlane.f32.xlu0 %v1457
  %v1459 = vpop.xlane.xlu0 %1458
  %v1460 = vsel %vm380, %v1456, 0.0
  %1461 = vadd.xlane.f32.xlu0 %v1460
  %v1462 = vpop.xlane.xlu0 %1461
  %v1463 = vrcp.pop %v1459
  %v1464 = vrcp.pop %v1462
  %v1465 = vmul.f32 %v1454, %v1463
  %v1466 = vmul.f32 %v1456, %v1464
  %v1467 = vpack.c.bf16 %v1466, %v1465
  %1468 = vrot.lane.b32.xlu0 %v1135, 64
  %v1469 = vpop.permute.xlu0 %1468
  %v1472 = vsel %vm380, %v1467, 0
  %1474 = vmatprep.subr.bf16.mxu0 0
  %1475 = vmatpush1.bf16.msra.mxu0 %v1469
  %1476 = vmatprep.subr.bf16.mxu0 0
  %1477 = vmatpush1.bf16.msra.mxu0 0
  %1478 = vmatprep.subr.bf16.mxu0 0
  %1479 = vmatpush1.bf16.msra.mxu0 0
  %1480 = vmatprep.subr.bf16.mxu0 0
  %1481 = vmatpush1.bf16.msra.mxu0 0
  %1482 = vmatprep.subr.bf16.mxu0 0
  %1483 = vmatpush1.bf16.msra.mxu0 0
  %1484 = vmatprep.subr.bf16.mxu0 0
  %1485 = vmatpush1.bf16.msra.mxu0 0
  %1486 = vmatprep.subr.bf16.mxu0 0
  %1487 = vmatpush1.bf16.msra.mxu0 0
  %1488 = vmatprep.subr.bf16.mxu0 0
  %1489 = vmatpush1.bf16.msra.mxu0 0
  %1490 = vmatprep.subr.bf16.mxu0 0
  %1491 = vmatpush1.bf16.msra.mxu0 0
  %1492 = vmatprep.subr.bf16.mxu0 0
  %1493 = vmatpush1.bf16.msra.mxu0 0
  %1494 = vmatprep.subr.bf16.mxu0 0
  %1495 = vmatpush1.bf16.msra.mxu0 0
  %1496 = vmatprep.subr.bf16.mxu0 0
  %1497 = vmatpush1.bf16.msra.mxu0 0
  %1498 = vmatprep.subr.bf16.mxu0 0
  %1499 = vmatpush1.bf16.msra.mxu0 0
  %1500 = vmatprep.subr.bf16.mxu0 0
  %1501 = vmatpush1.bf16.msra.mxu0 0
  %1502 = vmatprep.subr.bf16.mxu0 0
  %1503 = vmatpush1.bf16.msra.mxu0 0
  %1504 = vmatprep.subr.bf16.mxu0 0
  %1505 = vmatpush1.bf16.msra.mxu0 0
  %1506 = vmatprep.mubr.bf16.mxu0 0
  %1507 = vmatmul.mubr.bf16.gmra.mrb[0].mxu0 %v1472
  %v1508 = vpop.f32.mrb[0].mxu0
  %v1509 = vadd.f32 0.0, %v1508
  %v1510 = vpop.f32.mrb[0].mxu0
  %v1511 = vpop.f32.mrb[0].mxu0
  %v1512 = vadd.f32 0.0, %v1511
  %v1513 = vpop.f32.mrb[0].mxu0
  %1514 = vdwg.mxu0
  %v1515 = vpack.c.bf16 %v1512, %v1509
  %v1517 = vsel %vm332, %v1515, 0
  %1519 = vmatprep.subr.bf16.mxu0 0
  %1520 = vmatpush1.bf16.msra.mxu0 %v829
  %1521 = vmatprep.subr.bf16.mxu0 0
  %1522 = vmatpush1.bf16.msra.mxu0 %v830
  %1523 = vmatprep.subr.bf16.mxu0 0
  %1524 = vmatpush1.bf16.msra.mxu0 0
  %1525 = vmatprep.subr.bf16.mxu0 0
  %1526 = vmatpush1.bf16.msra.mxu0 0
  %1527 = vmatprep.subr.bf16.mxu0 0
  %1528 = vmatpush1.bf16.msra.mxu0 0
  %1529 = vmatprep.subr.bf16.mxu0 0
  %1530 = vmatpush1.bf16.msra.mxu0 0
  %1531 = vmatprep.subr.bf16.mxu0 0
  %1532 = vmatpush1.bf16.msra.mxu0 0
  %1533 = vmatprep.subr.bf16.mxu0 0
  %1534 = vmatpush1.bf16.msra.mxu0 0
  %1535 = vmatprep.subr.bf16.mxu0 0
  %1536 = vmatpush1.bf16.msra.mxu0 0
  %1537 = vmatprep.subr.bf16.mxu0 0
  %1538 = vmatpush1.bf16.msra.mxu0 0
  %1539 = vmatprep.subr.bf16.mxu0 0
  %1540 = vmatpush1.bf16.msra.mxu0 0
  %1541 = vmatprep.subr.bf16.mxu0 0
  %1542 = vmatpush1.bf16.msra.mxu0 0
  %1543 = vmatprep.subr.bf16.mxu0 0
  %1544 = vmatpush1.bf16.msra.mxu0 0
  %1545 = vmatprep.subr.bf16.mxu0 0
  %1546 = vmatpush1.bf16.msra.mxu0 0
  %1547 = vmatprep.subr.bf16.mxu0 0
  %1548 = vmatpush1.bf16.msra.mxu0 0
  %1549 = vmatprep.subr.bf16.mxu0 0
  %1550 = vmatpush1.bf16.msra.mxu0 0
  %1551 = vmatprep.mubr.bf16.mxu0 0
  %1552 = vmatmul.mubr.bf16.gmra.mrb[0].mxu0 %v1517
  %v1553 = vpop.f32.mrb[0].mxu0
  %v1554 = vadd.f32 0.0, %v1553
  %v1555 = vpop.f32.mrb[0].mxu0
  %v1556 = vpop.f32.mrb[0].mxu0
  %v1557 = vadd.f32 0.0, %v1556
  %v1558 = vpop.f32.mrb[0].mxu0
  %1559 = vdwg.mxu0
  %v1560 = vadd.f32 %v1388, %v1554
  %v1561 = vadd.f32 %v1391, %v1557
  %1562 = vrot.lane.b32.xlu0 %v1063, 32
  %v1563 = vpop.permute.xlu0 %1562
  %1564 = vrot.lane.b32.xlu0 %v1064, 32
  %v1565 = vpop.permute.xlu0 %1564
  %v1567 = vsel %vm332, %v1563, 0
  %v1570 = vsel %vm332, %v1565, 0
  %1572 = vmatprep.subr.bf16.mxu0 0
  %1573 = vmatpush1.bf16.xpose.msra.mxu0 %v1570
  %1574 = vmatprep.subr.bf16.mxu0 0
  %1575 = vmatpush1.bf16.xpose.msra.mxu0 0
  %1576 = vmatprep.subr.bf16.mxu0 0
  %1577 = vmatpush1.bf16.xpose.msra.mxu0 0
  %1578 = vmatprep.subr.bf16.mxu0 0
  %1579 = vmatpush1.bf16.xpose.msra.mxu0 0
  %1580 = vmatprep.subr.bf16.mxu0 0
  %1581 = vmatpush1.bf16.xpose.msra.mxu0 0
  %1582 = vmatprep.subr.bf16.mxu0 0
  %1583 = vmatpush1.bf16.xpose.msra.mxu0 0
  %1584 = vmatprep.subr.bf16.mxu0 0
  %1585 = vmatpush1.bf16.xpose.msra.mxu0 0
  %1586 = vmatprep.subr.bf16.mxu0 0
  %1587 = vmatpush1.bf16.xpose.msra.mxu0 0
  %1588 = vmatprep.subr.bf16.mxu0 0
  %1589 = vmatpush1.bf16.xpose.msra.mxu0 0
  %1590 = vmatprep.subr.bf16.mxu0 0
  %1591 = vmatpush1.bf16.xpose.msra.mxu0 0
  %1592 = vmatprep.subr.bf16.mxu0 0
  %1593 = vmatpush1.bf16.xpose.msra.mxu0 0
  %1594 = vmatprep.subr.bf16.mxu0 0
  %1595 = vmatpush1.bf16.xpose.msra.mxu0 0
  %1596 = vmatprep.subr.bf16.mxu0 0
  %1597 = vmatpush1.bf16.xpose.msra.mxu0 0
  %1598 = vmatprep.subr.bf16.mxu0 0
  %1599 = vmatpush1.bf16.xpose.msra.mxu0 0
  %1600 = vmatprep.subr.bf16.mxu0 0
  %1601 = vmatpush1.bf16.xpose.msra.mxu0 0
  %1602 = vmatprep.subr.bf16.mxu0 0
  %1603 = vmatpush1.bf16.xpose.msra.mxu0 0
  %1604 = vmatprep.mubr.bf16.mxu0 0
  %1605 = vmatmul.mubr.bf16.gmra.mrb[0].mxu0 %v1567
  %v1606 = vpop.f32.mrb[0].mxu0
  %v1607 = vadd.f32 0.0, %v1606
  %v1608 = vpop.f32.mrb[0].mxu0
  %v1609 = vpop.f32.mrb[0].mxu0
  %v1610 = vadd.f32 0.0, %v1609
  %v1611 = vpop.f32.mrb[0].mxu0
  %1612 = vdwg.mxu0
  %v1613 = vsel %vm380, %v1607, -inf
  %1614 = vmax.xlane.f32.xlu0 %v1613
  %v1615 = vpop.xlane.xlu0 %1614
  %v1616 = vsel %vm380, %v1610, -inf
  %1617 = vmax.xlane.f32.xlu0 %v1616
  %v1618 = vpop.xlane.xlu0 %1617
  %v1619 = vsub.f32 %v1607, %v1615
  %v1620 = vsub.f32 %v1610, %v1618
  %v1621 = vmul.f32 %v1619, 1.442695
  %v1622 = vpow.pop %v1621
  %v1623 = vmul.f32 %v1620, 1.442695
  %v1624 = vpow.pop %v1623
  %v1625 = vsel %vm380, %v1622, 0.0
  %1626 = vadd.xlane.f32.xlu0 %v1625
  %v1627 = vpop.xlane.xlu0 %1626
  %v1628 = vsel %vm380, %v1624, 0.0
  %1629 = vadd.xlane.f32.xlu0 %v1628
  %v1630 = vpop.xlane.xlu0 %1629
  %v1631 = vrcp.pop %v1627
  %v1632 = vrcp.pop %v1630
  %v1633 = vmul.f32 %v1622, %v1631
  %v1634 = vmul.f32 %v1624, %v1632
  %v1635 = vpack.c.bf16 %v1634, %v1633
  %1636 = vrot.lane.b32.xlu0 %v1135, 32
  %v1637 = vpop.permute.xlu0 %1636
  %v1640 = vsel %vm380, %v1635, 0
  %1642 = vmatprep.subr.bf16.mxu0 0
  %1643 = vmatpush1.bf16.msra.mxu0 %v1637
  %1644 = vmatprep.subr.bf16.mxu0 0
  %1645 = vmatpush1.bf16.msra.mxu0 0
  %1646 = vmatprep.subr.bf16.mxu0 0
  %1647 = vmatpush1.bf16.msra.mxu0 0
  %1648 = vmatprep.subr.bf16.mxu0 0
  %1649 = vmatpush1.bf16.msra.mxu0 0
  %1650 = vmatprep.subr.bf16.mxu0 0
  %1651 = vmatpush1.bf16.msra.mxu0 0
  %1652 = vmatprep.subr.bf16.mxu0 0
  %1653 = vmatpush1.bf16.msra.mxu0 0
  %1654 = vmatprep.subr.bf16.mxu0 0
  %1655 = vmatpush1.bf16.msra.mxu0 0
  %1656 = vmatprep.subr.bf16.mxu0 0
  %1657 = vmatpush1.bf16.msra.mxu0 0
  %1658 = vmatprep.subr.bf16.mxu0 0
  %1659 = vmatpush1.bf16.msra.mxu0 0
  %1660 = vmatprep.subr.bf16.mxu0 0
  %1661 = vmatpush1.bf16.msra.mxu0 0
  %1662 = vmatprep.subr.bf16.mxu0 0
  %1663 = vmatpush1.bf16.msra.mxu0 0
  %1664 = vmatprep.subr.bf16.mxu0 0
  %1665 = vmatpush1.bf16.msra.mxu0 0
  %1666 = vmatprep.subr.bf16.mxu0 0
  %1667 = vmatpush1.bf16.msra.mxu0 0
  %1668 = vmatprep.subr.bf16.mxu0 0
  %1669 = vmatpush1.bf16.msra.mxu0 0
  %1670 = vmatprep.subr.bf16.mxu0 0
  %1671 = vmatpush1.bf16.msra.mxu0 0
  %1672 = vmatprep.subr.bf16.mxu0 0
  %1673 = vmatpush1.bf16.msra.mxu0 0
  %1674 = vmatprep.mubr.bf16.mxu0 0
  %1675 = vmatmul.mubr.bf16.gmra.mrb[0].mxu0 %v1640
  %v1676 = vpop.f32.mrb[0].mxu0
  %v1677 = vadd.f32 0.0, %v1676
  %v1678 = vpop.f32.mrb[0].mxu0
  %v1679 = vpop.f32.mrb[0].mxu0
  %v1680 = vadd.f32 0.0, %v1679
  %v1681 = vpop.f32.mrb[0].mxu0
  %1682 = vdwg.mxu0
  %v1683 = vpack.c.bf16 %v1680, %v1677
  %v1685 = vsel %vm332, %v1683, 0
  %1687 = vmatprep.subr.bf16.mxu0 0
  %1688 = vmatpush1.bf16.msra.mxu0 %v1013
  %1689 = vmatprep.subr.bf16.mxu0 0
  %1690 = vmatpush1.bf16.msra.mxu0 %v1014
  %1691 = vmatprep.subr.bf16.mxu0 0
  %1692 = vmatpush1.bf16.msra.mxu0 0
  %1693 = vmatprep.subr.bf16.mxu0 0
  %1694 = vmatpush1.bf16.msra.mxu0 0
  %1695 = vmatprep.subr.bf16.mxu0 0
  %1696 = vmatpush1.bf16.msra.mxu0 0
  %1697 = vmatprep.subr.bf16.mxu0 0
  %1698 = vmatpush1.bf16.msra.mxu0 0
  %1699 = vmatprep.subr.bf16.mxu0 0
  %1700 = vmatpush1.bf16.msra.mxu0 0
  %1701 = vmatprep.subr.bf16.mxu0 0
  %1702 = vmatpush1.bf16.msra.mxu0 0
  %1703 = vmatprep.subr.bf16.mxu0 0
  %1704 = vmatpush1.bf16.msra.mxu0 0
  %1705 = vmatprep.subr.bf16.mxu0 0
  %1706 = vmatpush1.bf16.msra.mxu0 0
  %1707 = vmatprep.subr.bf16.mxu0 0
  %1708 = vmatpush1.bf16.msra.mxu0 0
  %1709 = vmatprep.subr.bf16.mxu0 0
  %1710 = vmatpush1.bf16.msra.mxu0 0
  %1711 = vmatprep.subr.bf16.mxu0 0
  %1712 = vmatpush1.bf16.msra.mxu0 0
  %1713 = vmatprep.subr.bf16.mxu0 0
  %1714 = vmatpush1.bf16.msra.mxu0 0
  %1715 = vmatprep.subr.bf16.mxu0 0
  %1716 = vmatpush1.bf16.msra.mxu0 0
  %1717 = vmatprep.subr.bf16.mxu0 0
  %1718 = vmatpush1.bf16.msra.mxu0 0
  %1719 = vmatprep.mubr.bf16.mxu0 0
  %1720 = vmatmul.mubr.bf16.gmra.mrb[0].mxu0 %v1685
  %v1721 = vpop.f32.mrb[0].mxu0
  %v1722 = vadd.f32 0.0, %v1721
  %v1723 = vpop.f32.mrb[0].mxu0
  %v1724 = vpop.f32.mrb[0].mxu0
  %v1725 = vadd.f32 0.0, %v1724
  %v1726 = vpop.f32.mrb[0].mxu0
  %1727 = vdwg.mxu0
  %v1728 = vadd.f32 %v1560, %v1722
  %v1729 = vadd.f32 %v1561, %v1725
  %v1730 = vadd.f32 %v45, %v1061
  %v1731 = vadd.f32 %v46, %v1062
  %v1732 = vadd.f32 %v47, %v1728
  %v1733 = vadd.f32 %v48, %v1729
  %v1734 = vld [vmem:[%s4] sm:$0x1]
  %v1736 = vlaneseq
  %v1737 = vshrl.u32 %v1736, 7
  %v1738 = vsub.s32 0, %v1737
  %v1739 = vrot.slane %v1734, %v1738
  %v1741 = vadd.f32 %v1730, %v1739
  %v1742 = vadd.f32 %v1731, %v1739
  %v1743 = vadd.f32 %v1732, %v1739
  %v1744 = vadd.f32 %v1733, %v1739
  %v1745 = vld [vmem:[%s5] sm:$0x1]
  %v1746 = vld [vmem:[%s6] sm:$0x1]
  %1747 = vadd.xlane.f32.xlu0 %v1741
  %v1748 = vpop.xlane.xlu0 %1747
  %1749 = vadd.xlane.f32.xlu0 %v1742
  %v1750 = vpop.xlane.xlu0 %1749
  %1751 = vadd.xlane.f32.xlu0 %v1743
  %v1752 = vpop.xlane.xlu0 %1751
  %1753 = vadd.xlane.f32.xlu0 %v1744
  %v1754 = vpop.xlane.xlu0 %1753
  %v1755 = vrcp.pop 128.0
  %v1756 = vmul.f32 %v1748, %v1755
  %v1757 = vmul.f32 %v1750, %v1755
  %v1758 = vmul.f32 %v1752, %v1755
  %v1759 = vmul.f32 %v1754, %v1755
  %v1760 = vsub.f32 %v1741, %v1756
  %v1761 = vsub.f32 %v1742, %v1757
  %v1762 = vsub.f32 %v1743, %v1758
  %v1763 = vsub.f32 %v1744, %v1759
  %v1764 = vmul.f32 %v1760, %v1760
  %v1765 = vmul.f32 %v1761, %v1761
  %v1766 = vmul.f32 %v1762, %v1762
  %v1767 = vmul.f32 %v1763, %v1763
  %1768 = vadd.xlane.f32.xlu0 %v1764
  %v1769 = vpop.xlane.xlu0 %1768
  %1770 = vadd.xlane.f32.xlu0 %v1765
  %v1771 = vpop.xlane.xlu0 %1770
  %1772 = vadd.xlane.f32.xlu0 %v1766
  %v1773 = vpop.xlane.xlu0 %1772
  %1774 = vadd.xlane.f32.xlu0 %v1767
  %v1775 = vpop.xlane.xlu0 %1774
  %v1776 = vmul.f32 %v1769, %v1755
  %v1777 = vmul.f32 %v1771, %v1755
  %v1778 = vmul.f32 %v1773, %v1755
  %v1779 = vmul.f32 %v1775, %v1755
  %v1780 = vadd.f32 %v1776, 1e-12
  %v1781 = vadd.f32 %v1777, 1e-12
  %v1782 = vadd.f32 %v1778, 1e-12
  %v1783 = vadd.f32 %v1779, 1e-12
  %v1784 = vrsqrt.pop %v1780
  %v1785 = vrsqrt.pop %v1781
  %v1786 = vrsqrt.pop %v1782
  %v1787 = vrsqrt.pop %v1783
  %v1788 = vmul.f32 %v1760, %v1784
  %v1789 = vmul.f32 %v1761, %v1785
  %v1790 = vmul.f32 %v1762, %v1786
  %v1791 = vmul.f32 %v1763, %v1787
  %v1793 = vlaneseq
  %v1794 = vshrl.u32 %v1793, 7
  %v1795 = vsub.s32 0, %v1794
  %v1796 = vrot.slane %v1745, %v1795
  %v1798 = vmul.f32 %v1788, %v1796
  %v1799 = vmul.f32 %v1789, %v1796
  %v1800 = vmul.f32 %v1790, %v1796
  %v1801 = vmul.f32 %v1791, %v1796
  %v1803 = vlaneseq
  %v1804 = vshrl.u32 %v1803, 7
  %v1805 = vsub.s32 0, %v1804
  %v1806 = vrot.slane %v1746, %v1805
  %v1808 = vadd.f32 %v1798, %v1806
  %v1809 = vadd.f32 %v1799, %v1806
  %v1810 = vadd.f32 %v1800, %v1806
  %v1811 = vadd.f32 %v1801, %v1806
  %v1812 = vpack.c.bf16 %v1809, %v1808
  %v1813 = vpack.c.bf16 %v1811, %v1810
  %v1814 = vld [vmem:[%s7] sm:$0xff]
  %v1815 = vld [vmem:[%s7 + $0x8] sm:$0xff]
  %v1816 = vld [vmem:[%s7 + $0x10] sm:$0xff]
  %v1817 = vld [vmem:[%s7 + $0x18] sm:$0xff]
  %v1818 = vld [vmem:[%s7 + $0x20] sm:$0xff]
  %v1819 = vld [vmem:[%s7 + $0x28] sm:$0xff]
  %v1820 = vld [vmem:[%s7 + $0x30] sm:$0xff]
  %v1821 = vld [vmem:[%s7 + $0x38] sm:$0xff]
  %v1822 = vld [vmem:[%s7 + $0x40] sm:$0xff]
  %v1823 = vld [vmem:[%s7 + $0x48] sm:$0xff]
  %v1824 = vld [vmem:[%s7 + $0x50] sm:$0xff]
  %v1825 = vld [vmem:[%s7 + $0x58] sm:$0xff]
  %v1826 = vld [vmem:[%s7 + $0x60] sm:$0xff]
  %v1827 = vld [vmem:[%s7 + $0x68] sm:$0xff]
  %v1828 = vld [vmem:[%s7 + $0x70] sm:$0xff]
  %v1829 = vld [vmem:[%s7 + $0x78] sm:$0xff]
  %v1830 = vld [vmem:[%s8] sm:$0x3]
  %v1832 = vlaneseq
  %v1833 = vshrl.u32 %v1832, 7
  %v1834 = vsub.s32 0, %v1833
  %v1835 = vrot.slane %v1830, %v1834
  %v1836 = vlaneseq
  %v1837 = vshrl.u32 %v1836, 7
  %v1838 = vsub.s32 1, %v1837
  %v1839 = vrot.slane %v1830, %v1838
  %v1858 = vunpack.c.l.b16 %v1814
  %v1859 = vunpack.c.h.b16 %v1814
  %v1860 = vunpack.c.l.b16 %v1815
  %v1861 = vunpack.c.h.b16 %v1815
  %v1862 = vunpack.c.l.b16 %v1816
  %v1863 = vunpack.c.h.b16 %v1816
  %v1864 = vunpack.c.l.b16 %v1817
  %v1865 = vunpack.c.h.b16 %v1817
  %v1866 = vunpack.c.l.b16 %v1818
  %v1867 = vunpack.c.h.b16 %v1818
  %v1868 = vunpack.c.l.b16 %v1819
  %v1869 = vunpack.c.h.b16 %v1819
  %v1870 = vunpack.c.l.b16 %v1820
  %v1871 = vunpack.c.h.b16 %v1820
  %v1872 = vunpack.c.l.b16 %v1821
  %v1873 = vunpack.c.h.b16 %v1821
  %v1874 = vunpack.c.l.b16 %v1822
  %v1875 = vunpack.c.h.b16 %v1822
  %v1876 = vunpack.c.l.b16 %v1823
  %v1877 = vunpack.c.h.b16 %v1823
  %v1878 = vunpack.c.l.b16 %v1824
  %v1879 = vunpack.c.h.b16 %v1824
  %v1880 = vunpack.c.l.b16 %v1825
  %v1881 = vunpack.c.h.b16 %v1825
  %v1882 = vunpack.c.l.b16 %v1826
  %v1883 = vunpack.c.h.b16 %v1826
  %v1884 = vunpack.c.l.b16 %v1827
  %v1885 = vunpack.c.h.b16 %v1827
  %v1886 = vunpack.c.l.b16 %v1828
  %v1887 = vunpack.c.h.b16 %v1828
  %v1888 = vunpack.c.l.b16 %v1829
  %v1889 = vunpack.c.h.b16 %v1829
  %v1890 = vpack.c.b16 %v1860, %v1858
  %v1891 = vpack.c.b16 %v1861, %v1859
  %v1892 = vpack.c.b16 %v1864, %v1862
  %v1893 = vpack.c.b16 %v1865, %v1863
  %v1894 = vpack.c.b16 %v1868, %v1866
  %v1895 = vpack.c.b16 %v1869, %v1867
  %v1896 = vpack.c.b16 %v1872, %v1870
  %v1897 = vpack.c.b16 %v1873, %v1871
  %v1898 = vpack.c.b16 %v1876, %v1874
  %v1899 = vpack.c.b16 %v1877, %v1875
  %v1900 = vpack.c.b16 %v1880, %v1878
  %v1901 = vpack.c.b16 %v1881, %v1879
  %v1902 = vpack.c.b16 %v1884, %v1882
  %v1903 = vpack.c.b16 %v1885, %v1883
  %v1904 = vpack.c.b16 %v1888, %v1886
  %v1905 = vpack.c.b16 %v1889, %v1887
  %1922 = vmatprep.subr.bf16.mxu0 %v1891
  %1923 = vmatpush1.bf16.msra.mxu0 %v1890
  %1924 = vmatprep.subr.bf16.mxu0 %v1893
  %1925 = vmatpush1.bf16.msra.mxu0 %v1892
  %1926 = vmatprep.subr.bf16.mxu0 %v1895
  %1927 = vmatpush1.bf16.msra.mxu0 %v1894
  %1928 = vmatprep.subr.bf16.mxu0 %v1897
  %1929 = vmatpush1.bf16.msra.mxu0 %v1896
  %1930 = vmatprep.subr.bf16.mxu0 %v1899
  %1931 = vmatpush1.bf16.msra.mxu0 %v1898
  %1932 = vmatprep.subr.bf16.mxu0 %v1901
  %1933 = vmatpush1.bf16.msra.mxu0 %v1900
  %1934 = vmatprep.subr.bf16.mxu0 %v1903
  %1935 = vmatpush1.bf16.msra.mxu0 %v1902
  %1936 = vmatprep.subr.bf16.mxu0 %v1905
  %1937 = vmatpush1.bf16.msra.mxu0 %v1904
  %1938 = vmatprep.subr.bf16.mxu0 0
  %1939 = vmatpush1.bf16.msra.mxu0 0
  %1940 = vmatprep.subr.bf16.mxu0 0
  %1941 = vmatpush1.bf16.msra.mxu0 0
  %1942 = vmatprep.subr.bf16.mxu0 0
  %1943 = vmatpush1.bf16.msra.mxu0 0
  %1944 = vmatprep.subr.bf16.mxu0 0
  %1945 = vmatpush1.bf16.msra.mxu0 0
  %1946 = vmatprep.subr.bf16.mxu0 0
  %1947 = vmatpush1.bf16.msra.mxu0 0
  %1948 = vmatprep.subr.bf16.mxu0 0
  %1949 = vmatpush1.bf16.msra.mxu0 0
  %1950 = vmatprep.subr.bf16.mxu0 0
  %1951 = vmatpush1.bf16.msra.mxu0 0
  %1952 = vmatprep.subr.bf16.mxu0 0
  %1953 = vmatpush1.bf16.msra.mxu0 0
  %1954 = vmatprep.mubr.bf16.mxu0 0
  %1955 = vmatmul.mubr.bf16.gmra.mrb[0].mxu0 %v1812
  %v1956 = vpop.f32.mrb[0].mxu0
  %v1957 = vadd.f32 %v1835, %v1956
  %v1958 = vpop.f32.mrb[0].mxu0
  %v1959 = vadd.f32 %v1839, %v1958
  %v1960 = vpop.f32.mrb[0].mxu0
  %v1961 = vadd.f32 %v1835, %v1960
  %v1962 = vpop.f32.mrb[0].mxu0
  %v1963 = vadd.f32 %v1839, %v1962
  %1964 = vmatprep.mubr.bf16.mxu0 0
  %1965 = vmatmul.mubr.bf16.gmra.mrb[0].mxu0 %v1813
  %v1966 = vpop.f32.mrb[0].mxu0
  %v1967 = vadd.f32 %v1835, %v1966
  %v1968 = vpop.f32.mrb[0].mxu0
  %v1969 = vadd.f32 %v1839, %v1968
  %v1970 = vpop.f32.mrb[0].mxu0
  %v1971 = vadd.f32 %v1835, %v1970
  %v1972 = vpop.f32.mrb[0].mxu0
  %v1973 = vadd.f32 %v1839, %v1972
  %1974 = vdwg.mxu0
  %v1975 = vmul.f32 %v1957, 0.5
  %v1976 = vmul.f32 %v1959, 0.5
  %v1977 = vmul.f32 %v1961, 0.5
  %v1978 = vmul.f32 %v1963, 0.5
  %v1979 = vmul.f32 %v1967, 0.5
  %v1980 = vmul.f32 %v1969, 0.5
  %v1981 = vmul.f32 %v1971, 0.5
  %v1982 = vmul.f32 %v1973, 0.5
  %v1983 = vmul.f32 %v1957, 0.70710677
  %v1984 = vmul.f32 %v1959, 0.70710677
  %v1985 = vmul.f32 %v1961, 0.70710677
  %v1986 = vmul.f32 %v1963, 0.70710677
  %v1987 = vmul.f32 %v1967, 0.70710677
  %v1988 = vmul.f32 %v1969, 0.70710677
  %v1989 = vmul.f32 %v1971, 0.70710677
  %v1990 = vmul.f32 %v1973, 0.70710677
  %v1991 = verf.f32.pop %v1983
  %v1992 = verf.f32.pop %v1984
  %v1993 = verf.f32.pop %v1985
  %v1994 = verf.f32.pop %v1986
  %v1995 = verf.f32.pop %v1987
  %v1996 = verf.f32.pop %v1988
  %v1997 = verf.f32.pop %v1989
  %v1998 = verf.f32.pop %v1990
  %v1999 = vadd.f32 %v1991, 1.0
  %v2000 = vadd.f32 %v1992, 1.0
  %v2001 = vadd.f32 %v1993, 1.0
  %v2002 = vadd.f32 %v1994, 1.0
  %v2003 = vadd.f32 %v1995, 1.0
  %v2004 = vadd.f32 %v1996, 1.0
  %v2005 = vadd.f32 %v1997, 1.0
  %v2006 = vadd.f32 %v1998, 1.0
  %v2007 = vmul.f32 %v1975, %v1999
  %v2008 = vmul.f32 %v1976, %v2000
  %v2009 = vmul.f32 %v1977, %v2001
  %v2010 = vmul.f32 %v1978, %v2002
  %v2011 = vmul.f32 %v1979, %v2003
  %v2012 = vmul.f32 %v1980, %v2004
  %v2013 = vmul.f32 %v1981, %v2005
  %v2014 = vmul.f32 %v1982, %v2006
  %v2015 = vpack.c.bf16 %v2009, %v2007
  %v2016 = vpack.c.bf16 %v2010, %v2008
  %v2017 = vpack.c.bf16 %v2013, %v2011
  %v2018 = vpack.c.bf16 %v2014, %v2012
  %v2019 = vld [vmem:[%s9] sm:$0xf]
  %v2020 = vld [vmem:[%s9 + $0x4] sm:$0xf]
  %v2021 = vld [vmem:[%s9 + $0x8] sm:$0xf]
  %v2022 = vld [vmem:[%s9 + $0xc] sm:$0xf]
  %v2023 = vld [vmem:[%s9 + $0x10] sm:$0xf]
  %v2024 = vld [vmem:[%s9 + $0x14] sm:$0xf]
  %v2025 = vld [vmem:[%s9 + $0x18] sm:$0xf]
  %v2026 = vld [vmem:[%s9 + $0x1c] sm:$0xf]
  %v2027 = vld [vmem:[%s9 + $0x20] sm:$0xf]
  %v2028 = vld [vmem:[%s9 + $0x24] sm:$0xf]
  %v2029 = vld [vmem:[%s9 + $0x28] sm:$0xf]
  %v2030 = vld [vmem:[%s9 + $0x2c] sm:$0xf]
  %v2031 = vld [vmem:[%s9 + $0x30] sm:$0xf]
  %v2032 = vld [vmem:[%s9 + $0x34] sm:$0xf]
  %v2033 = vld [vmem:[%s9 + $0x38] sm:$0xf]
  %v2034 = vld [vmem:[%s9 + $0x3c] sm:$0xf]
  %v2035 = vld [vmem:[%s9 + $0x40] sm:$0xf]
  %v2036 = vld [vmem:[%s9 + $0x44] sm:$0xf]
  %v2037 = vld [vmem:[%s9 + $0x48] sm:$0xf]
  %v2038 = vld [vmem:[%s9 + $0x4c] sm:$0xf]
  %v2039 = vld [vmem:[%s9 + $0x50] sm:$0xf]
  %v2040 = vld [vmem:[%s9 + $0x54] sm:$0xf]
  %v2041 = vld [vmem:[%s9 + $0x58] sm:$0xf]
  %v2042 = vld [vmem:[%s9 + $0x5c] sm:$0xf]
  %v2043 = vld [vmem:[%s9 + $0x60] sm:$0xf]
  %v2044 = vld [vmem:[%s9 + $0x64] sm:$0xf]
  %v2045 = vld [vmem:[%s9 + $0x68] sm:$0xf]
  %v2046 = vld [vmem:[%s9 + $0x6c] sm:$0xf]
  %v2047 = vld [vmem:[%s9 + $0x70] sm:$0xf]
  %v2048 = vld [vmem:[%s9 + $0x74] sm:$0xf]
  %v2049 = vld [vmem:[%s9 + $0x78] sm:$0xf]
  %v2050 = vld [vmem:[%s9 + $0x7c] sm:$0xf]
  %v2051 = vld [vmem:[%s10] sm:$0x1]
  %v2053 = vlaneseq
  %v2054 = vshrl.u32 %v2053, 7
  %v2055 = vsub.s32 0, %v2054
  %v2056 = vrot.slane %v2051, %v2055
  %v2090 = vunpack.c.l.b16 %v2019
  %v2091 = vunpack.c.l.b16 %v2020
  %v2092 = vunpack.c.l.b16 %v2021
  %v2093 = vunpack.c.l.b16 %v2022
  %v2094 = vunpack.c.l.b16 %v2023
  %v2095 = vunpack.c.l.b16 %v2024
  %v2096 = vunpack.c.l.b16 %v2025
  %v2097 = vunpack.c.l.b16 %v2026
  %v2098 = vunpack.c.l.b16 %v2027
  %v2099 = vunpack.c.l.b16 %v2028
  %v2100 = vunpack.c.l.b16 %v2029
  %v2101 = vunpack.c.l.b16 %v2030
  %v2102 = vunpack.c.l.b16 %v2031
  %v2103 = vunpack.c.l.b16 %v2032
  %v2104 = vunpack.c.l.b16 %v2033
  %v2105 = vunpack.c.l.b16 %v2034
  %v2106 = vunpack.c.l.b16 %v2035
  %v2107 = vunpack.c.l.b16 %v2036
  %v2108 = vunpack.c.l.b16 %v2037
  %v2109 = vunpack.c.l.b16 %v2038
  %v2110 = vunpack.c.l.b16 %v2039
  %v2111 = vunpack.c.l.b16 %v2040
  %v2112 = vunpack.c.l.b16 %v2041
  %v2113 = vunpack.c.l.b16 %v2042
  %v2114 = vunpack.c.l.b16 %v2043
  %v2115 = vunpack.c.l.b16 %v2044
  %v2116 = vunpack.c.l.b16 %v2045
  %v2117 = vunpack.c.l.b16 %v2046
  %v2118 = vunpack.c.l.b16 %v2047
  %v2119 = vunpack.c.l.b16 %v2048
  %v2120 = vunpack.c.l.b16 %v2049
  %v2121 = vunpack.c.l.b16 %v2050
  %v2122 = vpack.c.b16 %v2091, %v2090
  %v2123 = vpack.c.b16 %v2093, %v2092
  %v2124 = vpack.c.b16 %v2095, %v2094
  %v2125 = vpack.c.b16 %v2097, %v2096
  %v2126 = vpack.c.b16 %v2099, %v2098
  %v2127 = vpack.c.b16 %v2101, %v2100
  %v2128 = vpack.c.b16 %v2103, %v2102
  %v2129 = vpack.c.b16 %v2105, %v2104
  %v2130 = vpack.c.b16 %v2107, %v2106
  %v2131 = vpack.c.b16 %v2109, %v2108
  %v2132 = vpack.c.b16 %v2111, %v2110
  %v2133 = vpack.c.b16 %v2113, %v2112
  %v2134 = vpack.c.b16 %v2115, %v2114
  %v2135 = vpack.c.b16 %v2117, %v2116
  %v2136 = vpack.c.b16 %v2119, %v2118
  %v2137 = vpack.c.b16 %v2121, %v2120
  %2154 = vmatprep.subr.bf16.mxu0 0
  %2155 = vmatpush1.bf16.msra.mxu0 %v2122
  %2156 = vmatprep.subr.bf16.mxu0 0
  %2157 = vmatpush1.bf16.msra.mxu0 %v2123
  %2158 = vmatprep.subr.bf16.mxu0 0
  %2159 = vmatpush1.bf16.msra.mxu0 %v2124
  %2160 = vmatprep.subr.bf16.mxu0 0
  %2161 = vmatpush1.bf16.msra.mxu0 %v2125
  %2162 = vmatprep.subr.bf16.mxu0 0
  %2163 = vmatpush1.bf16.msra.mxu0 %v2126
  %2164 = vmatprep.subr.bf16.mxu0 0
  %2165 = vmatpush1.bf16.msra.mxu0 %v2127
  %2166 = vmatprep.subr.bf16.mxu0 0
  %2167 = vmatpush1.bf16.msra.mxu0 %v2128
  %2168 = vmatprep.subr.bf16.mxu0 0
  %2169 = vmatpush1.bf16.msra.mxu0 %v2129
  %2170 = vmatprep.subr.bf16.mxu0 0
  %2171 = vmatpush1.bf16.msra.mxu0 %v2130
  %2172 = vmatprep.subr.bf16.mxu0 0
  %2173 = vmatpush1.bf16.msra.mxu0 %v2131
  %2174 = vmatprep.subr.bf16.mxu0 0
  %2175 = vmatpush1.bf16.msra.mxu0 %v2132
  %2176 = vmatprep.subr.bf16.mxu0 0
  %2177 = vmatpush1.bf16.msra.mxu0 %v2133
  %2178 = vmatprep.subr.bf16.mxu0 0
  %2179 = vmatpush1.bf16.msra.mxu0 %v2134
  %2180 = vmatprep.subr.bf16.mxu0 0
  %2181 = vmatpush1.bf16.msra.mxu0 %v2135
  %2182 = vmatprep.subr.bf16.mxu0 0
  %2183 = vmatpush1.bf16.msra.mxu0 %v2136
  %2184 = vmatprep.subr.bf16.mxu0 0
  %2185 = vmatpush1.bf16.msra.mxu0 %v2137
  %2186 = vmatprep.mubr.bf16.mxu0 %v2016
  %2187 = vmatmul.mubr.bf16.gmra.mrb[0].mxu0 %v2015
  %v2188 = vpop.f32.mrb[0].mxu0
  %v2189 = vadd.f32 %v2056, %v2188
  %v2190 = vpop.f32.mrb[0].mxu0
  %v2191 = vpop.f32.mrb[0].mxu0
  %v2192 = vadd.f32 %v2056, %v2191
  %v2193 = vpop.f32.mrb[0].mxu0
  %2194 = vmatprep.mubr.bf16.mxu0 %v2018
  %2195 = vmatmul.mubr.bf16.gmra.mrb[0].mxu0 %v2017
  %v2196 = vpop.f32.mrb[0].mxu0
  %v2197 = vadd.f32 %v2056, %v2196
  %v2198 = vpop.f32.mrb[0].mxu0
  %v2199 = vpop.f32.mrb[0].mxu0
  %v2200 = vadd.f32 %v2056, %v2199
  %v2201 = vpop.f32.mrb[0].mxu0
  %2202 = vdwg.mxu0
  %v2203 = vadd.f32 %v1808, %v2189
  %v2204 = vadd.f32 %v1809, %v2192
  %v2205 = vadd.f32 %v1810, %v2197
  %v2206 = vadd.f32 %v1811, %v2200
  %v2207 = vld [vmem:[%s11] sm:$0x1]
  %v2208 = vld [vmem:[%s12] sm:$0x1]
  %2209 = vadd.xlane.f32.xlu0 %v2203
  %v2210 = vpop.xlane.xlu0 %2209
  %2211 = vadd.xlane.f32.xlu0 %v2204
  %v2212 = vpop.xlane.xlu0 %2211
  %2213 = vadd.xlane.f32.xlu0 %v2205
  %v2214 = vpop.xlane.xlu0 %2213
  %2215 = vadd.xlane.f32.xlu0 %v2206
  %v2216 = vpop.xlane.xlu0 %2215
  %v2217 = vmul.f32 %v2210, %v1755
  %v2218 = vmul.f32 %v2212, %v1755
  %v2219 = vmul.f32 %v2214, %v1755
  %v2220 = vmul.f32 %v2216, %v1755
  %v2221 = vsub.f32 %v2203, %v2217
  %v2222 = vsub.f32 %v2204, %v2218
  %v2223 = vsub.f32 %v2205, %v2219
  %v2224 = vsub.f32 %v2206, %v2220
  %v2225 = vmul.f32 %v2221, %v2221
  %v2226 = vmul.f32 %v2222, %v2222
  %v2227 = vmul.f32 %v2223, %v2223
  %v2228 = vmul.f32 %v2224, %v2224
  %2229 = vadd.xlane.f32.xlu0 %v2225
  %v2230 = vpop.xlane.xlu0 %2229
  %2231 = vadd.xlane.f32.xlu0 %v2226
  %v2232 = vpop.xlane.xlu0 %2231
  %2233 = vadd.xlane.f32.xlu0 %v2227
  %v2234 = vpop.xlane.xlu0 %2233
  %2235 = vadd.xlane.f32.xlu0 %v2228
  %v2236 = vpop.xlane.xlu0 %2235
  %v2237 = vmul.f32 %v2230, %v1755
  %v2238 = vmul.f32 %v2232, %v1755
  %v2239 = vmul.f32 %v2234, %v1755
  %v2240 = vmul.f32 %v2236, %v1755
  %v2241 = vadd.f32 %v2237, 1e-12
  %v2242 = vadd.f32 %v2238, 1e-12
  %v2243 = vadd.f32 %v2239, 1e-12
  %v2244 = vadd.f32 %v2240, 1e-12
  %v2245 = vrsqrt.pop %v2241
  %v2246 = vrsqrt.pop %v2242
  %v2247 = vrsqrt.pop %v2243
  %v2248 = vrsqrt.pop %v2244
  %v2249 = vmul.f32 %v2221, %v2245
  %v2250 = vmul.f32 %v2222, %v2246
  %v2251 = vmul.f32 %v2223, %v2247
  %v2252 = vmul.f32 %v2224, %v2248
  %v2254 = vlaneseq
  %v2255 = vshrl.u32 %v2254, 7
  %v2256 = vsub.s32 0, %v2255
  %v2257 = vrot.slane %v2207, %v2256
  %v2259 = vmul.f32 %v2249, %v2257
  %v2260 = vmul.f32 %v2250, %v2257
  %v2261 = vmul.f32 %v2251, %v2257
  %v2262 = vmul.f32 %v2252, %v2257
  %v2264 = vlaneseq
  %v2265 = vshrl.u32 %v2264, 7
  %v2266 = vsub.s32 0, %v2265
  %v2267 = vrot.slane %v2208, %v2266
  %v2269 = vadd.f32 %v2259, %v2267
  %v2270 = vadd.f32 %v2260, %v2267
  %v2271 = vadd.f32 %v2261, %v2267
  %v2272 = vadd.f32 %v2262, %v2267
  %2273 = vst [vmem:[%s13] sm:$0xff] %v2269
  %2274 = vst [vmem:[%s13 + $0x8] sm:$0xff] %v2270
  %2275 = vst [vmem:[%s13 + $0x10] sm:$0xff] %v2271
  %2276 = vst [vmem:[%s13 + $0x18] sm:$0xff] %v2272
  // Predicated region
  $region54: #{pretraining_forward.4} parent=0 // pred_check
    _
  $region55: #{pretraining_forward.4} parent=0 // pred_check_branch
    %2278 = sbr.rel (0) target = $region57
  $region56: #{pretraining_forward.4} parent=0 // pred_region
    _
  $region57: #{pretraining_forward.4} parent=0 // pred_fallthru
    _
  // Predicated region
  $region58: #{pretraining_forward.4} parent=0 // pred_check
    _
  $region59: #{pretraining_forward.4} parent=0 // pred_check_branch
    %2280 = sbr.rel (0) target = $region61
  $region60: #{pretraining_forward.4} parent=0 // pred_region
    _
  $region61: #{pretraining_forward.4} parent=0 // pred_fallthru
    _

// kernel: pretraining_forward.3
$region0: #{pretraining_forward.3}
  #allocation0 [shape = 'u32[]', space=smem, size = 0x4, offset = 0x4, fixed_abs, tag = 'smem constant byte address 0x4 - core index']
  #allocation1 [shape = 'u32[144,128]{1,0:T(1,128)}', space=vmem, size = 0x12000, scoped, tag = 'internal scratch']
  %s0 = inlined_call_operand.vmem [shape: f32[32,128], index: 0, kind: input, shape index: {}]
  %s1 = inlined_call_operand.vmem [shape: f32[1,128], index: 1, kind: input, shape index: {}]
  %s2 = inlined_call_operand.vmem [shape: f32[1,128], index: 2, kind: input, shape index: {}]
  %s3 = inlined_call_operand.vmem [shape: bf16[128,384], index: 3, kind: input, shape index: {}]
  %s4 = inlined_call_operand.vmem [shape: f32[1,384], index: 4, kind: input, shape index: {}]
  %s5 = inlined_call_operand.vmem [shape: bf16[128,128], index: 5, kind: input, shape index: {}]
  %s6 = inlined_call_operand.vmem [shape: f32[1,128], index: 6, kind: input, shape index: {}]
  %s7 = inlined_call_operand.vmem [shape: f32[1,128], index: 7, kind: input, shape index: {}]
  %s8 = inlined_call_operand.vmem [shape: f32[1,128], index: 8, kind: input, shape index: {}]
  %s9 = inlined_call_operand.vmem [shape: bf16[128,256], index: 9, kind: input, shape index: {}]
  %s10 = inlined_call_operand.vmem [shape: f32[1,256], index: 10, kind: input, shape index: {}]
  %s11 = inlined_call_operand.vmem [shape: bf16[256,128], index: 11, kind: input, shape index: {}]
  %s12 = inlined_call_operand.vmem [shape: f32[1,128], index: 12, kind: input, shape index: {}]
  %s13 = inlined_call_operand.vmem [shape: f32[1,128], index: 13, kind: input, shape index: {}]
  %s14 = inlined_call_operand.vmem [shape: f32[1,128], index: 14, kind: input, shape index: {}]
  %s15 = inlined_call_operand.vmem [shape: f32[32,128], index: 15, kind: output, shape index: {}]
  %s16 = sld [smem:[#allocation0]]
  $region70: #{pretraining_forward.3} parent=0
    _
  %s18 = ssub.s32 1, %s16
  %s19 = scalar_select 0, %s18, %s16
  // Predicated region
  $region2: #{pretraining_forward.3} parent=0 // pred_check
    _
  $region3: #{pretraining_forward.3} parent=0 // pred_check_branch
    %21 = sbr.rel (0) target = $region5
  $region4: #{pretraining_forward.3} parent=0 // pred_region
    _
  $region5: #{pretraining_forward.3} parent=0 // pred_fallthru
    _
  // Predicated region
  $region6: #{pretraining_forward.3} parent=0 // pred_check
    _
  $region7: #{pretraining_forward.3} parent=0 // pred_check_branch
    %23 = sbr.rel (0) target = $region9
  $region8: #{pretraining_forward.3} parent=0 // pred_region
    _
  $region9: #{pretraining_forward.3} parent=0 // pred_fallthru
    _
  // Predicated region
  $region10: #{pretraining_forward.3} parent=0 // pred_check
    _
  $region11: #{pretraining_forward.3} parent=0 // pred_check_branch
    %25 = sbr.rel (0) target = $region13
  $region12: #{pretraining_forward.3} parent=0 // pred_region
    _
  $region13: #{pretraining_forward.3} parent=0 // pred_fallthru
    _
  // Predicated region
  $region14: #{pretraining_forward.3} parent=0 // pred_check
    _
  $region15: #{pretraining_forward.3} parent=0 // pred_check_branch
    %27 = sbr.rel (0) target = $region17
  $region16: #{pretraining_forward.3} parent=0 // pred_region
    _
  $region17: #{pretraining_forward.3} parent=0 // pred_fallthru
    _
  // Predicated region
  $region18: #{pretraining_forward.3} parent=0 // pred_check
    _
  $region19: #{pretraining_forward.3} parent=0 // pred_check_branch
    %29 = sbr.rel (0) target = $region21
  $region20: #{pretraining_forward.3} parent=0 // pred_region
    _
  $region21: #{pretraining_forward.3} parent=0 // pred_fallthru
    _
  // Predicated region
  $region22: #{pretraining_forward.3} parent=0 // pred_check
    _
  $region23: #{pretraining_forward.3} parent=0 // pred_check_branch
    %31 = sbr.rel (0) target = $region25
  $region24: #{pretraining_forward.3} parent=0 // pred_region
    _
  $region25: #{pretraining_forward.3} parent=0 // pred_fallthru
    _
  // Predicated region
  $region26: #{pretraining_forward.3} parent=0 // pred_check
    _
  $region27: #{pretraining_forward.3} parent=0 // pred_check_branch
    %33 = sbr.rel (0) target = $region29
  $region28: #{pretraining_forward.3} parent=0 // pred_region
    _
  $region29: #{pretraining_forward.3} parent=0 // pred_fallthru
    _
  // Predicated region
  $region30: #{pretraining_forward.3} parent=0 // pred_check
    _
  $region31: #{pretraining_forward.3} parent=0 // pred_check_branch
    %35 = sbr.rel (0) target = $region33
  $region32: #{pretraining_forward.3} parent=0 // pred_region
    _
  $region33: #{pretraining_forward.3} parent=0 // pred_fallthru
    _
  // Predicated region
  $region34: #{pretraining_forward.3} parent=0 // pred_check
    _
  $region35: #{pretraining_forward.3} parent=0 // pred_check_branch
    %37 = sbr.rel (0) target = $region37
  $region36: #{pretraining_forward.3} parent=0 // pred_region
    _
  $region37: #{pretraining_forward.3} parent=0 // pred_fallthru
    _
  // Predicated region
  $region38: #{pretraining_forward.3} parent=0 // pred_check
    _
  $region39: #{pretraining_forward.3} parent=0 // pred_check_branch
    %39 = sbr.rel (0) target = $region41
  $region40: #{pretraining_forward.3} parent=0 // pred_region
    _
  $region41: #{pretraining_forward.3} parent=0 // pred_fallthru
    _
  // Predicated region
  $region42: #{pretraining_forward.3} parent=0 // pred_check
    _
  $region43: #{pretraining_forward.3} parent=0 // pred_check_branch
    %41 = sbr.rel (0) target = $region45
  $region44: #{pretraining_forward.3} parent=0 // pred_region
    _
  $region45: #{pretraining_forward.3} parent=0 // pred_fallthru
    _
  // Predicated region
  $region46: #{pretraining_forward.3} parent=0 // pred_check
    _
  $region47: #{pretraining_forward.3} parent=0 // pred_check_branch
    %43 = sbr.rel (0) target = $region49
  $region48: #{pretraining_forward.3} parent=0 // pred_region
    _
  $region49: #{pretraining_forward.3} parent=0 // pred_fallthru
    _
  // Predicated region
  $region50: #{pretraining_forward.3} parent=0 // pred_check
    _
  $region51: #{pretraining_forward.3} parent=0 // pred_check_branch
    %45 = sbr.rel (0) target = $region53
  $region52: #{pretraining_forward.3} parent=0 // pred_region
    _
  $region53: #{pretraining_forward.3} parent=0 // pred_fallthru
    _
  // Predicated region
  $region54: #{pretraining_forward.3} parent=0 // pred_check
    _
  $region55: #{pretraining_forward.3} parent=0 // pred_check_branch
    %47 = sbr.rel (0) target = $region57
  $region56: #{pretraining_forward.3} parent=0 // pred_region
    _
  $region57: #{pretraining_forward.3} parent=0 // pred_fallthru
    _
  // Predicated region
  $region58: #{pretraining_forward.3} parent=0 // pred_check
    _
  $region59: #{pretraining_forward.3} parent=0 // pred_check_branch
    %49 = sbr.rel (0) target = $region61
  $region60: #{pretraining_forward.3} parent=0 // pred_region
    _
  $region61: #{pretraining_forward.3} parent=0 // pred_fallthru
    _
  %v51 = vld [vmem:[%s0] sm:$0xff]
  %v52 = vld [vmem:[%s0 + $0x8] sm:$0xff]
  %v53 = vld [vmem:[%s0 + $0x10] sm:$0xff]
  %v54 = vld [vmem:[%s0 + $0x18] sm:$0xff]
  %v55 = vld [vmem:[%s1] sm:$0x1]
  %v56 = vld [vmem:[%s2] sm:$0x1]
  %57 = vadd.xlane.f32.xlu0 %v51
  %v58 = vpop.xlane.xlu0 %57
  %59 = vadd.xlane.f32.xlu0 %v52
  %v60 = vpop.xlane.xlu0 %59
  %61 = vadd.xlane.f32.xlu0 %v53
  %v62 = vpop.xlane.xlu0 %61
  %63 = vadd.xlane.f32.xlu0 %v54
  %v64 = vpop.xlane.xlu0 %63
  %v65 = vrcp.pop 128.0
  %v66 = vmul.f32 %v58, %v65
  %v67 = vmul.f32 %v60, %v65
  %v68 = vmul.f32 %v62, %v65
  %v69 = vmul.f32 %v64, %v65
  %v70 = vsub.f32 %v51, %v66
  %v71 = vsub.f32 %v52, %v67
  %v72 = vsub.f32 %v53, %v68
  %v73 = vsub.f32 %v54, %v69
  %v74 = vmul.f32 %v70, %v70
  %v75 = vmul.f32 %v71, %v71
  %v76 = vmul.f32 %v72, %v72
  %v77 = vmul.f32 %v73, %v73
  %78 = vadd.xlane.f32.xlu0 %v74
  %v79 = vpop.xlane.xlu0 %78
  %80 = vadd.xlane.f32.xlu0 %v75
  %v81 = vpop.xlane.xlu0 %80
  %82 = vadd.xlane.f32.xlu0 %v76
  %v83 = vpop.xlane.xlu0 %82
  %84 = vadd.xlane.f32.xlu0 %v77
  %v85 = vpop.xlane.xlu0 %84
  %v86 = vmul.f32 %v79, %v65
  %v87 = vmul.f32 %v81, %v65
  %v88 = vmul.f32 %v83, %v65
  %v89 = vmul.f32 %v85, %v65
  %v90 = vadd.f32 %v86, 1e-12
  %v91 = vadd.f32 %v87, 1e-12
  %v92 = vadd.f32 %v88, 1e-12
  %v93 = vadd.f32 %v89, 1e-12
  %v94 = vrsqrt.pop %v90
  %v95 = vrsqrt.pop %v91
  %v96 = vrsqrt.pop %v92
  %v97 = vrsqrt.pop %v93
  %v98 = vmul.f32 %v70, %v94
  %v99 = vmul.f32 %v71, %v95
  %v100 = vmul.f32 %v72, %v96
  %v101 = vmul.f32 %v73, %v97
  %v103 = vlaneseq
  %v104 = vshrl.u32 %v103, 7
  %v105 = vsub.s32 0, %v104
  %v106 = vrot.slane %v55, %v105
  %v108 = vmul.f32 %v98, %v106
  %v109 = vmul.f32 %v99, %v106
  %v110 = vmul.f32 %v100, %v106
  %v111 = vmul.f32 %v101, %v106
  %v113 = vlaneseq
  %v114 = vshrl.u32 %v113, 7
  %v115 = vsub.s32 0, %v114
  %v116 = vrot.slane %v56, %v115
  %v118 = vadd.f32 %v108, %v116
  %v119 = vadd.f32 %v109, %v116
  %v120 = vadd.f32 %v110, %v116
  %v121 = vadd.f32 %v111, %v116
  %v122 = vpack.c.bf16 %v119, %v118
  %v123 = vpack.c.bf16 %v121, %v120
  %v124 = vld [vmem:[%s3] sm:$0xff]
  %v125 = vld [vmem:[%s3 + $0x8] sm:$0xf]
  %v126 = vld [vmem:[%s3 + $0xc] sm:$0xff]
  %v127 = vld [vmem:[%s3 + $0x14] sm:$0xf]
  %v128 = vld [vmem:[%s3 + $0x18] sm:$0xff]
  %v129 = vld [vmem:[%s3 + $0x20] sm:$0xf]
  %v130 = vld [vmem:[%s3 + $0x24] sm:$0xff]
  %v131 = vld [vmem:[%s3 + $0x2c] sm:$0xf]
  %v132 = vld [vmem:[%s3 + $0x30] sm:$0xff]
  %v133 = vld [vmem:[%s3 + $0x38] sm:$0xf]
  %v134 = vld [vmem:[%s3 + $0x3c] sm:$0xff]
  %v135 = vld [vmem:[%s3 + $0x44] sm:$0xf]
  %v136 = vld [vmem:[%s3 + $0x48] sm:$0xff]
  %v137 = vld [vmem:[%s3 + $0x50] sm:$0xf]
  %v138 = vld [vmem:[%s3 + $0x54] sm:$0xff]
  %v139 = vld [vmem:[%s3 + $0x5c] sm:$0xf]
  %v140 = vld [vmem:[%s3 + $0x60] sm:$0xff]
  %v141 = vld [vmem:[%s3 + $0x68] sm:$0xf]
  %v142 = vld [vmem:[%s3 + $0x6c] sm:$0xff]
  %v143 = vld [vmem:[%s3 + $0x74] sm:$0xf]
  %v144 = vld [vmem:[%s3 + $0x78] sm:$0xff]
  %v145 = vld [vmem:[%s3 + $0x80] sm:$0xf]
  %v146 = vld [vmem:[%s3 + $0x84] sm:$0xff]
  %v147 = vld [vmem:[%s3 + $0x8c] sm:$0xf]
  %v148 = vld [vmem:[%s3 + $0x90] sm:$0xff]
  %v149 = vld [vmem:[%s3 + $0x98] sm:$0xf]
  %v150 = vld [vmem:[%s3 + $0x9c] sm:$0xff]
  %v151 = vld [vmem:[%s3 + $0xa4] sm:$0xf]
  %v152 = vld [vmem:[%s3 + $0xa8] sm:$0xff]
  %v153 = vld [vmem:[%s3 + $0xb0] sm:$0xf]
  %v154 = vld [vmem:[%s3 + $0xb4] sm:$0xff]
  %v155 = vld [vmem:[%s3 + $0xbc] sm:$0xf]
  %v156 = vld [vmem:[%s4] sm:$0x7]
  %v158 = vlaneseq
  %v159 = vshrl.u32 %v158, 7
  %v160 = vsub.s32 0, %v159
  %v161 = vrot.slane %v156, %v160
  %v162 = vlaneseq
  %v163 = vshrl.u32 %v162, 7
  %v164 = vsub.s32 1, %v163
  %v165 = vrot.slane %v156, %v164
  %v166 = vlaneseq
  %v167 = vshrl.u32 %v166, 7
  %v168 = vsub.s32 2, %v167
  %v169 = vrot.slane %v156, %v168
  %v205 = vunpack.c.l.b16 %v124
  %v206 = vunpack.c.h.b16 %v124
  %v207 = vunpack.c.l.b16 %v125
  %v208 = vunpack.c.l.b16 %v126
  %v209 = vunpack.c.h.b16 %v126
  %v210 = vunpack.c.l.b16 %v127
  %v211 = vunpack.c.l.b16 %v128
  %v212 = vunpack.c.h.b16 %v128
  %v213 = vunpack.c.l.b16 %v129
  %v214 = vunpack.c.l.b16 %v130
  %v215 = vunpack.c.h.b16 %v130
  %v216 = vunpack.c.l.b16 %v131
  %v217 = vunpack.c.l.b16 %v132
  %v218 = vunpack.c.h.b16 %v132
  %v219 = vunpack.c.l.b16 %v133
  %v220 = vunpack.c.l.b16 %v134
  %v221 = vunpack.c.h.b16 %v134
  %v222 = vunpack.c.l.b16 %v135
  %v223 = vunpack.c.l.b16 %v136
  %v224 = vunpack.c.h.b16 %v136
  %v225 = vunpack.c.l.b16 %v137
  %v226 = vunpack.c.l.b16 %v138
  %v227 = vunpack.c.h.b16 %v138
  %v228 = vunpack.c.l.b16 %v139
  %v229 = vunpack.c.l.b16 %v140
  %v230 = vunpack.c.h.b16 %v140
  %v231 = vunpack.c.l.b16 %v141
  %v232 = vunpack.c.l.b16 %v142
  %v233 = vunpack.c.h.b16 %v142
  %v234 = vunpack.c.l.b16 %v143
  %v235 = vunpack.c.l.b16 %v144
  %v236 = vunpack.c.h.b16 %v144
  %v237 = vunpack.c.l.b16 %v145
  %v238 = vunpack.c.l.b16 %v146
  %v239 = vunpack.c.h.b16 %v146
  %v240 = vunpack.c.l.b16 %v147
  %v241 = vunpack.c.l.b16 %v148
  %v242 = vunpack.c.h.b16 %v148
  %v243 = vunpack.c.l.b16 %v149
  %v244 = vunpack.c.l.b16 %v150
  %v245 = vunpack.c.h.b16 %v150
  %v246 = vunpack.c.l.b16 %v151
  %v247 = vunpack.c.l.b16 %v152
  %v248 = vunpack.c.h.b16 %v152
  %v249 = vunpack.c.l.b16 %v153
  %v250 = vunpack.c.l.b16 %v154
  %v251 = vunpack.c.h.b16 %v154
  %v252 = vunpack.c.l.b16 %v155
  %v253 = vpack.c.b16 %v208, %v205
  %v254 = vpack.c.b16 %v209, %v206
  %v255 = vpack.c.b16 %v210, %v207
  %v256 = vpack.c.b16 %v214, %v211
  %v257 = vpack.c.b16 %v215, %v212
  %v258 = vpack.c.b16 %v216, %v213
  %v259 = vpack.c.b16 %v220, %v217
  %v260 = vpack.c.b16 %v221, %v218
  %v261 = vpack.c.b16 %v222, %v219
  %v262 = vpack.c.b16 %v226, %v223
  %v263 = vpack.c.b16 %v227, %v224
  %v264 = vpack.c.b16 %v228, %v225
  %v265 = vpack.c.b16 %v232, %v229
  %v266 = vpack.c.b16 %v233, %v230
  %v267 = vpack.c.b16 %v234, %v231
  %v268 = vpack.c.b16 %v238, %v235
  %v269 = vpack.c.b16 %v239, %v236
  %v270 = vpack.c.b16 %v240, %v237
  %v271 = vpack.c.b16 %v244, %v241
  %v272 = vpack.c.b16 %v245, %v242
  %v273 = vpack.c.b16 %v246, %v243
  %v274 = vpack.c.b16 %v250, %v247
  %v275 = vpack.c.b16 %v251, %v248
  %v276 = vpack.c.b16 %v252, %v249
  %301 = vmatprep.subr.bf16.mxu0 %v254
  %302 = vmatpush1.bf16.msra.mxu0 %v253
  %303 = vmatprep.subr.bf16.mxu0 %v257
  %304 = vmatpush1.bf16.msra.mxu0 %v256
  %305 = vmatprep.subr.bf16.mxu0 %v260
  %306 = vmatpush1.bf16.msra.mxu0 %v259
  %307 = vmatprep.subr.bf16.mxu0 %v263
  %308 = vmatpush1.bf16.msra.mxu0 %v262
  %309 = vmatprep.subr.bf16.mxu0 %v266
  %310 = vmatpush1.bf16.msra.mxu0 %v265
  %311 = vmatprep.subr.bf16.mxu0 %v269
  %312 = vmatpush1.bf16.msra.mxu0 %v268
  %313 = vmatprep.subr.bf16.mxu0 %v272
  %314 = vmatpush1.bf16.msra.mxu0 %v271
  %315 = vmatprep.subr.bf16.mxu0 %v275
  %316 = vmatpush1.bf16.msra.mxu0 %v274
  %317 = vmatprep.subr.bf16.mxu0 0
  %318 = vmatpush1.bf16.msra.mxu0 0
  %319 = vmatprep.subr.bf16.mxu0 0
  %320 = vmatpush1.bf16.msra.mxu0 0
  %321 = vmatprep.subr.bf16.mxu0 0
  %322 = vmatpush1.bf16.msra.mxu0 0
  %323 = vmatprep.subr.bf16.mxu0 0
  %324 = vmatpush1.bf16.msra.mxu0 0
  %325 = vmatprep.subr.bf16.mxu0 0
  %326 = vmatpush1.bf16.msra.mxu0 0
  %327 = vmatprep.subr.bf16.mxu0 0
  %328 = vmatpush1.bf16.msra.mxu0 0
  %329 = vmatprep.subr.bf16.mxu0 0
  %330 = vmatpush1.bf16.msra.mxu0 0
  %331 = vmatprep.subr.bf16.mxu0 0
  %332 = vmatpush1.bf16.msra.mxu0 0
  %333 = vmatprep.mubr.bf16.mxu0 0
  %334 = vmatmul.mubr.bf16.gmra.mrb[0].mxu0 %v122
  %v335 = vpop.f32.mrb[0].mxu0
  %v336 = vadd.f32 %v161, %v335
  %v337 = vpop.f32.mrb[0].mxu0
  %v338 = vadd.f32 %v165, %v337
  %v339 = vpop.f32.mrb[0].mxu0
  %v340 = vadd.f32 %v161, %v339
  %v341 = vpop.f32.mrb[0].mxu0
  %v342 = vadd.f32 %v165, %v341
  %343 = vmatprep.mubr.bf16.mxu0 0
  %344 = vmatmul.mubr.bf16.gmra.mrb[0].mxu0 %v123
  %v345 = vpop.f32.mrb[0].mxu0
  %v346 = vadd.f32 %v161, %v345
  %v347 = vpop.f32.mrb[0].mxu0
  %v348 = vadd.f32 %v165, %v347
  %v349 = vpop.f32.mrb[0].mxu0
  %v350 = vadd.f32 %v161, %v349
  %v351 = vpop.f32.mrb[0].mxu0
  %v352 = vadd.f32 %v165, %v351
  %353 = vdwg.mxu0
  %354 = vmatprep.subr.bf16.mxu0 0
  %355 = vmatpush1.bf16.msra.mxu0 %v255
  %356 = vmatprep.subr.bf16.mxu0 0
  %357 = vmatpush1.bf16.msra.mxu0 %v258
  %358 = vmatprep.subr.bf16.mxu0 0
  %359 = vmatpush1.bf16.msra.mxu0 %v261
  %360 = vmatprep.subr.bf16.mxu0 0
  %361 = vmatpush1.bf16.msra.mxu0 %v264
  %362 = vmatprep.subr.bf16.mxu0 0
  %363 = vmatpush1.bf16.msra.mxu0 %v267
  %364 = vmatprep.subr.bf16.mxu0 0
  %365 = vmatpush1.bf16.msra.mxu0 %v270
  %366 = vmatprep.subr.bf16.mxu0 0
  %367 = vmatpush1.bf16.msra.mxu0 %v273
  %368 = vmatprep.subr.bf16.mxu0 0
  %369 = vmatpush1.bf16.msra.mxu0 %v276
  %370 = vmatprep.subr.bf16.mxu0 0
  %371 = vmatpush1.bf16.msra.mxu0 0
  %372 = vmatprep.subr.bf16.mxu0 0
  %373 = vmatpush1.bf16.msra.mxu0 0
  %374 = vmatprep.subr.bf16.mxu0 0
  %375 = vmatpush1.bf16.msra.mxu0 0
  %376 = vmatprep.subr.bf16.mxu0 0
  %377 = vmatpush1.bf16.msra.mxu0 0
  %378 = vmatprep.subr.bf16.mxu0 0
  %379 = vmatpush1.bf16.msra.mxu0 0
  %380 = vmatprep.subr.bf16.mxu0 0
  %381 = vmatpush1.bf16.msra.mxu0 0
  %382 = vmatprep.subr.bf16.mxu0 0
  %383 = vmatpush1.bf16.msra.mxu0 0
  %384 = vmatprep.subr.bf16.mxu0 0
  %385 = vmatpush1.bf16.msra.mxu0 0
  %386 = vmatprep.mubr.bf16.mxu0 0
  %387 = vmatmul.mubr.bf16.gmra.mrb[0].mxu0 %v122
  %v388 = vpop.f32.mrb[0].mxu0
  %v389 = vadd.f32 %v169, %v388
  %v390 = vpop.f32.mrb[0].mxu0
  %v391 = vpop.f32.mrb[0].mxu0
  %v392 = vadd.f32 %v169, %v391
  %v393 = vpop.f32.mrb[0].mxu0
  %394 = vmatprep.mubr.bf16.mxu0 0
  %395 = vmatmul.mubr.bf16.gmra.mrb[0].mxu0 %v123
  %v396 = vpop.f32.mrb[0].mxu0
  %v397 = vadd.f32 %v169, %v396
  %v398 = vpop.f32.mrb[0].mxu0
  %v399 = vpop.f32.mrb[0].mxu0
  %v400 = vadd.f32 %v169, %v399
  %v401 = vpop.f32.mrb[0].mxu0
  %402 = vdwg.mxu0
  %v403 = vpack.c.bf16 %v340, %v336
  %v404 = vpack.c.bf16 %v342, %v338
  %vm405 = vcmask 261120
  %v407 = vsel %vm405, %v403, 0
  %v410 = vsel %vm405, %v404, 0
  %412 = vmatprep.subr.bf16.mxu0 0
  %413 = vmatpush1.bf16.xpose.msra.mxu0 %v410
  %414 = vmatprep.subr.bf16.mxu0 0
  %415 = vmatpush1.bf16.xpose.msra.mxu0 0
  %416 = vmatprep.subr.bf16.mxu0 0
  %417 = vmatpush1.bf16.xpose.msra.mxu0 0
  %418 = vmatprep.subr.bf16.mxu0 0
  %419 = vmatpush1.bf16.xpose.msra.mxu0 0
  %420 = vmatprep.subr.bf16.mxu0 0
  %421 = vmatpush1.bf16.xpose.msra.mxu0 0
  %422 = vmatprep.subr.bf16.mxu0 0
  %423 = vmatpush1.bf16.xpose.msra.mxu0 0
  %424 = vmatprep.subr.bf16.mxu0 0
  %425 = vmatpush1.bf16.xpose.msra.mxu0 0
  %426 = vmatprep.subr.bf16.mxu0 0
  %427 = vmatpush1.bf16.xpose.msra.mxu0 0
  %428 = vmatprep.subr.bf16.mxu0 0
  %429 = vmatpush1.bf16.xpose.msra.mxu0 0
  %430 = vmatprep.subr.bf16.mxu0 0
  %431 = vmatpush1.bf16.xpose.msra.mxu0 0
  %432 = vmatprep.subr.bf16.mxu0 0
  %433 = vmatpush1.bf16.xpose.msra.mxu0 0
  %434 = vmatprep.subr.bf16.mxu0 0
  %435 = vmatpush1.bf16.xpose.msra.mxu0 0
  %436 = vmatprep.subr.bf16.mxu0 0
  %437 = vmatpush1.bf16.xpose.msra.mxu0 0
  %438 = vmatprep.subr.bf16.mxu0 0
  %439 = vmatpush1.bf16.xpose.msra.mxu0 0
  %440 = vmatprep.subr.bf16.mxu0 0
  %441 = vmatpush1.bf16.xpose.msra.mxu0 0
  %442 = vmatprep.subr.bf16.mxu0 0
  %443 = vmatpush1.bf16.xpose.msra.mxu0 0
  %444 = vmatprep.mubr.bf16.mxu0 0
  %445 = vmatmul.mubr.bf16.gmra.mrb[0].mxu0 %v407
  %v446 = vpop.f32.mrb[0].mxu0
  %v447 = vadd.f32 0.0, %v446
  %v448 = vpop.f32.mrb[0].mxu0
  %v449 = vpop.f32.mrb[0].mxu0
  %v450 = vadd.f32 0.0, %v449
  %v451 = vpop.f32.mrb[0].mxu0
  %452 = vdwg.mxu0
  %vm453 = vcmask 130048
  %v454 = vsel %vm453, %v447, -inf
  %455 = vmax.xlane.f32.xlu0 %v454
  %v456 = vpop.xlane.xlu0 %455
  %v457 = vsel %vm453, %v450, -inf
  %458 = vmax.xlane.f32.xlu0 %v457
  %v459 = vpop.xlane.xlu0 %458
  %v460 = vsub.f32 %v447, %v456
  %v461 = vsub.f32 %v450, %v459
  %v462 = vmul.f32 %v460, 1.442695
  %v463 = vpow.pop %v462
  %v464 = vmul.f32 %v461, 1.442695
  %v465 = vpow.pop %v464
  %v466 = vsel %vm453, %v463, 0.0
  %467 = vadd.xlane.f32.xlu0 %v466
  %v468 = vpop.xlane.xlu0 %467
  %v469 = vsel %vm453, %v465, 0.0
  %470 = vadd.xlane.f32.xlu0 %v469
  %v471 = vpop.xlane.xlu0 %470
  %v472 = vrcp.pop %v468
  %v473 = vrcp.pop %v471
  %v474 = vmul.f32 %v463, %v472
  %v475 = vmul.f32 %v465, %v473
  %v476 = vpack.c.bf16 %v475, %v474
  %v477 = vpack.c.bf16 %v392, %v389
  %v479 = vsel %vm453, %v476, 0
  %481 = vmatprep.subr.bf16.mxu0 0
  %482 = vmatpush1.bf16.msra.mxu0 %v477
  %483 = vmatprep.subr.bf16.mxu0 0
  %484 = vmatpush1.bf16.msra.mxu0 0
  %485 = vmatprep.subr.bf16.mxu0 0
  %486 = vmatpush1.bf16.msra.mxu0 0
  %487 = vmatprep.subr.bf16.mxu0 0
  %488 = vmatpush1.bf16.msra.mxu0 0
  %489 = vmatprep.subr.bf16.mxu0 0
  %490 = vmatpush1.bf16.msra.mxu0 0
  %491 = vmatprep.subr.bf16.mxu0 0
  %492 = vmatpush1.bf16.msra.mxu0 0
  %493 = vmatprep.subr.bf16.mxu0 0
  %494 = vmatpush1.bf16.msra.mxu0 0
  %495 = vmatprep.subr.bf16.mxu0 0
  %496 = vmatpush1.bf16.msra.mxu0 0
  %497 = vmatprep.subr.bf16.mxu0 0
  %498 = vmatpush1.bf16.msra.mxu0 0
  %499 = vmatprep.subr.bf16.mxu0 0
  %500 = vmatpush1.bf16.msra.mxu0 0
  %501 = vmatprep.subr.bf16.mxu0 0
  %502 = vmatpush1.bf16.msra.mxu0 0
  %503 = vmatprep.subr.bf16.mxu0 0
  %504 = vmatpush1.bf16.msra.mxu0 0
  %505 = vmatprep.subr.bf16.mxu0 0
  %506 = vmatpush1.bf16.msra.mxu0 0
  %507 = vmatprep.subr.bf16.mxu0 0
  %508 = vmatpush1.bf16.msra.mxu0 0
  %509 = vmatprep.subr.bf16.mxu0 0
  %510 = vmatpush1.bf16.msra.mxu0 0
  %511 = vmatprep.subr.bf16.mxu0 0
  %512 = vmatpush1.bf16.msra.mxu0 0
  %513 = vmatprep.mubr.bf16.mxu0 0
  %514 = vmatmul.mubr.bf16.gmra.mrb[0].mxu0 %v479
  %v515 = vpop.f32.mrb[0].mxu0
  %v516 = vadd.f32 0.0, %v515
  %v517 = vpop.f32.mrb[0].mxu0
  %v518 = vpop.f32.mrb[0].mxu0
  %v519 = vadd.f32 0.0, %v518
  %v520 = vpop.f32.mrb[0].mxu0
  %521 = vdwg.mxu0
  %v522 = vpack.c.bf16 %v519, %v516
  %v523 = vld [vmem:[%s5] sm:$0xf]
  %v524 = vld [vmem:[%s5 + $0x4] sm:$0xf]
  %v525 = vld [vmem:[%s5 + $0x8] sm:$0xf]
  %v526 = vld [vmem:[%s5 + $0xc] sm:$0xf]
  %528 = vrot.lane.b32.xlu0 %v403, 96
  %v529 = vpop.permute.xlu0 %528
  %531 = vrot.lane.b32.xlu0 %v404, 96
  %v532 = vpop.permute.xlu0 %531
  %v534 = vsel %vm405, %v529, 0
  %v537 = vsel %vm405, %v532, 0
  %539 = vmatprep.subr.bf16.mxu0 0
  %540 = vmatpush1.bf16.xpose.msra.mxu0 %v537
  %541 = vmatprep.subr.bf16.mxu0 0
  %542 = vmatpush1.bf16.xpose.msra.mxu0 0
  %543 = vmatprep.subr.bf16.mxu0 0
  %544 = vmatpush1.bf16.xpose.msra.mxu0 0
  %545 = vmatprep.subr.bf16.mxu0 0
  %546 = vmatpush1.bf16.xpose.msra.mxu0 0
  %547 = vmatprep.subr.bf16.mxu0 0
  %548 = vmatpush1.bf16.xpose.msra.mxu0 0
  %549 = vmatprep.subr.bf16.mxu0 0
  %550 = vmatpush1.bf16.xpose.msra.mxu0 0
  %551 = vmatprep.subr.bf16.mxu0 0
  %552 = vmatpush1.bf16.xpose.msra.mxu0 0
  %553 = vmatprep.subr.bf16.mxu0 0
  %554 = vmatpush1.bf16.xpose.msra.mxu0 0
  %555 = vmatprep.subr.bf16.mxu0 0
  %556 = vmatpush1.bf16.xpose.msra.mxu0 0
  %557 = vmatprep.subr.bf16.mxu0 0
  %558 = vmatpush1.bf16.xpose.msra.mxu0 0
  %559 = vmatprep.subr.bf16.mxu0 0
  %560 = vmatpush1.bf16.xpose.msra.mxu0 0
  %561 = vmatprep.subr.bf16.mxu0 0
  %562 = vmatpush1.bf16.xpose.msra.mxu0 0
  %563 = vmatprep.subr.bf16.mxu0 0
  %564 = vmatpush1.bf16.xpose.msra.mxu0 0
  %565 = vmatprep.subr.bf16.mxu0 0
  %566 = vmatpush1.bf16.xpose.msra.mxu0 0
  %567 = vmatprep.subr.bf16.mxu0 0
  %568 = vmatpush1.bf16.xpose.msra.mxu0 0
  %569 = vmatprep.subr.bf16.mxu0 0
  %570 = vmatpush1.bf16.xpose.msra.mxu0 0
  %571 = vmatprep.mubr.bf16.mxu0 0
  %572 = vmatmul.mubr.bf16.gmra.mrb[0].mxu0 %v534
  %v573 = vpop.f32.mrb[0].mxu0
  %v574 = vadd.f32 0.0, %v573
  %v575 = vpop.f32.mrb[0].mxu0
  %v576 = vpop.f32.mrb[0].mxu0
  %v577 = vadd.f32 0.0, %v576
  %v578 = vpop.f32.mrb[0].mxu0
  %579 = vdwg.mxu0
  %v580 = vsel %vm453, %v574, -inf
  %581 = vmax.xlane.f32.xlu0 %v580
  %v582 = vpop.xlane.xlu0 %581
  %v583 = vsel %vm453, %v577, -inf
  %584 = vmax.xlane.f32.xlu0 %v583
  %v585 = vpop.xlane.xlu0 %584
  %v586 = vsub.f32 %v574, %v582
  %v587 = vsub.f32 %v577, %v585
  %v588 = vmul.f32 %v586, 1.442695
  %v589 = vpow.pop %v588
  %v590 = vmul.f32 %v587, 1.442695
  %v591 = vpow.pop %v590
  %v592 = vsel %vm453, %v589, 0.0
  %593 = vadd.xlane.f32.xlu0 %v592
  %v594 = vpop.xlane.xlu0 %593
  %v595 = vsel %vm453, %v591, 0.0
  %596 = vadd.xlane.f32.xlu0 %v595
  %v597 = vpop.xlane.xlu0 %596
  %v598 = vrcp.pop %v594
  %v599 = vrcp.pop %v597
  %v600 = vmul.f32 %v589, %v598
  %v601 = vmul.f32 %v591, %v599
  %v602 = vpack.c.bf16 %v601, %v600
  %604 = vrot.lane.b32.xlu0 %v477, 96
  %v605 = vpop.permute.xlu0 %604
  %v608 = vsel %vm453, %v602, 0
  %610 = vmatprep.subr.bf16.mxu0 0
  %611 = vmatpush1.bf16.msra.mxu0 %v605
  %612 = vmatprep.subr.bf16.mxu0 0
  %613 = vmatpush1.bf16.msra.mxu0 0
  %614 = vmatprep.subr.bf16.mxu0 0
  %615 = vmatpush1.bf16.msra.mxu0 0
  %616 = vmatprep.subr.bf16.mxu0 0
  %617 = vmatpush1.bf16.msra.mxu0 0
  %618 = vmatprep.subr.bf16.mxu0 0
  %619 = vmatpush1.bf16.msra.mxu0 0
  %620 = vmatprep.subr.bf16.mxu0 0
  %621 = vmatpush1.bf16.msra.mxu0 0
  %622 = vmatprep.subr.bf16.mxu0 0
  %623 = vmatpush1.bf16.msra.mxu0 0
  %624 = vmatprep.subr.bf16.mxu0 0
  %625 = vmatpush1.bf16.msra.mxu0 0
  %626 = vmatprep.subr.bf16.mxu0 0
  %627 = vmatpush1.bf16.msra.mxu0 0
  %628 = vmatprep.subr.bf16.mxu0 0
  %629 = vmatpush1.bf16.msra.mxu0 0
  %630 = vmatprep.subr.bf16.mxu0 0
  %631 = vmatpush1.bf16.msra.mxu0 0
  %632 = vmatprep.subr.bf16.mxu0 0
  %633 = vmatpush1.bf16.msra.mxu0 0
  %634 = vmatprep.subr.bf16.mxu0 0
  %635 = vmatpush1.bf16.msra.mxu0 0
  %636 = vmatprep.subr.bf16.mxu0 0
  %637 = vmatpush1.bf16.msra.mxu0 0
  %638 = vmatprep.subr.bf16.mxu0 0
  %639 = vmatpush1.bf16.msra.mxu0 0
  %640 = vmatprep.subr.bf16.mxu0 0
  %641 = vmatpush1.bf16.msra.mxu0 0
  %642 = vmatprep.mubr.bf16.mxu0 0
  %643 = vmatmul.mubr.bf16.gmra.mrb[0].mxu0 %v608
  %v644 = vpop.f32.mrb[0].mxu0
  %v645 = vadd.f32 0.0, %v644
  %v646 = vpop.f32.mrb[0].mxu0
  %v647 = vpop.f32.mrb[0].mxu0
  %v648 = vadd.f32 0.0, %v647
  %v649 = vpop.f32.mrb[0].mxu0
  %650 = vdwg.mxu0
  %v651 = vpack.c.bf16 %v648, %v645
  %v652 = vld [vmem:[%s5 + $0x10] sm:$0xf]
  %v653 = vld [vmem:[%s5 + $0x14] sm:$0xf]
  %v654 = vld [vmem:[%s5 + $0x18] sm:$0xf]
  %v655 = vld [vmem:[%s5 + $0x1c] sm:$0xf]
  %v660 = vunpack.c.l.b16 %v652
  %v661 = vunpack.c.l.b16 %v653
  %v662 = vunpack.c.l.b16 %v654
  %v663 = vunpack.c.l.b16 %v655
  %v664 = vpack.c.b16 %v661, %v660
  %v665 = vpack.c.b16 %v663, %v662
  %v669 = vsel %vm405, %v651, 0
  %671 = vmatprep.subr.bf16.mxu0 0
  %672 = vmatpush1.bf16.msra.mxu0 %v664
  %673 = vmatprep.subr.bf16.mxu0 0
  %674 = vmatpush1.bf16.msra.mxu0 %v665
  %675 = vmatprep.subr.bf16.mxu0 0
  %676 = vmatpush1.bf16.msra.mxu0 0
  %677 = vmatprep.subr.bf16.mxu0 0
  %678 = vmatpush1.bf16.msra.mxu0 0
  %679 = vmatprep.subr.bf16.mxu0 0
  %680 = vmatpush1.bf16.msra.mxu0 0
  %681 = vmatprep.subr.bf16.mxu0 0
  %682 = vmatpush1.bf16.msra.mxu0 0
  %683 = vmatprep.subr.bf16.mxu0 0
  %684 = vmatpush1.bf16.msra.mxu0 0
  %685 = vmatprep.subr.bf16.mxu0 0
  %686 = vmatpush1.bf16.msra.mxu0 0
  %687 = vmatprep.subr.bf16.mxu0 0
  %688 = vmatpush1.bf16.msra.mxu0 0
  %689 = vmatprep.subr.bf16.mxu0 0
  %690 = vmatpush1.bf16.msra.mxu0 0
  %691 = vmatprep.subr.bf16.mxu0 0
  %692 = vmatpush1.bf16.msra.mxu0 0
  %693 = vmatprep.subr.bf16.mxu0 0
  %694 = vmatpush1.bf16.msra.mxu0 0
  %695 = vmatprep.subr.bf16.mxu0 0
  %696 = vmatpush1.bf16.msra.mxu0 0
  %697 = vmatprep.subr.bf16.mxu0 0
  %698 = vmatpush1.bf16.msra.mxu0 0
  %699 = vmatprep.subr.bf16.mxu0 0
  %700 = vmatpush1.bf16.msra.mxu0 0
  %701 = vmatprep.subr.bf16.mxu0 0
  %702 = vmatpush1.bf16.msra.mxu0 0
  %703 = vmatprep.mubr.bf16.mxu0 0
  %704 = vmatmul.mubr.bf16.gmra.mrb[0].mxu0 %v669
  %v705 = vpop.f32.mrb[0].mxu0
  %v706 = vadd.f32 0.0, %v705
  %v707 = vpop.f32.mrb[0].mxu0
  %v708 = vpop.f32.mrb[0].mxu0
  %v709 = vadd.f32 0.0, %v708
  %v710 = vpop.f32.mrb[0].mxu0
  %711 = vdwg.mxu0
  %v716 = vunpack.c.l.b16 %v523
  %v717 = vunpack.c.l.b16 %v524
  %v718 = vunpack.c.l.b16 %v525
  %v719 = vunpack.c.l.b16 %v526
  %v720 = vpack.c.b16 %v717, %v716
  %v721 = vpack.c.b16 %v719, %v718
  %v725 = vsel %vm405, %v522, 0
  %727 = vmatprep.subr.bf16.mxu0 0
  %728 = vmatpush1.bf16.msra.mxu0 %v720
  %729 = vmatprep.subr.bf16.mxu0 0
  %730 = vmatpush1.bf16.msra.mxu0 %v721
  %731 = vmatprep.subr.bf16.mxu0 0
  %732 = vmatpush1.bf16.msra.mxu0 0
  %733 = vmatprep.subr.bf16.mxu0 0
  %734 = vmatpush1.bf16.msra.mxu0 0
  %735 = vmatprep.subr.bf16.mxu0 0
  %736 = vmatpush1.bf16.msra.mxu0 0
  %737 = vmatprep.subr.bf16.mxu0 0
  %738 = vmatpush1.bf16.msra.mxu0 0
  %739 = vmatprep.subr.bf16.mxu0 0
  %740 = vmatpush1.bf16.msra.mxu0 0
  %741 = vmatprep.subr.bf16.mxu0 0
  %742 = vmatpush1.bf16.msra.mxu0 0
  %743 = vmatprep.subr.bf16.mxu0 0
  %744 = vmatpush1.bf16.msra.mxu0 0
  %745 = vmatprep.subr.bf16.mxu0 0
  %746 = vmatpush1.bf16.msra.mxu0 0
  %747 = vmatprep.subr.bf16.mxu0 0
  %748 = vmatpush1.bf16.msra.mxu0 0
  %749 = vmatprep.subr.bf16.mxu0 0
  %750 = vmatpush1.bf16.msra.mxu0 0
  %751 = vmatprep.subr.bf16.mxu0 0
  %752 = vmatpush1.bf16.msra.mxu0 0
  %753 = vmatprep.subr.bf16.mxu0 0
  %754 = vmatpush1.bf16.msra.mxu0 0
  %755 = vmatprep.subr.bf16.mxu0 0
  %756 = vmatpush1.bf16.msra.mxu0 0
  %757 = vmatprep.subr.bf16.mxu0 0
  %758 = vmatpush1.bf16.msra.mxu0 0
  %759 = vmatprep.mubr.bf16.mxu0 0
  %760 = vmatmul.mubr.bf16.gmra.mrb[0].mxu0 %v725
  %v761 = vpop.f32.mrb[0].mxu0
  %v762 = vadd.f32 %v706, %v761
  %v763 = vpop.f32.mrb[0].mxu0
  %v764 = vpop.f32.mrb[0].mxu0
  %v765 = vadd.f32 %v709, %v764
  %v766 = vpop.f32.mrb[0].mxu0
  %767 = vdwg.mxu0
  %768 = vrot.lane.b32.xlu0 %v403, 64
  %v769 = vpop.permute.xlu0 %768
  %770 = vrot.lane.b32.xlu0 %v404, 64
  %v771 = vpop.permute.xlu0 %770
  %v773 = vsel %vm405, %v769, 0
  %v776 = vsel %vm405, %v771, 0
  %778 = vmatprep.subr.bf16.mxu0 0
  %779 = vmatpush1.bf16.xpose.msra.mxu0 %v776
  %780 = vmatprep.subr.bf16.mxu0 0
  %781 = vmatpush1.bf16.xpose.msra.mxu0 0
  %782 = vmatprep.subr.bf16.mxu0 0
  %783 = vmatpush1.bf16.xpose.msra.mxu0 0
  %784 = vmatprep.subr.bf16.mxu0 0
  %785 = vmatpush1.bf16.xpose.msra.mxu0 0
  %786 = vmatprep.subr.bf16.mxu0 0
  %787 = vmatpush1.bf16.xpose.msra.mxu0 0
  %788 = vmatprep.subr.bf16.mxu0 0
  %789 = vmatpush1.bf16.xpose.msra.mxu0 0
  %790 = vmatprep.subr.bf16.mxu0 0
  %791 = vmatpush1.bf16.xpose.msra.mxu0 0
  %792 = vmatprep.subr.bf16.mxu0 0
  %793 = vmatpush1.bf16.xpose.msra.mxu0 0
  %794 = vmatprep.subr.bf16.mxu0 0
  %795 = vmatpush1.bf16.xpose.msra.mxu0 0
  %796 = vmatprep.subr.bf16.mxu0 0
  %797 = vmatpush1.bf16.xpose.msra.mxu0 0
  %798 = vmatprep.subr.bf16.mxu0 0
  %799 = vmatpush1.bf16.xpose.msra.mxu0 0
  %800 = vmatprep.subr.bf16.mxu0 0
  %801 = vmatpush1.bf16.xpose.msra.mxu0 0
  %802 = vmatprep.subr.bf16.mxu0 0
  %803 = vmatpush1.bf16.xpose.msra.mxu0 0
  %804 = vmatprep.subr.bf16.mxu0 0
  %805 = vmatpush1.bf16.xpose.msra.mxu0 0
  %806 = vmatprep.subr.bf16.mxu0 0
  %807 = vmatpush1.bf16.xpose.msra.mxu0 0
  %808 = vmatprep.subr.bf16.mxu0 0
  %809 = vmatpush1.bf16.xpose.msra.mxu0 0
  %810 = vmatprep.mubr.bf16.mxu0 0
  %811 = vmatmul.mubr.bf16.gmra.mrb[0].mxu0 %v773
  %v812 = vpop.f32.mrb[0].mxu0
  %v813 = vadd.f32 0.0, %v812
  %v814 = vpop.f32.mrb[0].mxu0
  %v815 = vpop.f32.mrb[0].mxu0
  %v816 = vadd.f32 0.0, %v815
  %v817 = vpop.f32.mrb[0].mxu0
  %818 = vdwg.mxu0
  %v819 = vsel %vm453, %v813, -inf
  %820 = vmax.xlane.f32.xlu0 %v819
  %v821 = vpop.xlane.xlu0 %820
  %v822 = vsel %vm453, %v816, -inf
  %823 = vmax.xlane.f32.xlu0 %v822
  %v824 = vpop.xlane.xlu0 %823
  %v825 = vsub.f32 %v813, %v821
  %v826 = vsub.f32 %v816, %v824
  %v827 = vmul.f32 %v825, 1.442695
  %v828 = vpow.pop %v827
  %v829 = vmul.f32 %v826, 1.442695
  %v830 = vpow.pop %v829
  %v831 = vsel %vm453, %v828, 0.0
  %832 = vadd.xlane.f32.xlu0 %v831
  %v833 = vpop.xlane.xlu0 %832
  %v834 = vsel %vm453, %v830, 0.0
  %835 = vadd.xlane.f32.xlu0 %v834
  %v836 = vpop.xlane.xlu0 %835
  %v837 = vrcp.pop %v833
  %v838 = vrcp.pop %v836
  %v839 = vmul.f32 %v828, %v837
  %v840 = vmul.f32 %v830, %v838
  %v841 = vpack.c.bf16 %v840, %v839
  %842 = vrot.lane.b32.xlu0 %v477, 64
  %v843 = vpop.permute.xlu0 %842
  %v846 = vsel %vm453, %v841, 0
  %848 = vmatprep.subr.bf16.mxu0 0
  %849 = vmatpush1.bf16.msra.mxu0 %v843
  %850 = vmatprep.subr.bf16.mxu0 0
  %851 = vmatpush1.bf16.msra.mxu0 0
  %852 = vmatprep.subr.bf16.mxu0 0
  %853 = vmatpush1.bf16.msra.mxu0 0
  %854 = vmatprep.subr.bf16.mxu0 0
  %855 = vmatpush1.bf16.msra.mxu0 0
  %856 = vmatprep.subr.bf16.mxu0 0
  %857 = vmatpush1.bf16.msra.mxu0 0
  %858 = vmatprep.subr.bf16.mxu0 0
  %859 = vmatpush1.bf16.msra.mxu0 0
  %860 = vmatprep.subr.bf16.mxu0 0
  %861 = vmatpush1.bf16.msra.mxu0 0
  %862 = vmatprep.subr.bf16.mxu0 0
  %863 = vmatpush1.bf16.msra.mxu0 0
  %864 = vmatprep.subr.bf16.mxu0 0
  %865 = vmatpush1.bf16.msra.mxu0 0
  %866 = vmatprep.subr.bf16.mxu0 0
  %867 = vmatpush1.bf16.msra.mxu0 0
  %868 = vmatprep.subr.bf16.mxu0 0
  %869 = vmatpush1.bf16.msra.mxu0 0
  %870 = vmatprep.subr.bf16.mxu0 0
  %871 = vmatpush1.bf16.msra.mxu0 0
  %872 = vmatprep.subr.bf16.mxu0 0
  %873 = vmatpush1.bf16.msra.mxu0 0
  %874 = vmatprep.subr.bf16.mxu0 0
  %875 = vmatpush1.bf16.msra.mxu0 0
  %876 = vmatprep.subr.bf16.mxu0 0
  %877 = vmatpush1.bf16.msra.mxu0 0
  %878 = vmatprep.subr.bf16.mxu0 0
  %879 = vmatpush1.bf16.msra.mxu0 0
  %880 = vmatprep.mubr.bf16.mxu0 0
  %881 = vmatmul.mubr.bf16.gmra.mrb[0].mxu0 %v846
  %v882 = vpop.f32.mrb[0].mxu0
  %v883 = vadd.f32 0.0, %v882
  %v884 = vpop.f32.mrb[0].mxu0
  %v885 = vpop.f32.mrb[0].mxu0
  %v886 = vadd.f32 0.0, %v885
  %v887 = vpop.f32.mrb[0].mxu0
  %888 = vdwg.mxu0
  %v889 = vpack.c.bf16 %v886, %v883
  %v890 = vld [vmem:[%s5 + $0x20] sm:$0xf]
  %v891 = vld [vmem:[%s5 + $0x24] sm:$0xf]
  %v892 = vld [vmem:[%s5 + $0x28] sm:$0xf]
  %v893 = vld [vmem:[%s5 + $0x2c] sm:$0xf]
  %v898 = vunpack.c.l.b16 %v890
  %v899 = vunpack.c.l.b16 %v891
  %v900 = vunpack.c.l.b16 %v892
  %v901 = vunpack.c.l.b16 %v893
  %v902 = vpack.c.b16 %v899, %v898
  %v903 = vpack.c.b16 %v901, %v900
  %v907 = vsel %vm405, %v889, 0
  %909 = vmatprep.subr.bf16.mxu0 0
  %910 = vmatpush1.bf16.msra.mxu0 %v902
  %911 = vmatprep.subr.bf16.mxu0 0
  %912 = vmatpush1.bf16.msra.mxu0 %v903
  %913 = vmatprep.subr.bf16.mxu0 0
  %914 = vmatpush1.bf16.msra.mxu0 0
  %915 = vmatprep.subr.bf16.mxu0 0
  %916 = vmatpush1.bf16.msra.mxu0 0
  %917 = vmatprep.subr.bf16.mxu0 0
  %918 = vmatpush1.bf16.msra.mxu0 0
  %919 = vmatprep.subr.bf16.mxu0 0
  %920 = vmatpush1.bf16.msra.mxu0 0
  %921 = vmatprep.subr.bf16.mxu0 0
  %922 = vmatpush1.bf16.msra.mxu0 0
  %923 = vmatprep.subr.bf16.mxu0 0
  %924 = vmatpush1.bf16.msra.mxu0 0
  %925 = vmatprep.subr.bf16.mxu0 0
  %926 = vmatpush1.bf16.msra.mxu0 0
  %927 = vmatprep.subr.bf16.mxu0 0
  %928 = vmatpush1.bf16.msra.mxu0 0
  %929 = vmatprep.subr.bf16.mxu0 0
  %930 = vmatpush1.bf16.msra.mxu0 0
  %931 = vmatprep.subr.bf16.mxu0 0
  %932 = vmatpush1.bf16.msra.mxu0 0
  %933 = vmatprep.subr.bf16.mxu0 0
  %934 = vmatpush1.bf16.msra.mxu0 0
  %935 = vmatprep.subr.bf16.mxu0 0
  %936 = vmatpush1.bf16.msra.mxu0 0
  %937 = vmatprep.subr.bf16.mxu0 0
  %938 = vmatpush1.bf16.msra.mxu0 0
  %939 = vmatprep.subr.bf16.mxu0 0
  %940 = vmatpush1.bf16.msra.mxu0 0
  %941 = vmatprep.mubr.bf16.mxu0 0
  %942 = vmatmul.mubr.bf16.gmra.mrb[0].mxu0 %v907
  %v943 = vpop.f32.mrb[0].mxu0
  %v944 = vadd.f32 0.0, %v943
  %v945 = vpop.f32.mrb[0].mxu0
  %v946 = vpop.f32.mrb[0].mxu0
  %v947 = vadd.f32 0.0, %v946
  %v948 = vpop.f32.mrb[0].mxu0
  %949 = vdwg.mxu0
  %v950 = vadd.f32 %v762, %v944
  %v951 = vadd.f32 %v765, %v947
  %952 = vrot.lane.b32.xlu0 %v403, 32
  %v953 = vpop.permute.xlu0 %952
  %954 = vrot.lane.b32.xlu0 %v404, 32
  %v955 = vpop.permute.xlu0 %954
  %v957 = vsel %vm405, %v953, 0
  %v960 = vsel %vm405, %v955, 0
  %962 = vmatprep.subr.bf16.mxu0 0
  %963 = vmatpush1.bf16.xpose.msra.mxu0 %v960
  %964 = vmatprep.subr.bf16.mxu0 0
  %965 = vmatpush1.bf16.xpose.msra.mxu0 0
  %966 = vmatprep.subr.bf16.mxu0 0
  %967 = vmatpush1.bf16.xpose.msra.mxu0 0
  %968 = vmatprep.subr.bf16.mxu0 0
  %969 = vmatpush1.bf16.xpose.msra.mxu0 0
  %970 = vmatprep.subr.bf16.mxu0 0
  %971 = vmatpush1.bf16.xpose.msra.mxu0 0
  %972 = vmatprep.subr.bf16.mxu0 0
  %973 = vmatpush1.bf16.xpose.msra.mxu0 0
  %974 = vmatprep.subr.bf16.mxu0 0
  %975 = vmatpush1.bf16.xpose.msra.mxu0 0
  %976 = vmatprep.subr.bf16.mxu0 0
  %977 = vmatpush1.bf16.xpose.msra.mxu0 0
  %978 = vmatprep.subr.bf16.mxu0 0
  %979 = vmatpush1.bf16.xpose.msra.mxu0 0
  %980 = vmatprep.subr.bf16.mxu0 0
  %981 = vmatpush1.bf16.xpose.msra.mxu0 0
  %982 = vmatprep.subr.bf16.mxu0 0
  %983 = vmatpush1.bf16.xpose.msra.mxu0 0
  %984 = vmatprep.subr.bf16.mxu0 0
  %985 = vmatpush1.bf16.xpose.msra.mxu0 0
  %986 = vmatprep.subr.bf16.mxu0 0
  %987 = vmatpush1.bf16.xpose.msra.mxu0 0
  %988 = vmatprep.subr.bf16.mxu0 0
  %989 = vmatpush1.bf16.xpose.msra.mxu0 0
  %990 = vmatprep.subr.bf16.mxu0 0
  %991 = vmatpush1.bf16.xpose.msra.mxu0 0
  %992 = vmatprep.subr.bf16.mxu0 0
  %993 = vmatpush1.bf16.xpose.msra.mxu0 0
  %994 = vmatprep.mubr.bf16.mxu0 0
  %995 = vmatmul.mubr.bf16.gmra.mrb[0].mxu0 %v957
  %v996 = vpop.f32.mrb[0].mxu0
  %v997 = vadd.f32 0.0, %v996
  %v998 = vpop.f32.mrb[0].mxu0
  %v999 = vpop.f32.mrb[0].mxu0
  %v1000 = vadd.f32 0.0, %v999
  %v1001 = vpop.f32.mrb[0].mxu0
  %1002 = vdwg.mxu0
  %v1003 = vsel %vm453, %v997, -inf
  %1004 = vmax.xlane.f32.xlu0 %v1003
  %v1005 = vpop.xlane.xlu0 %1004
  %v1006 = vsel %vm453, %v1000, -inf
  %1007 = vmax.xlane.f32.xlu0 %v1006
  %v1008 = vpop.xlane.xlu0 %1007
  %v1009 = vsub.f32 %v997, %v1005
  %v1010 = vsub.f32 %v1000, %v1008
  %v1011 = vmul.f32 %v1009, 1.442695
  %v1012 = vpow.pop %v1011
  %v1013 = vmul.f32 %v1010, 1.442695
  %v1014 = vpow.pop %v1013
  %v1015 = vsel %vm453, %v1012, 0.0
  %1016 = vadd.xlane.f32.xlu0 %v1015
  %v1017 = vpop.xlane.xlu0 %1016
  %v1018 = vsel %vm453, %v1014, 0.0
  %1019 = vadd.xlane.f32.xlu0 %v1018
  %v1020 = vpop.xlane.xlu0 %1019
  %v1021 = vrcp.pop %v1017
  %v1022 = vrcp.pop %v1020
  %v1023 = vmul.f32 %v1012, %v1021
  %v1024 = vmul.f32 %v1014, %v1022
  %v1025 = vpack.c.bf16 %v1024, %v1023
  %1026 = vrot.lane.b32.xlu0 %v477, 32
  %v1027 = vpop.permute.xlu0 %1026
  %v1030 = vsel %vm453, %v1025, 0
  %1032 = vmatprep.subr.bf16.mxu0 0
  %1033 = vmatpush1.bf16.msra.mxu0 %v1027
  %1034 = vmatprep.subr.bf16.mxu0 0
  %1035 = vmatpush1.bf16.msra.mxu0 0
  %1036 = vmatprep.subr.bf16.mxu0 0
  %1037 = vmatpush1.bf16.msra.mxu0 0
  %1038 = vmatprep.subr.bf16.mxu0 0
  %1039 = vmatpush1.bf16.msra.mxu0 0
  %1040 = vmatprep.subr.bf16.mxu0 0
  %1041 = vmatpush1.bf16.msra.mxu0 0
  %1042 = vmatprep.subr.bf16.mxu0 0
  %1043 = vmatpush1.bf16.msra.mxu0 0
  %1044 = vmatprep.subr.bf16.mxu0 0
  %1045 = vmatpush1.bf16.msra.mxu0 0
  %1046 = vmatprep.subr.bf16.mxu0 0
  %1047 = vmatpush1.bf16.msra.mxu0 0
  %1048 = vmatprep.subr.bf16.mxu0 0
  %1049 = vmatpush1.bf16.msra.mxu0 0
  %1050 = vmatprep.subr.bf16.mxu0 0
  %1051 = vmatpush1.bf16.msra.mxu0 0
  %1052 = vmatprep.subr.bf16.mxu0 0
  %1053 = vmatpush1.bf16.msra.mxu0 0
  %1054 = vmatprep.subr.bf16.mxu0 0
  %1055 = vmatpush1.bf16.msra.mxu0 0
  %1056 = vmatprep.subr.bf16.mxu0 0
  %1057 = vmatpush1.bf16.msra.mxu0 0
  %1058 = vmatprep.subr.bf16.mxu0 0
  %1059 = vmatpush1.bf16.msra.mxu0 0
  %1060 = vmatprep.subr.bf16.mxu0 0
  %1061 = vmatpush1.bf16.msra.mxu0 0
  %1062 = vmatprep.subr.bf16.mxu0 0
  %1063 = vmatpush1.bf16.msra.mxu0 0
  %1064 = vmatprep.mubr.bf16.mxu0 0
  %1065 = vmatmul.mubr.bf16.gmra.mrb[0].mxu0 %v1030
  %v1066 = vpop.f32.mrb[0].mxu0
  %v1067 = vadd.f32 0.0, %v1066
  %v1068 = vpop.f32.mrb[0].mxu0
  %v1069 = vpop.f32.mrb[0].mxu0
  %v1070 = vadd.f32 0.0, %v1069
  %v1071 = vpop.f32.mrb[0].mxu0
  %1072 = vdwg.mxu0
  %v1073 = vpack.c.bf16 %v1070, %v1067
  %v1074 = vld [vmem:[%s5 + $0x30] sm:$0xf]
  %v1075 = vld [vmem:[%s5 + $0x34] sm:$0xf]
  %v1076 = vld [vmem:[%s5 + $0x38] sm:$0xf]
  %v1077 = vld [vmem:[%s5 + $0x3c] sm:$0xf]
  %v1082 = vunpack.c.l.b16 %v1074
  %v1083 = vunpack.c.l.b16 %v1075
  %v1084 = vunpack.c.l.b16 %v1076
  %v1085 = vunpack.c.l.b16 %v1077
  %v1086 = vpack.c.b16 %v1083, %v1082
  %v1087 = vpack.c.b16 %v1085, %v1084
  %v1091 = vsel %vm405, %v1073, 0
  %1093 = vmatprep.subr.bf16.mxu0 0
  %1094 = vmatpush1.bf16.msra.mxu0 %v1086
  %1095 = vmatprep.subr.bf16.mxu0 0
  %1096 = vmatpush1.bf16.msra.mxu0 %v1087
  %1097 = vmatprep.subr.bf16.mxu0 0
  %1098 = vmatpush1.bf16.msra.mxu0 0
  %1099 = vmatprep.subr.bf16.mxu0 0
  %1100 = vmatpush1.bf16.msra.mxu0 0
  %1101 = vmatprep.subr.bf16.mxu0 0
  %1102 = vmatpush1.bf16.msra.mxu0 0
  %1103 = vmatprep.subr.bf16.mxu0 0
  %1104 = vmatpush1.bf16.msra.mxu0 0
  %1105 = vmatprep.subr.bf16.mxu0 0
  %1106 = vmatpush1.bf16.msra.mxu0 0
  %1107 = vmatprep.subr.bf16.mxu0 0
  %1108 = vmatpush1.bf16.msra.mxu0 0
  %1109 = vmatprep.subr.bf16.mxu0 0
  %1110 = vmatpush1.bf16.msra.mxu0 0
  %1111 = vmatprep.subr.bf16.mxu0 0
  %1112 = vmatpush1.bf16.msra.mxu0 0
  %1113 = vmatprep.subr.bf16.mxu0 0
  %1114 = vmatpush1.bf16.msra.mxu0 0
  %1115 = vmatprep.subr.bf16.mxu0 0
  %1116 = vmatpush1.bf16.msra.mxu0 0
  %1117 = vmatprep.subr.bf16.mxu0 0
  %1118 = vmatpush1.bf16.msra.mxu0 0
  %1119 = vmatprep.subr.bf16.mxu0 0
  %1120 = vmatpush1.bf16.msra.mxu0 0
  %1121 = vmatprep.subr.bf16.mxu0 0
  %1122 = vmatpush1.bf16.msra.mxu0 0
  %1123 = vmatprep.subr.bf16.mxu0 0
  %1124 = vmatpush1.bf16.msra.mxu0 0
  %1125 = vmatprep.mubr.bf16.mxu0 0
  %1126 = vmatmul.mubr.bf16.gmra.mrb[0].mxu0 %v1091
  %v1127 = vpop.f32.mrb[0].mxu0
  %v1128 = vadd.f32 0.0, %v1127
  %v1129 = vpop.f32.mrb[0].mxu0
  %v1130 = vpop.f32.mrb[0].mxu0
  %v1131 = vadd.f32 0.0, %v1130
  %v1132 = vpop.f32.mrb[0].mxu0
  %1133 = vdwg.mxu0
  %v1134 = vadd.f32 %v950, %v1128
  %v1135 = vadd.f32 %v951, %v1131
  %v1136 = vpack.c.bf16 %v350, %v346
  %v1137 = vpack.c.bf16 %v352, %v348
  %v1139 = vsel %vm405, %v1136, 0
  %v1142 = vsel %vm405, %v1137, 0
  %1144 = vmatprep.subr.bf16.mxu0 0
  %1145 = vmatpush1.bf16.xpose.msra.mxu0 %v1142
  %1146 = vmatprep.subr.bf16.mxu0 0
  %1147 = vmatpush1.bf16.xpose.msra.mxu0 0
  %1148 = vmatprep.subr.bf16.mxu0 0
  %1149 = vmatpush1.bf16.xpose.msra.mxu0 0
  %1150 = vmatprep.subr.bf16.mxu0 0
  %1151 = vmatpush1.bf16.xpose.msra.mxu0 0
  %1152 = vmatprep.subr.bf16.mxu0 0
  %1153 = vmatpush1.bf16.xpose.msra.mxu0 0
  %1154 = vmatprep.subr.bf16.mxu0 0
  %1155 = vmatpush1.bf16.xpose.msra.mxu0 0
  %1156 = vmatprep.subr.bf16.mxu0 0
  %1157 = vmatpush1.bf16.xpose.msra.mxu0 0
  %1158 = vmatprep.subr.bf16.mxu0 0
  %1159 = vmatpush1.bf16.xpose.msra.mxu0 0
  %1160 = vmatprep.subr.bf16.mxu0 0
  %1161 = vmatpush1.bf16.xpose.msra.mxu0 0
  %1162 = vmatprep.subr.bf16.mxu0 0
  %1163 = vmatpush1.bf16.xpose.msra.mxu0 0
  %1164 = vmatprep.subr.bf16.mxu0 0
  %1165 = vmatpush1.bf16.xpose.msra.mxu0 0
  %1166 = vmatprep.subr.bf16.mxu0 0
  %1167 = vmatpush1.bf16.xpose.msra.mxu0 0
  %1168 = vmatprep.subr.bf16.mxu0 0
  %1169 = vmatpush1.bf16.xpose.msra.mxu0 0
  %1170 = vmatprep.subr.bf16.mxu0 0
  %1171 = vmatpush1.bf16.xpose.msra.mxu0 0
  %1172 = vmatprep.subr.bf16.mxu0 0
  %1173 = vmatpush1.bf16.xpose.msra.mxu0 0
  %1174 = vmatprep.subr.bf16.mxu0 0
  %1175 = vmatpush1.bf16.xpose.msra.mxu0 0
  %1176 = vmatprep.mubr.bf16.mxu0 0
  %1177 = vmatmul.mubr.bf16.gmra.mrb[0].mxu0 %v1139
  %v1178 = vpop.f32.mrb[0].mxu0
  %v1179 = vadd.f32 0.0, %v1178
  %v1180 = vpop.f32.mrb[0].mxu0
  %v1181 = vpop.f32.mrb[0].mxu0
  %v1182 = vadd.f32 0.0, %v1181
  %v1183 = vpop.f32.mrb[0].mxu0
  %1184 = vdwg.mxu0
  %v1185 = vsel %vm453, %v1179, -inf
  %1186 = vmax.xlane.f32.xlu0 %v1185
  %v1187 = vpop.xlane.xlu0 %1186
  %v1188 = vsel %vm453, %v1182, -inf
  %1189 = vmax.xlane.f32.xlu0 %v1188
  %v1190 = vpop.xlane.xlu0 %1189
  %v1191 = vsub.f32 %v1179, %v1187
  %v1192 = vsub.f32 %v1182, %v1190
  %v1193 = vmul.f32 %v1191, 1.442695
  %v1194 = vpow.pop %v1193
  %v1195 = vmul.f32 %v1192, 1.442695
  %v1196 = vpow.pop %v1195
  %v1197 = vsel %vm453, %v1194, 0.0
  %1198 = vadd.xlane.f32.xlu0 %v1197
  %v1199 = vpop.xlane.xlu0 %1198
  %v1200 = vsel %vm453, %v1196, 0.0
  %1201 = vadd.xlane.f32.xlu0 %v1200
  %v1202 = vpop.xlane.xlu0 %1201
  %v1203 = vrcp.pop %v1199
  %v1204 = vrcp.pop %v1202
  %v1205 = vmul.f32 %v1194, %v1203
  %v1206 = vmul.f32 %v1196, %v1204
  %v1207 = vpack.c.bf16 %v1206, %v1205
  %v1208 = vpack.c.bf16 %v400, %v397
  %v1210 = vsel %vm453, %v1207, 0
  %1212 = vmatprep.subr.bf16.mxu0 0
  %1213 = vmatpush1.bf16.msra.mxu0 %v1208
  %1214 = vmatprep.subr.bf16.mxu0 0
  %1215 = vmatpush1.bf16.msra.mxu0 0
  %1216 = vmatprep.subr.bf16.mxu0 0
  %1217 = vmatpush1.bf16.msra.mxu0 0
  %1218 = vmatprep.subr.bf16.mxu0 0
  %1219 = vmatpush1.bf16.msra.mxu0 0
  %1220 = vmatprep.subr.bf16.mxu0 0
  %1221 = vmatpush1.bf16.msra.mxu0 0
  %1222 = vmatprep.subr.bf16.mxu0 0
  %1223 = vmatpush1.bf16.msra.mxu0 0
  %1224 = vmatprep.subr.bf16.mxu0 0
  %1225 = vmatpush1.bf16.msra.mxu0 0
  %1226 = vmatprep.subr.bf16.mxu0 0
  %1227 = vmatpush1.bf16.msra.mxu0 0
  %1228 = vmatprep.subr.bf16.mxu0 0
  %1229 = vmatpush1.bf16.msra.mxu0 0
  %1230 = vmatprep.subr.bf16.mxu0 0
  %1231 = vmatpush1.bf16.msra.mxu0 0
  %1232 = vmatprep.subr.bf16.mxu0 0
  %1233 = vmatpush1.bf16.msra.mxu0 0
  %1234 = vmatprep.subr.bf16.mxu0 0
  %1235 = vmatpush1.bf16.msra.mxu0 0
  %1236 = vmatprep.subr.bf16.mxu0 0
  %1237 = vmatpush1.bf16.msra.mxu0 0
  %1238 = vmatprep.subr.bf16.mxu0 0
  %1239 = vmatpush1.bf16.msra.mxu0 0
  %1240 = vmatprep.subr.bf16.mxu0 0
  %1241 = vmatpush1.bf16.msra.mxu0 0
  %1242 = vmatprep.subr.bf16.mxu0 0
  %1243 = vmatpush1.bf16.msra.mxu0 0
  %1244 = vmatprep.mubr.bf16.mxu0 0
  %1245 = vmatmul.mubr.bf16.gmra.mrb[0].mxu0 %v1210
  %v1246 = vpop.f32.mrb[0].mxu0
  %v1247 = vadd.f32 0.0, %v1246
  %v1248 = vpop.f32.mrb[0].mxu0
  %v1249 = vpop.f32.mrb[0].mxu0
  %v1250 = vadd.f32 0.0, %v1249
  %v1251 = vpop.f32.mrb[0].mxu0
  %1252 = vdwg.mxu0
  %v1253 = vpack.c.bf16 %v1250, %v1247
  %1255 = vrot.lane.b32.xlu0 %v1136, 96
  %v1256 = vpop.permute.xlu0 %1255
  %1258 = vrot.lane.b32.xlu0 %v1137, 96
  %v1259 = vpop.permute.xlu0 %1258
  %v1261 = vsel %vm405, %v1256, 0
  %v1264 = vsel %vm405, %v1259, 0
  %1266 = vmatprep.subr.bf16.mxu0 0
  %1267 = vmatpush1.bf16.xpose.msra.mxu0 %v1264
  %1268 = vmatprep.subr.bf16.mxu0 0
  %1269 = vmatpush1.bf16.xpose.msra.mxu0 0
  %1270 = vmatprep.subr.bf16.mxu0 0
  %1271 = vmatpush1.bf16.xpose.msra.mxu0 0
  %1272 = vmatprep.subr.bf16.mxu0 0
  %1273 = vmatpush1.bf16.xpose.msra.mxu0 0
  %1274 = vmatprep.subr.bf16.mxu0 0
  %1275 = vmatpush1.bf16.xpose.msra.mxu0 0
  %1276 = vmatprep.subr.bf16.mxu0 0
  %1277 = vmatpush1.bf16.xpose.msra.mxu0 0
  %1278 = vmatprep.subr.bf16.mxu0 0
  %1279 = vmatpush1.bf16.xpose.msra.mxu0 0
  %1280 = vmatprep.subr.bf16.mxu0 0
  %1281 = vmatpush1.bf16.xpose.msra.mxu0 0
  %1282 = vmatprep.subr.bf16.mxu0 0
  %1283 = vmatpush1.bf16.xpose.msra.mxu0 0
  %1284 = vmatprep.subr.bf16.mxu0 0
  %1285 = vmatpush1.bf16.xpose.msra.mxu0 0
  %1286 = vmatprep.subr.bf16.mxu0 0
  %1287 = vmatpush1.bf16.xpose.msra.mxu0 0
  %1288 = vmatprep.subr.bf16.mxu0 0
  %1289 = vmatpush1.bf16.xpose.msra.mxu0 0
  %1290 = vmatprep.subr.bf16.mxu0 0
  %1291 = vmatpush1.bf16.xpose.msra.mxu0 0
  %1292 = vmatprep.subr.bf16.mxu0 0
  %1293 = vmatpush1.bf16.xpose.msra.mxu0 0
  %1294 = vmatprep.subr.bf16.mxu0 0
  %1295 = vmatpush1.bf16.xpose.msra.mxu0 0
  %1296 = vmatprep.subr.bf16.mxu0 0
  %1297 = vmatpush1.bf16.xpose.msra.mxu0 0
  %1298 = vmatprep.mubr.bf16.mxu0 0
  %1299 = vmatmul.mubr.bf16.gmra.mrb[0].mxu0 %v1261
  %v1300 = vpop.f32.mrb[0].mxu0
  %v1301 = vadd.f32 0.0, %v1300
  %v1302 = vpop.f32.mrb[0].mxu0
  %v1303 = vpop.f32.mrb[0].mxu0
  %v1304 = vadd.f32 0.0, %v1303
  %v1305 = vpop.f32.mrb[0].mxu0
  %1306 = vdwg.mxu0
  %v1307 = vsel %vm453, %v1301, -inf
  %1308 = vmax.xlane.f32.xlu0 %v1307
  %v1309 = vpop.xlane.xlu0 %1308
  %v1310 = vsel %vm453, %v1304, -inf
  %1311 = vmax.xlane.f32.xlu0 %v1310
  %v1312 = vpop.xlane.xlu0 %1311
  %v1313 = vsub.f32 %v1301, %v1309
  %v1314 = vsub.f32 %v1304, %v1312
  %v1315 = vmul.f32 %v1313, 1.442695
  %v1316 = vpow.pop %v1315
  %v1317 = vmul.f32 %v1314, 1.442695
  %v1318 = vpow.pop %v1317
  %v1319 = vsel %vm453, %v1316, 0.0
  %1320 = vadd.xlane.f32.xlu0 %v1319
  %v1321 = vpop.xlane.xlu0 %1320
  %v1322 = vsel %vm453, %v1318, 0.0
  %1323 = vadd.xlane.f32.xlu0 %v1322
  %v1324 = vpop.xlane.xlu0 %1323
  %v1325 = vrcp.pop %v1321
  %v1326 = vrcp.pop %v1324
  %v1327 = vmul.f32 %v1316, %v1325
  %v1328 = vmul.f32 %v1318, %v1326
  %v1329 = vpack.c.bf16 %v1328, %v1327
  %1331 = vrot.lane.b32.xlu0 %v1208, 96
  %v1332 = vpop.permute.xlu0 %1331
  %v1335 = vsel %vm453, %v1329, 0
  %1337 = vmatprep.subr.bf16.mxu0 0
  %1338 = vmatpush1.bf16.msra.mxu0 %v1332
  %1339 = vmatprep.subr.bf16.mxu0 0
  %1340 = vmatpush1.bf16.msra.mxu0 0
  %1341 = vmatprep.subr.bf16.mxu0 0
  %1342 = vmatpush1.bf16.msra.mxu0 0
  %1343 = vmatprep.subr.bf16.mxu0 0
  %1344 = vmatpush1.bf16.msra.mxu0 0
  %1345 = vmatprep.subr.bf16.mxu0 0
  %1346 = vmatpush1.bf16.msra.mxu0 0
  %1347 = vmatprep.subr.bf16.mxu0 0
  %1348 = vmatpush1.bf16.msra.mxu0 0
  %1349 = vmatprep.subr.bf16.mxu0 0
  %1350 = vmatpush1.bf16.msra.mxu0 0
  %1351 = vmatprep.subr.bf16.mxu0 0
  %1352 = vmatpush1.bf16.msra.mxu0 0
  %1353 = vmatprep.subr.bf16.mxu0 0
  %1354 = vmatpush1.bf16.msra.mxu0 0
  %1355 = vmatprep.subr.bf16.mxu0 0
  %1356 = vmatpush1.bf16.msra.mxu0 0
  %1357 = vmatprep.subr.bf16.mxu0 0
  %1358 = vmatpush1.bf16.msra.mxu0 0
  %1359 = vmatprep.subr.bf16.mxu0 0
  %1360 = vmatpush1.bf16.msra.mxu0 0
  %1361 = vmatprep.subr.bf16.mxu0 0
  %1362 = vmatpush1.bf16.msra.mxu0 0
  %1363 = vmatprep.subr.bf16.mxu0 0
  %1364 = vmatpush1.bf16.msra.mxu0 0
  %1365 = vmatprep.subr.bf16.mxu0 0
  %1366 = vmatpush1.bf16.msra.mxu0 0
  %1367 = vmatprep.subr.bf16.mxu0 0
  %1368 = vmatpush1.bf16.msra.mxu0 0
  %1369 = vmatprep.mubr.bf16.mxu0 0
  %1370 = vmatmul.mubr.bf16.gmra.mrb[0].mxu0 %v1335
  %v1371 = vpop.f32.mrb[0].mxu0
  %v1372 = vadd.f32 0.0, %v1371
  %v1373 = vpop.f32.mrb[0].mxu0
  %v1374 = vpop.f32.mrb[0].mxu0
  %v1375 = vadd.f32 0.0, %v1374
  %v1376 = vpop.f32.mrb[0].mxu0
  %1377 = vdwg.mxu0
  %v1378 = vpack.c.bf16 %v1375, %v1372
  %v1380 = vsel %vm405, %v1378, 0
  %1382 = vmatprep.subr.bf16.mxu0 0
  %1383 = vmatpush1.bf16.msra.mxu0 %v664
  %1384 = vmatprep.subr.bf16.mxu0 0
  %1385 = vmatpush1.bf16.msra.mxu0 %v665
  %1386 = vmatprep.subr.bf16.mxu0 0
  %1387 = vmatpush1.bf16.msra.mxu0 0
  %1388 = vmatprep.subr.bf16.mxu0 0
  %1389 = vmatpush1.bf16.msra.mxu0 0
  %1390 = vmatprep.subr.bf16.mxu0 0
  %1391 = vmatpush1.bf16.msra.mxu0 0
  %1392 = vmatprep.subr.bf16.mxu0 0
  %1393 = vmatpush1.bf16.msra.mxu0 0
  %1394 = vmatprep.subr.bf16.mxu0 0
  %1395 = vmatpush1.bf16.msra.mxu0 0
  %1396 = vmatprep.subr.bf16.mxu0 0
  %1397 = vmatpush1.bf16.msra.mxu0 0
  %1398 = vmatprep.subr.bf16.mxu0 0
  %1399 = vmatpush1.bf16.msra.mxu0 0
  %1400 = vmatprep.subr.bf16.mxu0 0
  %1401 = vmatpush1.bf16.msra.mxu0 0
  %1402 = vmatprep.subr.bf16.mxu0 0
  %1403 = vmatpush1.bf16.msra.mxu0 0
  %1404 = vmatprep.subr.bf16.mxu0 0
  %1405 = vmatpush1.bf16.msra.mxu0 0
  %1406 = vmatprep.subr.bf16.mxu0 0
  %1407 = vmatpush1.bf16.msra.mxu0 0
  %1408 = vmatprep.subr.bf16.mxu0 0
  %1409 = vmatpush1.bf16.msra.mxu0 0
  %1410 = vmatprep.subr.bf16.mxu0 0
  %1411 = vmatpush1.bf16.msra.mxu0 0
  %1412 = vmatprep.subr.bf16.mxu0 0
  %1413 = vmatpush1.bf16.msra.mxu0 0
  %1414 = vmatprep.mubr.bf16.mxu0 0
  %1415 = vmatmul.mubr.bf16.gmra.mrb[0].mxu0 %v1380
  %v1416 = vpop.f32.mrb[0].mxu0
  %v1417 = vadd.f32 0.0, %v1416
  %v1418 = vpop.f32.mrb[0].mxu0
  %v1419 = vpop.f32.mrb[0].mxu0
  %v1420 = vadd.f32 0.0, %v1419
  %v1421 = vpop.f32.mrb[0].mxu0
  %1422 = vdwg.mxu0
  %v1424 = vsel %vm405, %v1253, 0
  %1426 = vmatprep.subr.bf16.mxu0 0
  %1427 = vmatpush1.bf16.msra.mxu0 %v720
  %1428 = vmatprep.subr.bf16.mxu0 0
  %1429 = vmatpush1.bf16.msra.mxu0 %v721
  %1430 = vmatprep.subr.bf16.mxu0 0
  %1431 = vmatpush1.bf16.msra.mxu0 0
  %1432 = vmatprep.subr.bf16.mxu0 0
  %1433 = vmatpush1.bf16.msra.mxu0 0
  %1434 = vmatprep.subr.bf16.mxu0 0
  %1435 = vmatpush1.bf16.msra.mxu0 0
  %1436 = vmatprep.subr.bf16.mxu0 0
  %1437 = vmatpush1.bf16.msra.mxu0 0
  %1438 = vmatprep.subr.bf16.mxu0 0
  %1439 = vmatpush1.bf16.msra.mxu0 0
  %1440 = vmatprep.subr.bf16.mxu0 0
  %1441 = vmatpush1.bf16.msra.mxu0 0
  %1442 = vmatprep.subr.bf16.mxu0 0
  %1443 = vmatpush1.bf16.msra.mxu0 0
  %1444 = vmatprep.subr.bf16.mxu0 0
  %1445 = vmatpush1.bf16.msra.mxu0 0
  %1446 = vmatprep.subr.bf16.mxu0 0
  %1447 = vmatpush1.bf16.msra.mxu0 0
  %1448 = vmatprep.subr.bf16.mxu0 0
  %1449 = vmatpush1.bf16.msra.mxu0 0
  %1450 = vmatprep.subr.bf16.mxu0 0
  %1451 = vmatpush1.bf16.msra.mxu0 0
  %1452 = vmatprep.subr.bf16.mxu0 0
  %1453 = vmatpush1.bf16.msra.mxu0 0
  %1454 = vmatprep.subr.bf16.mxu0 0
  %1455 = vmatpush1.bf16.msra.mxu0 0
  %1456 = vmatprep.subr.bf16.mxu0 0
  %1457 = vmatpush1.bf16.msra.mxu0 0
  %1458 = vmatprep.mubr.bf16.mxu0 0
  %1459 = vmatmul.mubr.bf16.gmra.mrb[0].mxu0 %v1424
  %v1460 = vpop.f32.mrb[0].mxu0
  %v1461 = vadd.f32 %v1417, %v1460
  %v1462 = vpop.f32.mrb[0].mxu0
  %v1463 = vpop.f32.mrb[0].mxu0
  %v1464 = vadd.f32 %v1420, %v1463
  %v1465 = vpop.f32.mrb[0].mxu0
  %1466 = vdwg.mxu0
  %1467 = vrot.lane.b32.xlu0 %v1136, 64
  %v1468 = vpop.permute.xlu0 %1467
  %1469 = vrot.lane.b32.xlu0 %v1137, 64
  %v1470 = vpop.permute.xlu0 %1469
  %v1472 = vsel %vm405, %v1468, 0
  %v1475 = vsel %vm405, %v1470, 0
  %1477 = vmatprep.subr.bf16.mxu0 0
  %1478 = vmatpush1.bf16.xpose.msra.mxu0 %v1475
  %1479 = vmatprep.subr.bf16.mxu0 0
  %1480 = vmatpush1.bf16.xpose.msra.mxu0 0
  %1481 = vmatprep.subr.bf16.mxu0 0
  %1482 = vmatpush1.bf16.xpose.msra.mxu0 0
  %1483 = vmatprep.subr.bf16.mxu0 0
  %1484 = vmatpush1.bf16.xpose.msra.mxu0 0
  %1485 = vmatprep.subr.bf16.mxu0 0
  %1486 = vmatpush1.bf16.xpose.msra.mxu0 0
  %1487 = vmatprep.subr.bf16.mxu0 0
  %1488 = vmatpush1.bf16.xpose.msra.mxu0 0
  %1489 = vmatprep.subr.bf16.mxu0 0
  %1490 = vmatpush1.bf16.xpose.msra.mxu0 0
  %1491 = vmatprep.subr.bf16.mxu0 0
  %1492 = vmatpush1.bf16.xpose.msra.mxu0 0
  %1493 = vmatprep.subr.bf16.mxu0 0
  %1494 = vmatpush1.bf16.xpose.msra.mxu0 0
  %1495 = vmatprep.subr.bf16.mxu0 0
  %1496 = vmatpush1.bf16.xpose.msra.mxu0 0
  %1497 = vmatprep.subr.bf16.mxu0 0
  %1498 = vmatpush1.bf16.xpose.msra.mxu0 0
  %1499 = vmatprep.subr.bf16.mxu0 0
  %1500 = vmatpush1.bf16.xpose.msra.mxu0 0
  %1501 = vmatprep.subr.bf16.mxu0 0
  %1502 = vmatpush1.bf16.xpose.msra.mxu0 0
  %1503 = vmatprep.subr.bf16.mxu0 0
  %1504 = vmatpush1.bf16.xpose.msra.mxu0 0
  %1505 = vmatprep.subr.bf16.mxu0 0
  %1506 = vmatpush1.bf16.xpose.msra.mxu0 0
  %1507 = vmatprep.subr.bf16.mxu0 0
  %1508 = vmatpush1.bf16.xpose.msra.mxu0 0
  %1509 = vmatprep.mubr.bf16.mxu0 0
  %1510 = vmatmul.mubr.bf16.gmra.mrb[0].mxu0 %v1472
  %v1511 = vpop.f32.mrb[0].mxu0
  %v1512 = vadd.f32 0.0, %v1511
  %v1513 = vpop.f32.mrb[0].mxu0
  %v1514 = vpop.f32.mrb[0].mxu0
  %v1515 = vadd.f32 0.0, %v1514
  %v1516 = vpop.f32.mrb[0].mxu0
  %1517 = vdwg.mxu0
  %v1518 = vsel %vm453, %v1512, -inf
  %1519 = vmax.xlane.f32.xlu0 %v1518
  %v1520 = vpop.xlane.xlu0 %1519
  %v1521 = vsel %vm453, %v1515, -inf
  %1522 = vmax.xlane.f32.xlu0 %v1521
  %v1523 = vpop.xlane.xlu0 %1522
  %v1524 = vsub.f32 %v1512, %v1520
  %v1525 = vsub.f32 %v1515, %v1523
  %v1526 = vmul.f32 %v1524, 1.442695
  %v1527 = vpow.pop %v1526
  %v1528 = vmul.f32 %v1525, 1.442695
  %v1529 = vpow.pop %v1528
  %v1530 = vsel %vm453, %v1527, 0.0
  %1531 = vadd.xlane.f32.xlu0 %v1530
  %v1532 = vpop.xlane.xlu0 %1531
  %v1533 = vsel %vm453, %v1529, 0.0
  %1534 = vadd.xlane.f32.xlu0 %v1533
  %v1535 = vpop.xlane.xlu0 %1534
  %v1536 = vrcp.pop %v1532
  %v1537 = vrcp.pop %v1535
  %v1538 = vmul.f32 %v1527, %v1536
  %v1539 = vmul.f32 %v1529, %v1537
  %v1540 = vpack.c.bf16 %v1539, %v1538
  %1541 = vrot.lane.b32.xlu0 %v1208, 64
  %v1542 = vpop.permute.xlu0 %1541
  %v1545 = vsel %vm453, %v1540, 0
  %1547 = vmatprep.subr.bf16.mxu0 0
  %1548 = vmatpush1.bf16.msra.mxu0 %v1542
  %1549 = vmatprep.subr.bf16.mxu0 0
  %1550 = vmatpush1.bf16.msra.mxu0 0
  %1551 = vmatprep.subr.bf16.mxu0 0
  %1552 = vmatpush1.bf16.msra.mxu0 0
  %1553 = vmatprep.subr.bf16.mxu0 0
  %1554 = vmatpush1.bf16.msra.mxu0 0
  %1555 = vmatprep.subr.bf16.mxu0 0
  %1556 = vmatpush1.bf16.msra.mxu0 0
  %1557 = vmatprep.subr.bf16.mxu0 0
  %1558 = vmatpush1.bf16.msra.mxu0 0
  %1559 = vmatprep.subr.bf16.mxu0 0
  %1560 = vmatpush1.bf16.msra.mxu0 0
  %1561 = vmatprep.subr.bf16.mxu0 0
  %1562 = vmatpush1.bf16.msra.mxu0 0
  %1563 = vmatprep.subr.bf16.mxu0 0
  %1564 = vmatpush1.bf16.msra.mxu0 0
  %1565 = vmatprep.subr.bf16.mxu0 0
  %1566 = vmatpush1.bf16.msra.mxu0 0
  %1567 = vmatprep.subr.bf16.mxu0 0
  %1568 = vmatpush1.bf16.msra.mxu0 0
  %1569 = vmatprep.subr.bf16.mxu0 0
  %1570 = vmatpush1.bf16.msra.mxu0 0
  %1571 = vmatprep.subr.bf16.mxu0 0
  %1572 = vmatpush1.bf16.msra.mxu0 0
  %1573 = vmatprep.subr.bf16.mxu0 0
  %1574 = vmatpush1.bf16.msra.mxu0 0
  %1575 = vmatprep.subr.bf16.mxu0 0
  %1576 = vmatpush1.bf16.msra.mxu0 0
  %1577 = vmatprep.subr.bf16.mxu0 0
  %1578 = vmatpush1.bf16.msra.mxu0 0
  %1579 = vmatprep.mubr.bf16.mxu0 0
  %1580 = vmatmul.mubr.bf16.gmra.mrb[0].mxu0 %v1545
  %v1581 = vpop.f32.mrb[0].mxu0
  %v1582 = vadd.f32 0.0, %v1581
  %v1583 = vpop.f32.mrb[0].mxu0
  %v1584 = vpop.f32.mrb[0].mxu0
  %v1585 = vadd.f32 0.0, %v1584
  %v1586 = vpop.f32.mrb[0].mxu0
  %1587 = vdwg.mxu0
  %v1588 = vpack.c.bf16 %v1585, %v1582
  %v1590 = vsel %vm405, %v1588, 0
  %1592 = vmatprep.subr.bf16.mxu0 0
  %1593 = vmatpush1.bf16.msra.mxu0 %v902
  %1594 = vmatprep.subr.bf16.mxu0 0
  %1595 = vmatpush1.bf16.msra.mxu0 %v903
  %1596 = vmatprep.subr.bf16.mxu0 0
  %1597 = vmatpush1.bf16.msra.mxu0 0
  %1598 = vmatprep.subr.bf16.mxu0 0
  %1599 = vmatpush1.bf16.msra.mxu0 0
  %1600 = vmatprep.subr.bf16.mxu0 0
  %1601 = vmatpush1.bf16.msra.mxu0 0
  %1602 = vmatprep.subr.bf16.mxu0 0
  %1603 = vmatpush1.bf16.msra.mxu0 0
  %1604 = vmatprep.subr.bf16.mxu0 0
  %1605 = vmatpush1.bf16.msra.mxu0 0
  %1606 = vmatprep.subr.bf16.mxu0 0
  %1607 = vmatpush1.bf16.msra.mxu0 0
  %1608 = vmatprep.subr.bf16.mxu0 0
  %1609 = vmatpush1.bf16.msra.mxu0 0
  %1610 = vmatprep.subr.bf16.mxu0 0
  %1611 = vmatpush1.bf16.msra.mxu0 0
  %1612 = vmatprep.subr.bf16.mxu0 0
  %1613 = vmatpush1.bf16.msra.mxu0 0
  %1614 = vmatprep.subr.bf16.mxu0 0
  %1615 = vmatpush1.bf16.msra.mxu0 0
  %1616 = vmatprep.subr.bf16.mxu0 0
  %1617 = vmatpush1.bf16.msra.mxu0 0
  %1618 = vmatprep.subr.bf16.mxu0 0
  %1619 = vmatpush1.bf16.msra.mxu0 0
  %1620 = vmatprep.subr.bf16.mxu0 0
  %1621 = vmatpush1.bf16.msra.mxu0 0
  %1622 = vmatprep.subr.bf16.mxu0 0
  %1623 = vmatpush1.bf16.msra.mxu0 0
  %1624 = vmatprep.mubr.bf16.mxu0 0
  %1625 = vmatmul.mubr.bf16.gmra.mrb[0].mxu0 %v1590
  %v1626 = vpop.f32.mrb[0].mxu0
  %v1627 = vadd.f32 0.0, %v1626
  %v1628 = vpop.f32.mrb[0].mxu0
  %v1629 = vpop.f32.mrb[0].mxu0
  %v1630 = vadd.f32 0.0, %v1629
  %v1631 = vpop.f32.mrb[0].mxu0
  %1632 = vdwg.mxu0
  %v1633 = vadd.f32 %v1461, %v1627
  %v1634 = vadd.f32 %v1464, %v1630
  %1635 = vrot.lane.b32.xlu0 %v1136, 32
  %v1636 = vpop.permute.xlu0 %1635
  %1637 = vrot.lane.b32.xlu0 %v1137, 32
  %v1638 = vpop.permute.xlu0 %1637
  %v1640 = vsel %vm405, %v1636, 0
  %v1643 = vsel %vm405, %v1638, 0
  %1645 = vmatprep.subr.bf16.mxu0 0
  %1646 = vmatpush1.bf16.xpose.msra.mxu0 %v1643
  %1647 = vmatprep.subr.bf16.mxu0 0
  %1648 = vmatpush1.bf16.xpose.msra.mxu0 0
  %1649 = vmatprep.subr.bf16.mxu0 0
  %1650 = vmatpush1.bf16.xpose.msra.mxu0 0
  %1651 = vmatprep.subr.bf16.mxu0 0
  %1652 = vmatpush1.bf16.xpose.msra.mxu0 0
  %1653 = vmatprep.subr.bf16.mxu0 0
  %1654 = vmatpush1.bf16.xpose.msra.mxu0 0
  %1655 = vmatprep.subr.bf16.mxu0 0
  %1656 = vmatpush1.bf16.xpose.msra.mxu0 0
  %1657 = vmatprep.subr.bf16.mxu0 0
  %1658 = vmatpush1.bf16.xpose.msra.mxu0 0
  %1659 = vmatprep.subr.bf16.mxu0 0
  %1660 = vmatpush1.bf16.xpose.msra.mxu0 0
  %1661 = vmatprep.subr.bf16.mxu0 0
  %1662 = vmatpush1.bf16.xpose.msra.mxu0 0
  %1663 = vmatprep.subr.bf16.mxu0 0
  %1664 = vmatpush1.bf16.xpose.msra.mxu0 0
  %1665 = vmatprep.subr.bf16.mxu0 0
  %1666 = vmatpush1.bf16.xpose.msra.mxu0 0
  %1667 = vmatprep.subr.bf16.mxu0 0
  %1668 = vmatpush1.bf16.xpose.msra.mxu0 0
  %1669 = vmatprep.subr.bf16.mxu0 0
  %1670 = vmatpush1.bf16.xpose.msra.mxu0 0
  %1671 = vmatprep.subr.bf16.mxu0 0
  %1672 = vmatpush1.bf16.xpose.msra.mxu0 0
  %1673 = vmatprep.subr.bf16.mxu0 0
  %1674 = vmatpush1.bf16.xpose.msra.mxu0 0
  %1675 = vmatprep.subr.bf16.mxu0 0
  %1676 = vmatpush1.bf16.xpose.msra.mxu0 0
  %1677 = vmatprep.mubr.bf16.mxu0 0
  %1678 = vmatmul.mubr.bf16.gmra.mrb[0].mxu0 %v1640
  %v1679 = vpop.f32.mrb[0].mxu0
  %v1680 = vadd.f32 0.0, %v1679
  %v1681 = vpop.f32.mrb[0].mxu0
  %v1682 = vpop.f32.mrb[0].mxu0
  %v1683 = vadd.f32 0.0, %v1682
  %v1684 = vpop.f32.mrb[0].mxu0
  %1685 = vdwg.mxu0
  %v1686 = vsel %vm453, %v1680, -inf
  %1687 = vmax.xlane.f32.xlu0 %v1686
  %v1688 = vpop.xlane.xlu0 %1687
  %v1689 = vsel %vm453, %v1683, -inf
  %1690 = vmax.xlane.f32.xlu0 %v1689
  %v1691 = vpop.xlane.xlu0 %1690
  %v1692 = vsub.f32 %v1680, %v1688
  %v1693 = vsub.f32 %v1683, %v1691
  %v1694 = vmul.f32 %v1692, 1.442695
  %v1695 = vpow.pop %v1694
  %v1696 = vmul.f32 %v1693, 1.442695
  %v1697 = vpow.pop %v1696
  %v1698 = vsel %vm453, %v1695, 0.0
  %1699 = vadd.xlane.f32.xlu0 %v1698
  %v1700 = vpop.xlane.xlu0 %1699
  %v1701 = vsel %vm453, %v1697, 0.0
  %1702 = vadd.xlane.f32.xlu0 %v1701
  %v1703 = vpop.xlane.xlu0 %1702
  %v1704 = vrcp.pop %v1700
  %v1705 = vrcp.pop %v1703
  %v1706 = vmul.f32 %v1695, %v1704
  %v1707 = vmul.f32 %v1697, %v1705
  %v1708 = vpack.c.bf16 %v1707, %v1706
  %1709 = vrot.lane.b32.xlu0 %v1208, 32
  %v1710 = vpop.permute.xlu0 %1709
  %v1713 = vsel %vm453, %v1708, 0
  %1715 = vmatprep.subr.bf16.mxu0 0
  %1716 = vmatpush1.bf16.msra.mxu0 %v1710
  %1717 = vmatprep.subr.bf16.mxu0 0
  %1718 = vmatpush1.bf16.msra.mxu0 0
  %1719 = vmatprep.subr.bf16.mxu0 0
  %1720 = vmatpush1.bf16.msra.mxu0 0
  %1721 = vmatprep.subr.bf16.mxu0 0
  %1722 = vmatpush1.bf16.msra.mxu0 0
  %1723 = vmatprep.subr.bf16.mxu0 0
  %1724 = vmatpush1.bf16.msra.mxu0 0
  %1725 = vmatprep.subr.bf16.mxu0 0
  %1726 = vmatpush1.bf16.msra.mxu0 0
  %1727 = vmatprep.subr.bf16.mxu0 0
  %1728 = vmatpush1.bf16.msra.mxu0 0
  %1729 = vmatprep.subr.bf16.mxu0 0
  %1730 = vmatpush1.bf16.msra.mxu0 0
  %1731 = vmatprep.subr.bf16.mxu0 0
  %1732 = vmatpush1.bf16.msra.mxu0 0
  %1733 = vmatprep.subr.bf16.mxu0 0
  %1734 = vmatpush1.bf16.msra.mxu0 0
  %1735 = vmatprep.subr.bf16.mxu0 0
  %1736 = vmatpush1.bf16.msra.mxu0 0
  %1737 = vmatprep.subr.bf16.mxu0 0
  %1738 = vmatpush1.bf16.msra.mxu0 0
  %1739 = vmatprep.subr.bf16.mxu0 0
  %1740 = vmatpush1.bf16.msra.mxu0 0
  %1741 = vmatprep.subr.bf16.mxu0 0
  %1742 = vmatpush1.bf16.msra.mxu0 0
  %1743 = vmatprep.subr.bf16.mxu0 0
  %1744 = vmatpush1.bf16.msra.mxu0 0
  %1745 = vmatprep.subr.bf16.mxu0 0
  %1746 = vmatpush1.bf16.msra.mxu0 0
  %1747 = vmatprep.mubr.bf16.mxu0 0
  %1748 = vmatmul.mubr.bf16.gmra.mrb[0].mxu0 %v1713
  %v1749 = vpop.f32.mrb[0].mxu0
  %v1750 = vadd.f32 0.0, %v1749
  %v1751 = vpop.f32.mrb[0].mxu0
  %v1752 = vpop.f32.mrb[0].mxu0
  %v1753 = vadd.f32 0.0, %v1752
  %v1754 = vpop.f32.mrb[0].mxu0
  %1755 = vdwg.mxu0
  %v1756 = vpack.c.bf16 %v1753, %v1750
  %v1758 = vsel %vm405, %v1756, 0
  %1760 = vmatprep.subr.bf16.mxu0 0
  %1761 = vmatpush1.bf16.msra.mxu0 %v1086
  %1762 = vmatprep.subr.bf16.mxu0 0
  %1763 = vmatpush1.bf16.msra.mxu0 %v1087
  %1764 = vmatprep.subr.bf16.mxu0 0
  %1765 = vmatpush1.bf16.msra.mxu0 0
  %1766 = vmatprep.subr.bf16.mxu0 0
  %1767 = vmatpush1.bf16.msra.mxu0 0
  %1768 = vmatprep.subr.bf16.mxu0 0
  %1769 = vmatpush1.bf16.msra.mxu0 0
  %1770 = vmatprep.subr.bf16.mxu0 0
  %1771 = vmatpush1.bf16.msra.mxu0 0
  %1772 = vmatprep.subr.bf16.mxu0 0
  %1773 = vmatpush1.bf16.msra.mxu0 0
  %1774 = vmatprep.subr.bf16.mxu0 0
  %1775 = vmatpush1.bf16.msra.mxu0 0
  %1776 = vmatprep.subr.bf16.mxu0 0
  %1777 = vmatpush1.bf16.msra.mxu0 0
  %1778 = vmatprep.subr.bf16.mxu0 0
  %1779 = vmatpush1.bf16.msra.mxu0 0
  %1780 = vmatprep.subr.bf16.mxu0 0
  %1781 = vmatpush1.bf16.msra.mxu0 0
  %1782 = vmatprep.subr.bf16.mxu0 0
  %1783 = vmatpush1.bf16.msra.mxu0 0
  %1784 = vmatprep.subr.bf16.mxu0 0
  %1785 = vmatpush1.bf16.msra.mxu0 0
  %1786 = vmatprep.subr.bf16.mxu0 0
  %1787 = vmatpush1.bf16.msra.mxu0 0
  %1788 = vmatprep.subr.bf16.mxu0 0
  %1789 = vmatpush1.bf16.msra.mxu0 0
  %1790 = vmatprep.subr.bf16.mxu0 0
  %1791 = vmatpush1.bf16.msra.mxu0 0
  %1792 = vmatprep.mubr.bf16.mxu0 0
  %1793 = vmatmul.mubr.bf16.gmra.mrb[0].mxu0 %v1758
  %v1794 = vpop.f32.mrb[0].mxu0
  %v1795 = vadd.f32 0.0, %v1794
  %v1796 = vpop.f32.mrb[0].mxu0
  %v1797 = vpop.f32.mrb[0].mxu0
  %v1798 = vadd.f32 0.0, %v1797
  %v1799 = vpop.f32.mrb[0].mxu0
  %1800 = vdwg.mxu0
  %v1801 = vadd.f32 %v1633, %v1795
  %v1802 = vadd.f32 %v1634, %v1798
  %v1803 = vadd.f32 %v118, %v1134
  %v1804 = vadd.f32 %v119, %v1135
  %v1805 = vadd.f32 %v120, %v1801
  %v1806 = vadd.f32 %v121, %v1802
  %v1807 = vld [vmem:[%s6] sm:$0x1]
  %v1809 = vlaneseq
  %v1810 = vshrl.u32 %v1809, 7
  %v1811 = vsub.s32 0, %v1810
  %v1812 = vrot.slane %v1807, %v1811
  %v1814 = vadd.f32 %v1803, %v1812
  %v1815 = vadd.f32 %v1804, %v1812
  %v1816 = vadd.f32 %v1805, %v1812
  %v1817 = vadd.f32 %v1806, %v1812
  %v1818 = vld [vmem:[%s7] sm:$0x1]
  %v1819 = vld [vmem:[%s8] sm:$0x1]
  %1820 = vadd.xlane.f32.xlu0 %v1814
  %v1821 = vpop.xlane.xlu0 %1820
  %1822 = vadd.xlane.f32.xlu0 %v1815
  %v1823 = vpop.xlane.xlu0 %1822
  %1824 = vadd.xlane.f32.xlu0 %v1816
  %v1825 = vpop.xlane.xlu0 %1824
  %1826 = vadd.xlane.f32.xlu0 %v1817
  %v1827 = vpop.xlane.xlu0 %1826
  %v1828 = vmul.f32 %v1821, %v65
  %v1829 = vmul.f32 %v1823, %v65
  %v1830 = vmul.f32 %v1825, %v65
  %v1831 = vmul.f32 %v1827, %v65
  %v1832 = vsub.f32 %v1814, %v1828
  %v1833 = vsub.f32 %v1815, %v1829
  %v1834 = vsub.f32 %v1816, %v1830
  %v1835 = vsub.f32 %v1817, %v1831
  %v1836 = vmul.f32 %v1832, %v1832
  %v1837 = vmul.f32 %v1833, %v1833
  %v1838 = vmul.f32 %v1834, %v1834
  %v1839 = vmul.f32 %v1835, %v1835
  %1840 = vadd.xlane.f32.xlu0 %v1836
  %v1841 = vpop.xlane.xlu0 %1840
  %1842 = vadd.xlane.f32.xlu0 %v1837
  %v1843 = vpop.xlane.xlu0 %1842
  %1844 = vadd.xlane.f32.xlu0 %v1838
  %v1845 = vpop.xlane.xlu0 %1844
  %1846 = vadd.xlane.f32.xlu0 %v1839
  %v1847 = vpop.xlane.xlu0 %1846
  %v1848 = vmul.f32 %v1841, %v65
  %v1849 = vmul.f32 %v1843, %v65
  %v1850 = vmul.f32 %v1845, %v65
  %v1851 = vmul.f32 %v1847, %v65
  %v1852 = vadd.f32 %v1848, 1e-12
  %v1853 = vadd.f32 %v1849, 1e-12
  %v1854 = vadd.f32 %v1850, 1e-12
  %v1855 = vadd.f32 %v1851, 1e-12
  %v1856 = vrsqrt.pop %v1852
  %v1857 = vrsqrt.pop %v1853
  %v1858 = vrsqrt.pop %v1854
  %v1859 = vrsqrt.pop %v1855
  %v1860 = vmul.f32 %v1832, %v1856
  %v1861 = vmul.f32 %v1833, %v1857
  %v1862 = vmul.f32 %v1834, %v1858
  %v1863 = vmul.f32 %v1835, %v1859
  %v1865 = vlaneseq
  %v1866 = vshrl.u32 %v1865, 7
  %v1867 = vsub.s32 0, %v1866
  %v1868 = vrot.slane %v1818, %v1867
  %v1870 = vmul.f32 %v1860, %v1868
  %v1871 = vmul.f32 %v1861, %v1868
  %v1872 = vmul.f32 %v1862, %v1868
  %v1873 = vmul.f32 %v1863, %v1868
  %v1875 = vlaneseq
  %v1876 = vshrl.u32 %v1875, 7
  %v1877 = vsub.s32 0, %v1876
  %v1878 = vrot.slane %v1819, %v1877
  %v1880 = vadd.f32 %v1870, %v1878
  %v1881 = vadd.f32 %v1871, %v1878
  %v1882 = vadd.f32 %v1872, %v1878
  %v1883 = vadd.f32 %v1873, %v1878
  %v1884 = vpack.c.bf16 %v1881, %v1880
  %v1885 = vpack.c.bf16 %v1883, %v1882
  %v1886 = vld [vmem:[%s9] sm:$0xff]
  %v1887 = vld [vmem:[%s9 + $0x8] sm:$0xff]
  %v1888 = vld [vmem:[%s9 + $0x10] sm:$0xff]
  %v1889 = vld [vmem:[%s9 + $0x18] sm:$0xff]
  %v1890 = vld [vmem:[%s9 + $0x20] sm:$0xff]
  %v1891 = vld [vmem:[%s9 + $0x28] sm:$0xff]
  %v1892 = vld [vmem:[%s9 + $0x30] sm:$0xff]
  %v1893 = vld [vmem:[%s9 + $0x38] sm:$0xff]
  %v1894 = vld [vmem:[%s9 + $0x40] sm:$0xff]
  %v1895 = vld [vmem:[%s9 + $0x48] sm:$0xff]
  %v1896 = vld [vmem:[%s9 + $0x50] sm:$0xff]
  %v1897 = vld [vmem:[%s9 + $0x58] sm:$0xff]
  %v1898 = vld [vmem:[%s9 + $0x60] sm:$0xff]
  %v1899 = vld [vmem:[%s9 + $0x68] sm:$0xff]
  %v1900 = vld [vmem:[%s9 + $0x70] sm:$0xff]
  %v1901 = vld [vmem:[%s9 + $0x78] sm:$0xff]
  %v1902 = vld [vmem:[%s10] sm:$0x3]
  %v1904 = vlaneseq
  %v1905 = vshrl.u32 %v1904, 7
  %v1906 = vsub.s32 0, %v1905
  %v1907 = vrot.slane %v1902, %v1906
  %v1908 = vlaneseq
  %v1909 = vshrl.u32 %v1908, 7
  %v1910 = vsub.s32 1, %v1909
  %v1911 = vrot.slane %v1902, %v1910
  %v1930 = vunpack.c.l.b16 %v1886
  %v1931 = vunpack.c.h.b16 %v1886
  %v1932 = vunpack.c.l.b16 %v1887
  %v1933 = vunpack.c.h.b16 %v1887
  %v1934 = vunpack.c.l.b16 %v1888
  %v1935 = vunpack.c.h.b16 %v1888
  %v1936 = vunpack.c.l.b16 %v1889
  %v1937 = vunpack.c.h.b16 %v1889
  %v1938 = vunpack.c.l.b16 %v1890
  %v1939 = vunpack.c.h.b16 %v1890
  %v1940 = vunpack.c.l.b16 %v1891
  %v1941 = vunpack.c.h.b16 %v1891
  %v1942 = vunpack.c.l.b16 %v1892
  %v1943 = vunpack.c.h.b16 %v1892
  %v1944 = vunpack.c.l.b16 %v1893
  %v1945 = vunpack.c.h.b16 %v1893
  %v1946 = vunpack.c.l.b16 %v1894
  %v1947 = vunpack.c.h.b16 %v1894
  %v1948 = vunpack.c.l.b16 %v1895
  %v1949 = vunpack.c.h.b16 %v1895
  %v1950 = vunpack.c.l.b16 %v1896
  %v1951 = vunpack.c.h.b16 %v1896
  %v1952 = vunpack.c.l.b16 %v1897
  %v1953 = vunpack.c.h.b16 %v1897
  %v1954 = vunpack.c.l.b16 %v1898
  %v1955 = vunpack.c.h.b16 %v1898
  %v1956 = vunpack.c.l.b16 %v1899
  %v1957 = vunpack.c.h.b16 %v1899
  %v1958 = vunpack.c.l.b16 %v1900
  %v1959 = vunpack.c.h.b16 %v1900
  %v1960 = vunpack.c.l.b16 %v1901
  %v1961 = vunpack.c.h.b16 %v1901
  %v1962 = vpack.c.b16 %v1932, %v1930
  %v1963 = vpack.c.b16 %v1933, %v1931
  %v1964 = vpack.c.b16 %v1936, %v1934
  %v1965 = vpack.c.b16 %v1937, %v1935
  %v1966 = vpack.c.b16 %v1940, %v1938
  %v1967 = vpack.c.b16 %v1941, %v1939
  %v1968 = vpack.c.b16 %v1944, %v1942
  %v1969 = vpack.c.b16 %v1945, %v1943
  %v1970 = vpack.c.b16 %v1948, %v1946
  %v1971 = vpack.c.b16 %v1949, %v1947
  %v1972 = vpack.c.b16 %v1952, %v1950
  %v1973 = vpack.c.b16 %v1953, %v1951
  %v1974 = vpack.c.b16 %v1956, %v1954
  %v1975 = vpack.c.b16 %v1957, %v1955
  %v1976 = vpack.c.b16 %v1960, %v1958
  %v1977 = vpack.c.b16 %v1961, %v1959
  %1994 = vmatprep.subr.bf16.mxu0 %v1963
  %1995 = vmatpush1.bf16.msra.mxu0 %v1962
  %1996 = vmatprep.subr.bf16.mxu0 %v1965
  %1997 = vmatpush1.bf16.msra.mxu0 %v1964
  %1998 = vmatprep.subr.bf16.mxu0 %v1967
  %1999 = vmatpush1.bf16.msra.mxu0 %v1966
  %2000 = vmatprep.subr.bf16.mxu0 %v1969
  %2001 = vmatpush1.bf16.msra.mxu0 %v1968
  %2002 = vmatprep.subr.bf16.mxu0 %v1971
  %2003 = vmatpush1.bf16.msra.mxu0 %v1970
  %2004 = vmatprep.subr.bf16.mxu0 %v1973
  %2005 = vmatpush1.bf16.msra.mxu0 %v1972
  %2006 = vmatprep.subr.bf16.mxu0 %v1975
  %2007 = vmatpush1.bf16.msra.mxu0 %v1974
  %2008 = vmatprep.subr.bf16.mxu0 %v1977
  %2009 = vmatpush1.bf16.msra.mxu0 %v1976
  %2010 = vmatprep.subr.bf16.mxu0 0
  %2011 = vmatpush1.bf16.msra.mxu0 0
  %2012 = vmatprep.subr.bf16.mxu0 0
  %2013 = vmatpush1.bf16.msra.mxu0 0
  %2014 = vmatprep.subr.bf16.mxu0 0
  %2015 = vmatpush1.bf16.msra.mxu0 0
  %2016 = vmatprep.subr.bf16.mxu0 0
  %2017 = vmatpush1.bf16.msra.mxu0 0
  %2018 = vmatprep.subr.bf16.mxu0 0
  %2019 = vmatpush1.bf16.msra.mxu0 0
  %2020 = vmatprep.subr.bf16.mxu0 0
  %2021 = vmatpush1.bf16.msra.mxu0 0
  %2022 = vmatprep.subr.bf16.mxu0 0
  %2023 = vmatpush1.bf16.msra.mxu0 0
  %2024 = vmatprep.subr.bf16.mxu0 0
  %2025 = vmatpush1.bf16.msra.mxu0 0
  %2026 = vmatprep.mubr.bf16.mxu0 0
  %2027 = vmatmul.mubr.bf16.gmra.mrb[0].mxu0 %v1884
  %v2028 = vpop.f32.mrb[0].mxu0
  %v2029 = vadd.f32 %v1907, %v2028
  %v2030 = vpop.f32.mrb[0].mxu0
  %v2031 = vadd.f32 %v1911, %v2030
  %v2032 = vpop.f32.mrb[0].mxu0
  %v2033 = vadd.f32 %v1907, %v2032
  %v2034 = vpop.f32.mrb[0].mxu0
  %v2035 = vadd.f32 %v1911, %v2034
  %2036 = vmatprep.mubr.bf16.mxu0 0
  %2037 = vmatmul.mubr.bf16.gmra.mrb[0].mxu0 %v1885
  %v2038 = vpop.f32.mrb[0].mxu0
  %v2039 = vadd.f32 %v1907, %v2038
  %v2040 = vpop.f32.mrb[0].mxu0
  %v2041 = vadd.f32 %v1911, %v2040
  %v2042 = vpop.f32.mrb[0].mxu0
  %v2043 = vadd.f32 %v1907, %v2042
  %v2044 = vpop.f32.mrb[0].mxu0
  %v2045 = vadd.f32 %v1911, %v2044
  %2046 = vdwg.mxu0
  %v2047 = vmul.f32 %v2029, 0.5
  %v2048 = vmul.f32 %v2031, 0.5
  %v2049 = vmul.f32 %v2033, 0.5
  %v2050 = vmul.f32 %v2035, 0.5
  %v2051 = vmul.f32 %v2039, 0.5
  %v2052 = vmul.f32 %v2041, 0.5
  %v2053 = vmul.f32 %v2043, 0.5
  %v2054 = vmul.f32 %v2045, 0.5
  %v2055 = vmul.f32 %v2029, 0.70710677
  %v2056 = vmul.f32 %v2031, 0.70710677
  %v2057 = vmul.f32 %v2033, 0.70710677
  %v2058 = vmul.f32 %v2035, 0.70710677
  %v2059 = vmul.f32 %v2039, 0.70710677
  %v2060 = vmul.f32 %v2041, 0.70710677
  %v2061 = vmul.f32 %v2043, 0.70710677
  %v2062 = vmul.f32 %v2045, 0.70710677
  %v2063 = verf.f32.pop %v2055
  %v2064 = verf.f32.pop %v2056
  %v2065 = verf.f32.pop %v2057
  %v2066 = verf.f32.pop %v2058
  %v2067 = verf.f32.pop %v2059
  %v2068 = verf.f32.pop %v2060
  %v2069 = verf.f32.pop %v2061
  %v2070 = verf.f32.pop %v2062
  %v2071 = vadd.f32 %v2063, 1.0
  %v2072 = vadd.f32 %v2064, 1.0
  %v2073 = vadd.f32 %v2065, 1.0
  %v2074 = vadd.f32 %v2066, 1.0
  %v2075 = vadd.f32 %v2067, 1.0
  %v2076 = vadd.f32 %v2068, 1.0
  %v2077 = vadd.f32 %v2069, 1.0
  %v2078 = vadd.f32 %v2070, 1.0
  %v2079 = vmul.f32 %v2047, %v2071
  %v2080 = vmul.f32 %v2048, %v2072
  %v2081 = vmul.f32 %v2049, %v2073
  %v2082 = vmul.f32 %v2050, %v2074
  %v2083 = vmul.f32 %v2051, %v2075
  %v2084 = vmul.f32 %v2052, %v2076
  %v2085 = vmul.f32 %v2053, %v2077
  %v2086 = vmul.f32 %v2054, %v2078
  %v2087 = vpack.c.bf16 %v2081, %v2079
  %v2088 = vpack.c.bf16 %v2082, %v2080
  %v2089 = vpack.c.bf16 %v2085, %v2083
  %v2090 = vpack.c.bf16 %v2086, %v2084
  %v2091 = vld [vmem:[%s11] sm:$0xf]
  %v2092 = vld [vmem:[%s11 + $0x4] sm:$0xf]
  %v2093 = vld [vmem:[%s11 + $0x8] sm:$0xf]
  %v2094 = vld [vmem:[%s11 + $0xc] sm:$0xf]
  %v2095 = vld [vmem:[%s11 + $0x10] sm:$0xf]
  %v2096 = vld [vmem:[%s11 + $0x14] sm:$0xf]
  %v2097 = vld [vmem:[%s11 + $0x18] sm:$0xf]
  %v2098 = vld [vmem:[%s11 + $0x1c] sm:$0xf]
  %v2099 = vld [vmem:[%s11 + $0x20] sm:$0xf]
  %v2100 = vld [vmem:[%s11 + $0x24] sm:$0xf]
  %v2101 = vld [vmem:[%s11 + $0x28] sm:$0xf]
  %v2102 = vld [vmem:[%s11 + $0x2c] sm:$0xf]
  %v2103 = vld [vmem:[%s11 + $0x30] sm:$0xf]
  %v2104 = vld [vmem:[%s11 + $0x34] sm:$0xf]
  %v2105 = vld [vmem:[%s11 + $0x38] sm:$0xf]
  %v2106 = vld [vmem:[%s11 + $0x3c] sm:$0xf]
  %v2107 = vld [vmem:[%s11 + $0x40] sm:$0xf]
  %v2108 = vld [vmem:[%s11 + $0x44] sm:$0xf]
  %v2109 = vld [vmem:[%s11 + $0x48] sm:$0xf]
  %v2110 = vld [vmem:[%s11 + $0x4c] sm:$0xf]
  %v2111 = vld [vmem:[%s11 + $0x50] sm:$0xf]
  %v2112 = vld [vmem:[%s11 + $0x54] sm:$0xf]
  %v2113 = vld [vmem:[%s11 + $0x58] sm:$0xf]
  %v2114 = vld [vmem:[%s11 + $0x5c] sm:$0xf]
  %v2115 = vld [vmem:[%s11 + $0x60] sm:$0xf]
  %v2116 = vld [vmem:[%s11 + $0x64] sm:$0xf]
  %v2117 = vld [vmem:[%s11 + $0x68] sm:$0xf]
  %v2118 = vld [vmem:[%s11 + $0x6c] sm:$0xf]
  %v2119 = vld [vmem:[%s11 + $0x70] sm:$0xf]
  %v2120 = vld [vmem:[%s11 + $0x74] sm:$0xf]
  %v2121 = vld [vmem:[%s11 + $0x78] sm:$0xf]
  %v2122 = vld [vmem:[%s11 + $0x7c] sm:$0xf]
  %v2123 = vld [vmem:[%s12] sm:$0x1]
  %v2125 = vlaneseq
  %v2126 = vshrl.u32 %v2125, 7
  %v2127 = vsub.s32 0, %v2126
  %v2128 = vrot.slane %v2123, %v2127
  %v2162 = vunpack.c.l.b16 %v2091
  %v2163 = vunpack.c.l.b16 %v2092
  %v2164 = vunpack.c.l.b16 %v2093
  %v2165 = vunpack.c.l.b16 %v2094
  %v2166 = vunpack.c.l.b16 %v2095
  %v2167 = vunpack.c.l.b16 %v2096
  %v2168 = vunpack.c.l.b16 %v2097
  %v2169 = vunpack.c.l.b16 %v2098
  %v2170 = vunpack.c.l.b16 %v2099
  %v2171 = vunpack.c.l.b16 %v2100
  %v2172 = vunpack.c.l.b16 %v2101
  %v2173 = vunpack.c.l.b16 %v2102
  %v2174 = vunpack.c.l.b16 %v2103
  %v2175 = vunpack.c.l.b16 %v2104
  %v2176 = vunpack.c.l.b16 %v2105
  %v2177 = vunpack.c.l.b16 %v2106
  %v2178 = vunpack.c.l.b16 %v2107
  %v2179 = vunpack.c.l.b16 %v2108
  %v2180 = vunpack.c.l.b16 %v2109
  %v2181 = vunpack.c.l.b16 %v2110
  %v2182 = vunpack.c.l.b16 %v2111
  %v2183 = vunpack.c.l.b16 %v2112
  %v2184 = vunpack.c.l.b16 %v2113
  %v2185 = vunpack.c.l.b16 %v2114
  %v2186 = vunpack.c.l.b16 %v2115
  %v2187 = vunpack.c.l.b16 %v2116
  %v2188 = vunpack.c.l.b16 %v2117
  %v2189 = vunpack.c.l.b16 %v2118
  %v2190 = vunpack.c.l.b16 %v2119
  %v2191 = vunpack.c.l.b16 %v2120
  %v2192 = vunpack.c.l.b16 %v2121
  %v2193 = vunpack.c.l.b16 %v2122
  %v2194 = vpack.c.b16 %v2163, %v2162
  %v2195 = vpack.c.b16 %v2165, %v2164
  %v2196 = vpack.c.b16 %v2167, %v2166
  %v2197 = vpack.c.b16 %v2169, %v2168
  %v2198 = vpack.c.b16 %v2171, %v2170
  %v2199 = vpack.c.b16 %v2173, %v2172
  %v2200 = vpack.c.b16 %v2175, %v2174
  %v2201 = vpack.c.b16 %v2177, %v2176
  %v2202 = vpack.c.b16 %v2179, %v2178
  %v2203 = vpack.c.b16 %v2181, %v2180
  %v2204 = vpack.c.b16 %v2183, %v2182
  %v2205 = vpack.c.b16 %v2185, %v2184
  %v2206 = vpack.c.b16 %v2187, %v2186
  %v2207 = vpack.c.b16 %v2189, %v2188
  %v2208 = vpack.c.b16 %v2191, %v2190
  %v2209 = vpack.c.b16 %v2193, %v2192
  %2226 = vmatprep.subr.bf16.mxu0 0
  %2227 = vmatpush1.bf16.msra.mxu0 %v2194
  %2228 = vmatprep.subr.bf16.mxu0 0
  %2229 = vmatpush1.bf16.msra.mxu0 %v2195
  %2230 = vmatprep.subr.bf16.mxu0 0
  %2231 = vmatpush1.bf16.msra.mxu0 %v2196
  %2232 = vmatprep.subr.bf16.mxu0 0
  %2233 = vmatpush1.bf16.msra.mxu0 %v2197
  %2234 = vmatprep.subr.bf16.mxu0 0
  %2235 = vmatpush1.bf16.msra.mxu0 %v2198
  %2236 = vmatprep.subr.bf16.mxu0 0
  %2237 = vmatpush1.bf16.msra.mxu0 %v2199
  %2238 = vmatprep.subr.bf16.mxu0 0
  %2239 = vmatpush1.bf16.msra.mxu0 %v2200
  %2240 = vmatprep.subr.bf16.mxu0 0
  %2241 = vmatpush1.bf16.msra.mxu0 %v2201
  %2242 = vmatprep.subr.bf16.mxu0 0
  %2243 = vmatpush1.bf16.msra.mxu0 %v2202
  %2244 = vmatprep.subr.bf16.mxu0 0
  %2245 = vmatpush1.bf16.msra.mxu0 %v2203
  %2246 = vmatprep.subr.bf16.mxu0 0
  %2247 = vmatpush1.bf16.msra.mxu0 %v2204
  %2248 = vmatprep.subr.bf16.mxu0 0
  %2249 = vmatpush1.bf16.msra.mxu0 %v2205
  %2250 = vmatprep.subr.bf16.mxu0 0
  %2251 = vmatpush1.bf16.msra.mxu0 %v2206
  %2252 = vmatprep.subr.bf16.mxu0 0
  %2253 = vmatpush1.bf16.msra.mxu0 %v2207
  %2254 = vmatprep.subr.bf16.mxu0 0
  %2255 = vmatpush1.bf16.msra.mxu0 %v2208
  %2256 = vmatprep.subr.bf16.mxu0 0
  %2257 = vmatpush1.bf16.msra.mxu0 %v2209
  %2258 = vmatprep.mubr.bf16.mxu0 %v2088
  %2259 = vmatmul.mubr.bf16.gmra.mrb[0].mxu0 %v2087
  %v2260 = vpop.f32.mrb[0].mxu0
  %v2261 = vadd.f32 %v2128, %v2260
  %v2262 = vpop.f32.mrb[0].mxu0
  %v2263 = vpop.f32.mrb[0].mxu0
  %v2264 = vadd.f32 %v2128, %v2263
  %v2265 = vpop.f32.mrb[0].mxu0
  %2266 = vmatprep.mubr.bf16.mxu0 %v2090
  %2267 = vmatmul.mubr.bf16.gmra.mrb[0].mxu0 %v2089
  %v2268 = vpop.f32.mrb[0].mxu0
  %v2269 = vadd.f32 %v2128, %v2268
  %v2270 = vpop.f32.mrb[0].mxu0
  %v2271 = vpop.f32.mrb[0].mxu0
  %v2272 = vadd.f32 %v2128, %v2271
  %v2273 = vpop.f32.mrb[0].mxu0
  %2274 = vdwg.mxu0
  %v2275 = vadd.f32 %v1880, %v2261
  %v2276 = vadd.f32 %v1881, %v2264
  %v2277 = vadd.f32 %v1882, %v2269
  %v2278 = vadd.f32 %v1883, %v2272
  %v2279 = vld [vmem:[%s13] sm:$0x1]
  %v2280 = vld [vmem:[%s14] sm:$0x1]
  %2281 = vadd.xlane.f32.xlu0 %v2275
  %v2282 = vpop.xlane.xlu0 %2281
  %2283 = vadd.xlane.f32.xlu0 %v2276
  %v2284 = vpop.xlane.xlu0 %2283
  %2285 = vadd.xlane.f32.xlu0 %v2277
  %v2286 = vpop.xlane.xlu0 %2285
  %2287 = vadd.xlane.f32.xlu0 %v2278
  %v2288 = vpop.xlane.xlu0 %2287
  %v2289 = vmul.f32 %v2282, %v65
  %v2290 = vmul.f32 %v2284, %v65
  %v2291 = vmul.f32 %v2286, %v65
  %v2292 = vmul.f32 %v2288, %v65
  %v2293 = vsub.f32 %v2275, %v2289
  %v2294 = vsub.f32 %v2276, %v2290
  %v2295 = vsub.f32 %v2277, %v2291
  %v2296 = vsub.f32 %v2278, %v2292
  %v2297 = vmul.f32 %v2293, %v2293
  %v2298 = vmul.f32 %v2294, %v2294
  %v2299 = vmul.f32 %v2295, %v2295
  %v2300 = vmul.f32 %v2296, %v2296
  %2301 = vadd.xlane.f32.xlu0 %v2297
  %v2302 = vpop.xlane.xlu0 %2301
  %2303 = vadd.xlane.f32.xlu0 %v2298
  %v2304 = vpop.xlane.xlu0 %2303
  %2305 = vadd.xlane.f32.xlu0 %v2299
  %v2306 = vpop.xlane.xlu0 %2305
  %2307 = vadd.xlane.f32.xlu0 %v2300
  %v2308 = vpop.xlane.xlu0 %2307
  %v2309 = vmul.f32 %v2302, %v65
  %v2310 = vmul.f32 %v2304, %v65
  %v2311 = vmul.f32 %v2306, %v65
  %v2312 = vmul.f32 %v2308, %v65
  %v2313 = vadd.f32 %v2309, 1e-12
  %v2314 = vadd.f32 %v2310, 1e-12
  %v2315 = vadd.f32 %v2311, 1e-12
  %v2316 = vadd.f32 %v2312, 1e-12
  %v2317 = vrsqrt.pop %v2313
  %v2318 = vrsqrt.pop %v2314
  %v2319 = vrsqrt.pop %v2315
  %v2320 = vrsqrt.pop %v2316
  %v2321 = vmul.f32 %v2293, %v2317
  %v2322 = vmul.f32 %v2294, %v2318
  %v2323 = vmul.f32 %v2295, %v2319
  %v2324 = vmul.f32 %v2296, %v2320
  %v2326 = vlaneseq
  %v2327 = vshrl.u32 %v2326, 7
  %v2328 = vsub.s32 0, %v2327
  %v2329 = vrot.slane %v2279, %v2328
  %v2331 = vmul.f32 %v2321, %v2329
  %v2332 = vmul.f32 %v2322, %v2329
  %v2333 = vmul.f32 %v2323, %v2329
  %v2334 = vmul.f32 %v2324, %v2329
  %v2336 = vlaneseq
  %v2337 = vshrl.u32 %v2336, 7
  %v2338 = vsub.s32 0, %v2337
  %v2339 = vrot.slane %v2280, %v2338
  %v2341 = vadd.f32 %v2331, %v2339
  %v2342 = vadd.f32 %v2332, %v2339
  %v2343 = vadd.f32 %v2333, %v2339
  %v2344 = vadd.f32 %v2334, %v2339
  %2345 = vst [vmem:[%s15] sm:$0xff] %v2341
  %2346 = vst [vmem:[%s15 + $0x8] sm:$0xff] %v2342
  %2347 = vst [vmem:[%s15 + $0x10] sm:$0xff] %v2343
  %2348 = vst [vmem:[%s15 + $0x18] sm:$0xff] %v2344
  // Predicated region
  $region62: #{pretraining_forward.3} parent=0 // pred_check
    _
  $region63: #{pretraining_forward.3} parent=0 // pred_check_branch
    %2350 = sbr.rel (0) target = $region65
  $region64: #{pretraining_forward.3} parent=0 // pred_region
    _
  $region65: #{pretraining_forward.3} parent=0 // pred_fallthru
    _
  // Predicated region
  $region66: #{pretraining_forward.3} parent=0 // pred_check
    _
  $region67: #{pretraining_forward.3} parent=0 // pred_check_branch
    %2352 = sbr.rel (0) target = $region69
  $region68: #{pretraining_forward.3} parent=0 // pred_region
    _
  $region69: #{pretraining_forward.3} parent=0 // pred_fallthru
    _

</llo_original>
